<compile_context>
chip_gen: v5e
topology: v5e:2x2
jax: 0.10.0
libtpu: 0.0.40
codegen_flags: <defaults>
</compile_context>

<pallas_src>
import jax
import jax.numpy as jnp
from jax.experimental import pallas as pl
from jax.experimental.pallas import tpu as pltpu


# ----------------------------------------------------------------------------
# Static geometry (the PyTorch module hard-codes 3x32x32 inputs, k=5, padding=2).
# ----------------------------------------------------------------------------
H = W = 32                     # CIFAR-10 spatial size
CIN = 3                        # input channels (HSV)
KSIZE = 5                      # conv kernel size
PAD = 2                        # conv padding
G = H + 2 * PAD                # 36: padded grid (conv1 output ring == conv2 zero padding)
GG = G * G                     # 1296
GG_PAD = ((GG + 127) // 128) * 128   # 1408: lane-padded spatial axis (11 * 128)
SUB = 8                        # f32 sublane tile
RPT1 = ((CIN + SUB - 1) // SUB) * SUB  # 8: rows per tap for conv1 im2col (channels padded)

# Static lane-roll amount per tap so that rolled[q] == act[q + dy*G + dx].
_TAP_SHIFTS = tuple(
    (-((ky - PAD) * G + (kx - PAD))) % GG_PAD
    for ky in range(KSIZE)
    for kx in range(KSIZE)
)


def _round_up(x, m):
    return ((x + m - 1) // m) * m


# ----------------------------------------------------------------------------
# Fused kernel: conv1+ReLU -> conv2+ReLU -> (fc2·fc1), one image per grid step.
# ----------------------------------------------------------------------------
def _fused_cnn_kernel(x_ref, ring_ref, w1_ref, b1_ref, w2_ref, b2_ref,
                      wfc_ref, bfc_ref, out_ref, col_ref):
    f32 = jnp.float32
    rpt1 = x_ref.shape[1]          # 8  (conv1 rows per tap = padded input channels)
    c1p = w1_ref.shape[0]          # 8  (padded conv1 output channels = conv2 rows per tap)
    c2 = w2_ref.shape[0]           # 8
    kc1 = w1_ref.shape[1]          # 25 * rpt1
    kc2 = w2_ref.shape[1]          # 25 * c1p

    # ---------------- conv1: tap-stacked im2col (aligned stores) + ONE dot ----------------
    x1 = x_ref[0]                                              # (rpt1, GG_PAD) f32
    for t, s in enumerate(_TAP_SHIFTS):
        piece = x1 if s == 0 else pltpu.roll(x1, s, axis=1)    # lane rotation (XLU)
        col_ref[rpt1 * t:rpt1 * (t + 1), :] = piece            # full, tile-aligned store
    pre1 = jnp.dot(w1_ref[...], col_ref[0:kc1, :],
                   preferred_element_type=f32)                  # (c1p, GG_PAD)
    # ReLU + zero the outer ring (it is conv2's zero padding). Lane-dense elementwise.
    h1 = jnp.maximum(pre1 + b1_ref[...], 0.0) * ring_ref[...]

    # ---------------- conv2: same structure ----------------
    for t, s in enumerate(_TAP_SHIFTS):
        piece = h1 if s == 0 else pltpu.roll(h1, s, axis=1)
        col_ref[c1p * t:c1p * (t + 1), :] = piece
    pre2 = jnp.dot(w2_ref[...], col_ref[0:kc2, :],
                   preferred_element_type=f32)                  # (c2, GG_PAD)
    h2 = jnp.maximum(pre2 + b2_ref[...], 0.0)

    # ---------------- fused fc1·fc2 (no ReLU between them in the reference) ----------------
    # wfc is the fused (fc2_w @ fc1_w) weight laid out on the padded grid (zeros on the
    # ring/tail), so the garbage h2 ring values contribute exactly zero.
    acc = bfc_ref[...]                                          # (1, n_out) f32
    for c in range(c2):
        acc = acc + jnp.dot(h2[c:c + 1, :].astype(jnp.bfloat16), wfc_ref[c],
                            preferred_element_type=f32)         # (1, n_out)
    out_ref[0] = acc


# ----------------------------------------------------------------------------
# Host-side weight packing (run ONCE, outside the jitted forward).
# ----------------------------------------------------------------------------
def _pack_conv_weight(w_oihw, in_pad, out_pad):
    """(O, I, kh, kw) -> (out_pad, kh*kw*in_pad); row k = tap*in_pad + ci; zero padding."""
    o, i, kh, kw = w_oihw.shape
    wt = jnp.transpose(w_oihw.astype(jnp.float32), (2, 3, 1, 0))        # (kh, kw, i, o)
    wt = jnp.pad(wt, ((0, 0), (0, 0), (0, in_pad - i), (0, out_pad - o)))
    return wt.reshape(kh * kw * in_pad, out_pad).T                       # (out_pad, K)


def prepare_params(params):
    """Pack / fuse all weights once (outside jit) into kernel-ready layouts."""
    assert params["conv1_w"].shape[2] == KSIZE and params["conv1_w"].shape[3] == KSIZE
    c1 = params["conv1_b"].shape[0]
    c2 = params["conv2_b"].shape[0]
    n_out = params["fc2_b"].shape[0]
    c1p = _round_up(c1, SUB)

    w1 = _pack_conv_weight(params["conv1_w"], RPT1, c1p)                 # (c1p, 25*RPT1) f32
    w2 = _pack_conv_weight(params["conv2_w"], c1p, c2)                   # (c2, 25*c1p)  f32
    b1 = jnp.pad(params["conv1_b"].astype(jnp.float32), (0, c1p - c1)).reshape(c1p, 1)
    b2 = params["conv2_b"].astype(jnp.float32).reshape(c2, 1)

    # Algebraic fc1·fc2 fusion (valid: no ReLU between fc1 and fc2 in the reference forward).
    wf = params["fc2_w"].astype(jnp.float32) @ params["fc1_w"].astype(jnp.float32)
    bf = (params["fc2_w"].astype(jnp.float32) @ params["fc1_b"].astype(jnp.float32)
          + params["fc2_b"].astype(jnp.float32))
    # Absorb the PyTorch NCHW flatten order and place the weight on the padded grid
    # (zeros on the ring and on the lane-padding tail).
    wf = wf.reshape(n_out, c2, H, W)
    wf = jnp.transpose(wf, (1, 2, 3, 0))                                 # (c2, H, W, n_out)
    wf = jnp.pad(wf, ((0, 0), (PAD, PAD), (PAD, PAD), (0, 0)))           # (c2, G, G, n_out)
    wf = wf.reshape(c2, GG, n_out)
    wf = jnp.pad(wf, ((0, 0), (0, GG_PAD - GG), (0, 0))).astype(jnp.bfloat16)

    # Interior mask on the padded grid (1 on the 32x32 interior, 0 on ring + lane tail).
    ring = jnp.pad(jnp.ones((H, W), jnp.float32), ((PAD, PAD), (PAD, PAD)))
    ring = jnp.pad(ring.reshape(1, GG), ((0, 0), (0, GG_PAD - GG)))

    return {"w1": w1, "b1": b1, "w2": w2, "b2": b2,
            "wfc": wf, "bfc": bf.reshape(1, n_out), "ring": ring}


# ----------------------------------------------------------------------------
# Jitted forward: cheap input layout + the single pallas_call (grid over batch).
# ----------------------------------------------------------------------------
def classic_cnn_forward(x_nchw, packed):
    """Forward equivalent to ClassicCNN.forward: NCHW input -> (B, 10) logits."""
    batch = x_nchw.shape[0]
    n_out = packed["bfc"].shape[1]
    kmax = max(packed["w1"].shape[1], packed["w2"].shape[1])

    xt = x_nchw.astype(jnp.float32)
    xp = jnp.pad(xt, ((0, 0), (0, RPT1 - CIN), (PAD, PAD), (PAD, PAD)))   # (B, 8, 36, 36)
    xf = jnp.pad(xp.reshape(batch, RPT1, GG),
                 ((0, 0), (0, 0), (0, GG_PAD - GG)))                      # (B, 8, 1408)

    logits = pl.pallas_call(
        _fused_cnn_kernel,
        out_shape=jax.ShapeDtypeStruct((batch, 1, n_out), jnp.float32),
        grid=(batch,),
        in_specs=[
            pl.BlockSpec((1, RPT1, GG_PAD), lambda b: (b, 0, 0)),         # per-image input
            pl.BlockSpec(packed["ring"].shape, lambda b: (0, 0)),
            pl.BlockSpec(packed["w1"].shape, lambda b: (0, 0)),
            pl.BlockSpec(packed["b1"].shape, lambda b: (0, 0)),
            pl.BlockSpec(packed["w2"].shape, lambda b: (0, 0)),
            pl.BlockSpec(packed["b2"].shape, lambda b: (0, 0)),
            pl.BlockSpec(packed["wfc"].shape, lambda b: (0, 0, 0)),
            pl.BlockSpec(packed["bfc"].shape, lambda b: (0, 0)),
        ],
        out_specs=pl.BlockSpec((1, 1, n_out), lambda b: (b, 0, 0)),
        scratch_shapes=[pltpu.VMEM((kmax, GG_PAD), jnp.float32)],         # im2col scratch
        compiler_params=pltpu.CompilerParams(dimension_semantics=("parallel",)),
    )(xf, packed["ring"], packed["w1"], packed["b1"],
      packed["w2"], packed["b2"], packed["wfc"], packed["bfc"])

    return logits.reshape(batch, n_out)


# ----------------------------------------------------------------------------
# Pure-JAX reference (XLA convs) for correctness checking.
# ----------------------------------------------------------------------------
def _reference_forward(x_nchw, params):
    dn = ("NCHW", "OIHW", "NCHW")
    h = jax.lax.conv_general_dilated(x_nchw, params["conv1_w"], (1, 1),
                                     ((PAD, PAD), (PAD, PAD)), dimension_numbers=dn)
    h = jax.nn.relu(h + params["conv1_b"][None, :, None, None])
    h = jax.lax.conv_general_dilated(h, params["conv2_w"], (1, 1),
                                     ((PAD, PAD), (PAD, PAD)), dimension_numbers=dn)
    h = jax.nn.relu(h + params["conv2_b"][None, :, None, None])
    flat = h.reshape(h.shape[0], -1)                       # NCHW flatten, like PyTorch
    fc1 = flat @ params["fc1_w"].T + params["fc1_b"]       # no ReLU after fc1 in the module
    return fc1 @ params["fc2_w"].T + params["fc2_b"]


# ----------------------------------------------------------------------------
# Deterministic parameter init (PyTorch default: U(-1/sqrt(fan_in), 1/sqrt(fan_in))).
# ----------------------------------------------------------------------------
def init_params(key, conv1_channels, conv2_channels, fc1_size, kernel_size):
    ks = jax.random.split(key, 8)
    k = kernel_size
    flatten_dim = conv2_channels * H * W   # padding=2, k=5 keeps 32x32

    def u(rng, shape, fan_in):
        bound = 1.0 / (fan_in ** 0.5)
        return jax.random.uniform(rng, shape, jnp.float32, -bound, bound)

    return {
        "conv1_w": u(ks[0], (conv1_channels, CIN, k, k), CIN * k * k),
        "conv1_b": u(ks[1], (conv1_channels,), CIN * k * k),
        "conv2_w": u(ks[2], (conv2_channels, conv1_channels, k, k),
                     conv1_channels * k * k),
        "conv2_b": u(ks[3], (conv2_channels,), conv1_channels * k * k),
        "fc1_w": u(ks[4], (fc1_size, flatten_dim), flatten_dim),
        "fc1_b": u(ks[5], (fc1_size,), flatten_dim),
        "fc2_w": u(ks[6], (10, fc1_size), fc1_size),
        "fc2_b": u(ks[7], (10,), fc1_size),
    }


if __name__ == "__main__":
    conv1_channels, conv2_channels, fc1_size, kernel_size = 4, 8, 32, 5
    key = jax.random.PRNGKey(0)
    pkey, xkey = jax.random.split(key)

    params = init_params(pkey, conv1_channels, conv2_channels, fc1_size, kernel_size)
    packed = prepare_params(params)            # weight packing: once, outside jit
    # Input layout matches PyTorch: NCHW, 3 channels, 32x32 (CIFAR-10 HSV), batch=2.
    x = jax.random.normal(xkey, (2, CIN, H, W), jnp.float32)

    fwd = jax.jit(classic_cnn_forward)
    logits = jax.block_until_ready(fwd(x, packed))
    assert logits.shape == (2, 10), logits.shape
    assert bool(jnp.all(jnp.isfinite(logits)))

    ref = _reference_forward(x, params)
    max_err = float(jnp.max(jnp.abs(logits - ref)))
    # bf16 is used for the fused FC weight / FC LHS, so allow ~1e-2-level deviation.
    assert max_err < 5e-2, f"mismatch vs pure-JAX reference: {max_err}"

    print("KERNEL_OK")
</pallas_src>

<mosaic_0001>
module attributes {stable_mosaic.version = 11 : i64} {
  func.func @_fused_cnn_kernel(%arg0: i32, %arg1: memref<1x8x1408xf32, #tpu.memory_space<vmem>>, %arg2: memref<1x1408xf32, #tpu.memory_space<vmem>>, %arg3: memref<8x200xf32, #tpu.memory_space<vmem>>, %arg4: memref<8x1xf32, #tpu.memory_space<vmem>>, %arg5: memref<8x200xf32, #tpu.memory_space<vmem>>, %arg6: memref<8x1xf32, #tpu.memory_space<vmem>>, %arg7: memref<8x1408x10xbf16, #tpu.memory_space<vmem>>, %arg8: memref<1x10xf32, #tpu.memory_space<vmem>>, %arg9: memref<1x1x10xf32, #tpu.memory_space<vmem>>, %arg10: memref<200x1408xf32, #tpu.memory_space<vmem>>) attributes {dimension_semantics = [#tpu.dimension_semantics<parallel>], iteration_bounds = array<i64: 2>, scalar_prefetch = 0 : i64, scratch_operands = 1 : i64, tpu.core_type = #tpu.core_type<tc>, window_params = [{transform_indices = @transform_0, window_bounds = array<i64: 1, 8, 1408>}, {pipeline_mode = #tpu.pipeline_mode<synchronous>, transform_indices = @transform_1, window_bounds = array<i64: 1, 1408>}, {pipeline_mode = #tpu.pipeline_mode<synchronous>, transform_indices = @transform_2, window_bounds = array<i64: 8, 200>}, {pipeline_mode = #tpu.pipeline_mode<synchronous>, transform_indices = @transform_3, window_bounds = array<i64: 8, 1>}, {pipeline_mode = #tpu.pipeline_mode<synchronous>, transform_indices = @transform_4, window_bounds = array<i64: 8, 200>}, {pipeline_mode = #tpu.pipeline_mode<synchronous>, transform_indices = @transform_5, window_bounds = array<i64: 8, 1>}, {pipeline_mode = #tpu.pipeline_mode<synchronous>, transform_indices = @transform_6, window_bounds = array<i64: 8, 1408, 10>}, {pipeline_mode = #tpu.pipeline_mode<synchronous>, transform_indices = @transform_7, window_bounds = array<i64: 1, 10>}, {transform_indices = @transform_8, window_bounds = array<i64: 1, 1, 10>}]} {
    %c0 = arith.constant 0 : index
    %c0_0 = arith.constant 0 : index
    %c0_1 = arith.constant 0 : index
    %0 = vector.load %arg1[%c0, %c0_0, %c0_1] : memref<1x8x1408xf32, #tpu.memory_space<vmem>>, vector<1x8x1408xf32>
    %1 = vector.shape_cast %0 : vector<1x8x1408xf32> to vector<8x1408xf32>
    %c74_i32 = arith.constant 74 : i32
    %2 = tpu.dynamic_rotate %1 by %c74_i32 dim 1 : vector<8x1408xf32>, i32 -> vector<8x1408xf32>
    %c0_2 = arith.constant 0 : index
    %c0_3 = arith.constant 0 : index
    %3 = vector.load %arg10[%c0_2, %c0_3] : memref<200x1408xf32, #tpu.memory_space<vmem>>, vector<8x1408xf32>
    tpu.vector_store %arg10[%c0_2, %c0_3], %2 {strides = array<i32>} : memref<200x1408xf32, #tpu.memory_space<vmem>>, vector<8x1408xf32>,
    %c73_i32 = arith.constant 73 : i32
    %4 = tpu.dynamic_rotate %1 by %c73_i32 dim 1 : vector<8x1408xf32>, i32 -> vector<8x1408xf32>
    %c8 = arith.constant 8 : index
    %c0_4 = arith.constant 0 : index
    %5 = vector.load %arg10[%c8, %c0_4] : memref<200x1408xf32, #tpu.memory_space<vmem>>, vector<8x1408xf32>
    tpu.vector_store %arg10[%c8, %c0_4], %4 {strides = array<i32>} : memref<200x1408xf32, #tpu.memory_space<vmem>>, vector<8x1408xf32>,
    %c72_i32 = arith.constant 72 : i32
    %6 = tpu.dynamic_rotate %1 by %c72_i32 dim 1 : vector<8x1408xf32>, i32 -> vector<8x1408xf32>
    %c16 = arith.constant 16 : index
    %c0_5 = arith.constant 0 : index
    %7 = vector.load %arg10[%c16, %c0_5] : memref<200x1408xf32, #tpu.memory_space<vmem>>, vector<8x1408xf32>
    tpu.vector_store %arg10[%c16, %c0_5], %6 {strides = array<i32>} : memref<200x1408xf32, #tpu.memory_space<vmem>>, vector<8x1408xf32>,
    %c71_i32 = arith.constant 71 : i32
    %8 = tpu.dynamic_rotate %1 by %c71_i32 dim 1 : vector<8x1408xf32>, i32 -> vector<8x1408xf32>
    %c24 = arith.constant 24 : index
    %c0_6 = arith.constant 0 : index
    %9 = vector.load %arg10[%c24, %c0_6] : memref<200x1408xf32, #tpu.memory_space<vmem>>, vector<8x1408xf32>
    tpu.vector_store %arg10[%c24, %c0_6], %8 {strides = array<i32>} : memref<200x1408xf32, #tpu.memory_space<vmem>>, vector<8x1408xf32>,
    %c70_i32 = arith.constant 70 : i32
    %10 = tpu.dynamic_rotate %1 by %c70_i32 dim 1 : vector<8x1408xf32>, i32 -> vector<8x1408xf32>
    %c32 = arith.constant 32 : index
    %c0_7 = arith.constant 0 : index
    %11 = vector.load %arg10[%c32, %c0_7] : memref<200x1408xf32, #tpu.memory_space<vmem>>, vector<8x1408xf32>
    tpu.vector_store %arg10[%c32, %c0_7], %10 {strides = array<i32>} : memref<200x1408xf32, #tpu.memory_space<vmem>>, vector<8x1408xf32>,
    %c38_i32 = arith.constant 38 : i32
    %12 = tpu.dynamic_rotate %1 by %c38_i32 dim 1 : vector<8x1408xf32>, i32 -> vector<8x1408xf32>
    %c40 = arith.constant 40 : index
    %c0_8 = arith.constant 0 : index
    %13 = vector.load %arg10[%c40, %c0_8] : memref<200x1408xf32, #tpu.memory_space<vmem>>, vector<8x1408xf32>
    tpu.vector_store %arg10[%c40, %c0_8], %12 {strides = array<i32>} : memref<200x1408xf32, #tpu.memory_space<vmem>>, vector<8x1408xf32>,
    %c37_i32 = arith.constant 37 : i32
    %14 = tpu.dynamic_rotate %1 by %c37_i32 dim 1 : vector<8x1408xf32>, i32 -> vector<8x1408xf32>
    %c48 = arith.constant 48 : index
    %c0_9 = arith.constant 0 : index
    %15 = vector.load %arg10[%c48, %c0_9] : memref<200x1408xf32, #tpu.memory_space<vmem>>, vector<8x1408xf32>
    tpu.vector_store %arg10[%c48, %c0_9], %14 {strides = array<i32>} : memref<200x1408xf32, #tpu.memory_space<vmem>>, vector<8x1408xf32>,
    %c36_i32 = arith.constant 36 : i32
    %16 = tpu.dynamic_rotate %1 by %c36_i32 dim 1 : vector<8x1408xf32>, i32 -> vector<8x1408xf32>
    %c56 = arith.constant 56 : index
    %c0_10 = arith.constant 0 : index
    %17 = vector.load %arg10[%c56, %c0_10] : memref<200x1408xf32, #tpu.memory_space<vmem>>, vector<8x1408xf32>
    tpu.vector_store %arg10[%c56, %c0_10], %16 {strides = array<i32>} : memref<200x1408xf32, #tpu.memory_space<vmem>>, vector<8x1408xf32>,
    %c35_i32 = arith.constant 35 : i32
    %18 = tpu.dynamic_rotate %1 by %c35_i32 dim 1 : vector<8x1408xf32>, i32 -> vector<8x1408xf32>
    %c64 = arith.constant 64 : index
    %c0_11 = arith.constant 0 : index
    %19 = vector.load %arg10[%c64, %c0_11] : memref<200x1408xf32, #tpu.memory_space<vmem>>, vector<8x1408xf32>
    tpu.vector_store %arg10[%c64, %c0_11], %18 {strides = array<i32>} : memref<200x1408xf32, #tpu.memory_space<vmem>>, vector<8x1408xf32>,
    %c34_i32 = arith.constant 34 : i32
    %20 = tpu.dynamic_rotate %1 by %c34_i32 dim 1 : vector<8x1408xf32>, i32 -> vector<8x1408xf32>
    %c72 = arith.constant 72 : index
    %c0_12 = arith.constant 0 : index
    %21 = vector.load %arg10[%c72, %c0_12] : memref<200x1408xf32, #tpu.memory_space<vmem>>, vector<8x1408xf32>
    tpu.vector_store %arg10[%c72, %c0_12], %20 {strides = array<i32>} : memref<200x1408xf32, #tpu.memory_space<vmem>>, vector<8x1408xf32>,
    %c2_i32 = arith.constant 2 : i32
    %22 = tpu.dynamic_rotate %1 by %c2_i32 dim 1 : vector<8x1408xf32>, i32 -> vector<8x1408xf32>
    %c80 = arith.constant 80 : index
    %c0_13 = arith.constant 0 : index
    %23 = vector.load %arg10[%c80, %c0_13] : memref<200x1408xf32, #tpu.memory_space<vmem>>, vector<8x1408xf32>
    tpu.vector_store %arg10[%c80, %c0_13], %22 {strides = array<i32>} : memref<200x1408xf32, #tpu.memory_space<vmem>>, vector<8x1408xf32>,
    %c1_i32 = arith.constant 1 : i32
    %24 = tpu.dynamic_rotate %1 by %c1_i32 dim 1 : vector<8x1408xf32>, i32 -> vector<8x1408xf32>
    %c88 = arith.constant 88 : index
    %c0_14 = arith.constant 0 : index
    %25 = vector.load %arg10[%c88, %c0_14] : memref<200x1408xf32, #tpu.memory_space<vmem>>, vector<8x1408xf32>
    tpu.vector_store %arg10[%c88, %c0_14], %24 {strides = array<i32>} : memref<200x1408xf32, #tpu.memory_space<vmem>>, vector<8x1408xf32>,
    %c96 = arith.constant 96 : index
    %c0_15 = arith.constant 0 : index
    %26 = vector.load %arg10[%c96, %c0_15] : memref<200x1408xf32, #tpu.memory_space<vmem>>, vector<8x1408xf32>
    tpu.vector_store %arg10[%c96, %c0_15], %1 {strides = array<i32>} : memref<200x1408xf32, #tpu.memory_space<vmem>>, vector<8x1408xf32>,
    %c1407_i32 = arith.constant 1407 : i32
    %27 = tpu.dynamic_rotate %1 by %c1407_i32 dim 1 : vector<8x1408xf32>, i32 -> vector<8x1408xf32>
    %c104 = arith.constant 104 : index
    %c0_16 = arith.constant 0 : index
    %28 = vector.load %arg10[%c104, %c0_16] : memref<200x1408xf32, #tpu.memory_space<vmem>>, vector<8x1408xf32>
    tpu.vector_store %arg10[%c104, %c0_16], %27 {strides = array<i32>} : memref<200x1408xf32, #tpu.memory_space<vmem>>, vector<8x1408xf32>,
    %c1406_i32 = arith.constant 1406 : i32
    %29 = tpu.dynamic_rotate %1 by %c1406_i32 dim 1 : vector<8x1408xf32>, i32 -> vector<8x1408xf32>
    %c112 = arith.constant 112 : index
    %c0_17 = arith.constant 0 : index
    %30 = vector.load %arg10[%c112, %c0_17] : memref<200x1408xf32, #tpu.memory_space<vmem>>, vector<8x1408xf32>
    tpu.vector_store %arg10[%c112, %c0_17], %29 {strides = array<i32>} : memref<200x1408xf32, #tpu.memory_space<vmem>>, vector<8x1408xf32>,
    %c1374_i32 = arith.constant 1374 : i32
    %31 = tpu.dynamic_rotate %1 by %c1374_i32 dim 1 : vector<8x1408xf32>, i32 -> vector<8x1408xf32>
    %c120 = arith.constant 120 : index
    %c0_18 = arith.constant 0 : index
    %32 = vector.load %arg10[%c120, %c0_18] : memref<200x1408xf32, #tpu.memory_space<vmem>>, vector<8x1408xf32>
    tpu.vector_store %arg10[%c120, %c0_18], %31 {strides = array<i32>} : memref<200x1408xf32, #tpu.memory_space<vmem>>, vector<8x1408xf32>,
    %c1373_i32 = arith.constant 1373 : i32
    %33 = tpu.dynamic_rotate %1 by %c1373_i32 dim 1 : vector<8x1408xf32>, i32 -> vector<8x1408xf32>
    %c128 = arith.constant 128 : index
    %c0_19 = arith.constant 0 : index
    %34 = vector.load %arg10[%c128, %c0_19] : memref<200x1408xf32, #tpu.memory_space<vmem>>, vector<8x1408xf32>
    tpu.vector_store %arg10[%c128, %c0_19], %33 {strides = array<i32>} : memref<200x1408xf32, #tpu.memory_space<vmem>>, vector<8x1408xf32>,
    %c1372_i32 = arith.constant 1372 : i32
    %35 = tpu.dynamic_rotate %1 by %c1372_i32 dim 1 : vector<8x1408xf32>, i32 -> vector<8x1408xf32>
    %c136 = arith.constant 136 : index
    %c0_20 = arith.constant 0 : index
    %36 = vector.load %arg10[%c136, %c0_20] : memref<200x1408xf32, #tpu.memory_space<vmem>>, vector<8x1408xf32>
    tpu.vector_store %arg10[%c136, %c0_20], %35 {strides = array<i32>} : memref<200x1408xf32, #tpu.memory_space<vmem>>, vector<8x1408xf32>,
    %c1371_i32 = arith.constant 1371 : i32
    %37 = tpu.dynamic_rotate %1 by %c1371_i32 dim 1 : vector<8x1408xf32>, i32 -> vector<8x1408xf32>
    %c144 = arith.constant 144 : index
    %c0_21 = arith.constant 0 : index
    %38 = vector.load %arg10[%c144, %c0_21] : memref<200x1408xf32, #tpu.memory_space<vmem>>, vector<8x1408xf32>
    tpu.vector_store %arg10[%c144, %c0_21], %37 {strides = array<i32>} : memref<200x1408xf32, #tpu.memory_space<vmem>>, vector<8x1408xf32>,
    %c1370_i32 = arith.constant 1370 : i32
    %39 = tpu.dynamic_rotate %1 by %c1370_i32 dim 1 : vector<8x1408xf32>, i32 -> vector<8x1408xf32>
    %c152 = arith.constant 152 : index
    %c0_22 = arith.constant 0 : index
    %40 = vector.load %arg10[%c152, %c0_22] : memref<200x1408xf32, #tpu.memory_space<vmem>>, vector<8x1408xf32>
    tpu.vector_store %arg10[%c152, %c0_22], %39 {strides = array<i32>} : memref<200x1408xf32, #tpu.memory_space<vmem>>, vector<8x1408xf32>,
    %c1338_i32 = arith.constant 1338 : i32
    %41 = tpu.dynamic_rotate %1 by %c1338_i32 dim 1 : vector<8x1408xf32>, i32 -> vector<8x1408xf32>
    %c160 = arith.constant 160 : index
    %c0_23 = arith.constant 0 : index
    %42 = vector.load %arg10[%c160, %c0_23] : memref<200x1408xf32, #tpu.memory_space<vmem>>, vector<8x1408xf32>
    tpu.vector_store %arg10[%c160, %c0_23], %41 {strides = array<i32>} : memref<200x1408xf32, #tpu.memory_space<vmem>>, vector<8x1408xf32>,
    %c1337_i32 = arith.constant 1337 : i32
    %43 = tpu.dynamic_rotate %1 by %c1337_i32 dim 1 : vector<8x1408xf32>, i32 -> vector<8x1408xf32>
    %c168 = arith.constant 168 : index
    %c0_24 = arith.constant 0 : index
    %44 = vector.load %arg10[%c168, %c0_24] : memref<200x1408xf32, #tpu.memory_space<vmem>>, vector<8x1408xf32>
    tpu.vector_store %arg10[%c168, %c0_24], %43 {strides = array<i32>} : memref<200x1408xf32, #tpu.memory_space<vmem>>, vector<8x1408xf32>,
    %c1336_i32 = arith.constant 1336 : i32
    %45 = tpu.dynamic_rotate %1 by %c1336_i32 dim 1 : vector<8x1408xf32>, i32 -> vector<8x1408xf32>
    %c176 = arith.constant 176 : index
    %c0_25 = arith.constant 0 : index
    %46 = vector.load %arg10[%c176, %c0_25] : memref<200x1408xf32, #tpu.memory_space<vmem>>, vector<8x1408xf32>
    tpu.vector_store %arg10[%c176, %c0_25], %45 {strides = array<i32>} : memref<200x1408xf32, #tpu.memory_space<vmem>>, vector<8x1408xf32>,
    %c1335_i32 = arith.constant 1335 : i32
    %47 = tpu.dynamic_rotate %1 by %c1335_i32 dim 1 : vector<8x1408xf32>, i32 -> vector<8x1408xf32>
    %c184 = arith.constant 184 : index
    %c0_26 = arith.constant 0 : index
    %48 = vector.load %arg10[%c184, %c0_26] : memref<200x1408xf32, #tpu.memory_space<vmem>>, vector<8x1408xf32>
    tpu.vector_store %arg10[%c184, %c0_26], %47 {strides = array<i32>} : memref<200x1408xf32, #tpu.memory_space<vmem>>, vector<8x1408xf32>,
    %c1334_i32 = arith.constant 1334 : i32
    %49 = tpu.dynamic_rotate %1 by %c1334_i32 dim 1 : vector<8x1408xf32>, i32 -> vector<8x1408xf32>
    %c192 = arith.constant 192 : index
    %c0_27 = arith.constant 0 : index
    %50 = vector.load %arg10[%c192, %c0_27] : memref<200x1408xf32, #tpu.memory_space<vmem>>, vector<8x1408xf32>
    tpu.vector_store %arg10[%c192, %c0_27], %49 {strides = array<i32>} : memref<200x1408xf32, #tpu.memory_space<vmem>>, vector<8x1408xf32>,
    %c0_28 = arith.constant 0 : index
    %c0_29 = arith.constant 0 : index
    %51 = vector.load %arg3[%c0_28, %c0_29] : memref<8x200xf32, #tpu.memory_space<vmem>>, vector<8x200xf32>
    %c0_30 = arith.constant 0 : index
    %c0_31 = arith.constant 0 : index
    %52 = vector.load %arg10[%c0_30, %c0_31] : memref<200x1408xf32, #tpu.memory_space<vmem>>, vector<200x1408xf32>
    %cst = arith.constant dense<0.000000e+00> : vector<8x1408xf32>
    %53 = tpu.matmul %51, %52, %cst {dimension_numbers = #tpu.dot_dimension_numbers<[1], [0], [0], [1], [0, 0, 1, 1], [], []>} : vector<8x200xf32>, vector<200x1408xf32>, vector<8x1408xf32> -> vector<8x1408xf32>
    %c0_32 = arith.constant 0 : index
    %c0_33 = arith.constant 0 : index
    %54 = vector.load %arg4[%c0_32, %c0_33] : memref<8x1xf32, #tpu.memory_space<vmem>>, vector<8x1xf32>
    %55 = vector.broadcast %54 : vector<8x1xf32> to vector<8x1408xf32>
    %56 = arith.addf %53, %55 : vector<8x1408xf32>
    %cst_34 = arith.constant 0.000000e+00 : f32
    %57 = vector.broadcast %cst_34 : f32 to vector<8x1408xf32>
    %58 = arith.maximumf %56, %57 : vector<8x1408xf32>
    %c0_35 = arith.constant 0 : index
    %c0_36 = arith.constant 0 : index
    %59 = vector.load %arg2[%c0_35, %c0_36] : memref<1x1408xf32, #tpu.memory_space<vmem>>, vector<1x1408xf32>
    %60 = vector.broadcast %59 : vector<1x1408xf32> to vector<8x1408xf32>
    %61 = arith.mulf %58, %60 : vector<8x1408xf32>
    %c74_i32_37 = arith.constant 74 : i32
    %62 = tpu.dynamic_rotate %61 by %c74_i32_37 dim 1 : vector<8x1408xf32>, i32 -> vector<8x1408xf32>
    %c0_38 = arith.constant 0 : index
    %c0_39 = arith.constant 0 : index
    %63 = vector.load %arg10[%c0_38, %c0_39] : memref<200x1408xf32, #tpu.memory_space<vmem>>, vector<8x1408xf32>
    tpu.vector_store %arg10[%c0_38, %c0_39], %62 {strides = array<i32>} : memref<200x1408xf32, #tpu.memory_space<vmem>>, vector<8x1408xf32>,
    %c73_i32_40 = arith.constant 73 : i32
    %64 = tpu.dynamic_rotate %61 by %c73_i32_40 dim 1 : vector<8x1408xf32>, i32 -> vector<8x1408xf32>
    %c8_41 = arith.constant 8 : index
    %c0_42 = arith.constant 0 : index
    %65 = vector.load %arg10[%c8_41, %c0_42] : memref<200x1408xf32, #tpu.memory_space<vmem>>, vector<8x1408xf32>
    tpu.vector_store %arg10[%c8_41, %c0_42], %64 {strides = array<i32>} : memref<200x1408xf32, #tpu.memory_space<vmem>>, vector<8x1408xf32>,
    %c72_i32_43 = arith.constant 72 : i32
    %66 = tpu.dynamic_rotate %61 by %c72_i32_43 dim 1 : vector<8x1408xf32>, i32 -> vector<8x1408xf32>
    %c16_44 = arith.constant 16 : index
    %c0_45 = arith.constant 0 : index
    %67 = vector.load %arg10[%c16_44, %c0_45] : memref<200x1408xf32, #tpu.memory_space<vmem>>, vector<8x1408xf32>
    tpu.vector_store %arg10[%c16_44, %c0_45], %66 {strides = array<i32>} : memref<200x1408xf32, #tpu.memory_space<vmem>>, vector<8x1408xf32>,
    %c71_i32_46 = arith.constant 71 : i32
    %68 = tpu.dynamic_rotate %61 by %c71_i32_46 dim 1 : vector<8x1408xf32>, i32 -> vector<8x1408xf32>
    %c24_47 = arith.constant 24 : index
    %c0_48 = arith.constant 0 : index
    %69 = vector.load %arg10[%c24_47, %c0_48] : memref<200x1408xf32, #tpu.memory_space<vmem>>, vector<8x1408xf32>
    tpu.vector_store %arg10[%c24_47, %c0_48], %68 {strides = array<i32>} : memref<200x1408xf32, #tpu.memory_space<vmem>>, vector<8x1408xf32>,
    %c70_i32_49 = arith.constant 70 : i32
    %70 = tpu.dynamic_rotate %61 by %c70_i32_49 dim 1 : vector<8x1408xf32>, i32 -> vector<8x1408xf32>
    %c32_50 = arith.constant 32 : index
    %c0_51 = arith.constant 0 : index
    %71 = vector.load %arg10[%c32_50, %c0_51] : memref<200x1408xf32, #tpu.memory_space<vmem>>, vector<8x1408xf32>
    tpu.vector_store %arg10[%c32_50, %c0_51], %70 {strides = array<i32>} : memref<200x1408xf32, #tpu.memory_space<vmem>>, vector<8x1408xf32>,
    %c38_i32_52 = arith.constant 38 : i32
    %72 = tpu.dynamic_rotate %61 by %c38_i32_52 dim 1 : vector<8x1408xf32>, i32 -> vector<8x1408xf32>
    %c40_53 = arith.constant 40 : index
    %c0_54 = arith.constant 0 : index
    %73 = vector.load %arg10[%c40_53, %c0_54] : memref<200x1408xf32, #tpu.memory_space<vmem>>, vector<8x1408xf32>
    tpu.vector_store %arg10[%c40_53, %c0_54], %72 {strides = array<i32>} : memref<200x1408xf32, #tpu.memory_space<vmem>>, vector<8x1408xf32>,
    %c37_i32_55 = arith.constant 37 : i32
    %74 = tpu.dynamic_rotate %61 by %c37_i32_55 dim 1 : vector<8x1408xf32>, i32 -> vector<8x1408xf32>
    %c48_56 = arith.constant 48 : index
    %c0_57 = arith.constant 0 : index
    %75 = vector.load %arg10[%c48_56, %c0_57] : memref<200x1408xf32, #tpu.memory_space<vmem>>, vector<8x1408xf32>
    tpu.vector_store %arg10[%c48_56, %c0_57], %74 {strides = array<i32>} : memref<200x1408xf32, #tpu.memory_space<vmem>>, vector<8x1408xf32>,
    %c36_i32_58 = arith.constant 36 : i32
    %76 = tpu.dynamic_rotate %61 by %c36_i32_58 dim 1 : vector<8x1408xf32>, i32 -> vector<8x1408xf32>
    %c56_59 = arith.constant 56 : index
    %c0_60 = arith.constant 0 : index
    %77 = vector.load %arg10[%c56_59, %c0_60] : memref<200x1408xf32, #tpu.memory_space<vmem>>, vector<8x1408xf32>
    tpu.vector_store %arg10[%c56_59, %c0_60], %76 {strides = array<i32>} : memref<200x1408xf32, #tpu.memory_space<vmem>>, vector<8x1408xf32>,
    %c35_i32_61 = arith.constant 35 : i32
    %78 = tpu.dynamic_rotate %61 by %c35_i32_61 dim 1 : vector<8x1408xf32>, i32 -> vector<8x1408xf32>
    %c64_62 = arith.constant 64 : index
    %c0_63 = arith.constant 0 : index
    %79 = vector.load %arg10[%c64_62, %c0_63] : memref<200x1408xf32, #tpu.memory_space<vmem>>, vector<8x1408xf32>
    tpu.vector_store %arg10[%c64_62, %c0_63], %78 {strides = array<i32>} : memref<200x1408xf32, #tpu.memory_space<vmem>>, vector<8x1408xf32>,
    %c34_i32_64 = arith.constant 34 : i32
    %80 = tpu.dynamic_rotate %61 by %c34_i32_64 dim 1 : vector<8x1408xf32>, i32 -> vector<8x1408xf32>
    %c72_65 = arith.constant 72 : index
    %c0_66 = arith.constant 0 : index
    %81 = vector.load %arg10[%c72_65, %c0_66] : memref<200x1408xf32, #tpu.memory_space<vmem>>, vector<8x1408xf32>
    tpu.vector_store %arg10[%c72_65, %c0_66], %80 {strides = array<i32>} : memref<200x1408xf32, #tpu.memory_space<vmem>>, vector<8x1408xf32>,
    %c2_i32_67 = arith.constant 2 : i32
    %82 = tpu.dynamic_rotate %61 by %c2_i32_67 dim 1 : vector<8x1408xf32>, i32 -> vector<8x1408xf32>
    %c80_68 = arith.constant 80 : index
    %c0_69 = arith.constant 0 : index
    %83 = vector.load %arg10[%c80_68, %c0_69] : memref<200x1408xf32, #tpu.memory_space<vmem>>, vector<8x1408xf32>
    tpu.vector_store %arg10[%c80_68, %c0_69], %82 {strides = array<i32>} : memref<200x1408xf32, #tpu.memory_space<vmem>>, vector<8x1408xf32>,
    %c1_i32_70 = arith.constant 1 : i32
    %84 = tpu.dynamic_rotate %61 by %c1_i32_70 dim 1 : vector<8x1408xf32>, i32 -> vector<8x1408xf32>
    %c88_71 = arith.constant 88 : index
    %c0_72 = arith.constant 0 : index
    %85 = vector.load %arg10[%c88_71, %c0_72] : memref<200x1408xf32, #tpu.memory_space<vmem>>, vector<8x1408xf32>
    tpu.vector_store %arg10[%c88_71, %c0_72], %84 {strides = array<i32>} : memref<200x1408xf32, #tpu.memory_space<vmem>>, vector<8x1408xf32>,
    %c96_73 = arith.constant 96 : index
    %c0_74 = arith.constant 0 : index
    %86 = vector.load %arg10[%c96_73, %c0_74] : memref<200x1408xf32, #tpu.memory_space<vmem>>, vector<8x1408xf32>
    tpu.vector_store %arg10[%c96_73, %c0_74], %61 {strides = array<i32>} : memref<200x1408xf32, #tpu.memory_space<vmem>>, vector<8x1408xf32>,
    %c1407_i32_75 = arith.constant 1407 : i32
    %87 = tpu.dynamic_rotate %61 by %c1407_i32_75 dim 1 : vector<8x1408xf32>, i32 -> vector<8x1408xf32>
    %c104_76 = arith.constant 104 : index
    %c0_77 = arith.constant 0 : index
    %88 = vector.load %arg10[%c104_76, %c0_77] : memref<200x1408xf32, #tpu.memory_space<vmem>>, vector<8x1408xf32>
    tpu.vector_store %arg10[%c104_76, %c0_77], %87 {strides = array<i32>} : memref<200x1408xf32, #tpu.memory_space<vmem>>, vector<8x1408xf32>,
    %c1406_i32_78 = arith.constant 1406 : i32
    %89 = tpu.dynamic_rotate %61 by %c1406_i32_78 dim 1 : vector<8x1408xf32>, i32 -> vector<8x1408xf32>
    %c112_79 = arith.constant 112 : index
    %c0_80 = arith.constant 0 : index
    %90 = vector.load %arg10[%c112_79, %c0_80] : memref<200x1408xf32, #tpu.memory_space<vmem>>, vector<8x1408xf32>
    tpu.vector_store %arg10[%c112_79, %c0_80], %89 {strides = array<i32>} : memref<200x1408xf32, #tpu.memory_space<vmem>>, vector<8x1408xf32>,
    %c1374_i32_81 = arith.constant 1374 : i32
    %91 = tpu.dynamic_rotate %61 by %c1374_i32_81 dim 1 : vector<8x1408xf32>, i32 -> vector<8x1408xf32>
    %c120_82 = arith.constant 120 : index
    %c0_83 = arith.constant 0 : index
    %92 = vector.load %arg10[%c120_82, %c0_83] : memref<200x1408xf32, #tpu.memory_space<vmem>>, vector<8x1408xf32>
    tpu.vector_store %arg10[%c120_82, %c0_83], %91 {strides = array<i32>} : memref<200x1408xf32, #tpu.memory_space<vmem>>, vector<8x1408xf32>,
    %c1373_i32_84 = arith.constant 1373 : i32
    %93 = tpu.dynamic_rotate %61 by %c1373_i32_84 dim 1 : vector<8x1408xf32>, i32 -> vector<8x1408xf32>
    %c128_85 = arith.constant 128 : index
    %c0_86 = arith.constant 0 : index
    %94 = vector.load %arg10[%c128_85, %c0_86] : memref<200x1408xf32, #tpu.memory_space<vmem>>, vector<8x1408xf32>
    tpu.vector_store %arg10[%c128_85, %c0_86], %93 {strides = array<i32>} : memref<200x1408xf32, #tpu.memory_space<vmem>>, vector<8x1408xf32>,
    %c1372_i32_87 = arith.constant 1372 : i32
    %95 = tpu.dynamic_rotate %61 by %c1372_i32_87 dim 1 : vector<8x1408xf32>, i32 -> vector<8x1408xf32>
    %c136_88 = arith.constant 136 : index
    %c0_89 = arith.constant 0 : index
    %96 = vector.load %arg10[%c136_88, %c0_89] : memref<200x1408xf32, #tpu.memory_space<vmem>>, vector<8x1408xf32>
    tpu.vector_store %arg10[%c136_88, %c0_89], %95 {strides = array<i32>} : memref<200x1408xf32, #tpu.memory_space<vmem>>, vector<8x1408xf32>,
    %c1371_i32_90 = arith.constant 1371 : i32
    %97 = tpu.dynamic_rotate %61 by %c1371_i32_90 dim 1 : vector<8x1408xf32>, i32 -> vector<8x1408xf32>
    %c144_91 = arith.constant 144 : index
    %c0_92 = arith.constant 0 : index
    %98 = vector.load %arg10[%c144_91, %c0_92] : memref<200x1408xf32, #tpu.memory_space<vmem>>, vector<8x1408xf32>
    tpu.vector_store %arg10[%c144_91, %c0_92], %97 {strides = array<i32>} : memref<200x1408xf32, #tpu.memory_space<vmem>>, vector<8x1408xf32>,
    %c1370_i32_93 = arith.constant 1370 : i32
    %99 = tpu.dynamic_rotate %61 by %c1370_i32_93 dim 1 : vector<8x1408xf32>, i32 -> vector<8x1408xf32>
    %c152_94 = arith.constant 152 : index
    %c0_95 = arith.constant 0 : index
    %100 = vector.load %arg10[%c152_94, %c0_95] : memref<200x1408xf32, #tpu.memory_space<vmem>>, vector<8x1408xf32>
    tpu.vector_store %arg10[%c152_94, %c0_95], %99 {strides = array<i32>} : memref<200x1408xf32, #tpu.memory_space<vmem>>, vector<8x1408xf32>,
    %c1338_i32_96 = arith.constant 1338 : i32
    %101 = tpu.dynamic_rotate %61 by %c1338_i32_96 dim 1 : vector<8x1408xf32>, i32 -> vector<8x1408xf32>
    %c160_97 = arith.constant 160 : index
    %c0_98 = arith.constant 0 : index
    %102 = vector.load %arg10[%c160_97, %c0_98] : memref<200x1408xf32, #tpu.memory_space<vmem>>, vector<8x1408xf32>
    tpu.vector_store %arg10[%c160_97, %c0_98], %101 {strides = array<i32>} : memref<200x1408xf32, #tpu.memory_space<vmem>>, vector<8x1408xf32>,
    %c1337_i32_99 = arith.constant 1337 : i32
    %103 = tpu.dynamic_rotate %61 by %c1337_i32_99 dim 1 : vector<8x1408xf32>, i32 -> vector<8x1408xf32>
    %c168_100 = arith.constant 168 : index
    %c0_101 = arith.constant 0 : index
    %104 = vector.load %arg10[%c168_100, %c0_101] : memref<200x1408xf32, #tpu.memory_space<vmem>>, vector<8x1408xf32>
    tpu.vector_store %arg10[%c168_100, %c0_101], %103 {strides = array<i32>} : memref<200x1408xf32, #tpu.memory_space<vmem>>, vector<8x1408xf32>,
    %c1336_i32_102 = arith.constant 1336 : i32
    %105 = tpu.dynamic_rotate %61 by %c1336_i32_102 dim 1 : vector<8x1408xf32>, i32 -> vector<8x1408xf32>
    %c176_103 = arith.constant 176 : index
    %c0_104 = arith.constant 0 : index
    %106 = vector.load %arg10[%c176_103, %c0_104] : memref<200x1408xf32, #tpu.memory_space<vmem>>, vector<8x1408xf32>
    tpu.vector_store %arg10[%c176_103, %c0_104], %105 {strides = array<i32>} : memref<200x1408xf32, #tpu.memory_space<vmem>>, vector<8x1408xf32>,
    %c1335_i32_105 = arith.constant 1335 : i32
    %107 = tpu.dynamic_rotate %61 by %c1335_i32_105 dim 1 : vector<8x1408xf32>, i32 -> vector<8x1408xf32>
    %c184_106 = arith.constant 184 : index
    %c0_107 = arith.constant 0 : index
    %108 = vector.load %arg10[%c184_106, %c0_107] : memref<200x1408xf32, #tpu.memory_space<vmem>>, vector<8x1408xf32>
    tpu.vector_store %arg10[%c184_106, %c0_107], %107 {strides = array<i32>} : memref<200x1408xf32, #tpu.memory_space<vmem>>, vector<8x1408xf32>,
    %c1334_i32_108 = arith.constant 1334 : i32
    %109 = tpu.dynamic_rotate %61 by %c1334_i32_108 dim 1 : vector<8x1408xf32>, i32 -> vector<8x1408xf32>
    %c192_109 = arith.constant 192 : index
    %c0_110 = arith.constant 0 : index
    %110 = vector.load %arg10[%c192_109, %c0_110] : memref<200x1408xf32, #tpu.memory_space<vmem>>, vector<8x1408xf32>
    tpu.vector_store %arg10[%c192_109, %c0_110], %109 {strides = array<i32>} : memref<200x1408xf32, #tpu.memory_space<vmem>>, vector<8x1408xf32>,
    %c0_111 = arith.constant 0 : index
    %c0_112 = arith.constant 0 : index
    %111 = vector.load %arg5[%c0_111, %c0_112] : memref<8x200xf32, #tpu.memory_space<vmem>>, vector<8x200xf32>
    %c0_113 = arith.constant 0 : index
    %c0_114 = arith.constant 0 : index
    %112 = vector.load %arg10[%c0_113, %c0_114] : memref<200x1408xf32, #tpu.memory_space<vmem>>, vector<200x1408xf32>
    %cst_115 = arith.constant dense<0.000000e+00> : vector<8x1408xf32>
    %113 = tpu.matmul %111, %112, %cst_115 {dimension_numbers = #tpu.dot_dimension_numbers<[1], [0], [0], [1], [0, 0, 1, 1], [], []>} : vector<8x200xf32>, vector<200x1408xf32>, vector<8x1408xf32> -> vector<8x1408xf32>
    %c0_116 = arith.constant 0 : index
    %c0_117 = arith.constant 0 : index
    %114 = vector.load %arg6[%c0_116, %c0_117] : memref<8x1xf32, #tpu.memory_space<vmem>>, vector<8x1xf32>
    %115 = vector.broadcast %114 : vector<8x1xf32> to vector<8x1408xf32>
    %116 = arith.addf %113, %115 : vector<8x1408xf32>
    %cst_118 = arith.constant 0.000000e+00 : f32
    %117 = vector.broadcast %cst_118 : f32 to vector<8x1408xf32>
    %118 = arith.maximumf %116, %117 : vector<8x1408xf32>
    %c0_119 = arith.constant 0 : index
    %c0_120 = arith.constant 0 : index
    %119 = vector.load %arg8[%c0_119, %c0_120] : memref<1x10xf32, #tpu.memory_space<vmem>>, vector<1x10xf32>
    %120 = vector.extract_strided_slice %118 {offsets = [0, 0], sizes = [1, 1408], strides = [1, 1]} : vector<8x1408xf32> to vector<1x1408xf32>
    %121 = arith.truncf %120 : vector<1x1408xf32> to vector<1x1408xbf16>
    %c0_121 = arith.constant 0 : index
    %c0_122 = arith.constant 0 : index
    %c0_123 = arith.constant 0 : index
    %122 = vector.load %arg7[%c0_121, %c0_122, %c0_123] : memref<8x1408x10xbf16, #tpu.memory_space<vmem>>, vector<1x1408x10xbf16>
    %123 = vector.shape_cast %122 : vector<1x1408x10xbf16> to vector<1408x10xbf16>
    %cst_124 = arith.constant dense<0.000000e+00> : vector<1x10xf32>
    %124 = tpu.matmul %121, %123, %cst_124 {dimension_numbers = #tpu.dot_dimension_numbers<[1], [0], [0], [1], [0, 0, 1, 1], [], []>} : vector<1x1408xbf16>, vector<1408x10xbf16>, vector<1x10xf32> -> vector<1x10xf32>
    %125 = arith.addf %119, %124 : vector<1x10xf32>
    %126 = vector.extract_strided_slice %118 {offsets = [1, 0], sizes = [1, 1408], strides = [1, 1]} : vector<8x1408xf32> to vector<1x1408xf32>
    %127 = arith.truncf %126 : vector<1x1408xf32> to vector<1x1408xbf16>
    %c1 = arith.constant 1 : index
    %c0_125 = arith.constant 0 : index
    %c0_126 = arith.constant 0 : index
    %128 = vector.load %arg7[%c1, %c0_125, %c0_126] : memref<8x1408x10xbf16, #tpu.memory_space<vmem>>, vector<1x1408x10xbf16>
    %129 = vector.shape_cast %128 : vector<1x1408x10xbf16> to vector<1408x10xbf16>
    %cst_127 = arith.constant dense<0.000000e+00> : vector<1x10xf32>
    %130 = tpu.matmul %127, %129, %cst_127 {dimension_numbers = #tpu.dot_dimension_numbers<[1], [0], [0], [1], [0, 0, 1, 1], [], []>} : vector<1x1408xbf16>, vector<1408x10xbf16>, vector<1x10xf32> -> vector<1x10xf32>
    %131 = arith.addf %125, %130 : vector<1x10xf32>
    %132 = vector.extract_strided_slice %118 {offsets = [2, 0], sizes = [1, 1408], strides = [1, 1]} : vector<8x1408xf32> to vector<1x1408xf32>
    %133 = arith.truncf %132 : vector<1x1408xf32> to vector<1x1408xbf16>
    %c2 = arith.constant 2 : index
    %c0_128 = arith.constant 0 : index
    %c0_129 = arith.constant 0 : index
    %134 = vector.load %arg7[%c2, %c0_128, %c0_129] : memref<8x1408x10xbf16, #tpu.memory_space<vmem>>, vector<1x1408x10xbf16>
    %135 = vector.shape_cast %134 : vector<1x1408x10xbf16> to vector<1408x10xbf16>
    %cst_130 = arith.constant dense<0.000000e+00> : vector<1x10xf32>
    %136 = tpu.matmul %133, %135, %cst_130 {dimension_numbers = #tpu.dot_dimension_numbers<[1], [0], [0], [1], [0, 0, 1, 1], [], []>} : vector<1x1408xbf16>, vector<1408x10xbf16>, vector<1x10xf32> -> vector<1x10xf32>
    %137 = arith.addf %131, %136 : vector<1x10xf32>
    %138 = vector.extract_strided_slice %118 {offsets = [3, 0], sizes = [1, 1408], strides = [1, 1]} : vector<8x1408xf32> to vector<1x1408xf32>
    %139 = arith.truncf %138 : vector<1x1408xf32> to vector<1x1408xbf16>
    %c3 = arith.constant 3 : index
    %c0_131 = arith.constant 0 : index
    %c0_132 = arith.constant 0 : index
    %140 = vector.load %arg7[%c3, %c0_131, %c0_132] : memref<8x1408x10xbf16, #tpu.memory_space<vmem>>, vector<1x1408x10xbf16>
    %141 = vector.shape_cast %140 : vector<1x1408x10xbf16> to vector<1408x10xbf16>
    %cst_133 = arith.constant dense<0.000000e+00> : vector<1x10xf32>
    %142 = tpu.matmul %139, %141, %cst_133 {dimension_numbers = #tpu.dot_dimension_numbers<[1], [0], [0], [1], [0, 0, 1, 1], [], []>} : vector<1x1408xbf16>, vector<1408x10xbf16>, vector<1x10xf32> -> vector<1x10xf32>
    %143 = arith.addf %137, %142 : vector<1x10xf32>
    %144 = vector.extract_strided_slice %118 {offsets = [4, 0], sizes = [1, 1408], strides = [1, 1]} : vector<8x1408xf32> to vector<1x1408xf32>
    %145 = arith.truncf %144 : vector<1x1408xf32> to vector<1x1408xbf16>
    %c4 = arith.constant 4 : index
    %c0_134 = arith.constant 0 : index
    %c0_135 = arith.constant 0 : index
    %146 = vector.load %arg7[%c4, %c0_134, %c0_135] : memref<8x1408x10xbf16, #tpu.memory_space<vmem>>, vector<1x1408x10xbf16>
    %147 = vector.shape_cast %146 : vector<1x1408x10xbf16> to vector<1408x10xbf16>
    %cst_136 = arith.constant dense<0.000000e+00> : vector<1x10xf32>
    %148 = tpu.matmul %145, %147, %cst_136 {dimension_numbers = #tpu.dot_dimension_numbers<[1], [0], [0], [1], [0, 0, 1, 1], [], []>} : vector<1x1408xbf16>, vector<1408x10xbf16>, vector<1x10xf32> -> vector<1x10xf32>
    %149 = arith.addf %143, %148 : vector<1x10xf32>
    %150 = vector.extract_strided_slice %118 {offsets = [5, 0], sizes = [1, 1408], strides = [1, 1]} : vector<8x1408xf32> to vector<1x1408xf32>
    %151 = arith.truncf %150 : vector<1x1408xf32> to vector<1x1408xbf16>
    %c5 = arith.constant 5 : index
    %c0_137 = arith.constant 0 : index
    %c0_138 = arith.constant 0 : index
    %152 = vector.load %arg7[%c5, %c0_137, %c0_138] : memref<8x1408x10xbf16, #tpu.memory_space<vmem>>, vector<1x1408x10xbf16>
    %153 = vector.shape_cast %152 : vector<1x1408x10xbf16> to vector<1408x10xbf16>
    %cst_139 = arith.constant dense<0.000000e+00> : vector<1x10xf32>
    %154 = tpu.matmul %151, %153, %cst_139 {dimension_numbers = #tpu.dot_dimension_numbers<[1], [0], [0], [1], [0, 0, 1, 1], [], []>} : vector<1x1408xbf16>, vector<1408x10xbf16>, vector<1x10xf32> -> vector<1x10xf32>
    %155 = arith.addf %149, %154 : vector<1x10xf32>
    %156 = vector.extract_strided_slice %118 {offsets = [6, 0], sizes = [1, 1408], strides = [1, 1]} : vector<8x1408xf32> to vector<1x1408xf32>
    %157 = arith.truncf %156 : vector<1x1408xf32> to vector<1x1408xbf16>
    %c6 = arith.constant 6 : index
    %c0_140 = arith.constant 0 : index
    %c0_141 = arith.constant 0 : index
    %158 = vector.load %arg7[%c6, %c0_140, %c0_141] : memref<8x1408x10xbf16, #tpu.memory_space<vmem>>, vector<1x1408x10xbf16>
    %159 = vector.shape_cast %158 : vector<1x1408x10xbf16> to vector<1408x10xbf16>
    %cst_142 = arith.constant dense<0.000000e+00> : vector<1x10xf32>
    %160 = tpu.matmul %157, %159, %cst_142 {dimension_numbers = #tpu.dot_dimension_numbers<[1], [0], [0], [1], [0, 0, 1, 1], [], []>} : vector<1x1408xbf16>, vector<1408x10xbf16>, vector<1x10xf32> -> vector<1x10xf32>
    %161 = arith.addf %155, %160 : vector<1x10xf32>
    %162 = vector.extract_strided_slice %118 {offsets = [7, 0], sizes = [1, 1408], strides = [1, 1]} : vector<8x1408xf32> to vector<1x1408xf32>
    %163 = arith.truncf %162 : vector<1x1408xf32> to vector<1x1408xbf16>
    %c7 = arith.constant 7 : index
    %c0_143 = arith.constant 0 : index
    %c0_144 = arith.constant 0 : index
    %164 = vector.load %arg7[%c7, %c0_143, %c0_144] : memref<8x1408x10xbf16, #tpu.memory_space<vmem>>, vector<1x1408x10xbf16>
    %165 = vector.shape_cast %164 : vector<1x1408x10xbf16> to vector<1408x10xbf16>
    %cst_145 = arith.constant dense<0.000000e+00> : vector<1x10xf32>
    %166 = tpu.matmul %163, %165, %cst_145 {dimension_numbers = #tpu.dot_dimension_numbers<[1], [0], [0], [1], [0, 0, 1, 1], [], []>} : vector<1x1408xbf16>, vector<1408x10xbf16>, vector<1x10xf32> -> vector<1x10xf32>
    %167 = arith.addf %161, %166 : vector<1x10xf32>
    %c0_146 = arith.constant 0 : index
    %c0_147 = arith.constant 0 : index
    %c0_148 = arith.constant 0 : index
    %168 = vector.load %arg9[%c0_146, %c0_147, %c0_148] : memref<1x1x10xf32, #tpu.memory_space<vmem>>, vector<1x1x10xf32>
    %169 = vector.shape_cast %168 : vector<1x1x10xf32> to vector<1x10xf32>
    %170 = vector.shape_cast %167 : vector<1x10xf32> to vector<1x1x10xf32>
    tpu.vector_store %arg9[%c0_146, %c0_147, %c0_148], %170 {strides = array<i32>} : memref<1x1x10xf32, #tpu.memory_space<vmem>>, vector<1x1x10xf32>,
    return
  }
  func.func @transform_0(%arg0: i32) -> (i32, i32, i32) {
    %c0_i32 = arith.constant 0 : i32
    %c0_i32_0 = arith.constant 0 : i32
    %c0_i32_1 = arith.constant 0 : i32
    return %arg0, %c0_i32, %c0_i32_0 : i32, i32, i32
  }
  func.func @transform_1(%arg0: i32) -> (i32, i32) {
    %c0_i32 = arith.constant 0 : i32
    %c0_i32_0 = arith.constant 0 : i32
    %c0_i32_1 = arith.constant 0 : i32
    return %c0_i32, %c0_i32_0 : i32, i32
  }
  func.func @transform_2(%arg0: i32) -> (i32, i32) {
    %c0_i32 = arith.constant 0 : i32
    %c0_i32_0 = arith.constant 0 : i32
    %c0_i32_1 = arith.constant 0 : i32
    return %c0_i32, %c0_i32_0 : i32, i32
  }
  func.func @transform_3(%arg0: i32) -> (i32, i32) {
    %c0_i32 = arith.constant 0 : i32
    %c0_i32_0 = arith.constant 0 : i32
    %c0_i32_1 = arith.constant 0 : i32
    return %c0_i32, %c0_i32_0 : i32, i32
  }
  func.func @transform_4(%arg0: i32) -> (i32, i32) {
    %c0_i32 = arith.constant 0 : i32
    %c0_i32_0 = arith.constant 0 : i32
    %c0_i32_1 = arith.constant 0 : i32
    return %c0_i32, %c0_i32_0 : i32, i32
  }
  func.func @transform_5(%arg0: i32) -> (i32, i32) {
    %c0_i32 = arith.constant 0 : i32
    %c0_i32_0 = arith.constant 0 : i32
    %c0_i32_1 = arith.constant 0 : i32
    return %c0_i32, %c0_i32_0 : i32, i32
  }
  func.func @transform_6(%arg0: i32) -> (i32, i32, i32) {
    %c0_i32 = arith.constant 0 : i32
    %c0_i32_0 = arith.constant 0 : i32
    %c0_i32_1 = arith.constant 0 : i32
    %c0_i32_2 = arith.constant 0 : i32
    return %c0_i32, %c0_i32_0, %c0_i32_1 : i32, i32, i32
  }
  func.func @transform_7(%arg0: i32) -> (i32, i32) {
    %c0_i32 = arith.constant 0 : i32
    %c0_i32_0 = arith.constant 0 : i32
    %c0_i32_1 = arith.constant 0 : i32
    return %c0_i32, %c0_i32_0 : i32, i32
  }
  func.func @transform_8(%arg0: i32) -> (i32, i32, i32) {
    %c0_i32 = arith.constant 0 : i32
    %c0_i32_0 = arith.constant 0 : i32
    %c0_i32_1 = arith.constant 0 : i32
    return %arg0, %c0_i32, %c0_i32_0 : i32, i32, i32
  }
}

</mosaic_0001>

<llo_original>
// kernel: classic_cnn_forward.1
$region0: #{classic_cnn_forward.1}
  #allocation0 [shape = 'u32[]', space=smem, size = 0x4, offset = 0x4, fixed_abs, tag = 'smem constant byte address 0x4 - core index']
  #allocation1 [shape = 'u32[72,128]{1,0:T(1,128)}', space=vmem, size = 0x9000, scoped, tag = 'internal scratch']
  #allocation2 [shape = 'f32[200,1408]{1,0:T(8,128)}', space=vmem, size = 0x113000, scoped, tag = 'scratch operand']
  %s0 = inlined_call_operand.vmem [shape: f32[2,8,1408], index: 0, kind: input, shape index: {}]
  %s1 = inlined_call_operand.vmem [shape: f32[1,1408], index: 1, kind: input, shape index: {}]
  %s2 = inlined_call_operand.vmem [shape: f32[8,200], index: 2, kind: input, shape index: {}]
  %s3 = inlined_call_operand.vmem [shape: f32[8,1], index: 3, kind: input, shape index: {}]
  %s4 = inlined_call_operand.vmem [shape: f32[8,200], index: 4, kind: input, shape index: {}]
  %s5 = inlined_call_operand.vmem [shape: f32[8,1], index: 5, kind: input, shape index: {}]
  %s6 = inlined_call_operand.vmem [shape: bf16[8,1408,10], index: 6, kind: input, shape index: {}]
  %s7 = inlined_call_operand.vmem [shape: f32[1,10], index: 7, kind: input, shape index: {}]
  %s8 = inlined_call_operand.hbm [shape: f32[2,1,10], index: 8, kind: output, shape index: {}]
  %s9 = sld [smem:[#allocation0]]
  $region65: #{classic_cnn_forward.1} parent=0
    _
  %s11 = ssub.s32 1, %s9
  %s12 = scalar_select 0, %s11, %s9
  $region1: #{classic_cnn_forward.1} parent=0
    #allocation3 [shape = 'u8[1024]{0}', space=vmem, size = 0x400, scoped, tag = 'output window, operand 0']
    #allocation4 [shape = 's32[2]{0}', space=sflag, size = 0x8, scoped, tag = 'scoped memory for classic_cnn_forward.1']
    %13 = vsyncpa [#allocation4], 0
    %s14 = scalar_lea.sflag [#allocation4], 1
    %15 = vsyncpa %s14, 0
    loop: start=0, step=1, limit=4
    $region2: #{classic_cnn_forward.1} parent=1 // loop_pre_header
      _
    $region3: #{classic_cnn_forward.1} parent=1 // loop_header
      %s17 = sphi 0, %s21
      %p18 = scmp.ge.s32.totalorder %s17, 4
      %s27 = sphi 0, %s29
      %s30 = sphi 0, %s27
      %s31 = sphi 0, %s30
      %s47 = sphi 0, %s31
      %s51 = sphi 0, %s51
      %s53 = sphi 0, %s51
      %s54 = sphi 0, %s53
      %s68 = sphi 0, %s54
      %s72 = sphi 0, %s72
      %s74 = sphi 0, %s72
      %s75 = sphi 0, %s74
      %s89 = sphi 0, %s75
      %s93 = sphi 0, %s93
      %s95 = sphi 0, %s93
      %s96 = sphi 0, %s95
      %s110 = sphi 0, %s96
      %s114 = sphi 0, %s114
      %s116 = sphi 0, %s114
      %s117 = sphi 0, %s116
      %s131 = sphi 0, %s117
      %s135 = sphi 0, %s135
      %s137 = sphi 0, %s135
      %s138 = sphi 0, %s137
      %s152 = sphi 0, %s138
      %s156 = sphi 0, %s156
      %s158 = sphi 0, %s156
      %s159 = sphi 0, %s158
      %s173 = sphi 0, %s159
      %s177 = sphi 0, %s177
      %s179 = sphi 0, %s177
      %s180 = sphi 0, %s179
      %s194 = sphi 0, %s180
      %s200 = sphi 0, %s202
      %s203 = sphi 0, %s200
      %s204 = sphi 0, %s203
      %s220 = sphi 0, %s204
    $region4: #{classic_cnn_forward.1} parent=1 // loop_header_branch
      %20 = sbr.rel (%p18) target = $region8
    $region5: #{classic_cnn_forward.1} parent=1 // loop_body
      %s22 = ssub.s32 %s17, 1
      %s23 = ssub.s32 %s17, 2
      %s24 = sadd.s32 %s17, 1
      %s25 = ssub.s32 %s17, %s24
      %p26 = scmp.eq.s32.totalorder %s25, 0
      %s28 = sadd.s32 %s27, 1
      %s29 = scalar_select %p26, %s27, %s28
      %p32 = pneg %p26
      %p33 = scmp.eq.s32.totalorder %s17, 1
      %p34 = por %p32, %p33
      %p35 = scmp.ne.s32.totalorder %s27, %s30
      %p36 = scmp.eq.s32.totalorder %s17, 0
      %p37 = por %p35, %p36
      %p38 = scmp.ne.s32.totalorder %s27, %s30
      %p39 = scmp.eq.s32.totalorder %s22, 1
      %p40 = por %p38, %p39
      %p41 = scmp.ne.s32.totalorder %s30, %s31
      %p42 = scmp.eq.s32.totalorder %s22, 0
      %p43 = por %p41, %p42
      %p44 = scmp.ne.s32.totalorder %s30, %s31
      %p45 = scmp.eq.s32.totalorder %s23, 1
      %p46 = por %p44, %p45
      %p48 = scmp.ne.s32.totalorder %s31, %s47
      %p49 = scmp.eq.s32.totalorder %s23, 0
      %p50 = por %p48, %p49
      %s52 = sadd.s32 %s51, 1
      %p55 = scmp.eq.s32.totalorder %s17, 1
      %p56 = scmp.ne.s32.totalorder %s51, %s53
      %p57 = scmp.eq.s32.totalorder %s17, 0
      %p58 = por %p56, %p57
      %p59 = scmp.ne.s32.totalorder %s51, %s53
      %p60 = scmp.eq.s32.totalorder %s22, 1
      %p61 = por %p59, %p60
      %p62 = scmp.ne.s32.totalorder %s53, %s54
      %p63 = scmp.eq.s32.totalorder %s22, 0
      %p64 = por %p62, %p63
      %p65 = scmp.ne.s32.totalorder %s53, %s54
      %p66 = scmp.eq.s32.totalorder %s23, 1
      %p67 = por %p65, %p66
      %p69 = scmp.ne.s32.totalorder %s54, %s68
      %p70 = scmp.eq.s32.totalorder %s23, 0
      %p71 = por %p69, %p70
      %s73 = sadd.s32 %s72, 1
      %p76 = scmp.eq.s32.totalorder %s17, 1
      %p77 = scmp.ne.s32.totalorder %s72, %s74
      %p78 = scmp.eq.s32.totalorder %s17, 0
      %p79 = por %p77, %p78
      %p80 = scmp.ne.s32.totalorder %s72, %s74
      %p81 = scmp.eq.s32.totalorder %s22, 1
      %p82 = por %p80, %p81
      %p83 = scmp.ne.s32.totalorder %s74, %s75
      %p84 = scmp.eq.s32.totalorder %s22, 0
      %p85 = por %p83, %p84
      %p86 = scmp.ne.s32.totalorder %s74, %s75
      %p87 = scmp.eq.s32.totalorder %s23, 1
      %p88 = por %p86, %p87
      %p90 = scmp.ne.s32.totalorder %s75, %s89
      %p91 = scmp.eq.s32.totalorder %s23, 0
      %p92 = por %p90, %p91
      %s94 = sadd.s32 %s93, 1
      %p97 = scmp.eq.s32.totalorder %s17, 1
      %p98 = scmp.ne.s32.totalorder %s93, %s95
      %p99 = scmp.eq.s32.totalorder %s17, 0
      %p100 = por %p98, %p99
      %p101 = scmp.ne.s32.totalorder %s93, %s95
      %p102 = scmp.eq.s32.totalorder %s22, 1
      %p103 = por %p101, %p102
      %p104 = scmp.ne.s32.totalorder %s95, %s96
      %p105 = scmp.eq.s32.totalorder %s22, 0
      %p106 = por %p104, %p105
      %p107 = scmp.ne.s32.totalorder %s95, %s96
      %p108 = scmp.eq.s32.totalorder %s23, 1
      %p109 = por %p107, %p108
      %p111 = scmp.ne.s32.totalorder %s96, %s110
      %p112 = scmp.eq.s32.totalorder %s23, 0
      %p113 = por %p111, %p112
      %s115 = sadd.s32 %s114, 1
      %p118 = scmp.eq.s32.totalorder %s17, 1
      %p119 = scmp.ne.s32.totalorder %s114, %s116
      %p120 = scmp.eq.s32.totalorder %s17, 0
      %p121 = por %p119, %p120
      %p122 = scmp.ne.s32.totalorder %s114, %s116
      %p123 = scmp.eq.s32.totalorder %s22, 1
      %p124 = por %p122, %p123
      %p125 = scmp.ne.s32.totalorder %s116, %s117
      %p126 = scmp.eq.s32.totalorder %s22, 0
      %p127 = por %p125, %p126
      %p128 = scmp.ne.s32.totalorder %s116, %s117
      %p129 = scmp.eq.s32.totalorder %s23, 1
      %p130 = por %p128, %p129
      %p132 = scmp.ne.s32.totalorder %s117, %s131
      %p133 = scmp.eq.s32.totalorder %s23, 0
      %p134 = por %p132, %p133
      %s136 = sadd.s32 %s135, 1
      %p139 = scmp.eq.s32.totalorder %s17, 1
      %p140 = scmp.ne.s32.totalorder %s135, %s137
      %p141 = scmp.eq.s32.totalorder %s17, 0
      %p142 = por %p140, %p141
      %p143 = scmp.ne.s32.totalorder %s135, %s137
      %p144 = scmp.eq.s32.totalorder %s22, 1
      %p145 = por %p143, %p144
      %p146 = scmp.ne.s32.totalorder %s137, %s138
      %p147 = scmp.eq.s32.totalorder %s22, 0
      %p148 = por %p146, %p147
      %p149 = scmp.ne.s32.totalorder %s137, %s138
      %p150 = scmp.eq.s32.totalorder %s23, 1
      %p151 = por %p149, %p150
      %p153 = scmp.ne.s32.totalorder %s138, %s152
      %p154 = scmp.eq.s32.totalorder %s23, 0
      %p155 = por %p153, %p154
      %s157 = sadd.s32 %s156, 1
      %p160 = scmp.eq.s32.totalorder %s17, 1
      %p161 = scmp.ne.s32.totalorder %s156, %s158
      %p162 = scmp.eq.s32.totalorder %s17, 0
      %p163 = por %p161, %p162
      %p164 = scmp.ne.s32.totalorder %s156, %s158
      %p165 = scmp.eq.s32.totalorder %s22, 1
      %p166 = por %p164, %p165
      %p167 = scmp.ne.s32.totalorder %s158, %s159
      %p168 = scmp.eq.s32.totalorder %s22, 0
      %p169 = por %p167, %p168
      %p170 = scmp.ne.s32.totalorder %s158, %s159
      %p171 = scmp.eq.s32.totalorder %s23, 1
      %p172 = por %p170, %p171
      %p174 = scmp.ne.s32.totalorder %s159, %s173
      %p175 = scmp.eq.s32.totalorder %s23, 0
      %p176 = por %p174, %p175
      %s178 = sadd.s32 %s177, 1
      %p181 = scmp.eq.s32.totalorder %s17, 1
      %p182 = scmp.ne.s32.totalorder %s177, %s179
      %p183 = scmp.eq.s32.totalorder %s17, 0
      %p184 = por %p182, %p183
      %p185 = scmp.ne.s32.totalorder %s177, %s179
      %p186 = scmp.eq.s32.totalorder %s22, 1
      %p187 = por %p185, %p186
      %p188 = scmp.ne.s32.totalorder %s179, %s180
      %p189 = scmp.eq.s32.totalorder %s22, 0
      %p190 = por %p188, %p189
      %p191 = scmp.ne.s32.totalorder %s179, %s180
      %p192 = scmp.eq.s32.totalorder %s23, 1
      %p193 = por %p191, %p192
      %p195 = scmp.ne.s32.totalorder %s180, %s194
      %p196 = scmp.eq.s32.totalorder %s23, 0
      %p197 = por %p195, %p196
      %s198 = ssub.s32 %s17, %s24
      %p199 = scmp.eq.s32.totalorder %s198, 0
      %s201 = sadd.s32 %s200, 1
      %s202 = scalar_select %p199, %s200, %s201
      %p205 = pneg %p199
      %p206 = scmp.eq.s32.totalorder %s17, 1
      %p207 = por %p205, %p206
      %p208 = scmp.ne.s32.totalorder %s200, %s203
      %p209 = scmp.eq.s32.totalorder %s17, 0
      %p210 = por %p208, %p209
      %p211 = scmp.ne.s32.totalorder %s200, %s203
      %p212 = scmp.eq.s32.totalorder %s22, 1
      %p213 = por %p211, %p212
      %p214 = scmp.ne.s32.totalorder %s203, %s204
      %p215 = scmp.eq.s32.totalorder %s22, 0
      %p216 = por %p214, %p215
      %p217 = scmp.ne.s32.totalorder %s203, %s204
      %p218 = scmp.eq.s32.totalorder %s23, 1
      %p219 = por %p217, %p218
      %p221 = scmp.ne.s32.totalorder %s204, %s220
      %p222 = scmp.eq.s32.totalorder %s23, 0
      %p223 = por %p221, %p222
      %p224 = scmp.le.s32.totalorder 1, %s17
      %p225 = scmp.lt.s32.totalorder %s17, 3
      %p226 = pnand %p224, %p225
      %p227 = pneg %p226
      // Predicated region
      $region9: #{classic_cnn_forward.1} parent=5 // pred_check
        _
      $region10: #{classic_cnn_forward.1} parent=5 // pred_check_branch
        %229 = sbr.rel (%p226) target = $region12
      $region11: #{classic_cnn_forward.1} parent=5 // pred_region
        %s230 = ssub.s32 %s17, 1
        // Predicated region
        $region13: #{classic_cnn_forward.1} parent=11 // pred_check
          %p231 = pneg %p64
        $region14: #{classic_cnn_forward.1} parent=11 // pred_check_branch
          %233 = sbr.rel (%p231) target = $region16
        $region15: #{classic_cnn_forward.1} parent=11 // pred_region
          _
        $region16: #{classic_cnn_forward.1} parent=11 // pred_fallthru
          _
        // Predicated region
        $region17: #{classic_cnn_forward.1} parent=11 // pred_check
          %p234 = pneg %p85
        $region18: #{classic_cnn_forward.1} parent=11 // pred_check_branch
          %236 = sbr.rel (%p234) target = $region20
        $region19: #{classic_cnn_forward.1} parent=11 // pred_region
          _
        $region20: #{classic_cnn_forward.1} parent=11 // pred_fallthru
          _
        // Predicated region
        $region21: #{classic_cnn_forward.1} parent=11 // pred_check
          %p237 = pneg %p106
        $region22: #{classic_cnn_forward.1} parent=11 // pred_check_branch
          %239 = sbr.rel (%p237) target = $region24
        $region23: #{classic_cnn_forward.1} parent=11 // pred_region
          _
        $region24: #{classic_cnn_forward.1} parent=11 // pred_fallthru
          _
        // Predicated region
        $region25: #{classic_cnn_forward.1} parent=11 // pred_check
          %p240 = pneg %p127
        $region26: #{classic_cnn_forward.1} parent=11 // pred_check_branch
          %242 = sbr.rel (%p240) target = $region28
        $region27: #{classic_cnn_forward.1} parent=11 // pred_region
          _
        $region28: #{classic_cnn_forward.1} parent=11 // pred_fallthru
          _
        // Predicated region
        $region29: #{classic_cnn_forward.1} parent=11 // pred_check
          %p243 = pneg %p148
        $region30: #{classic_cnn_forward.1} parent=11 // pred_check_branch
          %245 = sbr.rel (%p243) target = $region32
        $region31: #{classic_cnn_forward.1} parent=11 // pred_region
          _
        $region32: #{classic_cnn_forward.1} parent=11 // pred_fallthru
          _
        // Predicated region
        $region33: #{classic_cnn_forward.1} parent=11 // pred_check
          %p246 = pneg %p169
        $region34: #{classic_cnn_forward.1} parent=11 // pred_check_branch
          %248 = sbr.rel (%p246) target = $region36
        $region35: #{classic_cnn_forward.1} parent=11 // pred_region
          _
        $region36: #{classic_cnn_forward.1} parent=11 // pred_fallthru
          _
        // Predicated region
        $region37: #{classic_cnn_forward.1} parent=11 // pred_check
          %p249 = pneg %p190
        $region38: #{classic_cnn_forward.1} parent=11 // pred_check_branch
          %251 = sbr.rel (%p249) target = $region40
        $region39: #{classic_cnn_forward.1} parent=11 // pred_region
          _
        $region40: #{classic_cnn_forward.1} parent=11 // pred_fallthru
          _
      $region12: #{classic_cnn_forward.1} parent=5 // pred_fallthru
        _
      %p252 = scmp.lt.s32.totalorder %s17, 2
      // Predicated region
      $region41: #{classic_cnn_forward.1} parent=5 // pred_check
        %p253 = pneg %p252
      $region42: #{classic_cnn_forward.1} parent=5 // pred_check_branch
        %255 = sbr.rel (%p253) target = $region44
      $region43: #{classic_cnn_forward.1} parent=5 // pred_region
        // Predicated region
        $region45: #{classic_cnn_forward.1} parent=43 // pred_check
          %p256 = pneg %p37
        $region46: #{classic_cnn_forward.1} parent=43 // pred_check_branch
          %258 = sbr.rel (%p256) target = $region48
        $region47: #{classic_cnn_forward.1} parent=43 // pred_region
          %p259 = scmp.lt.s32.totalorder %s17, 1
          %s260 = scalar_select %p259, %s17, 1
          %s261 = smul.addr %s260, 11
          %s262 = smul.addr %s261, 8
          %s263 = scalar_lea.vmem %s0, %s262
        $region48: #{classic_cnn_forward.1} parent=43 // pred_fallthru
          _
      $region44: #{classic_cnn_forward.1} parent=5 // pred_fallthru
        _
      %p264 = scmp.le.s32.totalorder 1, %s17
      %p265 = scmp.lt.s32.totalorder %s17, 3
      %p266 = pnand %p264, %p265
      %p267 = pneg %p266
      // Predicated region
      $region49: #{classic_cnn_forward.1} parent=5 // pred_check
        _
      $region50: #{classic_cnn_forward.1} parent=5 // pred_check_branch
        %269 = sbr.rel (%p266) target = $region52
      $region51: #{classic_cnn_forward.1} parent=5 // pred_region
        %s270 = ssub.s32 %s17, 1
        %p271 = scmp.lt.s32.totalorder %s22, 1
        %s272 = scalar_select %p271, %s22, 1
        %s273 = smul.addr %s272, 11
        %s274 = smul.addr %s273, 8
        %s275 = scalar_lea.vmem %s0, %s274
        %p276 = pneg %p43
        %p277 = pneg %p40
        %p278 = pneg %p64
        %p279 = pneg %p61
        %p280 = pneg %p85
        %p281 = pneg %p82
        %p282 = pneg %p106
        %p283 = pneg %p103
        %p284 = pneg %p127
        %p285 = pneg %p124
        %p286 = pneg %p148
        %p287 = pneg %p145
        %p288 = pneg %p169
        %p289 = pneg %p166
        %p290 = pneg %p190
        %p291 = pneg %p187
        %p292 = pneg %p216
        %p293 = pneg %p213
        %s294 = sand.u32 %s203, 1
        %s295 = scalar_lea.sflag [#allocation4], %s294
        %s296 = sand.u32 %s203, 1
        %s297 = scalar_lea.vmem [#allocation3], %s296
        %p298 = scmp.lt.s32.totalorder %s22, 1
        %s299 = scalar_select %p298, %s22, 1
        %s300 = smul.addr %s299, 11
        %s301 = smul.addr %s300, 8
        %s302 = scalar_lea.vmem %s0, %s301
        %v303 = vld [vmem:[%s302] sm:$0xff]
        %v304 = vld [vmem:[%s302 + $0x8] sm:$0xff]
        %v305 = vld [vmem:[%s302 + $0x10] sm:$0xff]
        %v306 = vld [vmem:[%s302 + $0x18] sm:$0xff]
        %v307 = vld [vmem:[%s302 + $0x20] sm:$0xff]
        %v308 = vld [vmem:[%s302 + $0x28] sm:$0xff]
        %v309 = vld [vmem:[%s302 + $0x30] sm:$0xff]
        %v310 = vld [vmem:[%s302 + $0x38] sm:$0xff]
        %v311 = vld [vmem:[%s302 + $0x40] sm:$0xff]
        %v312 = vld [vmem:[%s302 + $0x48] sm:$0xff]
        %v313 = vld [vmem:[%s302 + $0x50] sm:$0xff]
        %314 = vrot.lane.b32.xlu0 %v303, 74
        %v315 = vpop.permute.xlu0 %314
        %316 = vrot.lane.b32.xlu0 %v304, 74
        %v317 = vpop.permute.xlu0 %316
        %318 = vrot.lane.b32.xlu0 %v305, 74
        %v319 = vpop.permute.xlu0 %318
        %320 = vrot.lane.b32.xlu0 %v306, 74
        %v321 = vpop.permute.xlu0 %320
        %322 = vrot.lane.b32.xlu0 %v307, 74
        %v323 = vpop.permute.xlu0 %322
        %324 = vrot.lane.b32.xlu0 %v308, 74
        %v325 = vpop.permute.xlu0 %324
        %326 = vrot.lane.b32.xlu0 %v309, 74
        %v327 = vpop.permute.xlu0 %326
        %328 = vrot.lane.b32.xlu0 %v310, 74
        %v329 = vpop.permute.xlu0 %328
        %330 = vrot.lane.b32.xlu0 %v311, 74
        %v331 = vpop.permute.xlu0 %330
        %332 = vrot.lane.b32.xlu0 %v312, 74
        %v333 = vpop.permute.xlu0 %332
        %334 = vrot.lane.b32.xlu0 %v313, 74
        %v335 = vpop.permute.xlu0 %334
        %v336 = vlaneseq
        %v337 = vand.u32 %v336, 127
        %vm338 = vcmp.lt.s32.totalorder %v337, 74
        %v339 = vsel %vm338, %v333, %v335
        %v340 = vsel %vm338, %v331, %v333
        %v341 = vsel %vm338, %v329, %v331
        %v342 = vsel %vm338, %v327, %v329
        %v343 = vsel %vm338, %v325, %v327
        %v344 = vsel %vm338, %v323, %v325
        %v345 = vsel %vm338, %v321, %v323
        %v346 = vsel %vm338, %v319, %v321
        %v347 = vsel %vm338, %v317, %v319
        %v348 = vsel %vm338, %v315, %v317
        %v349 = vsel %vm338, %v335, %v315
        %350 = vst [vmem:[#allocation2] sm:$0xff] %v349
        %351 = vst [vmem:[#allocation2 + $0x8] sm:$0xff] %v348
        %352 = vst [vmem:[#allocation2 + $0x10] sm:$0xff] %v347
        %353 = vst [vmem:[#allocation2 + $0x18] sm:$0xff] %v346
        %354 = vst [vmem:[#allocation2 + $0x20] sm:$0xff] %v345
        %355 = vst [vmem:[#allocation2 + $0x28] sm:$0xff] %v344
        %356 = vst [vmem:[#allocation2 + $0x30] sm:$0xff] %v343
        %357 = vst [vmem:[#allocation2 + $0x38] sm:$0xff] %v342
        %358 = vst [vmem:[#allocation2 + $0x40] sm:$0xff] %v341
        %359 = vst [vmem:[#allocation2 + $0x48] sm:$0xff] %v340
        %360 = vst [vmem:[#allocation2 + $0x50] sm:$0xff] %v339
        %361 = vrot.lane.b32.xlu0 %v303, 73
        %v362 = vpop.permute.xlu0 %361
        %363 = vrot.lane.b32.xlu0 %v304, 73
        %v364 = vpop.permute.xlu0 %363
        %365 = vrot.lane.b32.xlu0 %v305, 73
        %v366 = vpop.permute.xlu0 %365
        %367 = vrot.lane.b32.xlu0 %v306, 73
        %v368 = vpop.permute.xlu0 %367
        %369 = vrot.lane.b32.xlu0 %v307, 73
        %v370 = vpop.permute.xlu0 %369
        %371 = vrot.lane.b32.xlu0 %v308, 73
        %v372 = vpop.permute.xlu0 %371
        %373 = vrot.lane.b32.xlu0 %v309, 73
        %v374 = vpop.permute.xlu0 %373
        %375 = vrot.lane.b32.xlu0 %v310, 73
        %v376 = vpop.permute.xlu0 %375
        %377 = vrot.lane.b32.xlu0 %v311, 73
        %v378 = vpop.permute.xlu0 %377
        %379 = vrot.lane.b32.xlu0 %v312, 73
        %v380 = vpop.permute.xlu0 %379
        %381 = vrot.lane.b32.xlu0 %v313, 73
        %v382 = vpop.permute.xlu0 %381
        %vm383 = vcmp.lt.s32.totalorder %v337, 73
        %v384 = vsel %vm383, %v380, %v382
        %v385 = vsel %vm383, %v378, %v380
        %v386 = vsel %vm383, %v376, %v378
        %v387 = vsel %vm383, %v374, %v376
        %v388 = vsel %vm383, %v372, %v374
        %v389 = vsel %vm383, %v370, %v372
        %v390 = vsel %vm383, %v368, %v370
        %v391 = vsel %vm383, %v366, %v368
        %v392 = vsel %vm383, %v364, %v366
        %v393 = vsel %vm383, %v362, %v364
        %v394 = vsel %vm383, %v382, %v362
        %395 = vst [vmem:[#allocation2 + $0x58] sm:$0xff] %v394
        %396 = vst [vmem:[#allocation2 + $0x60] sm:$0xff] %v393
        %397 = vst [vmem:[#allocation2 + $0x68] sm:$0xff] %v392
        %398 = vst [vmem:[#allocation2 + $0x70] sm:$0xff] %v391
        %399 = vst [vmem:[#allocation2 + $0x78] sm:$0xff] %v390
        %400 = vst [vmem:[#allocation2 + $0x80] sm:$0xff] %v389
        %401 = vst [vmem:[#allocation2 + $0x88] sm:$0xff] %v388
        %402 = vst [vmem:[#allocation2 + $0x90] sm:$0xff] %v387
        %403 = vst [vmem:[#allocation2 + $0x98] sm:$0xff] %v386
        %404 = vst [vmem:[#allocation2 + $0xa0] sm:$0xff] %v385
        %405 = vst [vmem:[#allocation2 + $0xa8] sm:$0xff] %v384
        %406 = vrot.lane.b32.xlu0 %v303, 72
        %v407 = vpop.permute.xlu0 %406
        %408 = vrot.lane.b32.xlu0 %v304, 72
        %v409 = vpop.permute.xlu0 %408
        %410 = vrot.lane.b32.xlu0 %v305, 72
        %v411 = vpop.permute.xlu0 %410
        %412 = vrot.lane.b32.xlu0 %v306, 72
        %v413 = vpop.permute.xlu0 %412
        %414 = vrot.lane.b32.xlu0 %v307, 72
        %v415 = vpop.permute.xlu0 %414
        %416 = vrot.lane.b32.xlu0 %v308, 72
        %v417 = vpop.permute.xlu0 %416
        %418 = vrot.lane.b32.xlu0 %v309, 72
        %v419 = vpop.permute.xlu0 %418
        %420 = vrot.lane.b32.xlu0 %v310, 72
        %v421 = vpop.permute.xlu0 %420
        %422 = vrot.lane.b32.xlu0 %v311, 72
        %v423 = vpop.permute.xlu0 %422
        %424 = vrot.lane.b32.xlu0 %v312, 72
        %v425 = vpop.permute.xlu0 %424
        %426 = vrot.lane.b32.xlu0 %v313, 72
        %v427 = vpop.permute.xlu0 %426
        %vm428 = vcmp.lt.s32.totalorder %v337, 72
        %v429 = vsel %vm428, %v425, %v427
        %v430 = vsel %vm428, %v423, %v425
        %v431 = vsel %vm428, %v421, %v423
        %v432 = vsel %vm428, %v419, %v421
        %v433 = vsel %vm428, %v417, %v419
        %v434 = vsel %vm428, %v415, %v417
        %v435 = vsel %vm428, %v413, %v415
        %v436 = vsel %vm428, %v411, %v413
        %v437 = vsel %vm428, %v409, %v411
        %v438 = vsel %vm428, %v407, %v409
        %v439 = vsel %vm428, %v427, %v407
        %440 = vst [vmem:[#allocation2 + $0xb0] sm:$0xff] %v439
        %441 = vst [vmem:[#allocation2 + $0xb8] sm:$0xff] %v438
        %442 = vst [vmem:[#allocation2 + $0xc0] sm:$0xff] %v437
        %443 = vst [vmem:[#allocation2 + $0xc8] sm:$0xff] %v436
        %444 = vst [vmem:[#allocation2 + $0xd0] sm:$0xff] %v435
        %445 = vst [vmem:[#allocation2 + $0xd8] sm:$0xff] %v434
        %446 = vst [vmem:[#allocation2 + $0xe0] sm:$0xff] %v433
        %447 = vst [vmem:[#allocation2 + $0xe8] sm:$0xff] %v432
        %448 = vst [vmem:[#allocation2 + $0xf0] sm:$0xff] %v431
        %449 = vst [vmem:[#allocation2 + $0xf8] sm:$0xff] %v430
        %450 = vst [vmem:[#allocation2 + $0x100] sm:$0xff] %v429
        %451 = vrot.lane.b32.xlu0 %v303, 71
        %v452 = vpop.permute.xlu0 %451
        %453 = vrot.lane.b32.xlu0 %v304, 71
        %v454 = vpop.permute.xlu0 %453
        %455 = vrot.lane.b32.xlu0 %v305, 71
        %v456 = vpop.permute.xlu0 %455
        %457 = vrot.lane.b32.xlu0 %v306, 71
        %v458 = vpop.permute.xlu0 %457
        %459 = vrot.lane.b32.xlu0 %v307, 71
        %v460 = vpop.permute.xlu0 %459
        %461 = vrot.lane.b32.xlu0 %v308, 71
        %v462 = vpop.permute.xlu0 %461
        %463 = vrot.lane.b32.xlu0 %v309, 71
        %v464 = vpop.permute.xlu0 %463
        %465 = vrot.lane.b32.xlu0 %v310, 71
        %v466 = vpop.permute.xlu0 %465
        %467 = vrot.lane.b32.xlu0 %v311, 71
        %v468 = vpop.permute.xlu0 %467
        %469 = vrot.lane.b32.xlu0 %v312, 71
        %v470 = vpop.permute.xlu0 %469
        %471 = vrot.lane.b32.xlu0 %v313, 71
        %v472 = vpop.permute.xlu0 %471
        %vm473 = vcmp.lt.s32.totalorder %v337, 71
        %v474 = vsel %vm473, %v470, %v472
        %v475 = vsel %vm473, %v468, %v470
        %v476 = vsel %vm473, %v466, %v468
        %v477 = vsel %vm473, %v464, %v466
        %v478 = vsel %vm473, %v462, %v464
        %v479 = vsel %vm473, %v460, %v462
        %v480 = vsel %vm473, %v458, %v460
        %v481 = vsel %vm473, %v456, %v458
        %v482 = vsel %vm473, %v454, %v456
        %v483 = vsel %vm473, %v452, %v454
        %v484 = vsel %vm473, %v472, %v452
        %485 = vst [vmem:[#allocation2 + $0x108] sm:$0xff] %v484
        %486 = vst [vmem:[#allocation2 + $0x110] sm:$0xff] %v483
        %487 = vst [vmem:[#allocation2 + $0x118] sm:$0xff] %v482
        %488 = vst [vmem:[#allocation2 + $0x120] sm:$0xff] %v481
        %489 = vst [vmem:[#allocation2 + $0x128] sm:$0xff] %v480
        %490 = vst [vmem:[#allocation2 + $0x130] sm:$0xff] %v479
        %491 = vst [vmem:[#allocation2 + $0x138] sm:$0xff] %v478
        %492 = vst [vmem:[#allocation2 + $0x140] sm:$0xff] %v477
        %493 = vst [vmem:[#allocation2 + $0x148] sm:$0xff] %v476
        %494 = vst [vmem:[#allocation2 + $0x150] sm:$0xff] %v475
        %495 = vst [vmem:[#allocation2 + $0x158] sm:$0xff] %v474
        %496 = vrot.lane.b32.xlu0 %v303, 70
        %v497 = vpop.permute.xlu0 %496
        %498 = vrot.lane.b32.xlu0 %v304, 70
        %v499 = vpop.permute.xlu0 %498
        %500 = vrot.lane.b32.xlu0 %v305, 70
        %v501 = vpop.permute.xlu0 %500
        %502 = vrot.lane.b32.xlu0 %v306, 70
        %v503 = vpop.permute.xlu0 %502
        %504 = vrot.lane.b32.xlu0 %v307, 70
        %v505 = vpop.permute.xlu0 %504
        %506 = vrot.lane.b32.xlu0 %v308, 70
        %v507 = vpop.permute.xlu0 %506
        %508 = vrot.lane.b32.xlu0 %v309, 70
        %v509 = vpop.permute.xlu0 %508
        %510 = vrot.lane.b32.xlu0 %v310, 70
        %v511 = vpop.permute.xlu0 %510
        %512 = vrot.lane.b32.xlu0 %v311, 70
        %v513 = vpop.permute.xlu0 %512
        %514 = vrot.lane.b32.xlu0 %v312, 70
        %v515 = vpop.permute.xlu0 %514
        %516 = vrot.lane.b32.xlu0 %v313, 70
        %v517 = vpop.permute.xlu0 %516
        %vm518 = vcmp.lt.s32.totalorder %v337, 70
        %v519 = vsel %vm518, %v515, %v517
        %v520 = vsel %vm518, %v513, %v515
        %v521 = vsel %vm518, %v511, %v513
        %v522 = vsel %vm518, %v509, %v511
        %v523 = vsel %vm518, %v507, %v509
        %v524 = vsel %vm518, %v505, %v507
        %v525 = vsel %vm518, %v503, %v505
        %v526 = vsel %vm518, %v501, %v503
        %v527 = vsel %vm518, %v499, %v501
        %v528 = vsel %vm518, %v497, %v499
        %v529 = vsel %vm518, %v517, %v497
        %530 = vst [vmem:[#allocation2 + $0x160] sm:$0xff] %v529
        %531 = vst [vmem:[#allocation2 + $0x168] sm:$0xff] %v528
        %532 = vst [vmem:[#allocation2 + $0x170] sm:$0xff] %v527
        %533 = vst [vmem:[#allocation2 + $0x178] sm:$0xff] %v526
        %534 = vst [vmem:[#allocation2 + $0x180] sm:$0xff] %v525
        %535 = vst [vmem:[#allocation2 + $0x188] sm:$0xff] %v524
        %536 = vst [vmem:[#allocation2 + $0x190] sm:$0xff] %v523
        %537 = vst [vmem:[#allocation2 + $0x198] sm:$0xff] %v522
        %538 = vst [vmem:[#allocation2 + $0x1a0] sm:$0xff] %v521
        %539 = vst [vmem:[#allocation2 + $0x1a8] sm:$0xff] %v520
        %540 = vst [vmem:[#allocation2 + $0x1b0] sm:$0xff] %v519
        %541 = vrot.lane.b32.xlu0 %v303, 38
        %v542 = vpop.permute.xlu0 %541
        %543 = vrot.lane.b32.xlu0 %v304, 38
        %v544 = vpop.permute.xlu0 %543
        %545 = vrot.lane.b32.xlu0 %v305, 38
        %v546 = vpop.permute.xlu0 %545
        %547 = vrot.lane.b32.xlu0 %v306, 38
        %v548 = vpop.permute.xlu0 %547
        %549 = vrot.lane.b32.xlu0 %v307, 38
        %v550 = vpop.permute.xlu0 %549
        %551 = vrot.lane.b32.xlu0 %v308, 38
        %v552 = vpop.permute.xlu0 %551
        %553 = vrot.lane.b32.xlu0 %v309, 38
        %v554 = vpop.permute.xlu0 %553
        %555 = vrot.lane.b32.xlu0 %v310, 38
        %v556 = vpop.permute.xlu0 %555
        %557 = vrot.lane.b32.xlu0 %v311, 38
        %v558 = vpop.permute.xlu0 %557
        %559 = vrot.lane.b32.xlu0 %v312, 38
        %v560 = vpop.permute.xlu0 %559
        %561 = vrot.lane.b32.xlu0 %v313, 38
        %v562 = vpop.permute.xlu0 %561
        %vm563 = vcmp.lt.s32.totalorder %v337, 38
        %v564 = vsel %vm563, %v560, %v562
        %v565 = vsel %vm563, %v558, %v560
        %v566 = vsel %vm563, %v556, %v558
        %v567 = vsel %vm563, %v554, %v556
        %v568 = vsel %vm563, %v552, %v554
        %v569 = vsel %vm563, %v550, %v552
        %v570 = vsel %vm563, %v548, %v550
        %v571 = vsel %vm563, %v546, %v548
        %v572 = vsel %vm563, %v544, %v546
        %v573 = vsel %vm563, %v542, %v544
        %v574 = vsel %vm563, %v562, %v542
        %575 = vst [vmem:[#allocation2 + $0x1b8] sm:$0xff] %v574
        %576 = vst [vmem:[#allocation2 + $0x1c0] sm:$0xff] %v573
        %577 = vst [vmem:[#allocation2 + $0x1c8] sm:$0xff] %v572
        %578 = vst [vmem:[#allocation2 + $0x1d0] sm:$0xff] %v571
        %579 = vst [vmem:[#allocation2 + $0x1d8] sm:$0xff] %v570
        %580 = vst [vmem:[#allocation2 + $0x1e0] sm:$0xff] %v569
        %581 = vst [vmem:[#allocation2 + $0x1e8] sm:$0xff] %v568
        %582 = vst [vmem:[#allocation2 + $0x1f0] sm:$0xff] %v567
        %583 = vst [vmem:[#allocation2 + $0x1f8] sm:$0xff] %v566
        %584 = vst [vmem:[#allocation2 + $0x200] sm:$0xff] %v565
        %585 = vst [vmem:[#allocation2 + $0x208] sm:$0xff] %v564
        %586 = vrot.lane.b32.xlu0 %v303, 37
        %v587 = vpop.permute.xlu0 %586
        %588 = vrot.lane.b32.xlu0 %v304, 37
        %v589 = vpop.permute.xlu0 %588
        %590 = vrot.lane.b32.xlu0 %v305, 37
        %v591 = vpop.permute.xlu0 %590
        %592 = vrot.lane.b32.xlu0 %v306, 37
        %v593 = vpop.permute.xlu0 %592
        %594 = vrot.lane.b32.xlu0 %v307, 37
        %v595 = vpop.permute.xlu0 %594
        %596 = vrot.lane.b32.xlu0 %v308, 37
        %v597 = vpop.permute.xlu0 %596
        %598 = vrot.lane.b32.xlu0 %v309, 37
        %v599 = vpop.permute.xlu0 %598
        %600 = vrot.lane.b32.xlu0 %v310, 37
        %v601 = vpop.permute.xlu0 %600
        %602 = vrot.lane.b32.xlu0 %v311, 37
        %v603 = vpop.permute.xlu0 %602
        %604 = vrot.lane.b32.xlu0 %v312, 37
        %v605 = vpop.permute.xlu0 %604
        %606 = vrot.lane.b32.xlu0 %v313, 37
        %v607 = vpop.permute.xlu0 %606
        %vm608 = vcmp.lt.s32.totalorder %v337, 37
        %v609 = vsel %vm608, %v605, %v607
        %v610 = vsel %vm608, %v603, %v605
        %v611 = vsel %vm608, %v601, %v603
        %v612 = vsel %vm608, %v599, %v601
        %v613 = vsel %vm608, %v597, %v599
        %v614 = vsel %vm608, %v595, %v597
        %v615 = vsel %vm608, %v593, %v595
        %v616 = vsel %vm608, %v591, %v593
        %v617 = vsel %vm608, %v589, %v591
        %v618 = vsel %vm608, %v587, %v589
        %v619 = vsel %vm608, %v607, %v587
        %620 = vst [vmem:[#allocation2 + $0x210] sm:$0xff] %v619
        %621 = vst [vmem:[#allocation2 + $0x218] sm:$0xff] %v618
        %622 = vst [vmem:[#allocation2 + $0x220] sm:$0xff] %v617
        %623 = vst [vmem:[#allocation2 + $0x228] sm:$0xff] %v616
        %624 = vst [vmem:[#allocation2 + $0x230] sm:$0xff] %v615
        %625 = vst [vmem:[#allocation2 + $0x238] sm:$0xff] %v614
        %626 = vst [vmem:[#allocation2 + $0x240] sm:$0xff] %v613
        %627 = vst [vmem:[#allocation2 + $0x248] sm:$0xff] %v612
        %628 = vst [vmem:[#allocation2 + $0x250] sm:$0xff] %v611
        %629 = vst [vmem:[#allocation2 + $0x258] sm:$0xff] %v610
        %630 = vst [vmem:[#allocation2 + $0x260] sm:$0xff] %v609
        %631 = vrot.lane.b32.xlu0 %v303, 36
        %v632 = vpop.permute.xlu0 %631
        %633 = vrot.lane.b32.xlu0 %v304, 36
        %v634 = vpop.permute.xlu0 %633
        %635 = vrot.lane.b32.xlu0 %v305, 36
        %v636 = vpop.permute.xlu0 %635
        %637 = vrot.lane.b32.xlu0 %v306, 36
        %v638 = vpop.permute.xlu0 %637
        %639 = vrot.lane.b32.xlu0 %v307, 36
        %v640 = vpop.permute.xlu0 %639
        %641 = vrot.lane.b32.xlu0 %v308, 36
        %v642 = vpop.permute.xlu0 %641
        %643 = vrot.lane.b32.xlu0 %v309, 36
        %v644 = vpop.permute.xlu0 %643
        %645 = vrot.lane.b32.xlu0 %v310, 36
        %v646 = vpop.permute.xlu0 %645
        %647 = vrot.lane.b32.xlu0 %v311, 36
        %v648 = vpop.permute.xlu0 %647
        %649 = vrot.lane.b32.xlu0 %v312, 36
        %v650 = vpop.permute.xlu0 %649
        %651 = vrot.lane.b32.xlu0 %v313, 36
        %v652 = vpop.permute.xlu0 %651
        %vm653 = vcmp.lt.s32.totalorder %v337, 36
        %v654 = vsel %vm653, %v650, %v652
        %v655 = vsel %vm653, %v648, %v650
        %v656 = vsel %vm653, %v646, %v648
        %v657 = vsel %vm653, %v644, %v646
        %v658 = vsel %vm653, %v642, %v644
        %v659 = vsel %vm653, %v640, %v642
        %v660 = vsel %vm653, %v638, %v640
        %v661 = vsel %vm653, %v636, %v638
        %v662 = vsel %vm653, %v634, %v636
        %v663 = vsel %vm653, %v632, %v634
        %v664 = vsel %vm653, %v652, %v632
        %665 = vst [vmem:[#allocation2 + $0x268] sm:$0xff] %v664
        %666 = vst [vmem:[#allocation2 + $0x270] sm:$0xff] %v663
        %667 = vst [vmem:[#allocation2 + $0x278] sm:$0xff] %v662
        %668 = vst [vmem:[#allocation2 + $0x280] sm:$0xff] %v661
        %669 = vst [vmem:[#allocation2 + $0x288] sm:$0xff] %v660
        %670 = vst [vmem:[#allocation2 + $0x290] sm:$0xff] %v659
        %671 = vst [vmem:[#allocation2 + $0x298] sm:$0xff] %v658
        %672 = vst [vmem:[#allocation2 + $0x2a0] sm:$0xff] %v657
        %673 = vst [vmem:[#allocation2 + $0x2a8] sm:$0xff] %v656
        %674 = vst [vmem:[#allocation2 + $0x2b0] sm:$0xff] %v655
        %675 = vst [vmem:[#allocation2 + $0x2b8] sm:$0xff] %v654
        %676 = vrot.lane.b32.xlu0 %v303, 35
        %v677 = vpop.permute.xlu0 %676
        %678 = vrot.lane.b32.xlu0 %v304, 35
        %v679 = vpop.permute.xlu0 %678
        %680 = vrot.lane.b32.xlu0 %v305, 35
        %v681 = vpop.permute.xlu0 %680
        %682 = vrot.lane.b32.xlu0 %v306, 35
        %v683 = vpop.permute.xlu0 %682
        %684 = vrot.lane.b32.xlu0 %v307, 35
        %v685 = vpop.permute.xlu0 %684
        %686 = vrot.lane.b32.xlu0 %v308, 35
        %v687 = vpop.permute.xlu0 %686
        %688 = vrot.lane.b32.xlu0 %v309, 35
        %v689 = vpop.permute.xlu0 %688
        %690 = vrot.lane.b32.xlu0 %v310, 35
        %v691 = vpop.permute.xlu0 %690
        %692 = vrot.lane.b32.xlu0 %v311, 35
        %v693 = vpop.permute.xlu0 %692
        %694 = vrot.lane.b32.xlu0 %v312, 35
        %v695 = vpop.permute.xlu0 %694
        %696 = vrot.lane.b32.xlu0 %v313, 35
        %v697 = vpop.permute.xlu0 %696
        %vm698 = vcmp.lt.s32.totalorder %v337, 35
        %v699 = vsel %vm698, %v695, %v697
        %v700 = vsel %vm698, %v693, %v695
        %v701 = vsel %vm698, %v691, %v693
        %v702 = vsel %vm698, %v689, %v691
        %v703 = vsel %vm698, %v687, %v689
        %v704 = vsel %vm698, %v685, %v687
        %v705 = vsel %vm698, %v683, %v685
        %v706 = vsel %vm698, %v681, %v683
        %v707 = vsel %vm698, %v679, %v681
        %v708 = vsel %vm698, %v677, %v679
        %v709 = vsel %vm698, %v697, %v677
        %710 = vst [vmem:[#allocation2 + $0x2c0] sm:$0xff] %v709
        %711 = vst [vmem:[#allocation2 + $0x2c8] sm:$0xff] %v708
        %712 = vst [vmem:[#allocation2 + $0x2d0] sm:$0xff] %v707
        %713 = vst [vmem:[#allocation2 + $0x2d8] sm:$0xff] %v706
        %714 = vst [vmem:[#allocation2 + $0x2e0] sm:$0xff] %v705
        %715 = vst [vmem:[#allocation2 + $0x2e8] sm:$0xff] %v704
        %716 = vst [vmem:[#allocation2 + $0x2f0] sm:$0xff] %v703
        %717 = vst [vmem:[#allocation2 + $0x2f8] sm:$0xff] %v702
        %718 = vst [vmem:[#allocation2 + $0x300] sm:$0xff] %v701
        %719 = vst [vmem:[#allocation2 + $0x308] sm:$0xff] %v700
        %720 = vst [vmem:[#allocation2 + $0x310] sm:$0xff] %v699
        %721 = vrot.lane.b32.xlu0 %v303, 34
        %v722 = vpop.permute.xlu0 %721
        %723 = vrot.lane.b32.xlu0 %v304, 34
        %v724 = vpop.permute.xlu0 %723
        %725 = vrot.lane.b32.xlu0 %v305, 34
        %v726 = vpop.permute.xlu0 %725
        %727 = vrot.lane.b32.xlu0 %v306, 34
        %v728 = vpop.permute.xlu0 %727
        %729 = vrot.lane.b32.xlu0 %v307, 34
        %v730 = vpop.permute.xlu0 %729
        %731 = vrot.lane.b32.xlu0 %v308, 34
        %v732 = vpop.permute.xlu0 %731
        %733 = vrot.lane.b32.xlu0 %v309, 34
        %v734 = vpop.permute.xlu0 %733
        %735 = vrot.lane.b32.xlu0 %v310, 34
        %v736 = vpop.permute.xlu0 %735
        %737 = vrot.lane.b32.xlu0 %v311, 34
        %v738 = vpop.permute.xlu0 %737
        %739 = vrot.lane.b32.xlu0 %v312, 34
        %v740 = vpop.permute.xlu0 %739
        %741 = vrot.lane.b32.xlu0 %v313, 34
        %v742 = vpop.permute.xlu0 %741
        %vm743 = vcmp.lt.s32.totalorder %v337, 34
        %v744 = vsel %vm743, %v740, %v742
        %v745 = vsel %vm743, %v738, %v740
        %v746 = vsel %vm743, %v736, %v738
        %v747 = vsel %vm743, %v734, %v736
        %v748 = vsel %vm743, %v732, %v734
        %v749 = vsel %vm743, %v730, %v732
        %v750 = vsel %vm743, %v728, %v730
        %v751 = vsel %vm743, %v726, %v728
        %v752 = vsel %vm743, %v724, %v726
        %v753 = vsel %vm743, %v722, %v724
        %v754 = vsel %vm743, %v742, %v722
        %755 = vst [vmem:[#allocation2 + $0x318] sm:$0xff] %v754
        %756 = vst [vmem:[#allocation2 + $0x320] sm:$0xff] %v753
        %757 = vst [vmem:[#allocation2 + $0x328] sm:$0xff] %v752
        %758 = vst [vmem:[#allocation2 + $0x330] sm:$0xff] %v751
        %759 = vst [vmem:[#allocation2 + $0x338] sm:$0xff] %v750
        %760 = vst [vmem:[#allocation2 + $0x340] sm:$0xff] %v749
        %761 = vst [vmem:[#allocation2 + $0x348] sm:$0xff] %v748
        %762 = vst [vmem:[#allocation2 + $0x350] sm:$0xff] %v747
        %763 = vst [vmem:[#allocation2 + $0x358] sm:$0xff] %v746
        %764 = vst [vmem:[#allocation2 + $0x360] sm:$0xff] %v745
        %765 = vst [vmem:[#allocation2 + $0x368] sm:$0xff] %v744
        %766 = vrot.lane.b32.xlu0 %v303, 2
        %v767 = vpop.permute.xlu0 %766
        %768 = vrot.lane.b32.xlu0 %v304, 2
        %v769 = vpop.permute.xlu0 %768
        %770 = vrot.lane.b32.xlu0 %v305, 2
        %v771 = vpop.permute.xlu0 %770
        %772 = vrot.lane.b32.xlu0 %v306, 2
        %v773 = vpop.permute.xlu0 %772
        %774 = vrot.lane.b32.xlu0 %v307, 2
        %v775 = vpop.permute.xlu0 %774
        %776 = vrot.lane.b32.xlu0 %v308, 2
        %v777 = vpop.permute.xlu0 %776
        %778 = vrot.lane.b32.xlu0 %v309, 2
        %v779 = vpop.permute.xlu0 %778
        %780 = vrot.lane.b32.xlu0 %v310, 2
        %v781 = vpop.permute.xlu0 %780
        %782 = vrot.lane.b32.xlu0 %v311, 2
        %v783 = vpop.permute.xlu0 %782
        %784 = vrot.lane.b32.xlu0 %v312, 2
        %v785 = vpop.permute.xlu0 %784
        %786 = vrot.lane.b32.xlu0 %v313, 2
        %v787 = vpop.permute.xlu0 %786
        %vm788 = vcmp.lt.s32.totalorder %v337, 2
        %v789 = vsel %vm788, %v785, %v787
        %v790 = vsel %vm788, %v783, %v785
        %v791 = vsel %vm788, %v781, %v783
        %v792 = vsel %vm788, %v779, %v781
        %v793 = vsel %vm788, %v777, %v779
        %v794 = vsel %vm788, %v775, %v777
        %v795 = vsel %vm788, %v773, %v775
        %v796 = vsel %vm788, %v771, %v773
        %v797 = vsel %vm788, %v769, %v771
        %v798 = vsel %vm788, %v767, %v769
        %v799 = vsel %vm788, %v787, %v767
        %800 = vst [vmem:[#allocation2 + $0x370] sm:$0xff] %v799
        %801 = vst [vmem:[#allocation2 + $0x378] sm:$0xff] %v798
        %802 = vst [vmem:[#allocation2 + $0x380] sm:$0xff] %v797
        %803 = vst [vmem:[#allocation2 + $0x388] sm:$0xff] %v796
        %804 = vst [vmem:[#allocation2 + $0x390] sm:$0xff] %v795
        %805 = vst [vmem:[#allocation2 + $0x398] sm:$0xff] %v794
        %806 = vst [vmem:[#allocation2 + $0x3a0] sm:$0xff] %v793
        %807 = vst [vmem:[#allocation2 + $0x3a8] sm:$0xff] %v792
        %808 = vst [vmem:[#allocation2 + $0x3b0] sm:$0xff] %v791
        %809 = vst [vmem:[#allocation2 + $0x3b8] sm:$0xff] %v790
        %810 = vst [vmem:[#allocation2 + $0x3c0] sm:$0xff] %v789
        %811 = vrot.lane.b32.xlu0 %v303, 1
        %v812 = vpop.permute.xlu0 %811
        %813 = vrot.lane.b32.xlu0 %v304, 1
        %v814 = vpop.permute.xlu0 %813
        %815 = vrot.lane.b32.xlu0 %v305, 1
        %v816 = vpop.permute.xlu0 %815
        %817 = vrot.lane.b32.xlu0 %v306, 1
        %v818 = vpop.permute.xlu0 %817
        %819 = vrot.lane.b32.xlu0 %v307, 1
        %v820 = vpop.permute.xlu0 %819
        %821 = vrot.lane.b32.xlu0 %v308, 1
        %v822 = vpop.permute.xlu0 %821
        %823 = vrot.lane.b32.xlu0 %v309, 1
        %v824 = vpop.permute.xlu0 %823
        %825 = vrot.lane.b32.xlu0 %v310, 1
        %v826 = vpop.permute.xlu0 %825
        %827 = vrot.lane.b32.xlu0 %v311, 1
        %v828 = vpop.permute.xlu0 %827
        %829 = vrot.lane.b32.xlu0 %v312, 1
        %v830 = vpop.permute.xlu0 %829
        %831 = vrot.lane.b32.xlu0 %v313, 1
        %v832 = vpop.permute.xlu0 %831
        %vm833 = vcmp.lt.s32.totalorder %v337, 1
        %v834 = vsel %vm833, %v830, %v832
        %v835 = vsel %vm833, %v828, %v830
        %v836 = vsel %vm833, %v826, %v828
        %v837 = vsel %vm833, %v824, %v826
        %v838 = vsel %vm833, %v822, %v824
        %v839 = vsel %vm833, %v820, %v822
        %v840 = vsel %vm833, %v818, %v820
        %v841 = vsel %vm833, %v816, %v818
        %v842 = vsel %vm833, %v814, %v816
        %v843 = vsel %vm833, %v812, %v814
        %v844 = vsel %vm833, %v832, %v812
        %845 = vst [vmem:[#allocation2 + $0x3c8] sm:$0xff] %v844
        %846 = vst [vmem:[#allocation2 + $0x3d0] sm:$0xff] %v843
        %847 = vst [vmem:[#allocation2 + $0x3d8] sm:$0xff] %v842
        %848 = vst [vmem:[#allocation2 + $0x3e0] sm:$0xff] %v841
        %849 = vst [vmem:[#allocation2 + $0x3e8] sm:$0xff] %v840
        %850 = vst [vmem:[#allocation2 + $0x3f0] sm:$0xff] %v839
        %851 = vst [vmem:[#allocation2 + $0x3f8] sm:$0xff] %v838
        %852 = vst [vmem:[#allocation2 + $0x400] sm:$0xff] %v837
        %853 = vst [vmem:[#allocation2 + $0x408] sm:$0xff] %v836
        %854 = vst [vmem:[#allocation2 + $0x410] sm:$0xff] %v835
        %855 = vst [vmem:[#allocation2 + $0x418] sm:$0xff] %v834
        %856 = vst [vmem:[#allocation2 + $0x420] sm:$0xff] %v303
        %857 = vst [vmem:[#allocation2 + $0x428] sm:$0xff] %v304
        %858 = vst [vmem:[#allocation2 + $0x430] sm:$0xff] %v305
        %859 = vst [vmem:[#allocation2 + $0x438] sm:$0xff] %v306
        %860 = vst [vmem:[#allocation2 + $0x440] sm:$0xff] %v307
        %861 = vst [vmem:[#allocation2 + $0x448] sm:$0xff] %v308
        %862 = vst [vmem:[#allocation2 + $0x450] sm:$0xff] %v309
        %863 = vst [vmem:[#allocation2 + $0x458] sm:$0xff] %v310
        %864 = vst [vmem:[#allocation2 + $0x460] sm:$0xff] %v311
        %865 = vst [vmem:[#allocation2 + $0x468] sm:$0xff] %v312
        %866 = vst [vmem:[#allocation2 + $0x470] sm:$0xff] %v313
        %867 = vrot.lane.b32.xlu0 %v303, 127
        %v868 = vpop.permute.xlu0 %867
        %869 = vrot.lane.b32.xlu0 %v304, 127
        %v870 = vpop.permute.xlu0 %869
        %871 = vrot.lane.b32.xlu0 %v305, 127
        %v872 = vpop.permute.xlu0 %871
        %873 = vrot.lane.b32.xlu0 %v306, 127
        %v874 = vpop.permute.xlu0 %873
        %875 = vrot.lane.b32.xlu0 %v307, 127
        %v876 = vpop.permute.xlu0 %875
        %877 = vrot.lane.b32.xlu0 %v308, 127
        %v878 = vpop.permute.xlu0 %877
        %879 = vrot.lane.b32.xlu0 %v309, 127
        %v880 = vpop.permute.xlu0 %879
        %881 = vrot.lane.b32.xlu0 %v310, 127
        %v882 = vpop.permute.xlu0 %881
        %883 = vrot.lane.b32.xlu0 %v311, 127
        %v884 = vpop.permute.xlu0 %883
        %885 = vrot.lane.b32.xlu0 %v312, 127
        %v886 = vpop.permute.xlu0 %885
        %887 = vrot.lane.b32.xlu0 %v313, 127
        %v888 = vpop.permute.xlu0 %887
        %vm889 = vcmp.lt.s32.totalorder %v337, 127
        %v890 = vsel %vm889, %v886, %v888
        %v891 = vsel %vm889, %v884, %v886
        %v892 = vsel %vm889, %v882, %v884
        %v893 = vsel %vm889, %v880, %v882
        %v894 = vsel %vm889, %v878, %v880
        %v895 = vsel %vm889, %v876, %v878
        %v896 = vsel %vm889, %v874, %v876
        %v897 = vsel %vm889, %v872, %v874
        %v898 = vsel %vm889, %v870, %v872
        %v899 = vsel %vm889, %v868, %v870
        %v900 = vsel %vm889, %v888, %v868
        %901 = vst [vmem:[#allocation2 + $0x478] sm:$0xff] %v899
        %902 = vst [vmem:[#allocation2 + $0x480] sm:$0xff] %v898
        %903 = vst [vmem:[#allocation2 + $0x488] sm:$0xff] %v897
        %904 = vst [vmem:[#allocation2 + $0x490] sm:$0xff] %v896
        %905 = vst [vmem:[#allocation2 + $0x498] sm:$0xff] %v895
        %906 = vst [vmem:[#allocation2 + $0x4a0] sm:$0xff] %v894
        %907 = vst [vmem:[#allocation2 + $0x4a8] sm:$0xff] %v893
        %908 = vst [vmem:[#allocation2 + $0x4b0] sm:$0xff] %v892
        %909 = vst [vmem:[#allocation2 + $0x4b8] sm:$0xff] %v891
        %910 = vst [vmem:[#allocation2 + $0x4c0] sm:$0xff] %v890
        %911 = vst [vmem:[#allocation2 + $0x4c8] sm:$0xff] %v900
        %912 = vrot.lane.b32.xlu0 %v303, 126
        %v913 = vpop.permute.xlu0 %912
        %914 = vrot.lane.b32.xlu0 %v304, 126
        %v915 = vpop.permute.xlu0 %914
        %916 = vrot.lane.b32.xlu0 %v305, 126
        %v917 = vpop.permute.xlu0 %916
        %918 = vrot.lane.b32.xlu0 %v306, 126
        %v919 = vpop.permute.xlu0 %918
        %920 = vrot.lane.b32.xlu0 %v307, 126
        %v921 = vpop.permute.xlu0 %920
        %922 = vrot.lane.b32.xlu0 %v308, 126
        %v923 = vpop.permute.xlu0 %922
        %924 = vrot.lane.b32.xlu0 %v309, 126
        %v925 = vpop.permute.xlu0 %924
        %926 = vrot.lane.b32.xlu0 %v310, 126
        %v927 = vpop.permute.xlu0 %926
        %928 = vrot.lane.b32.xlu0 %v311, 126
        %v929 = vpop.permute.xlu0 %928
        %930 = vrot.lane.b32.xlu0 %v312, 126
        %v931 = vpop.permute.xlu0 %930
        %932 = vrot.lane.b32.xlu0 %v313, 126
        %v933 = vpop.permute.xlu0 %932
        %vm934 = vcmp.lt.s32.totalorder %v337, 126
        %v935 = vsel %vm934, %v931, %v933
        %v936 = vsel %vm934, %v929, %v931
        %v937 = vsel %vm934, %v927, %v929
        %v938 = vsel %vm934, %v925, %v927
        %v939 = vsel %vm934, %v923, %v925
        %v940 = vsel %vm934, %v921, %v923
        %v941 = vsel %vm934, %v919, %v921
        %v942 = vsel %vm934, %v917, %v919
        %v943 = vsel %vm934, %v915, %v917
        %v944 = vsel %vm934, %v913, %v915
        %v945 = vsel %vm934, %v933, %v913
        %946 = vst [vmem:[#allocation2 + $0x4d0] sm:$0xff] %v944
        %947 = vst [vmem:[#allocation2 + $0x4d8] sm:$0xff] %v943
        %948 = vst [vmem:[#allocation2 + $0x4e0] sm:$0xff] %v942
        %949 = vst [vmem:[#allocation2 + $0x4e8] sm:$0xff] %v941
        %950 = vst [vmem:[#allocation2 + $0x4f0] sm:$0xff] %v940
        %951 = vst [vmem:[#allocation2 + $0x4f8] sm:$0xff] %v939
        %952 = vst [vmem:[#allocation2 + $0x500] sm:$0xff] %v938
        %953 = vst [vmem:[#allocation2 + $0x508] sm:$0xff] %v937
        %954 = vst [vmem:[#allocation2 + $0x510] sm:$0xff] %v936
        %955 = vst [vmem:[#allocation2 + $0x518] sm:$0xff] %v935
        %956 = vst [vmem:[#allocation2 + $0x520] sm:$0xff] %v945
        %957 = vrot.lane.b32.xlu0 %v303, 94
        %v958 = vpop.permute.xlu0 %957
        %959 = vrot.lane.b32.xlu0 %v304, 94
        %v960 = vpop.permute.xlu0 %959
        %961 = vrot.lane.b32.xlu0 %v305, 94
        %v962 = vpop.permute.xlu0 %961
        %963 = vrot.lane.b32.xlu0 %v306, 94
        %v964 = vpop.permute.xlu0 %963
        %965 = vrot.lane.b32.xlu0 %v307, 94
        %v966 = vpop.permute.xlu0 %965
        %967 = vrot.lane.b32.xlu0 %v308, 94
        %v968 = vpop.permute.xlu0 %967
        %969 = vrot.lane.b32.xlu0 %v309, 94
        %v970 = vpop.permute.xlu0 %969
        %971 = vrot.lane.b32.xlu0 %v310, 94
        %v972 = vpop.permute.xlu0 %971
        %973 = vrot.lane.b32.xlu0 %v311, 94
        %v974 = vpop.permute.xlu0 %973
        %975 = vrot.lane.b32.xlu0 %v312, 94
        %v976 = vpop.permute.xlu0 %975
        %977 = vrot.lane.b32.xlu0 %v313, 94
        %v978 = vpop.permute.xlu0 %977
        %vm979 = vcmp.lt.s32.totalorder %v337, 94
        %v980 = vsel %vm979, %v976, %v978
        %v981 = vsel %vm979, %v974, %v976
        %v982 = vsel %vm979, %v972, %v974
        %v983 = vsel %vm979, %v970, %v972
        %v984 = vsel %vm979, %v968, %v970
        %v985 = vsel %vm979, %v966, %v968
        %v986 = vsel %vm979, %v964, %v966
        %v987 = vsel %vm979, %v962, %v964
        %v988 = vsel %vm979, %v960, %v962
        %v989 = vsel %vm979, %v958, %v960
        %v990 = vsel %vm979, %v978, %v958
        %991 = vst [vmem:[#allocation2 + $0x528] sm:$0xff] %v989
        %992 = vst [vmem:[#allocation2 + $0x530] sm:$0xff] %v988
        %993 = vst [vmem:[#allocation2 + $0x538] sm:$0xff] %v987
        %994 = vst [vmem:[#allocation2 + $0x540] sm:$0xff] %v986
        %995 = vst [vmem:[#allocation2 + $0x548] sm:$0xff] %v985
        %996 = vst [vmem:[#allocation2 + $0x550] sm:$0xff] %v984
        %997 = vst [vmem:[#allocation2 + $0x558] sm:$0xff] %v983
        %998 = vst [vmem:[#allocation2 + $0x560] sm:$0xff] %v982
        %999 = vst [vmem:[#allocation2 + $0x568] sm:$0xff] %v981
        %1000 = vst [vmem:[#allocation2 + $0x570] sm:$0xff] %v980
        %1001 = vst [vmem:[#allocation2 + $0x578] sm:$0xff] %v990
        %1002 = vrot.lane.b32.xlu0 %v303, 93
        %v1003 = vpop.permute.xlu0 %1002
        %1004 = vrot.lane.b32.xlu0 %v304, 93
        %v1005 = vpop.permute.xlu0 %1004
        %1006 = vrot.lane.b32.xlu0 %v305, 93
        %v1007 = vpop.permute.xlu0 %1006
        %1008 = vrot.lane.b32.xlu0 %v306, 93
        %v1009 = vpop.permute.xlu0 %1008
        %1010 = vrot.lane.b32.xlu0 %v307, 93
        %v1011 = vpop.permute.xlu0 %1010
        %1012 = vrot.lane.b32.xlu0 %v308, 93
        %v1013 = vpop.permute.xlu0 %1012
        %1014 = vrot.lane.b32.xlu0 %v309, 93
        %v1015 = vpop.permute.xlu0 %1014
        %1016 = vrot.lane.b32.xlu0 %v310, 93
        %v1017 = vpop.permute.xlu0 %1016
        %1018 = vrot.lane.b32.xlu0 %v311, 93
        %v1019 = vpop.permute.xlu0 %1018
        %1020 = vrot.lane.b32.xlu0 %v312, 93
        %v1021 = vpop.permute.xlu0 %1020
        %1022 = vrot.lane.b32.xlu0 %v313, 93
        %v1023 = vpop.permute.xlu0 %1022
        %vm1024 = vcmp.lt.s32.totalorder %v337, 93
        %v1025 = vsel %vm1024, %v1021, %v1023
        %v1026 = vsel %vm1024, %v1019, %v1021
        %v1027 = vsel %vm1024, %v1017, %v1019
        %v1028 = vsel %vm1024, %v1015, %v1017
        %v1029 = vsel %vm1024, %v1013, %v1015
        %v1030 = vsel %vm1024, %v1011, %v1013
        %v1031 = vsel %vm1024, %v1009, %v1011
        %v1032 = vsel %vm1024, %v1007, %v1009
        %v1033 = vsel %vm1024, %v1005, %v1007
        %v1034 = vsel %vm1024, %v1003, %v1005
        %v1035 = vsel %vm1024, %v1023, %v1003
        %1036 = vst [vmem:[#allocation2 + $0x580] sm:$0xff] %v1034
        %1037 = vst [vmem:[#allocation2 + $0x588] sm:$0xff] %v1033
        %1038 = vst [vmem:[#allocation2 + $0x590] sm:$0xff] %v1032
        %1039 = vst [vmem:[#allocation2 + $0x598] sm:$0xff] %v1031
        %1040 = vst [vmem:[#allocation2 + $0x5a0] sm:$0xff] %v1030
        %1041 = vst [vmem:[#allocation2 + $0x5a8] sm:$0xff] %v1029
        %1042 = vst [vmem:[#allocation2 + $0x5b0] sm:$0xff] %v1028
        %1043 = vst [vmem:[#allocation2 + $0x5b8] sm:$0xff] %v1027
        %1044 = vst [vmem:[#allocation2 + $0x5c0] sm:$0xff] %v1026
        %1045 = vst [vmem:[#allocation2 + $0x5c8] sm:$0xff] %v1025
        %1046 = vst [vmem:[#allocation2 + $0x5d0] sm:$0xff] %v1035
        %1047 = vrot.lane.b32.xlu0 %v303, 92
        %v1048 = vpop.permute.xlu0 %1047
        %1049 = vrot.lane.b32.xlu0 %v304, 92
        %v1050 = vpop.permute.xlu0 %1049
        %1051 = vrot.lane.b32.xlu0 %v305, 92
        %v1052 = vpop.permute.xlu0 %1051
        %1053 = vrot.lane.b32.xlu0 %v306, 92
        %v1054 = vpop.permute.xlu0 %1053
        %1055 = vrot.lane.b32.xlu0 %v307, 92
        %v1056 = vpop.permute.xlu0 %1055
        %1057 = vrot.lane.b32.xlu0 %v308, 92
        %v1058 = vpop.permute.xlu0 %1057
        %1059 = vrot.lane.b32.xlu0 %v309, 92
        %v1060 = vpop.permute.xlu0 %1059
        %1061 = vrot.lane.b32.xlu0 %v310, 92
        %v1062 = vpop.permute.xlu0 %1061
        %1063 = vrot.lane.b32.xlu0 %v311, 92
        %v1064 = vpop.permute.xlu0 %1063
        %1065 = vrot.lane.b32.xlu0 %v312, 92
        %v1066 = vpop.permute.xlu0 %1065
        %1067 = vrot.lane.b32.xlu0 %v313, 92
        %v1068 = vpop.permute.xlu0 %1067
        %vm1069 = vcmp.lt.s32.totalorder %v337, 92
        %v1070 = vsel %vm1069, %v1066, %v1068
        %v1071 = vsel %vm1069, %v1064, %v1066
        %v1072 = vsel %vm1069, %v1062, %v1064
        %v1073 = vsel %vm1069, %v1060, %v1062
        %v1074 = vsel %vm1069, %v1058, %v1060
        %v1075 = vsel %vm1069, %v1056, %v1058
        %v1076 = vsel %vm1069, %v1054, %v1056
        %v1077 = vsel %vm1069, %v1052, %v1054
        %v1078 = vsel %vm1069, %v1050, %v1052
        %v1079 = vsel %vm1069, %v1048, %v1050
        %v1080 = vsel %vm1069, %v1068, %v1048
        %1081 = vst [vmem:[#allocation2 + $0x5d8] sm:$0xff] %v1079
        %1082 = vst [vmem:[#allocation2 + $0x5e0] sm:$0xff] %v1078
        %1083 = vst [vmem:[#allocation2 + $0x5e8] sm:$0xff] %v1077
        %1084 = vst [vmem:[#allocation2 + $0x5f0] sm:$0xff] %v1076
        %1085 = vst [vmem:[#allocation2 + $0x5f8] sm:$0xff] %v1075
        %1086 = vst [vmem:[#allocation2 + $0x600] sm:$0xff] %v1074
        %1087 = vst [vmem:[#allocation2 + $0x608] sm:$0xff] %v1073
        %1088 = vst [vmem:[#allocation2 + $0x610] sm:$0xff] %v1072
        %1089 = vst [vmem:[#allocation2 + $0x618] sm:$0xff] %v1071
        %1090 = vst [vmem:[#allocation2 + $0x620] sm:$0xff] %v1070
        %1091 = vst [vmem:[#allocation2 + $0x628] sm:$0xff] %v1080
        %1092 = vrot.lane.b32.xlu0 %v303, 91
        %v1093 = vpop.permute.xlu0 %1092
        %1094 = vrot.lane.b32.xlu0 %v304, 91
        %v1095 = vpop.permute.xlu0 %1094
        %1096 = vrot.lane.b32.xlu0 %v305, 91
        %v1097 = vpop.permute.xlu0 %1096
        %1098 = vrot.lane.b32.xlu0 %v306, 91
        %v1099 = vpop.permute.xlu0 %1098
        %1100 = vrot.lane.b32.xlu0 %v307, 91
        %v1101 = vpop.permute.xlu0 %1100
        %1102 = vrot.lane.b32.xlu0 %v308, 91
        %v1103 = vpop.permute.xlu0 %1102
        %1104 = vrot.lane.b32.xlu0 %v309, 91
        %v1105 = vpop.permute.xlu0 %1104
        %1106 = vrot.lane.b32.xlu0 %v310, 91
        %v1107 = vpop.permute.xlu0 %1106
        %1108 = vrot.lane.b32.xlu0 %v311, 91
        %v1109 = vpop.permute.xlu0 %1108
        %1110 = vrot.lane.b32.xlu0 %v312, 91
        %v1111 = vpop.permute.xlu0 %1110
        %1112 = vrot.lane.b32.xlu0 %v313, 91
        %v1113 = vpop.permute.xlu0 %1112
        %vm1114 = vcmp.lt.s32.totalorder %v337, 91
        %v1115 = vsel %vm1114, %v1111, %v1113
        %v1116 = vsel %vm1114, %v1109, %v1111
        %v1117 = vsel %vm1114, %v1107, %v1109
        %v1118 = vsel %vm1114, %v1105, %v1107
        %v1119 = vsel %vm1114, %v1103, %v1105
        %v1120 = vsel %vm1114, %v1101, %v1103
        %v1121 = vsel %vm1114, %v1099, %v1101
        %v1122 = vsel %vm1114, %v1097, %v1099
        %v1123 = vsel %vm1114, %v1095, %v1097
        %v1124 = vsel %vm1114, %v1093, %v1095
        %v1125 = vsel %vm1114, %v1113, %v1093
        %1126 = vst [vmem:[#allocation2 + $0x630] sm:$0xff] %v1124
        %1127 = vst [vmem:[#allocation2 + $0x638] sm:$0xff] %v1123
        %1128 = vst [vmem:[#allocation2 + $0x640] sm:$0xff] %v1122
        %1129 = vst [vmem:[#allocation2 + $0x648] sm:$0xff] %v1121
        %1130 = vst [vmem:[#allocation2 + $0x650] sm:$0xff] %v1120
        %1131 = vst [vmem:[#allocation2 + $0x658] sm:$0xff] %v1119
        %1132 = vst [vmem:[#allocation2 + $0x660] sm:$0xff] %v1118
        %1133 = vst [vmem:[#allocation2 + $0x668] sm:$0xff] %v1117
        %1134 = vst [vmem:[#allocation2 + $0x670] sm:$0xff] %v1116
        %1135 = vst [vmem:[#allocation2 + $0x678] sm:$0xff] %v1115
        %1136 = vst [vmem:[#allocation2 + $0x680] sm:$0xff] %v1125
        %1137 = vrot.lane.b32.xlu0 %v303, 90
        %v1138 = vpop.permute.xlu0 %1137
        %1139 = vrot.lane.b32.xlu0 %v304, 90
        %v1140 = vpop.permute.xlu0 %1139
        %1141 = vrot.lane.b32.xlu0 %v305, 90
        %v1142 = vpop.permute.xlu0 %1141
        %1143 = vrot.lane.b32.xlu0 %v306, 90
        %v1144 = vpop.permute.xlu0 %1143
        %1145 = vrot.lane.b32.xlu0 %v307, 90
        %v1146 = vpop.permute.xlu0 %1145
        %1147 = vrot.lane.b32.xlu0 %v308, 90
        %v1148 = vpop.permute.xlu0 %1147
        %1149 = vrot.lane.b32.xlu0 %v309, 90
        %v1150 = vpop.permute.xlu0 %1149
        %1151 = vrot.lane.b32.xlu0 %v310, 90
        %v1152 = vpop.permute.xlu0 %1151
        %1153 = vrot.lane.b32.xlu0 %v311, 90
        %v1154 = vpop.permute.xlu0 %1153
        %1155 = vrot.lane.b32.xlu0 %v312, 90
        %v1156 = vpop.permute.xlu0 %1155
        %1157 = vrot.lane.b32.xlu0 %v313, 90
        %v1158 = vpop.permute.xlu0 %1157
        %vm1159 = vcmp.lt.s32.totalorder %v337, 90
        %v1160 = vsel %vm1159, %v1156, %v1158
        %v1161 = vsel %vm1159, %v1154, %v1156
        %v1162 = vsel %vm1159, %v1152, %v1154
        %v1163 = vsel %vm1159, %v1150, %v1152
        %v1164 = vsel %vm1159, %v1148, %v1150
        %v1165 = vsel %vm1159, %v1146, %v1148
        %v1166 = vsel %vm1159, %v1144, %v1146
        %v1167 = vsel %vm1159, %v1142, %v1144
        %v1168 = vsel %vm1159, %v1140, %v1142
        %v1169 = vsel %vm1159, %v1138, %v1140
        %v1170 = vsel %vm1159, %v1158, %v1138
        %1171 = vst [vmem:[#allocation2 + $0x688] sm:$0xff] %v1169
        %1172 = vst [vmem:[#allocation2 + $0x690] sm:$0xff] %v1168
        %1173 = vst [vmem:[#allocation2 + $0x698] sm:$0xff] %v1167
        %1174 = vst [vmem:[#allocation2 + $0x6a0] sm:$0xff] %v1166
        %1175 = vst [vmem:[#allocation2 + $0x6a8] sm:$0xff] %v1165
        %1176 = vst [vmem:[#allocation2 + $0x6b0] sm:$0xff] %v1164
        %1177 = vst [vmem:[#allocation2 + $0x6b8] sm:$0xff] %v1163
        %1178 = vst [vmem:[#allocation2 + $0x6c0] sm:$0xff] %v1162
        %1179 = vst [vmem:[#allocation2 + $0x6c8] sm:$0xff] %v1161
        %1180 = vst [vmem:[#allocation2 + $0x6d0] sm:$0xff] %v1160
        %1181 = vst [vmem:[#allocation2 + $0x6d8] sm:$0xff] %v1170
        %1182 = vrot.lane.b32.xlu0 %v303, 58
        %v1183 = vpop.permute.xlu0 %1182
        %1184 = vrot.lane.b32.xlu0 %v304, 58
        %v1185 = vpop.permute.xlu0 %1184
        %1186 = vrot.lane.b32.xlu0 %v305, 58
        %v1187 = vpop.permute.xlu0 %1186
        %1188 = vrot.lane.b32.xlu0 %v306, 58
        %v1189 = vpop.permute.xlu0 %1188
        %1190 = vrot.lane.b32.xlu0 %v307, 58
        %v1191 = vpop.permute.xlu0 %1190
        %1192 = vrot.lane.b32.xlu0 %v308, 58
        %v1193 = vpop.permute.xlu0 %1192
        %1194 = vrot.lane.b32.xlu0 %v309, 58
        %v1195 = vpop.permute.xlu0 %1194
        %1196 = vrot.lane.b32.xlu0 %v310, 58
        %v1197 = vpop.permute.xlu0 %1196
        %1198 = vrot.lane.b32.xlu0 %v311, 58
        %v1199 = vpop.permute.xlu0 %1198
        %1200 = vrot.lane.b32.xlu0 %v312, 58
        %v1201 = vpop.permute.xlu0 %1200
        %1202 = vrot.lane.b32.xlu0 %v313, 58
        %v1203 = vpop.permute.xlu0 %1202
        %vm1204 = vcmp.lt.s32.totalorder %v337, 58
        %v1205 = vsel %vm1204, %v1201, %v1203
        %v1206 = vsel %vm1204, %v1199, %v1201
        %v1207 = vsel %vm1204, %v1197, %v1199
        %v1208 = vsel %vm1204, %v1195, %v1197
        %v1209 = vsel %vm1204, %v1193, %v1195
        %v1210 = vsel %vm1204, %v1191, %v1193
        %v1211 = vsel %vm1204, %v1189, %v1191
        %v1212 = vsel %vm1204, %v1187, %v1189
        %v1213 = vsel %vm1204, %v1185, %v1187
        %v1214 = vsel %vm1204, %v1183, %v1185
        %v1215 = vsel %vm1204, %v1203, %v1183
        %1216 = vst [vmem:[#allocation2 + $0x6e0] sm:$0xff] %v1214
        %1217 = vst [vmem:[#allocation2 + $0x6e8] sm:$0xff] %v1213
        %1218 = vst [vmem:[#allocation2 + $0x6f0] sm:$0xff] %v1212
        %1219 = vst [vmem:[#allocation2 + $0x6f8] sm:$0xff] %v1211
        %1220 = vst [vmem:[#allocation2 + $0x700] sm:$0xff] %v1210
        %1221 = vst [vmem:[#allocation2 + $0x708] sm:$0xff] %v1209
        %1222 = vst [vmem:[#allocation2 + $0x710] sm:$0xff] %v1208
        %1223 = vst [vmem:[#allocation2 + $0x718] sm:$0xff] %v1207
        %1224 = vst [vmem:[#allocation2 + $0x720] sm:$0xff] %v1206
        %1225 = vst [vmem:[#allocation2 + $0x728] sm:$0xff] %v1205
        %1226 = vst [vmem:[#allocation2 + $0x730] sm:$0xff] %v1215
        %1227 = vrot.lane.b32.xlu0 %v303, 57
        %v1228 = vpop.permute.xlu0 %1227
        %1229 = vrot.lane.b32.xlu0 %v304, 57
        %v1230 = vpop.permute.xlu0 %1229
        %1231 = vrot.lane.b32.xlu0 %v305, 57
        %v1232 = vpop.permute.xlu0 %1231
        %1233 = vrot.lane.b32.xlu0 %v306, 57
        %v1234 = vpop.permute.xlu0 %1233
        %1235 = vrot.lane.b32.xlu0 %v307, 57
        %v1236 = vpop.permute.xlu0 %1235
        %1237 = vrot.lane.b32.xlu0 %v308, 57
        %v1238 = vpop.permute.xlu0 %1237
        %1239 = vrot.lane.b32.xlu0 %v309, 57
        %v1240 = vpop.permute.xlu0 %1239
        %1241 = vrot.lane.b32.xlu0 %v310, 57
        %v1242 = vpop.permute.xlu0 %1241
        %1243 = vrot.lane.b32.xlu0 %v311, 57
        %v1244 = vpop.permute.xlu0 %1243
        %1245 = vrot.lane.b32.xlu0 %v312, 57
        %v1246 = vpop.permute.xlu0 %1245
        %1247 = vrot.lane.b32.xlu0 %v313, 57
        %v1248 = vpop.permute.xlu0 %1247
        %vm1249 = vcmp.lt.s32.totalorder %v337, 57
        %v1250 = vsel %vm1249, %v1246, %v1248
        %v1251 = vsel %vm1249, %v1244, %v1246
        %v1252 = vsel %vm1249, %v1242, %v1244
        %v1253 = vsel %vm1249, %v1240, %v1242
        %v1254 = vsel %vm1249, %v1238, %v1240
        %v1255 = vsel %vm1249, %v1236, %v1238
        %v1256 = vsel %vm1249, %v1234, %v1236
        %v1257 = vsel %vm1249, %v1232, %v1234
        %v1258 = vsel %vm1249, %v1230, %v1232
        %v1259 = vsel %vm1249, %v1228, %v1230
        %v1260 = vsel %vm1249, %v1248, %v1228
        %1261 = vst [vmem:[#allocation2 + $0x738] sm:$0xff] %v1259
        %1262 = vst [vmem:[#allocation2 + $0x740] sm:$0xff] %v1258
        %1263 = vst [vmem:[#allocation2 + $0x748] sm:$0xff] %v1257
        %1264 = vst [vmem:[#allocation2 + $0x750] sm:$0xff] %v1256
        %1265 = vst [vmem:[#allocation2 + $0x758] sm:$0xff] %v1255
        %1266 = vst [vmem:[#allocation2 + $0x760] sm:$0xff] %v1254
        %1267 = vst [vmem:[#allocation2 + $0x768] sm:$0xff] %v1253
        %1268 = vst [vmem:[#allocation2 + $0x770] sm:$0xff] %v1252
        %1269 = vst [vmem:[#allocation2 + $0x778] sm:$0xff] %v1251
        %1270 = vst [vmem:[#allocation2 + $0x780] sm:$0xff] %v1250
        %1271 = vst [vmem:[#allocation2 + $0x788] sm:$0xff] %v1260
        %1272 = vrot.lane.b32.xlu0 %v303, 56
        %v1273 = vpop.permute.xlu0 %1272
        %1274 = vrot.lane.b32.xlu0 %v304, 56
        %v1275 = vpop.permute.xlu0 %1274
        %1276 = vrot.lane.b32.xlu0 %v305, 56
        %v1277 = vpop.permute.xlu0 %1276
        %1278 = vrot.lane.b32.xlu0 %v306, 56
        %v1279 = vpop.permute.xlu0 %1278
        %1280 = vrot.lane.b32.xlu0 %v307, 56
        %v1281 = vpop.permute.xlu0 %1280
        %1282 = vrot.lane.b32.xlu0 %v308, 56
        %v1283 = vpop.permute.xlu0 %1282
        %1284 = vrot.lane.b32.xlu0 %v309, 56
        %v1285 = vpop.permute.xlu0 %1284
        %1286 = vrot.lane.b32.xlu0 %v310, 56
        %v1287 = vpop.permute.xlu0 %1286
        %1288 = vrot.lane.b32.xlu0 %v311, 56
        %v1289 = vpop.permute.xlu0 %1288
        %1290 = vrot.lane.b32.xlu0 %v312, 56
        %v1291 = vpop.permute.xlu0 %1290
        %1292 = vrot.lane.b32.xlu0 %v313, 56
        %v1293 = vpop.permute.xlu0 %1292
        %vm1294 = vcmp.lt.s32.totalorder %v337, 56
        %v1295 = vsel %vm1294, %v1291, %v1293
        %v1296 = vsel %vm1294, %v1289, %v1291
        %v1297 = vsel %vm1294, %v1287, %v1289
        %v1298 = vsel %vm1294, %v1285, %v1287
        %v1299 = vsel %vm1294, %v1283, %v1285
        %v1300 = vsel %vm1294, %v1281, %v1283
        %v1301 = vsel %vm1294, %v1279, %v1281
        %v1302 = vsel %vm1294, %v1277, %v1279
        %v1303 = vsel %vm1294, %v1275, %v1277
        %v1304 = vsel %vm1294, %v1273, %v1275
        %v1305 = vsel %vm1294, %v1293, %v1273
        %1306 = vst [vmem:[#allocation2 + $0x790] sm:$0xff] %v1304
        %1307 = vst [vmem:[#allocation2 + $0x798] sm:$0xff] %v1303
        %1308 = vst [vmem:[#allocation2 + $0x7a0] sm:$0xff] %v1302
        %1309 = vst [vmem:[#allocation2 + $0x7a8] sm:$0xff] %v1301
        %1310 = vst [vmem:[#allocation2 + $0x7b0] sm:$0xff] %v1300
        %1311 = vst [vmem:[#allocation2 + $0x7b8] sm:$0xff] %v1299
        %1312 = vst [vmem:[#allocation2 + $0x7c0] sm:$0xff] %v1298
        %1313 = vst [vmem:[#allocation2 + $0x7c8] sm:$0xff] %v1297
        %1314 = vst [vmem:[#allocation2 + $0x7d0] sm:$0xff] %v1296
        %1315 = vst [vmem:[#allocation2 + $0x7d8] sm:$0xff] %v1295
        %1316 = vst [vmem:[#allocation2 + $0x7e0] sm:$0xff] %v1305
        %1317 = vrot.lane.b32.xlu0 %v303, 55
        %v1318 = vpop.permute.xlu0 %1317
        %1319 = vrot.lane.b32.xlu0 %v304, 55
        %v1320 = vpop.permute.xlu0 %1319
        %1321 = vrot.lane.b32.xlu0 %v305, 55
        %v1322 = vpop.permute.xlu0 %1321
        %1323 = vrot.lane.b32.xlu0 %v306, 55
        %v1324 = vpop.permute.xlu0 %1323
        %1325 = vrot.lane.b32.xlu0 %v307, 55
        %v1326 = vpop.permute.xlu0 %1325
        %1327 = vrot.lane.b32.xlu0 %v308, 55
        %v1328 = vpop.permute.xlu0 %1327
        %1329 = vrot.lane.b32.xlu0 %v309, 55
        %v1330 = vpop.permute.xlu0 %1329
        %1331 = vrot.lane.b32.xlu0 %v310, 55
        %v1332 = vpop.permute.xlu0 %1331
        %1333 = vrot.lane.b32.xlu0 %v311, 55
        %v1334 = vpop.permute.xlu0 %1333
        %1335 = vrot.lane.b32.xlu0 %v312, 55
        %v1336 = vpop.permute.xlu0 %1335
        %1337 = vrot.lane.b32.xlu0 %v313, 55
        %v1338 = vpop.permute.xlu0 %1337
        %vm1339 = vcmp.lt.s32.totalorder %v337, 55
        %v1340 = vsel %vm1339, %v1336, %v1338
        %v1341 = vsel %vm1339, %v1334, %v1336
        %v1342 = vsel %vm1339, %v1332, %v1334
        %v1343 = vsel %vm1339, %v1330, %v1332
        %v1344 = vsel %vm1339, %v1328, %v1330
        %v1345 = vsel %vm1339, %v1326, %v1328
        %v1346 = vsel %vm1339, %v1324, %v1326
        %v1347 = vsel %vm1339, %v1322, %v1324
        %v1348 = vsel %vm1339, %v1320, %v1322
        %v1349 = vsel %vm1339, %v1318, %v1320
        %v1350 = vsel %vm1339, %v1338, %v1318
        %1351 = vst [vmem:[#allocation2 + $0x7e8] sm:$0xff] %v1349
        %1352 = vst [vmem:[#allocation2 + $0x7f0] sm:$0xff] %v1348
        %1353 = vst [vmem:[#allocation2 + $0x7f8] sm:$0xff] %v1347
        %1354 = vst [vmem:[#allocation2 + $0x800] sm:$0xff] %v1346
        %1355 = vst [vmem:[#allocation2 + $0x808] sm:$0xff] %v1345
        %1356 = vst [vmem:[#allocation2 + $0x810] sm:$0xff] %v1344
        %1357 = vst [vmem:[#allocation2 + $0x818] sm:$0xff] %v1343
        %1358 = vst [vmem:[#allocation2 + $0x820] sm:$0xff] %v1342
        %1359 = vst [vmem:[#allocation2 + $0x828] sm:$0xff] %v1341
        %1360 = vst [vmem:[#allocation2 + $0x830] sm:$0xff] %v1340
        %1361 = vst [vmem:[#allocation2 + $0x838] sm:$0xff] %v1350
        %1362 = vrot.lane.b32.xlu0 %v303, 54
        %v1363 = vpop.permute.xlu0 %1362
        %1364 = vrot.lane.b32.xlu0 %v304, 54
        %v1365 = vpop.permute.xlu0 %1364
        %1366 = vrot.lane.b32.xlu0 %v305, 54
        %v1367 = vpop.permute.xlu0 %1366
        %1368 = vrot.lane.b32.xlu0 %v306, 54
        %v1369 = vpop.permute.xlu0 %1368
        %1370 = vrot.lane.b32.xlu0 %v307, 54
        %v1371 = vpop.permute.xlu0 %1370
        %1372 = vrot.lane.b32.xlu0 %v308, 54
        %v1373 = vpop.permute.xlu0 %1372
        %1374 = vrot.lane.b32.xlu0 %v309, 54
        %v1375 = vpop.permute.xlu0 %1374
        %1376 = vrot.lane.b32.xlu0 %v310, 54
        %v1377 = vpop.permute.xlu0 %1376
        %1378 = vrot.lane.b32.xlu0 %v311, 54
        %v1379 = vpop.permute.xlu0 %1378
        %1380 = vrot.lane.b32.xlu0 %v312, 54
        %v1381 = vpop.permute.xlu0 %1380
        %1382 = vrot.lane.b32.xlu0 %v313, 54
        %v1383 = vpop.permute.xlu0 %1382
        %vm1384 = vcmp.lt.s32.totalorder %v337, 54
        %v1385 = vsel %vm1384, %v1381, %v1383
        %v1386 = vsel %vm1384, %v1379, %v1381
        %v1387 = vsel %vm1384, %v1377, %v1379
        %v1388 = vsel %vm1384, %v1375, %v1377
        %v1389 = vsel %vm1384, %v1373, %v1375
        %v1390 = vsel %vm1384, %v1371, %v1373
        %v1391 = vsel %vm1384, %v1369, %v1371
        %v1392 = vsel %vm1384, %v1367, %v1369
        %v1393 = vsel %vm1384, %v1365, %v1367
        %v1394 = vsel %vm1384, %v1363, %v1365
        %v1395 = vsel %vm1384, %v1383, %v1363
        %1396 = vst [vmem:[#allocation2 + $0x840] sm:$0xff] %v1394
        %1397 = vst [vmem:[#allocation2 + $0x848] sm:$0xff] %v1393
        %1398 = vst [vmem:[#allocation2 + $0x850] sm:$0xff] %v1392
        %1399 = vst [vmem:[#allocation2 + $0x858] sm:$0xff] %v1391
        %1400 = vst [vmem:[#allocation2 + $0x860] sm:$0xff] %v1390
        %1401 = vst [vmem:[#allocation2 + $0x868] sm:$0xff] %v1389
        %1402 = vst [vmem:[#allocation2 + $0x870] sm:$0xff] %v1388
        %1403 = vst [vmem:[#allocation2 + $0x878] sm:$0xff] %v1387
        %1404 = vst [vmem:[#allocation2 + $0x880] sm:$0xff] %v1386
        %1405 = vst [vmem:[#allocation2 + $0x888] sm:$0xff] %v1385
        %1406 = vst [vmem:[#allocation2 + $0x890] sm:$0xff] %v1395
        %v1407 = vld [vmem:[%s2] sm:$0xff]
        %v1408 = vld [vmem:[%s2 + $0x8] sm:$0xff]
        %v1409 = vld [vmem:[#allocation2] sm:$0xff]
        %v1410 = vld [vmem:[#allocation2 + $0x8] sm:$0xff]
        %v1411 = vld [vmem:[#allocation2 + $0x10] sm:$0xff]
        %v1412 = vld [vmem:[#allocation2 + $0x18] sm:$0xff]
        %v1413 = vld [vmem:[#allocation2 + $0x20] sm:$0xff]
        %v1414 = vld [vmem:[#allocation2 + $0x28] sm:$0xff]
        %v1415 = vld [vmem:[#allocation2 + $0x30] sm:$0xff]
        %v1416 = vld [vmem:[#allocation2 + $0x38] sm:$0xff]
        %v1417 = vld [vmem:[#allocation2 + $0x40] sm:$0xff]
        %v1418 = vld [vmem:[#allocation2 + $0x48] sm:$0xff]
        %v1419 = vld [vmem:[#allocation2 + $0x50] sm:$0xff]
        %v1420 = vld [vmem:[#allocation2 + $0x58] sm:$0xff]
        %v1421 = vld [vmem:[#allocation2 + $0x60] sm:$0xff]
        %v1422 = vld [vmem:[#allocation2 + $0x68] sm:$0xff]
        %v1423 = vld [vmem:[#allocation2 + $0x70] sm:$0xff]
        %v1424 = vld [vmem:[#allocation2 + $0x78] sm:$0xff]
        %v1425 = vld [vmem:[#allocation2 + $0x80] sm:$0xff]
        %v1426 = vld [vmem:[#allocation2 + $0x88] sm:$0xff]
        %v1427 = vld [vmem:[#allocation2 + $0x90] sm:$0xff]
        %v1428 = vld [vmem:[#allocation2 + $0x98] sm:$0xff]
        %v1429 = vld [vmem:[#allocation2 + $0xa0] sm:$0xff]
        %v1430 = vld [vmem:[#allocation2 + $0xa8] sm:$0xff]
        %v1431 = vld [vmem:[#allocation2 + $0xb0] sm:$0xff]
        %v1432 = vld [vmem:[#allocation2 + $0xb8] sm:$0xff]
        %v1433 = vld [vmem:[#allocation2 + $0xc0] sm:$0xff]
        %v1434 = vld [vmem:[#allocation2 + $0xc8] sm:$0xff]
        %v1435 = vld [vmem:[#allocation2 + $0xd0] sm:$0xff]
        %v1436 = vld [vmem:[#allocation2 + $0xd8] sm:$0xff]
        %v1437 = vld [vmem:[#allocation2 + $0xe0] sm:$0xff]
        %v1438 = vld [vmem:[#allocation2 + $0xe8] sm:$0xff]
        %v1439 = vld [vmem:[#allocation2 + $0xf0] sm:$0xff]
        %v1440 = vld [vmem:[#allocation2 + $0xf8] sm:$0xff]
        %v1441 = vld [vmem:[#allocation2 + $0x100] sm:$0xff]
        %v1442 = vld [vmem:[#allocation2 + $0x108] sm:$0xff]
        %v1443 = vld [vmem:[#allocation2 + $0x110] sm:$0xff]
        %v1444 = vld [vmem:[#allocation2 + $0x118] sm:$0xff]
        %v1445 = vld [vmem:[#allocation2 + $0x120] sm:$0xff]
        %v1446 = vld [vmem:[#allocation2 + $0x128] sm:$0xff]
        %v1447 = vld [vmem:[#allocation2 + $0x130] sm:$0xff]
        %v1448 = vld [vmem:[#allocation2 + $0x138] sm:$0xff]
        %v1449 = vld [vmem:[#allocation2 + $0x140] sm:$0xff]
        %v1450 = vld [vmem:[#allocation2 + $0x148] sm:$0xff]
        %v1451 = vld [vmem:[#allocation2 + $0x150] sm:$0xff]
        %v1452 = vld [vmem:[#allocation2 + $0x158] sm:$0xff]
        %v1453 = vld [vmem:[#allocation2 + $0x160] sm:$0xff]
        %v1454 = vld [vmem:[#allocation2 + $0x168] sm:$0xff]
        %v1455 = vld [vmem:[#allocation2 + $0x170] sm:$0xff]
        %v1456 = vld [vmem:[#allocation2 + $0x178] sm:$0xff]
        %v1457 = vld [vmem:[#allocation2 + $0x180] sm:$0xff]
        %v1458 = vld [vmem:[#allocation2 + $0x188] sm:$0xff]
        %v1459 = vld [vmem:[#allocation2 + $0x190] sm:$0xff]
        %v1460 = vld [vmem:[#allocation2 + $0x198] sm:$0xff]
        %v1461 = vld [vmem:[#allocation2 + $0x1a0] sm:$0xff]
        %v1462 = vld [vmem:[#allocation2 + $0x1a8] sm:$0xff]
        %v1463 = vld [vmem:[#allocation2 + $0x1b0] sm:$0xff]
        %v1464 = vld [vmem:[#allocation2 + $0x1b8] sm:$0xff]
        %v1465 = vld [vmem:[#allocation2 + $0x1c0] sm:$0xff]
        %v1466 = vld [vmem:[#allocation2 + $0x1c8] sm:$0xff]
        %v1467 = vld [vmem:[#allocation2 + $0x1d0] sm:$0xff]
        %v1468 = vld [vmem:[#allocation2 + $0x1d8] sm:$0xff]
        %v1469 = vld [vmem:[#allocation2 + $0x1e0] sm:$0xff]
        %v1470 = vld [vmem:[#allocation2 + $0x1e8] sm:$0xff]
        %v1471 = vld [vmem:[#allocation2 + $0x1f0] sm:$0xff]
        %v1472 = vld [vmem:[#allocation2 + $0x1f8] sm:$0xff]
        %v1473 = vld [vmem:[#allocation2 + $0x200] sm:$0xff]
        %v1474 = vld [vmem:[#allocation2 + $0x208] sm:$0xff]
        %v1475 = vld [vmem:[#allocation2 + $0x210] sm:$0xff]
        %v1476 = vld [vmem:[#allocation2 + $0x218] sm:$0xff]
        %v1477 = vld [vmem:[#allocation2 + $0x220] sm:$0xff]
        %v1478 = vld [vmem:[#allocation2 + $0x228] sm:$0xff]
        %v1479 = vld [vmem:[#allocation2 + $0x230] sm:$0xff]
        %v1480 = vld [vmem:[#allocation2 + $0x238] sm:$0xff]
        %v1481 = vld [vmem:[#allocation2 + $0x240] sm:$0xff]
        %v1482 = vld [vmem:[#allocation2 + $0x248] sm:$0xff]
        %v1483 = vld [vmem:[#allocation2 + $0x250] sm:$0xff]
        %v1484 = vld [vmem:[#allocation2 + $0x258] sm:$0xff]
        %v1485 = vld [vmem:[#allocation2 + $0x260] sm:$0xff]
        %v1486 = vld [vmem:[#allocation2 + $0x268] sm:$0xff]
        %v1487 = vld [vmem:[#allocation2 + $0x270] sm:$0xff]
        %v1488 = vld [vmem:[#allocation2 + $0x278] sm:$0xff]
        %v1489 = vld [vmem:[#allocation2 + $0x280] sm:$0xff]
        %v1490 = vld [vmem:[#allocation2 + $0x288] sm:$0xff]
        %v1491 = vld [vmem:[#allocation2 + $0x290] sm:$0xff]
        %v1492 = vld [vmem:[#allocation2 + $0x298] sm:$0xff]
        %v1493 = vld [vmem:[#allocation2 + $0x2a0] sm:$0xff]
        %v1494 = vld [vmem:[#allocation2 + $0x2a8] sm:$0xff]
        %v1495 = vld [vmem:[#allocation2 + $0x2b0] sm:$0xff]
        %v1496 = vld [vmem:[#allocation2 + $0x2b8] sm:$0xff]
        %v1497 = vld [vmem:[#allocation2 + $0x2c0] sm:$0xff]
        %v1498 = vld [vmem:[#allocation2 + $0x2c8] sm:$0xff]
        %v1499 = vld [vmem:[#allocation2 + $0x2d0] sm:$0xff]
        %v1500 = vld [vmem:[#allocation2 + $0x2d8] sm:$0xff]
        %v1501 = vld [vmem:[#allocation2 + $0x2e0] sm:$0xff]
        %v1502 = vld [vmem:[#allocation2 + $0x2e8] sm:$0xff]
        %v1503 = vld [vmem:[#allocation2 + $0x2f0] sm:$0xff]
        %v1504 = vld [vmem:[#allocation2 + $0x2f8] sm:$0xff]
        %v1505 = vld [vmem:[#allocation2 + $0x300] sm:$0xff]
        %v1506 = vld [vmem:[#allocation2 + $0x308] sm:$0xff]
        %v1507 = vld [vmem:[#allocation2 + $0x310] sm:$0xff]
        %v1508 = vld [vmem:[#allocation2 + $0x318] sm:$0xff]
        %v1509 = vld [vmem:[#allocation2 + $0x320] sm:$0xff]
        %v1510 = vld [vmem:[#allocation2 + $0x328] sm:$0xff]
        %v1511 = vld [vmem:[#allocation2 + $0x330] sm:$0xff]
        %v1512 = vld [vmem:[#allocation2 + $0x338] sm:$0xff]
        %v1513 = vld [vmem:[#allocation2 + $0x340] sm:$0xff]
        %v1514 = vld [vmem:[#allocation2 + $0x348] sm:$0xff]
        %v1515 = vld [vmem:[#allocation2 + $0x350] sm:$0xff]
        %v1516 = vld [vmem:[#allocation2 + $0x358] sm:$0xff]
        %v1517 = vld [vmem:[#allocation2 + $0x360] sm:$0xff]
        %v1518 = vld [vmem:[#allocation2 + $0x368] sm:$0xff]
        %v1519 = vld [vmem:[#allocation2 + $0x370] sm:$0xff]
        %v1520 = vld [vmem:[#allocation2 + $0x378] sm:$0xff]
        %v1521 = vld [vmem:[#allocation2 + $0x380] sm:$0xff]
        %v1522 = vld [vmem:[#allocation2 + $0x388] sm:$0xff]
        %v1523 = vld [vmem:[#allocation2 + $0x390] sm:$0xff]
        %v1524 = vld [vmem:[#allocation2 + $0x398] sm:$0xff]
        %v1525 = vld [vmem:[#allocation2 + $0x3a0] sm:$0xff]
        %v1526 = vld [vmem:[#allocation2 + $0x3a8] sm:$0xff]
        %v1527 = vld [vmem:[#allocation2 + $0x3b0] sm:$0xff]
        %v1528 = vld [vmem:[#allocation2 + $0x3b8] sm:$0xff]
        %v1529 = vld [vmem:[#allocation2 + $0x3c0] sm:$0xff]
        %v1530 = vld [vmem:[#allocation2 + $0x3c8] sm:$0xff]
        %v1531 = vld [vmem:[#allocation2 + $0x3d0] sm:$0xff]
        %v1532 = vld [vmem:[#allocation2 + $0x3d8] sm:$0xff]
        %v1533 = vld [vmem:[#allocation2 + $0x3e0] sm:$0xff]
        %v1534 = vld [vmem:[#allocation2 + $0x3e8] sm:$0xff]
        %v1535 = vld [vmem:[#allocation2 + $0x3f0] sm:$0xff]
        %v1536 = vld [vmem:[#allocation2 + $0x3f8] sm:$0xff]
        %v1537 = vld [vmem:[#allocation2 + $0x400] sm:$0xff]
        %v1538 = vld [vmem:[#allocation2 + $0x408] sm:$0xff]
        %v1539 = vld [vmem:[#allocation2 + $0x410] sm:$0xff]
        %v1540 = vld [vmem:[#allocation2 + $0x418] sm:$0xff]
        %v1541 = vld [vmem:[#allocation2 + $0x420] sm:$0xff]
        %v1542 = vld [vmem:[#allocation2 + $0x428] sm:$0xff]
        %v1543 = vld [vmem:[#allocation2 + $0x430] sm:$0xff]
        %v1544 = vld [vmem:[#allocation2 + $0x438] sm:$0xff]
        %v1545 = vld [vmem:[#allocation2 + $0x440] sm:$0xff]
        %v1546 = vld [vmem:[#allocation2 + $0x448] sm:$0xff]
        %v1547 = vld [vmem:[#allocation2 + $0x450] sm:$0xff]
        %v1548 = vld [vmem:[#allocation2 + $0x458] sm:$0xff]
        %v1549 = vld [vmem:[#allocation2 + $0x460] sm:$0xff]
        %v1550 = vld [vmem:[#allocation2 + $0x468] sm:$0xff]
        %v1551 = vld [vmem:[#allocation2 + $0x470] sm:$0xff]
        %v1552 = vld [vmem:[#allocation2 + $0x478] sm:$0xff]
        %v1553 = vld [vmem:[#allocation2 + $0x480] sm:$0xff]
        %v1554 = vld [vmem:[#allocation2 + $0x488] sm:$0xff]
        %v1555 = vld [vmem:[#allocation2 + $0x490] sm:$0xff]
        %v1556 = vld [vmem:[#allocation2 + $0x498] sm:$0xff]
        %v1557 = vld [vmem:[#allocation2 + $0x4a0] sm:$0xff]
        %v1558 = vld [vmem:[#allocation2 + $0x4a8] sm:$0xff]
        %v1559 = vld [vmem:[#allocation2 + $0x4b0] sm:$0xff]
        %v1560 = vld [vmem:[#allocation2 + $0x4b8] sm:$0xff]
        %v1561 = vld [vmem:[#allocation2 + $0x4c0] sm:$0xff]
        %v1562 = vld [vmem:[#allocation2 + $0x4c8] sm:$0xff]
        %v1563 = vld [vmem:[#allocation2 + $0x4d0] sm:$0xff]
        %v1564 = vld [vmem:[#allocation2 + $0x4d8] sm:$0xff]
        %v1565 = vld [vmem:[#allocation2 + $0x4e0] sm:$0xff]
        %v1566 = vld [vmem:[#allocation2 + $0x4e8] sm:$0xff]
        %v1567 = vld [vmem:[#allocation2 + $0x4f0] sm:$0xff]
        %v1568 = vld [vmem:[#allocation2 + $0x4f8] sm:$0xff]
        %v1569 = vld [vmem:[#allocation2 + $0x500] sm:$0xff]
        %v1570 = vld [vmem:[#allocation2 + $0x508] sm:$0xff]
        %v1571 = vld [vmem:[#allocation2 + $0x510] sm:$0xff]
        %v1572 = vld [vmem:[#allocation2 + $0x518] sm:$0xff]
        %v1573 = vld [vmem:[#allocation2 + $0x520] sm:$0xff]
        %v1574 = vld [vmem:[#allocation2 + $0x528] sm:$0xff]
        %v1575 = vld [vmem:[#allocation2 + $0x530] sm:$0xff]
        %v1576 = vld [vmem:[#allocation2 + $0x538] sm:$0xff]
        %v1577 = vld [vmem:[#allocation2 + $0x540] sm:$0xff]
        %v1578 = vld [vmem:[#allocation2 + $0x548] sm:$0xff]
        %v1579 = vld [vmem:[#allocation2 + $0x550] sm:$0xff]
        %v1580 = vld [vmem:[#allocation2 + $0x558] sm:$0xff]
        %v1581 = vld [vmem:[#allocation2 + $0x560] sm:$0xff]
        %v1582 = vld [vmem:[#allocation2 + $0x568] sm:$0xff]
        %v1583 = vld [vmem:[#allocation2 + $0x570] sm:$0xff]
        %v1584 = vld [vmem:[#allocation2 + $0x578] sm:$0xff]
        %v1585 = vld [vmem:[#allocation2 + $0x580] sm:$0xff]
        %v1586 = vld [vmem:[#allocation2 + $0x588] sm:$0xff]
        %v1587 = vld [vmem:[#allocation2 + $0x590] sm:$0xff]
        %v1588 = vld [vmem:[#allocation2 + $0x598] sm:$0xff]
        %v1589 = vld [vmem:[#allocation2 + $0x5a0] sm:$0xff]
        %v1590 = vld [vmem:[#allocation2 + $0x5a8] sm:$0xff]
        %v1591 = vld [vmem:[#allocation2 + $0x5b0] sm:$0xff]
        %v1592 = vld [vmem:[#allocation2 + $0x5b8] sm:$0xff]
        %v1593 = vld [vmem:[#allocation2 + $0x5c0] sm:$0xff]
        %v1594 = vld [vmem:[#allocation2 + $0x5c8] sm:$0xff]
        %v1595 = vld [vmem:[#allocation2 + $0x5d0] sm:$0xff]
        %v1596 = vld [vmem:[#allocation2 + $0x5d8] sm:$0xff]
        %v1597 = vld [vmem:[#allocation2 + $0x5e0] sm:$0xff]
        %v1598 = vld [vmem:[#allocation2 + $0x5e8] sm:$0xff]
        %v1599 = vld [vmem:[#allocation2 + $0x5f0] sm:$0xff]
        %v1600 = vld [vmem:[#allocation2 + $0x5f8] sm:$0xff]
        %v1601 = vld [vmem:[#allocation2 + $0x600] sm:$0xff]
        %v1602 = vld [vmem:[#allocation2 + $0x608] sm:$0xff]
        %v1603 = vld [vmem:[#allocation2 + $0x610] sm:$0xff]
        %v1604 = vld [vmem:[#allocation2 + $0x618] sm:$0xff]
        %v1605 = vld [vmem:[#allocation2 + $0x620] sm:$0xff]
        %v1606 = vld [vmem:[#allocation2 + $0x628] sm:$0xff]
        %v1607 = vld [vmem:[#allocation2 + $0x630] sm:$0xff]
        %v1608 = vld [vmem:[#allocation2 + $0x638] sm:$0xff]
        %v1609 = vld [vmem:[#allocation2 + $0x640] sm:$0xff]
        %v1610 = vld [vmem:[#allocation2 + $0x648] sm:$0xff]
        %v1611 = vld [vmem:[#allocation2 + $0x650] sm:$0xff]
        %v1612 = vld [vmem:[#allocation2 + $0x658] sm:$0xff]
        %v1613 = vld [vmem:[#allocation2 + $0x660] sm:$0xff]
        %v1614 = vld [vmem:[#allocation2 + $0x668] sm:$0xff]
        %v1615 = vld [vmem:[#allocation2 + $0x670] sm:$0xff]
        %v1616 = vld [vmem:[#allocation2 + $0x678] sm:$0xff]
        %v1617 = vld [vmem:[#allocation2 + $0x680] sm:$0xff]
        %v1618 = vld [vmem:[#allocation2 + $0x688] sm:$0xff]
        %v1619 = vld [vmem:[#allocation2 + $0x690] sm:$0xff]
        %v1620 = vld [vmem:[#allocation2 + $0x698] sm:$0xff]
        %v1621 = vld [vmem:[#allocation2 + $0x6a0] sm:$0xff]
        %v1622 = vld [vmem:[#allocation2 + $0x6a8] sm:$0xff]
        %v1623 = vld [vmem:[#allocation2 + $0x6b0] sm:$0xff]
        %v1624 = vld [vmem:[#allocation2 + $0x6b8] sm:$0xff]
        %v1625 = vld [vmem:[#allocation2 + $0x6c0] sm:$0xff]
        %v1626 = vld [vmem:[#allocation2 + $0x6c8] sm:$0xff]
        %v1627 = vld [vmem:[#allocation2 + $0x6d0] sm:$0xff]
        %v1628 = vld [vmem:[#allocation2 + $0x6d8] sm:$0xff]
        %v1629 = vld [vmem:[#allocation2 + $0x6e0] sm:$0xff]
        %v1630 = vld [vmem:[#allocation2 + $0x6e8] sm:$0xff]
        %v1631 = vld [vmem:[#allocation2 + $0x6f0] sm:$0xff]
        %v1632 = vld [vmem:[#allocation2 + $0x6f8] sm:$0xff]
        %v1633 = vld [vmem:[#allocation2 + $0x700] sm:$0xff]
        %v1634 = vld [vmem:[#allocation2 + $0x708] sm:$0xff]
        %v1635 = vld [vmem:[#allocation2 + $0x710] sm:$0xff]
        %v1636 = vld [vmem:[#allocation2 + $0x718] sm:$0xff]
        %v1637 = vld [vmem:[#allocation2 + $0x720] sm:$0xff]
        %v1638 = vld [vmem:[#allocation2 + $0x728] sm:$0xff]
        %v1639 = vld [vmem:[#allocation2 + $0x730] sm:$0xff]
        %v1640 = vld [vmem:[#allocation2 + $0x738] sm:$0xff]
        %v1641 = vld [vmem:[#allocation2 + $0x740] sm:$0xff]
        %v1642 = vld [vmem:[#allocation2 + $0x748] sm:$0xff]
        %v1643 = vld [vmem:[#allocation2 + $0x750] sm:$0xff]
        %v1644 = vld [vmem:[#allocation2 + $0x758] sm:$0xff]
        %v1645 = vld [vmem:[#allocation2 + $0x760] sm:$0xff]
        %v1646 = vld [vmem:[#allocation2 + $0x768] sm:$0xff]
        %v1647 = vld [vmem:[#allocation2 + $0x770] sm:$0xff]
        %v1648 = vld [vmem:[#allocation2 + $0x778] sm:$0xff]
        %v1649 = vld [vmem:[#allocation2 + $0x780] sm:$0xff]
        %v1650 = vld [vmem:[#allocation2 + $0x788] sm:$0xff]
        %v1651 = vld [vmem:[#allocation2 + $0x790] sm:$0xff]
        %v1652 = vld [vmem:[#allocation2 + $0x798] sm:$0xff]
        %v1653 = vld [vmem:[#allocation2 + $0x7a0] sm:$0xff]
        %v1654 = vld [vmem:[#allocation2 + $0x7a8] sm:$0xff]
        %v1655 = vld [vmem:[#allocation2 + $0x7b0] sm:$0xff]
        %v1656 = vld [vmem:[#allocation2 + $0x7b8] sm:$0xff]
        %v1657 = vld [vmem:[#allocation2 + $0x7c0] sm:$0xff]
        %v1658 = vld [vmem:[#allocation2 + $0x7c8] sm:$0xff]
        %v1659 = vld [vmem:[#allocation2 + $0x7d0] sm:$0xff]
        %v1660 = vld [vmem:[#allocation2 + $0x7d8] sm:$0xff]
        %v1661 = vld [vmem:[#allocation2 + $0x7e0] sm:$0xff]
        %v1662 = vld [vmem:[#allocation2 + $0x7e8] sm:$0xff]
        %v1663 = vld [vmem:[#allocation2 + $0x7f0] sm:$0xff]
        %v1664 = vld [vmem:[#allocation2 + $0x7f8] sm:$0xff]
        %v1665 = vld [vmem:[#allocation2 + $0x800] sm:$0xff]
        %v1666 = vld [vmem:[#allocation2 + $0x808] sm:$0xff]
        %v1667 = vld [vmem:[#allocation2 + $0x810] sm:$0xff]
        %v1668 = vld [vmem:[#allocation2 + $0x818] sm:$0xff]
        %v1669 = vld [vmem:[#allocation2 + $0x820] sm:$0xff]
        %v1670 = vld [vmem:[#allocation2 + $0x828] sm:$0xff]
        %v1671 = vld [vmem:[#allocation2 + $0x830] sm:$0xff]
        %v1672 = vld [vmem:[#allocation2 + $0x838] sm:$0xff]
        %v1673 = vld [vmem:[#allocation2 + $0x840] sm:$0xff]
        %v1674 = vld [vmem:[#allocation2 + $0x848] sm:$0xff]
        %v1675 = vld [vmem:[#allocation2 + $0x850] sm:$0xff]
        %v1676 = vld [vmem:[#allocation2 + $0x858] sm:$0xff]
        %v1677 = vld [vmem:[#allocation2 + $0x860] sm:$0xff]
        %v1678 = vld [vmem:[#allocation2 + $0x868] sm:$0xff]
        %v1679 = vld [vmem:[#allocation2 + $0x870] sm:$0xff]
        %v1680 = vld [vmem:[#allocation2 + $0x878] sm:$0xff]
        %v1681 = vld [vmem:[#allocation2 + $0x880] sm:$0xff]
        %v1682 = vld [vmem:[#allocation2 + $0x888] sm:$0xff]
        %v1683 = vld [vmem:[#allocation2 + $0x890] sm:$0xff]
        %v1684 = vld [vmem:[%s3] sm:$0xff]
        %1686 = vset.pattern.permute.xlu0 0
        %1687 = vperm.xlu0 %1686, %v1684
        %v1688 = vpop.permute.xlu0 %1687
        %vm1690 = vcmask 588800
        %v1692 = vsel %vm1690, %v1408, 0
        %1694 = vmatpush.msra.mxu0 %v1574
        %1695 = vmatpush.msra.mxu0 %v1563
        %1696 = vmatpush.msra.mxu0 %v1552
        %1697 = vmatpush.msra.mxu0 %v1541
        %1698 = vmatpush.msra.mxu0 %v1530
        %1699 = vmatpush.msra.mxu0 %v1519
        %1700 = vmatpush.msra.mxu0 %v1508
        %1701 = vmatpush.msra.mxu0 %v1497
        %1702 = vmatpush.msra.mxu0 %v1486
        %1703 = vmatpush.msra.mxu0 %v1475
        %1704 = vmatpush.msra.mxu0 %v1464
        %1705 = vmatpush.msra.mxu0 %v1453
        %1706 = vmatpush.msra.mxu0 %v1442
        %1707 = vmatpush.msra.mxu0 %v1431
        %1708 = vmatpush.msra.mxu0 %v1420
        %1709 = vmatpush.msra.mxu0 %v1409
        %1710 = vmatmul.f32.gmra.mxu0 %v1407
        %v1711 = vpop.f32.mrf.mxu0
        %v1712 = vadd.f32 %v1688, %v1711
        %1713 = vdwg.mxu0
        %1714 = vmatpush.msra.mxu0 0.0
        %1715 = vmatpush.msra.mxu0 0.0
        %1716 = vmatpush.msra.mxu0 0.0
        %1717 = vmatpush.msra.mxu0 0.0
        %1718 = vmatpush.msra.mxu0 0.0
        %1719 = vmatpush.msra.mxu0 0.0
        %1720 = vmatpush.msra.mxu0 0.0
        %1721 = vmatpush.msra.mxu0 %v1673
        %1722 = vmatpush.msra.mxu0 %v1662
        %1723 = vmatpush.msra.mxu0 %v1651
        %1724 = vmatpush.msra.mxu0 %v1640
        %1725 = vmatpush.msra.mxu0 %v1629
        %1726 = vmatpush.msra.mxu0 %v1618
        %1727 = vmatpush.msra.mxu0 %v1607
        %1728 = vmatpush.msra.mxu0 %v1596
        %1729 = vmatpush.msra.mxu0 %v1585
        %1730 = vmatmul.f32.gmra.mxu0 %v1692
        %v1731 = vpop.f32.mrf.mxu0
        %v1732 = vadd.f32 %v1712, %v1731
        %1733 = vdwg.mxu0
        %1734 = vmatpush.msra.mxu0 %v1575
        %1735 = vmatpush.msra.mxu0 %v1564
        %1736 = vmatpush.msra.mxu0 %v1553
        %1737 = vmatpush.msra.mxu0 %v1542
        %1738 = vmatpush.msra.mxu0 %v1531
        %1739 = vmatpush.msra.mxu0 %v1520
        %1740 = vmatpush.msra.mxu0 %v1509
        %1741 = vmatpush.msra.mxu0 %v1498
        %1742 = vmatpush.msra.mxu0 %v1487
        %1743 = vmatpush.msra.mxu0 %v1476
        %1744 = vmatpush.msra.mxu0 %v1465
        %1745 = vmatpush.msra.mxu0 %v1454
        %1746 = vmatpush.msra.mxu0 %v1443
        %1747 = vmatpush.msra.mxu0 %v1432
        %1748 = vmatpush.msra.mxu0 %v1421
        %1749 = vmatpush.msra.mxu0 %v1410
        %1750 = vmatmul.f32.gmra.mxu0 %v1407
        %v1751 = vpop.f32.mrf.mxu0
        %v1752 = vadd.f32 %v1688, %v1751
        %1753 = vdwg.mxu0
        %1754 = vmatpush.msra.mxu0 0.0
        %1755 = vmatpush.msra.mxu0 0.0
        %1756 = vmatpush.msra.mxu0 0.0
        %1757 = vmatpush.msra.mxu0 0.0
        %1758 = vmatpush.msra.mxu0 0.0
        %1759 = vmatpush.msra.mxu0 0.0
        %1760 = vmatpush.msra.mxu0 0.0
        %1761 = vmatpush.msra.mxu0 %v1674
        %1762 = vmatpush.msra.mxu0 %v1663
        %1763 = vmatpush.msra.mxu0 %v1652
        %1764 = vmatpush.msra.mxu0 %v1641
        %1765 = vmatpush.msra.mxu0 %v1630
        %1766 = vmatpush.msra.mxu0 %v1619
        %1767 = vmatpush.msra.mxu0 %v1608
        %1768 = vmatpush.msra.mxu0 %v1597
        %1769 = vmatpush.msra.mxu0 %v1586
        %1770 = vmatmul.f32.gmra.mxu0 %v1692
        %v1771 = vpop.f32.mrf.mxu0
        %v1772 = vadd.f32 %v1752, %v1771
        %1773 = vdwg.mxu0
        %1774 = vmatpush.msra.mxu0 %v1576
        %1775 = vmatpush.msra.mxu0 %v1565
        %1776 = vmatpush.msra.mxu0 %v1554
        %1777 = vmatpush.msra.mxu0 %v1543
        %1778 = vmatpush.msra.mxu0 %v1532
        %1779 = vmatpush.msra.mxu0 %v1521
        %1780 = vmatpush.msra.mxu0 %v1510
        %1781 = vmatpush.msra.mxu0 %v1499
        %1782 = vmatpush.msra.mxu0 %v1488
        %1783 = vmatpush.msra.mxu0 %v1477
        %1784 = vmatpush.msra.mxu0 %v1466
        %1785 = vmatpush.msra.mxu0 %v1455
        %1786 = vmatpush.msra.mxu0 %v1444
        %1787 = vmatpush.msra.mxu0 %v1433
        %1788 = vmatpush.msra.mxu0 %v1422
        %1789 = vmatpush.msra.mxu0 %v1411
        %1790 = vmatmul.f32.gmra.mxu0 %v1407
        %v1791 = vpop.f32.mrf.mxu0
        %v1792 = vadd.f32 %v1688, %v1791
        %1793 = vdwg.mxu0
        %1794 = vmatpush.msra.mxu0 0.0
        %1795 = vmatpush.msra.mxu0 0.0
        %1796 = vmatpush.msra.mxu0 0.0
        %1797 = vmatpush.msra.mxu0 0.0
        %1798 = vmatpush.msra.mxu0 0.0
        %1799 = vmatpush.msra.mxu0 0.0
        %1800 = vmatpush.msra.mxu0 0.0
        %1801 = vmatpush.msra.mxu0 %v1675
        %1802 = vmatpush.msra.mxu0 %v1664
        %1803 = vmatpush.msra.mxu0 %v1653
        %1804 = vmatpush.msra.mxu0 %v1642
        %1805 = vmatpush.msra.mxu0 %v1631
        %1806 = vmatpush.msra.mxu0 %v1620
        %1807 = vmatpush.msra.mxu0 %v1609
        %1808 = vmatpush.msra.mxu0 %v1598
        %1809 = vmatpush.msra.mxu0 %v1587
        %1810 = vmatmul.f32.gmra.mxu0 %v1692
        %v1811 = vpop.f32.mrf.mxu0
        %v1812 = vadd.f32 %v1792, %v1811
        %1813 = vdwg.mxu0
        %1814 = vmatpush.msra.mxu0 %v1577
        %1815 = vmatpush.msra.mxu0 %v1566
        %1816 = vmatpush.msra.mxu0 %v1555
        %1817 = vmatpush.msra.mxu0 %v1544
        %1818 = vmatpush.msra.mxu0 %v1533
        %1819 = vmatpush.msra.mxu0 %v1522
        %1820 = vmatpush.msra.mxu0 %v1511
        %1821 = vmatpush.msra.mxu0 %v1500
        %1822 = vmatpush.msra.mxu0 %v1489
        %1823 = vmatpush.msra.mxu0 %v1478
        %1824 = vmatpush.msra.mxu0 %v1467
        %1825 = vmatpush.msra.mxu0 %v1456
        %1826 = vmatpush.msra.mxu0 %v1445
        %1827 = vmatpush.msra.mxu0 %v1434
        %1828 = vmatpush.msra.mxu0 %v1423
        %1829 = vmatpush.msra.mxu0 %v1412
        %1830 = vmatmul.f32.gmra.mxu0 %v1407
        %v1831 = vpop.f32.mrf.mxu0
        %v1832 = vadd.f32 %v1688, %v1831
        %1833 = vdwg.mxu0
        %1834 = vmatpush.msra.mxu0 0.0
        %1835 = vmatpush.msra.mxu0 0.0
        %1836 = vmatpush.msra.mxu0 0.0
        %1837 = vmatpush.msra.mxu0 0.0
        %1838 = vmatpush.msra.mxu0 0.0
        %1839 = vmatpush.msra.mxu0 0.0
        %1840 = vmatpush.msra.mxu0 0.0
        %1841 = vmatpush.msra.mxu0 %v1676
        %1842 = vmatpush.msra.mxu0 %v1665
        %1843 = vmatpush.msra.mxu0 %v1654
        %1844 = vmatpush.msra.mxu0 %v1643
        %1845 = vmatpush.msra.mxu0 %v1632
        %1846 = vmatpush.msra.mxu0 %v1621
        %1847 = vmatpush.msra.mxu0 %v1610
        %1848 = vmatpush.msra.mxu0 %v1599
        %1849 = vmatpush.msra.mxu0 %v1588
        %1850 = vmatmul.f32.gmra.mxu0 %v1692
        %v1851 = vpop.f32.mrf.mxu0
        %v1852 = vadd.f32 %v1832, %v1851
        %1853 = vdwg.mxu0
        %1854 = vmatpush.msra.mxu0 %v1578
        %1855 = vmatpush.msra.mxu0 %v1567
        %1856 = vmatpush.msra.mxu0 %v1556
        %1857 = vmatpush.msra.mxu0 %v1545
        %1858 = vmatpush.msra.mxu0 %v1534
        %1859 = vmatpush.msra.mxu0 %v1523
        %1860 = vmatpush.msra.mxu0 %v1512
        %1861 = vmatpush.msra.mxu0 %v1501
        %1862 = vmatpush.msra.mxu0 %v1490
        %1863 = vmatpush.msra.mxu0 %v1479
        %1864 = vmatpush.msra.mxu0 %v1468
        %1865 = vmatpush.msra.mxu0 %v1457
        %1866 = vmatpush.msra.mxu0 %v1446
        %1867 = vmatpush.msra.mxu0 %v1435
        %1868 = vmatpush.msra.mxu0 %v1424
        %1869 = vmatpush.msra.mxu0 %v1413
        %1870 = vmatmul.f32.gmra.mxu0 %v1407
        %v1871 = vpop.f32.mrf.mxu0
        %v1872 = vadd.f32 %v1688, %v1871
        %1873 = vdwg.mxu0
        %1874 = vmatpush.msra.mxu0 0.0
        %1875 = vmatpush.msra.mxu0 0.0
        %1876 = vmatpush.msra.mxu0 0.0
        %1877 = vmatpush.msra.mxu0 0.0
        %1878 = vmatpush.msra.mxu0 0.0
        %1879 = vmatpush.msra.mxu0 0.0
        %1880 = vmatpush.msra.mxu0 0.0
        %1881 = vmatpush.msra.mxu0 %v1677
        %1882 = vmatpush.msra.mxu0 %v1666
        %1883 = vmatpush.msra.mxu0 %v1655
        %1884 = vmatpush.msra.mxu0 %v1644
        %1885 = vmatpush.msra.mxu0 %v1633
        %1886 = vmatpush.msra.mxu0 %v1622
        %1887 = vmatpush.msra.mxu0 %v1611
        %1888 = vmatpush.msra.mxu0 %v1600
        %1889 = vmatpush.msra.mxu0 %v1589
        %1890 = vmatmul.f32.gmra.mxu0 %v1692
        %v1891 = vpop.f32.mrf.mxu0
        %v1892 = vadd.f32 %v1872, %v1891
        %1893 = vdwg.mxu0
        %1894 = vmatpush.msra.mxu0 %v1579
        %1895 = vmatpush.msra.mxu0 %v1568
        %1896 = vmatpush.msra.mxu0 %v1557
        %1897 = vmatpush.msra.mxu0 %v1546
        %1898 = vmatpush.msra.mxu0 %v1535
        %1899 = vmatpush.msra.mxu0 %v1524
        %1900 = vmatpush.msra.mxu0 %v1513
        %1901 = vmatpush.msra.mxu0 %v1502
        %1902 = vmatpush.msra.mxu0 %v1491
        %1903 = vmatpush.msra.mxu0 %v1480
        %1904 = vmatpush.msra.mxu0 %v1469
        %1905 = vmatpush.msra.mxu0 %v1458
        %1906 = vmatpush.msra.mxu0 %v1447
        %1907 = vmatpush.msra.mxu0 %v1436
        %1908 = vmatpush.msra.mxu0 %v1425
        %1909 = vmatpush.msra.mxu0 %v1414
        %1910 = vmatmul.f32.gmra.mxu0 %v1407
        %v1911 = vpop.f32.mrf.mxu0
        %v1912 = vadd.f32 %v1688, %v1911
        %1913 = vdwg.mxu0
        %1914 = vmatpush.msra.mxu0 0.0
        %1915 = vmatpush.msra.mxu0 0.0
        %1916 = vmatpush.msra.mxu0 0.0
        %1917 = vmatpush.msra.mxu0 0.0
        %1918 = vmatpush.msra.mxu0 0.0
        %1919 = vmatpush.msra.mxu0 0.0
        %1920 = vmatpush.msra.mxu0 0.0
        %1921 = vmatpush.msra.mxu0 %v1678
        %1922 = vmatpush.msra.mxu0 %v1667
        %1923 = vmatpush.msra.mxu0 %v1656
        %1924 = vmatpush.msra.mxu0 %v1645
        %1925 = vmatpush.msra.mxu0 %v1634
        %1926 = vmatpush.msra.mxu0 %v1623
        %1927 = vmatpush.msra.mxu0 %v1612
        %1928 = vmatpush.msra.mxu0 %v1601
        %1929 = vmatpush.msra.mxu0 %v1590
        %1930 = vmatmul.f32.gmra.mxu0 %v1692
        %v1931 = vpop.f32.mrf.mxu0
        %v1932 = vadd.f32 %v1912, %v1931
        %1933 = vdwg.mxu0
        %1934 = vmatpush.msra.mxu0 %v1580
        %1935 = vmatpush.msra.mxu0 %v1569
        %1936 = vmatpush.msra.mxu0 %v1558
        %1937 = vmatpush.msra.mxu0 %v1547
        %1938 = vmatpush.msra.mxu0 %v1536
        %1939 = vmatpush.msra.mxu0 %v1525
        %1940 = vmatpush.msra.mxu0 %v1514
        %1941 = vmatpush.msra.mxu0 %v1503
        %1942 = vmatpush.msra.mxu0 %v1492
        %1943 = vmatpush.msra.mxu0 %v1481
        %1944 = vmatpush.msra.mxu0 %v1470
        %1945 = vmatpush.msra.mxu0 %v1459
        %1946 = vmatpush.msra.mxu0 %v1448
        %1947 = vmatpush.msra.mxu0 %v1437
        %1948 = vmatpush.msra.mxu0 %v1426
        %1949 = vmatpush.msra.mxu0 %v1415
        %1950 = vmatmul.f32.gmra.mxu0 %v1407
        %v1951 = vpop.f32.mrf.mxu0
        %v1952 = vadd.f32 %v1688, %v1951
        %1953 = vdwg.mxu0
        %1954 = vmatpush.msra.mxu0 0.0
        %1955 = vmatpush.msra.mxu0 0.0
        %1956 = vmatpush.msra.mxu0 0.0
        %1957 = vmatpush.msra.mxu0 0.0
        %1958 = vmatpush.msra.mxu0 0.0
        %1959 = vmatpush.msra.mxu0 0.0
        %1960 = vmatpush.msra.mxu0 0.0
        %1961 = vmatpush.msra.mxu0 %v1679
        %1962 = vmatpush.msra.mxu0 %v1668
        %1963 = vmatpush.msra.mxu0 %v1657
        %1964 = vmatpush.msra.mxu0 %v1646
        %1965 = vmatpush.msra.mxu0 %v1635
        %1966 = vmatpush.msra.mxu0 %v1624
        %1967 = vmatpush.msra.mxu0 %v1613
        %1968 = vmatpush.msra.mxu0 %v1602
        %1969 = vmatpush.msra.mxu0 %v1591
        %1970 = vmatmul.f32.gmra.mxu0 %v1692
        %v1971 = vpop.f32.mrf.mxu0
        %v1972 = vadd.f32 %v1952, %v1971
        %1973 = vdwg.mxu0
        %1974 = vmatpush.msra.mxu0 %v1581
        %1975 = vmatpush.msra.mxu0 %v1570
        %1976 = vmatpush.msra.mxu0 %v1559
        %1977 = vmatpush.msra.mxu0 %v1548
        %1978 = vmatpush.msra.mxu0 %v1537
        %1979 = vmatpush.msra.mxu0 %v1526
        %1980 = vmatpush.msra.mxu0 %v1515
        %1981 = vmatpush.msra.mxu0 %v1504
        %1982 = vmatpush.msra.mxu0 %v1493
        %1983 = vmatpush.msra.mxu0 %v1482
        %1984 = vmatpush.msra.mxu0 %v1471
        %1985 = vmatpush.msra.mxu0 %v1460
        %1986 = vmatpush.msra.mxu0 %v1449
        %1987 = vmatpush.msra.mxu0 %v1438
        %1988 = vmatpush.msra.mxu0 %v1427
        %1989 = vmatpush.msra.mxu0 %v1416
        %1990 = vmatmul.f32.gmra.mxu0 %v1407
        %v1991 = vpop.f32.mrf.mxu0
        %v1992 = vadd.f32 %v1688, %v1991
        %1993 = vdwg.mxu0
        %1994 = vmatpush.msra.mxu0 0.0
        %1995 = vmatpush.msra.mxu0 0.0
        %1996 = vmatpush.msra.mxu0 0.0
        %1997 = vmatpush.msra.mxu0 0.0
        %1998 = vmatpush.msra.mxu0 0.0
        %1999 = vmatpush.msra.mxu0 0.0
        %2000 = vmatpush.msra.mxu0 0.0
        %2001 = vmatpush.msra.mxu0 %v1680
        %2002 = vmatpush.msra.mxu0 %v1669
        %2003 = vmatpush.msra.mxu0 %v1658
        %2004 = vmatpush.msra.mxu0 %v1647
        %2005 = vmatpush.msra.mxu0 %v1636
        %2006 = vmatpush.msra.mxu0 %v1625
        %2007 = vmatpush.msra.mxu0 %v1614
        %2008 = vmatpush.msra.mxu0 %v1603
        %2009 = vmatpush.msra.mxu0 %v1592
        %2010 = vmatmul.f32.gmra.mxu0 %v1692
        %v2011 = vpop.f32.mrf.mxu0
        %v2012 = vadd.f32 %v1992, %v2011
        %2013 = vdwg.mxu0
        %2014 = vmatpush.msra.mxu0 %v1582
        %2015 = vmatpush.msra.mxu0 %v1571
        %2016 = vmatpush.msra.mxu0 %v1560
        %2017 = vmatpush.msra.mxu0 %v1549
        %2018 = vmatpush.msra.mxu0 %v1538
        %2019 = vmatpush.msra.mxu0 %v1527
        %2020 = vmatpush.msra.mxu0 %v1516
        %2021 = vmatpush.msra.mxu0 %v1505
        %2022 = vmatpush.msra.mxu0 %v1494
        %2023 = vmatpush.msra.mxu0 %v1483
        %2024 = vmatpush.msra.mxu0 %v1472
        %2025 = vmatpush.msra.mxu0 %v1461
        %2026 = vmatpush.msra.mxu0 %v1450
        %2027 = vmatpush.msra.mxu0 %v1439
        %2028 = vmatpush.msra.mxu0 %v1428
        %2029 = vmatpush.msra.mxu0 %v1417
        %2030 = vmatmul.f32.gmra.mxu0 %v1407
        %v2031 = vpop.f32.mrf.mxu0
        %v2032 = vadd.f32 %v1688, %v2031
        %2033 = vdwg.mxu0
        %2034 = vmatpush.msra.mxu0 0.0
        %2035 = vmatpush.msra.mxu0 0.0
        %2036 = vmatpush.msra.mxu0 0.0
        %2037 = vmatpush.msra.mxu0 0.0
        %2038 = vmatpush.msra.mxu0 0.0
        %2039 = vmatpush.msra.mxu0 0.0
        %2040 = vmatpush.msra.mxu0 0.0
        %2041 = vmatpush.msra.mxu0 %v1681
        %2042 = vmatpush.msra.mxu0 %v1670
        %2043 = vmatpush.msra.mxu0 %v1659
        %2044 = vmatpush.msra.mxu0 %v1648
        %2045 = vmatpush.msra.mxu0 %v1637
        %2046 = vmatpush.msra.mxu0 %v1626
        %2047 = vmatpush.msra.mxu0 %v1615
        %2048 = vmatpush.msra.mxu0 %v1604
        %2049 = vmatpush.msra.mxu0 %v1593
        %2050 = vmatmul.f32.gmra.mxu0 %v1692
        %v2051 = vpop.f32.mrf.mxu0
        %v2052 = vadd.f32 %v2032, %v2051
        %2053 = vdwg.mxu0
        %2054 = vmatpush.msra.mxu0 %v1583
        %2055 = vmatpush.msra.mxu0 %v1572
        %2056 = vmatpush.msra.mxu0 %v1561
        %2057 = vmatpush.msra.mxu0 %v1550
        %2058 = vmatpush.msra.mxu0 %v1539
        %2059 = vmatpush.msra.mxu0 %v1528
        %2060 = vmatpush.msra.mxu0 %v1517
        %2061 = vmatpush.msra.mxu0 %v1506
        %2062 = vmatpush.msra.mxu0 %v1495
        %2063 = vmatpush.msra.mxu0 %v1484
        %2064 = vmatpush.msra.mxu0 %v1473
        %2065 = vmatpush.msra.mxu0 %v1462
        %2066 = vmatpush.msra.mxu0 %v1451
        %2067 = vmatpush.msra.mxu0 %v1440
        %2068 = vmatpush.msra.mxu0 %v1429
        %2069 = vmatpush.msra.mxu0 %v1418
        %2070 = vmatmul.f32.gmra.mxu0 %v1407
        %v2071 = vpop.f32.mrf.mxu0
        %v2072 = vadd.f32 %v1688, %v2071
        %2073 = vdwg.mxu0
        %2074 = vmatpush.msra.mxu0 0.0
        %2075 = vmatpush.msra.mxu0 0.0
        %2076 = vmatpush.msra.mxu0 0.0
        %2077 = vmatpush.msra.mxu0 0.0
        %2078 = vmatpush.msra.mxu0 0.0
        %2079 = vmatpush.msra.mxu0 0.0
        %2080 = vmatpush.msra.mxu0 0.0
        %2081 = vmatpush.msra.mxu0 %v1682
        %2082 = vmatpush.msra.mxu0 %v1671
        %2083 = vmatpush.msra.mxu0 %v1660
        %2084 = vmatpush.msra.mxu0 %v1649
        %2085 = vmatpush.msra.mxu0 %v1638
        %2086 = vmatpush.msra.mxu0 %v1627
        %2087 = vmatpush.msra.mxu0 %v1616
        %2088 = vmatpush.msra.mxu0 %v1605
        %2089 = vmatpush.msra.mxu0 %v1594
        %2090 = vmatmul.f32.gmra.mxu0 %v1692
        %v2091 = vpop.f32.mrf.mxu0
        %v2092 = vadd.f32 %v2072, %v2091
        %2093 = vdwg.mxu0
        %2094 = vmatpush.msra.mxu0 %v1584
        %2095 = vmatpush.msra.mxu0 %v1573
        %2096 = vmatpush.msra.mxu0 %v1562
        %2097 = vmatpush.msra.mxu0 %v1551
        %2098 = vmatpush.msra.mxu0 %v1540
        %2099 = vmatpush.msra.mxu0 %v1529
        %2100 = vmatpush.msra.mxu0 %v1518
        %2101 = vmatpush.msra.mxu0 %v1507
        %2102 = vmatpush.msra.mxu0 %v1496
        %2103 = vmatpush.msra.mxu0 %v1485
        %2104 = vmatpush.msra.mxu0 %v1474
        %2105 = vmatpush.msra.mxu0 %v1463
        %2106 = vmatpush.msra.mxu0 %v1452
        %2107 = vmatpush.msra.mxu0 %v1441
        %2108 = vmatpush.msra.mxu0 %v1430
        %2109 = vmatpush.msra.mxu0 %v1419
        %2110 = vmatmul.f32.gmra.mxu0 %v1407
        %v2111 = vpop.f32.mrf.mxu0
        %v2112 = vadd.f32 %v1688, %v2111
        %2113 = vdwg.mxu0
        %2114 = vmatpush.msra.mxu0 0.0
        %2115 = vmatpush.msra.mxu0 0.0
        %2116 = vmatpush.msra.mxu0 0.0
        %2117 = vmatpush.msra.mxu0 0.0
        %2118 = vmatpush.msra.mxu0 0.0
        %2119 = vmatpush.msra.mxu0 0.0
        %2120 = vmatpush.msra.mxu0 0.0
        %2121 = vmatpush.msra.mxu0 %v1683
        %2122 = vmatpush.msra.mxu0 %v1672
        %2123 = vmatpush.msra.mxu0 %v1661
        %2124 = vmatpush.msra.mxu0 %v1650
        %2125 = vmatpush.msra.mxu0 %v1639
        %2126 = vmatpush.msra.mxu0 %v1628
        %2127 = vmatpush.msra.mxu0 %v1617
        %2128 = vmatpush.msra.mxu0 %v1606
        %2129 = vmatpush.msra.mxu0 %v1595
        %2130 = vmatmul.f32.gmra.mxu0 %v1692
        %v2131 = vpop.f32.mrf.mxu0
        %v2132 = vadd.f32 %v2112, %v2131
        %2133 = vdwg.mxu0
        %v2134 = vmax.f32 %v1732, 0.0
        %v2135 = vmax.f32 %v1772, 0.0
        %v2136 = vmax.f32 %v1812, 0.0
        %v2137 = vmax.f32 %v1852, 0.0
        %v2138 = vmax.f32 %v1892, 0.0
        %v2139 = vmax.f32 %v1932, 0.0
        %v2140 = vmax.f32 %v1972, 0.0
        %v2141 = vmax.f32 %v2012, 0.0
        %v2142 = vmax.f32 %v2052, 0.0
        %v2143 = vmax.f32 %v2092, 0.0
        %v2144 = vmax.f32 %v2132, 0.0
        %v2145 = vld [vmem:[%s1] sm:$0xff]
        %v2146 = vld [vmem:[%s1 + $0x8] sm:$0x7]
        %v2149 = vperm.slane %v2145, 0
        %v2150 = vperm.slane %v2145, 1
        %v2151 = vperm.slane %v2145, 2
        %v2152 = vperm.slane %v2145, 3
        %v2153 = vperm.slane %v2145, 4
        %v2154 = vperm.slane %v2145, 5
        %v2155 = vperm.slane %v2145, 6
        %v2156 = vperm.slane %v2145, 7
        %v2157 = vperm.slane %v2146, 0
        %v2158 = vperm.slane %v2146, 1
        %v2159 = vperm.slane %v2146, 2
        %v2171 = vmul.f32 %v2134, %v2149
        %v2172 = vmul.f32 %v2135, %v2150
        %v2173 = vmul.f32 %v2136, %v2151
        %v2174 = vmul.f32 %v2137, %v2152
        %v2175 = vmul.f32 %v2138, %v2153
        %v2176 = vmul.f32 %v2139, %v2154
        %v2177 = vmul.f32 %v2140, %v2155
        %v2178 = vmul.f32 %v2141, %v2156
        %v2179 = vmul.f32 %v2142, %v2157
        %v2180 = vmul.f32 %v2143, %v2158
        %v2181 = vmul.f32 %v2144, %v2159
        %2182 = vrot.lane.b32.xlu0 %v2171, 74
        %v2183 = vpop.permute.xlu0 %2182
        %2184 = vrot.lane.b32.xlu0 %v2172, 74
        %v2185 = vpop.permute.xlu0 %2184
        %2186 = vrot.lane.b32.xlu0 %v2173, 74
        %v2187 = vpop.permute.xlu0 %2186
        %2188 = vrot.lane.b32.xlu0 %v2174, 74
        %v2189 = vpop.permute.xlu0 %2188
        %2190 = vrot.lane.b32.xlu0 %v2175, 74
        %v2191 = vpop.permute.xlu0 %2190
        %2192 = vrot.lane.b32.xlu0 %v2176, 74
        %v2193 = vpop.permute.xlu0 %2192
        %2194 = vrot.lane.b32.xlu0 %v2177, 74
        %v2195 = vpop.permute.xlu0 %2194
        %2196 = vrot.lane.b32.xlu0 %v2178, 74
        %v2197 = vpop.permute.xlu0 %2196
        %2198 = vrot.lane.b32.xlu0 %v2179, 74
        %v2199 = vpop.permute.xlu0 %2198
        %2200 = vrot.lane.b32.xlu0 %v2180, 74
        %v2201 = vpop.permute.xlu0 %2200
        %2202 = vrot.lane.b32.xlu0 %v2181, 74
        %v2203 = vpop.permute.xlu0 %2202
        %v2204 = vsel %vm338, %v2201, %v2203
        %v2205 = vsel %vm338, %v2199, %v2201
        %v2206 = vsel %vm338, %v2197, %v2199
        %v2207 = vsel %vm338, %v2195, %v2197
        %v2208 = vsel %vm338, %v2193, %v2195
        %v2209 = vsel %vm338, %v2191, %v2193
        %v2210 = vsel %vm338, %v2189, %v2191
        %v2211 = vsel %vm338, %v2187, %v2189
        %v2212 = vsel %vm338, %v2185, %v2187
        %v2213 = vsel %vm338, %v2183, %v2185
        %v2214 = vsel %vm338, %v2203, %v2183
        %2215 = vst [vmem:[#allocation2] sm:$0xff] %v2214
        %2216 = vst [vmem:[#allocation2 + $0x8] sm:$0xff] %v2213
        %2217 = vst [vmem:[#allocation2 + $0x10] sm:$0xff] %v2212
        %2218 = vst [vmem:[#allocation2 + $0x18] sm:$0xff] %v2211
        %2219 = vst [vmem:[#allocation2 + $0x20] sm:$0xff] %v2210
        %2220 = vst [vmem:[#allocation2 + $0x28] sm:$0xff] %v2209
        %2221 = vst [vmem:[#allocation2 + $0x30] sm:$0xff] %v2208
        %2222 = vst [vmem:[#allocation2 + $0x38] sm:$0xff] %v2207
        %2223 = vst [vmem:[#allocation2 + $0x40] sm:$0xff] %v2206
        %2224 = vst [vmem:[#allocation2 + $0x48] sm:$0xff] %v2205
        %2225 = vst [vmem:[#allocation2 + $0x50] sm:$0xff] %v2204
        %2226 = vrot.lane.b32.xlu0 %v2171, 73
        %v2227 = vpop.permute.xlu0 %2226
        %2228 = vrot.lane.b32.xlu0 %v2172, 73
        %v2229 = vpop.permute.xlu0 %2228
        %2230 = vrot.lane.b32.xlu0 %v2173, 73
        %v2231 = vpop.permute.xlu0 %2230
        %2232 = vrot.lane.b32.xlu0 %v2174, 73
        %v2233 = vpop.permute.xlu0 %2232
        %2234 = vrot.lane.b32.xlu0 %v2175, 73
        %v2235 = vpop.permute.xlu0 %2234
        %2236 = vrot.lane.b32.xlu0 %v2176, 73
        %v2237 = vpop.permute.xlu0 %2236
        %2238 = vrot.lane.b32.xlu0 %v2177, 73
        %v2239 = vpop.permute.xlu0 %2238
        %2240 = vrot.lane.b32.xlu0 %v2178, 73
        %v2241 = vpop.permute.xlu0 %2240
        %2242 = vrot.lane.b32.xlu0 %v2179, 73
        %v2243 = vpop.permute.xlu0 %2242
        %2244 = vrot.lane.b32.xlu0 %v2180, 73
        %v2245 = vpop.permute.xlu0 %2244
        %2246 = vrot.lane.b32.xlu0 %v2181, 73
        %v2247 = vpop.permute.xlu0 %2246
        %v2248 = vsel %vm383, %v2245, %v2247
        %v2249 = vsel %vm383, %v2243, %v2245
        %v2250 = vsel %vm383, %v2241, %v2243
        %v2251 = vsel %vm383, %v2239, %v2241
        %v2252 = vsel %vm383, %v2237, %v2239
        %v2253 = vsel %vm383, %v2235, %v2237
        %v2254 = vsel %vm383, %v2233, %v2235
        %v2255 = vsel %vm383, %v2231, %v2233
        %v2256 = vsel %vm383, %v2229, %v2231
        %v2257 = vsel %vm383, %v2227, %v2229
        %v2258 = vsel %vm383, %v2247, %v2227
        %2259 = vst [vmem:[#allocation2 + $0x58] sm:$0xff] %v2258
        %2260 = vst [vmem:[#allocation2 + $0x60] sm:$0xff] %v2257
        %2261 = vst [vmem:[#allocation2 + $0x68] sm:$0xff] %v2256
        %2262 = vst [vmem:[#allocation2 + $0x70] sm:$0xff] %v2255
        %2263 = vst [vmem:[#allocation2 + $0x78] sm:$0xff] %v2254
        %2264 = vst [vmem:[#allocation2 + $0x80] sm:$0xff] %v2253
        %2265 = vst [vmem:[#allocation2 + $0x88] sm:$0xff] %v2252
        %2266 = vst [vmem:[#allocation2 + $0x90] sm:$0xff] %v2251
        %2267 = vst [vmem:[#allocation2 + $0x98] sm:$0xff] %v2250
        %2268 = vst [vmem:[#allocation2 + $0xa0] sm:$0xff] %v2249
        %2269 = vst [vmem:[#allocation2 + $0xa8] sm:$0xff] %v2248
        %2270 = vrot.lane.b32.xlu0 %v2171, 72
        %v2271 = vpop.permute.xlu0 %2270
        %2272 = vrot.lane.b32.xlu0 %v2172, 72
        %v2273 = vpop.permute.xlu0 %2272
        %2274 = vrot.lane.b32.xlu0 %v2173, 72
        %v2275 = vpop.permute.xlu0 %2274
        %2276 = vrot.lane.b32.xlu0 %v2174, 72
        %v2277 = vpop.permute.xlu0 %2276
        %2278 = vrot.lane.b32.xlu0 %v2175, 72
        %v2279 = vpop.permute.xlu0 %2278
        %2280 = vrot.lane.b32.xlu0 %v2176, 72
        %v2281 = vpop.permute.xlu0 %2280
        %2282 = vrot.lane.b32.xlu0 %v2177, 72
        %v2283 = vpop.permute.xlu0 %2282
        %2284 = vrot.lane.b32.xlu0 %v2178, 72
        %v2285 = vpop.permute.xlu0 %2284
        %2286 = vrot.lane.b32.xlu0 %v2179, 72
        %v2287 = vpop.permute.xlu0 %2286
        %2288 = vrot.lane.b32.xlu0 %v2180, 72
        %v2289 = vpop.permute.xlu0 %2288
        %2290 = vrot.lane.b32.xlu0 %v2181, 72
        %v2291 = vpop.permute.xlu0 %2290
        %v2292 = vsel %vm428, %v2289, %v2291
        %v2293 = vsel %vm428, %v2287, %v2289
        %v2294 = vsel %vm428, %v2285, %v2287
        %v2295 = vsel %vm428, %v2283, %v2285
        %v2296 = vsel %vm428, %v2281, %v2283
        %v2297 = vsel %vm428, %v2279, %v2281
        %v2298 = vsel %vm428, %v2277, %v2279
        %v2299 = vsel %vm428, %v2275, %v2277
        %v2300 = vsel %vm428, %v2273, %v2275
        %v2301 = vsel %vm428, %v2271, %v2273
        %v2302 = vsel %vm428, %v2291, %v2271
        %2303 = vst [vmem:[#allocation2 + $0xb0] sm:$0xff] %v2302
        %2304 = vst [vmem:[#allocation2 + $0xb8] sm:$0xff] %v2301
        %2305 = vst [vmem:[#allocation2 + $0xc0] sm:$0xff] %v2300
        %2306 = vst [vmem:[#allocation2 + $0xc8] sm:$0xff] %v2299
        %2307 = vst [vmem:[#allocation2 + $0xd0] sm:$0xff] %v2298
        %2308 = vst [vmem:[#allocation2 + $0xd8] sm:$0xff] %v2297
        %2309 = vst [vmem:[#allocation2 + $0xe0] sm:$0xff] %v2296
        %2310 = vst [vmem:[#allocation2 + $0xe8] sm:$0xff] %v2295
        %2311 = vst [vmem:[#allocation2 + $0xf0] sm:$0xff] %v2294
        %2312 = vst [vmem:[#allocation2 + $0xf8] sm:$0xff] %v2293
        %2313 = vst [vmem:[#allocation2 + $0x100] sm:$0xff] %v2292
        %2314 = vrot.lane.b32.xlu0 %v2171, 71
        %v2315 = vpop.permute.xlu0 %2314
        %2316 = vrot.lane.b32.xlu0 %v2172, 71
        %v2317 = vpop.permute.xlu0 %2316
        %2318 = vrot.lane.b32.xlu0 %v2173, 71
        %v2319 = vpop.permute.xlu0 %2318
        %2320 = vrot.lane.b32.xlu0 %v2174, 71
        %v2321 = vpop.permute.xlu0 %2320
        %2322 = vrot.lane.b32.xlu0 %v2175, 71
        %v2323 = vpop.permute.xlu0 %2322
        %2324 = vrot.lane.b32.xlu0 %v2176, 71
        %v2325 = vpop.permute.xlu0 %2324
        %2326 = vrot.lane.b32.xlu0 %v2177, 71
        %v2327 = vpop.permute.xlu0 %2326
        %2328 = vrot.lane.b32.xlu0 %v2178, 71
        %v2329 = vpop.permute.xlu0 %2328
        %2330 = vrot.lane.b32.xlu0 %v2179, 71
        %v2331 = vpop.permute.xlu0 %2330
        %2332 = vrot.lane.b32.xlu0 %v2180, 71
        %v2333 = vpop.permute.xlu0 %2332
        %2334 = vrot.lane.b32.xlu0 %v2181, 71
        %v2335 = vpop.permute.xlu0 %2334
        %v2336 = vsel %vm473, %v2333, %v2335
        %v2337 = vsel %vm473, %v2331, %v2333
        %v2338 = vsel %vm473, %v2329, %v2331
        %v2339 = vsel %vm473, %v2327, %v2329
        %v2340 = vsel %vm473, %v2325, %v2327
        %v2341 = vsel %vm473, %v2323, %v2325
        %v2342 = vsel %vm473, %v2321, %v2323
        %v2343 = vsel %vm473, %v2319, %v2321
        %v2344 = vsel %vm473, %v2317, %v2319
        %v2345 = vsel %vm473, %v2315, %v2317
        %v2346 = vsel %vm473, %v2335, %v2315
        %2347 = vst [vmem:[#allocation2 + $0x108] sm:$0xff] %v2346
        %2348 = vst [vmem:[#allocation2 + $0x110] sm:$0xff] %v2345
        %2349 = vst [vmem:[#allocation2 + $0x118] sm:$0xff] %v2344
        %2350 = vst [vmem:[#allocation2 + $0x120] sm:$0xff] %v2343
        %2351 = vst [vmem:[#allocation2 + $0x128] sm:$0xff] %v2342
        %2352 = vst [vmem:[#allocation2 + $0x130] sm:$0xff] %v2341
        %2353 = vst [vmem:[#allocation2 + $0x138] sm:$0xff] %v2340
        %2354 = vst [vmem:[#allocation2 + $0x140] sm:$0xff] %v2339
        %2355 = vst [vmem:[#allocation2 + $0x148] sm:$0xff] %v2338
        %2356 = vst [vmem:[#allocation2 + $0x150] sm:$0xff] %v2337
        %2357 = vst [vmem:[#allocation2 + $0x158] sm:$0xff] %v2336
        %2358 = vrot.lane.b32.xlu0 %v2171, 70
        %v2359 = vpop.permute.xlu0 %2358
        %2360 = vrot.lane.b32.xlu0 %v2172, 70
        %v2361 = vpop.permute.xlu0 %2360
        %2362 = vrot.lane.b32.xlu0 %v2173, 70
        %v2363 = vpop.permute.xlu0 %2362
        %2364 = vrot.lane.b32.xlu0 %v2174, 70
        %v2365 = vpop.permute.xlu0 %2364
        %2366 = vrot.lane.b32.xlu0 %v2175, 70
        %v2367 = vpop.permute.xlu0 %2366
        %2368 = vrot.lane.b32.xlu0 %v2176, 70
        %v2369 = vpop.permute.xlu0 %2368
        %2370 = vrot.lane.b32.xlu0 %v2177, 70
        %v2371 = vpop.permute.xlu0 %2370
        %2372 = vrot.lane.b32.xlu0 %v2178, 70
        %v2373 = vpop.permute.xlu0 %2372
        %2374 = vrot.lane.b32.xlu0 %v2179, 70
        %v2375 = vpop.permute.xlu0 %2374
        %2376 = vrot.lane.b32.xlu0 %v2180, 70
        %v2377 = vpop.permute.xlu0 %2376
        %2378 = vrot.lane.b32.xlu0 %v2181, 70
        %v2379 = vpop.permute.xlu0 %2378
        %v2380 = vsel %vm518, %v2377, %v2379
        %v2381 = vsel %vm518, %v2375, %v2377
        %v2382 = vsel %vm518, %v2373, %v2375
        %v2383 = vsel %vm518, %v2371, %v2373
        %v2384 = vsel %vm518, %v2369, %v2371
        %v2385 = vsel %vm518, %v2367, %v2369
        %v2386 = vsel %vm518, %v2365, %v2367
        %v2387 = vsel %vm518, %v2363, %v2365
        %v2388 = vsel %vm518, %v2361, %v2363
        %v2389 = vsel %vm518, %v2359, %v2361
        %v2390 = vsel %vm518, %v2379, %v2359
        %2391 = vst [vmem:[#allocation2 + $0x160] sm:$0xff] %v2390
        %2392 = vst [vmem:[#allocation2 + $0x168] sm:$0xff] %v2389
        %2393 = vst [vmem:[#allocation2 + $0x170] sm:$0xff] %v2388
        %2394 = vst [vmem:[#allocation2 + $0x178] sm:$0xff] %v2387
        %2395 = vst [vmem:[#allocation2 + $0x180] sm:$0xff] %v2386
        %2396 = vst [vmem:[#allocation2 + $0x188] sm:$0xff] %v2385
        %2397 = vst [vmem:[#allocation2 + $0x190] sm:$0xff] %v2384
        %2398 = vst [vmem:[#allocation2 + $0x198] sm:$0xff] %v2383
        %2399 = vst [vmem:[#allocation2 + $0x1a0] sm:$0xff] %v2382
        %2400 = vst [vmem:[#allocation2 + $0x1a8] sm:$0xff] %v2381
        %2401 = vst [vmem:[#allocation2 + $0x1b0] sm:$0xff] %v2380
        %2402 = vrot.lane.b32.xlu0 %v2171, 38
        %v2403 = vpop.permute.xlu0 %2402
        %2404 = vrot.lane.b32.xlu0 %v2172, 38
        %v2405 = vpop.permute.xlu0 %2404
        %2406 = vrot.lane.b32.xlu0 %v2173, 38
        %v2407 = vpop.permute.xlu0 %2406
        %2408 = vrot.lane.b32.xlu0 %v2174, 38
        %v2409 = vpop.permute.xlu0 %2408
        %2410 = vrot.lane.b32.xlu0 %v2175, 38
        %v2411 = vpop.permute.xlu0 %2410
        %2412 = vrot.lane.b32.xlu0 %v2176, 38
        %v2413 = vpop.permute.xlu0 %2412
        %2414 = vrot.lane.b32.xlu0 %v2177, 38
        %v2415 = vpop.permute.xlu0 %2414
        %2416 = vrot.lane.b32.xlu0 %v2178, 38
        %v2417 = vpop.permute.xlu0 %2416
        %2418 = vrot.lane.b32.xlu0 %v2179, 38
        %v2419 = vpop.permute.xlu0 %2418
        %2420 = vrot.lane.b32.xlu0 %v2180, 38
        %v2421 = vpop.permute.xlu0 %2420
        %2422 = vrot.lane.b32.xlu0 %v2181, 38
        %v2423 = vpop.permute.xlu0 %2422
        %v2424 = vsel %vm563, %v2421, %v2423
        %v2425 = vsel %vm563, %v2419, %v2421
        %v2426 = vsel %vm563, %v2417, %v2419
        %v2427 = vsel %vm563, %v2415, %v2417
        %v2428 = vsel %vm563, %v2413, %v2415
        %v2429 = vsel %vm563, %v2411, %v2413
        %v2430 = vsel %vm563, %v2409, %v2411
        %v2431 = vsel %vm563, %v2407, %v2409
        %v2432 = vsel %vm563, %v2405, %v2407
        %v2433 = vsel %vm563, %v2403, %v2405
        %v2434 = vsel %vm563, %v2423, %v2403
        %2435 = vst [vmem:[#allocation2 + $0x1b8] sm:$0xff] %v2434
        %2436 = vst [vmem:[#allocation2 + $0x1c0] sm:$0xff] %v2433
        %2437 = vst [vmem:[#allocation2 + $0x1c8] sm:$0xff] %v2432
        %2438 = vst [vmem:[#allocation2 + $0x1d0] sm:$0xff] %v2431
        %2439 = vst [vmem:[#allocation2 + $0x1d8] sm:$0xff] %v2430
        %2440 = vst [vmem:[#allocation2 + $0x1e0] sm:$0xff] %v2429
        %2441 = vst [vmem:[#allocation2 + $0x1e8] sm:$0xff] %v2428
        %2442 = vst [vmem:[#allocation2 + $0x1f0] sm:$0xff] %v2427
        %2443 = vst [vmem:[#allocation2 + $0x1f8] sm:$0xff] %v2426
        %2444 = vst [vmem:[#allocation2 + $0x200] sm:$0xff] %v2425
        %2445 = vst [vmem:[#allocation2 + $0x208] sm:$0xff] %v2424
        %2446 = vrot.lane.b32.xlu0 %v2171, 37
        %v2447 = vpop.permute.xlu0 %2446
        %2448 = vrot.lane.b32.xlu0 %v2172, 37
        %v2449 = vpop.permute.xlu0 %2448
        %2450 = vrot.lane.b32.xlu0 %v2173, 37
        %v2451 = vpop.permute.xlu0 %2450
        %2452 = vrot.lane.b32.xlu0 %v2174, 37
        %v2453 = vpop.permute.xlu0 %2452
        %2454 = vrot.lane.b32.xlu0 %v2175, 37
        %v2455 = vpop.permute.xlu0 %2454
        %2456 = vrot.lane.b32.xlu0 %v2176, 37
        %v2457 = vpop.permute.xlu0 %2456
        %2458 = vrot.lane.b32.xlu0 %v2177, 37
        %v2459 = vpop.permute.xlu0 %2458
        %2460 = vrot.lane.b32.xlu0 %v2178, 37
        %v2461 = vpop.permute.xlu0 %2460
        %2462 = vrot.lane.b32.xlu0 %v2179, 37
        %v2463 = vpop.permute.xlu0 %2462
        %2464 = vrot.lane.b32.xlu0 %v2180, 37
        %v2465 = vpop.permute.xlu0 %2464
        %2466 = vrot.lane.b32.xlu0 %v2181, 37
        %v2467 = vpop.permute.xlu0 %2466
        %v2468 = vsel %vm608, %v2465, %v2467
        %v2469 = vsel %vm608, %v2463, %v2465
        %v2470 = vsel %vm608, %v2461, %v2463
        %v2471 = vsel %vm608, %v2459, %v2461
        %v2472 = vsel %vm608, %v2457, %v2459
        %v2473 = vsel %vm608, %v2455, %v2457
        %v2474 = vsel %vm608, %v2453, %v2455
        %v2475 = vsel %vm608, %v2451, %v2453
        %v2476 = vsel %vm608, %v2449, %v2451
        %v2477 = vsel %vm608, %v2447, %v2449
        %v2478 = vsel %vm608, %v2467, %v2447
        %2479 = vst [vmem:[#allocation2 + $0x210] sm:$0xff] %v2478
        %2480 = vst [vmem:[#allocation2 + $0x218] sm:$0xff] %v2477
        %2481 = vst [vmem:[#allocation2 + $0x220] sm:$0xff] %v2476
        %2482 = vst [vmem:[#allocation2 + $0x228] sm:$0xff] %v2475
        %2483 = vst [vmem:[#allocation2 + $0x230] sm:$0xff] %v2474
        %2484 = vst [vmem:[#allocation2 + $0x238] sm:$0xff] %v2473
        %2485 = vst [vmem:[#allocation2 + $0x240] sm:$0xff] %v2472
        %2486 = vst [vmem:[#allocation2 + $0x248] sm:$0xff] %v2471
        %2487 = vst [vmem:[#allocation2 + $0x250] sm:$0xff] %v2470
        %2488 = vst [vmem:[#allocation2 + $0x258] sm:$0xff] %v2469
        %2489 = vst [vmem:[#allocation2 + $0x260] sm:$0xff] %v2468
        %2490 = vrot.lane.b32.xlu0 %v2171, 36
        %v2491 = vpop.permute.xlu0 %2490
        %2492 = vrot.lane.b32.xlu0 %v2172, 36
        %v2493 = vpop.permute.xlu0 %2492
        %2494 = vrot.lane.b32.xlu0 %v2173, 36
        %v2495 = vpop.permute.xlu0 %2494
        %2496 = vrot.lane.b32.xlu0 %v2174, 36
        %v2497 = vpop.permute.xlu0 %2496
        %2498 = vrot.lane.b32.xlu0 %v2175, 36
        %v2499 = vpop.permute.xlu0 %2498
        %2500 = vrot.lane.b32.xlu0 %v2176, 36
        %v2501 = vpop.permute.xlu0 %2500
        %2502 = vrot.lane.b32.xlu0 %v2177, 36
        %v2503 = vpop.permute.xlu0 %2502
        %2504 = vrot.lane.b32.xlu0 %v2178, 36
        %v2505 = vpop.permute.xlu0 %2504
        %2506 = vrot.lane.b32.xlu0 %v2179, 36
        %v2507 = vpop.permute.xlu0 %2506
        %2508 = vrot.lane.b32.xlu0 %v2180, 36
        %v2509 = vpop.permute.xlu0 %2508
        %2510 = vrot.lane.b32.xlu0 %v2181, 36
        %v2511 = vpop.permute.xlu0 %2510
        %v2512 = vsel %vm653, %v2509, %v2511
        %v2513 = vsel %vm653, %v2507, %v2509
        %v2514 = vsel %vm653, %v2505, %v2507
        %v2515 = vsel %vm653, %v2503, %v2505
        %v2516 = vsel %vm653, %v2501, %v2503
        %v2517 = vsel %vm653, %v2499, %v2501
        %v2518 = vsel %vm653, %v2497, %v2499
        %v2519 = vsel %vm653, %v2495, %v2497
        %v2520 = vsel %vm653, %v2493, %v2495
        %v2521 = vsel %vm653, %v2491, %v2493
        %v2522 = vsel %vm653, %v2511, %v2491
        %2523 = vst [vmem:[#allocation2 + $0x268] sm:$0xff] %v2522
        %2524 = vst [vmem:[#allocation2 + $0x270] sm:$0xff] %v2521
        %2525 = vst [vmem:[#allocation2 + $0x278] sm:$0xff] %v2520
        %2526 = vst [vmem:[#allocation2 + $0x280] sm:$0xff] %v2519
        %2527 = vst [vmem:[#allocation2 + $0x288] sm:$0xff] %v2518
        %2528 = vst [vmem:[#allocation2 + $0x290] sm:$0xff] %v2517
        %2529 = vst [vmem:[#allocation2 + $0x298] sm:$0xff] %v2516
        %2530 = vst [vmem:[#allocation2 + $0x2a0] sm:$0xff] %v2515
        %2531 = vst [vmem:[#allocation2 + $0x2a8] sm:$0xff] %v2514
        %2532 = vst [vmem:[#allocation2 + $0x2b0] sm:$0xff] %v2513
        %2533 = vst [vmem:[#allocation2 + $0x2b8] sm:$0xff] %v2512
        %2534 = vrot.lane.b32.xlu0 %v2171, 35
        %v2535 = vpop.permute.xlu0 %2534
        %2536 = vrot.lane.b32.xlu0 %v2172, 35
        %v2537 = vpop.permute.xlu0 %2536
        %2538 = vrot.lane.b32.xlu0 %v2173, 35
        %v2539 = vpop.permute.xlu0 %2538
        %2540 = vrot.lane.b32.xlu0 %v2174, 35
        %v2541 = vpop.permute.xlu0 %2540
        %2542 = vrot.lane.b32.xlu0 %v2175, 35
        %v2543 = vpop.permute.xlu0 %2542
        %2544 = vrot.lane.b32.xlu0 %v2176, 35
        %v2545 = vpop.permute.xlu0 %2544
        %2546 = vrot.lane.b32.xlu0 %v2177, 35
        %v2547 = vpop.permute.xlu0 %2546
        %2548 = vrot.lane.b32.xlu0 %v2178, 35
        %v2549 = vpop.permute.xlu0 %2548
        %2550 = vrot.lane.b32.xlu0 %v2179, 35
        %v2551 = vpop.permute.xlu0 %2550
        %2552 = vrot.lane.b32.xlu0 %v2180, 35
        %v2553 = vpop.permute.xlu0 %2552
        %2554 = vrot.lane.b32.xlu0 %v2181, 35
        %v2555 = vpop.permute.xlu0 %2554
        %v2556 = vsel %vm698, %v2553, %v2555
        %v2557 = vsel %vm698, %v2551, %v2553
        %v2558 = vsel %vm698, %v2549, %v2551
        %v2559 = vsel %vm698, %v2547, %v2549
        %v2560 = vsel %vm698, %v2545, %v2547
        %v2561 = vsel %vm698, %v2543, %v2545
        %v2562 = vsel %vm698, %v2541, %v2543
        %v2563 = vsel %vm698, %v2539, %v2541
        %v2564 = vsel %vm698, %v2537, %v2539
        %v2565 = vsel %vm698, %v2535, %v2537
        %v2566 = vsel %vm698, %v2555, %v2535
        %2567 = vst [vmem:[#allocation2 + $0x2c0] sm:$0xff] %v2566
        %2568 = vst [vmem:[#allocation2 + $0x2c8] sm:$0xff] %v2565
        %2569 = vst [vmem:[#allocation2 + $0x2d0] sm:$0xff] %v2564
        %2570 = vst [vmem:[#allocation2 + $0x2d8] sm:$0xff] %v2563
        %2571 = vst [vmem:[#allocation2 + $0x2e0] sm:$0xff] %v2562
        %2572 = vst [vmem:[#allocation2 + $0x2e8] sm:$0xff] %v2561
        %2573 = vst [vmem:[#allocation2 + $0x2f0] sm:$0xff] %v2560
        %2574 = vst [vmem:[#allocation2 + $0x2f8] sm:$0xff] %v2559
        %2575 = vst [vmem:[#allocation2 + $0x300] sm:$0xff] %v2558
        %2576 = vst [vmem:[#allocation2 + $0x308] sm:$0xff] %v2557
        %2577 = vst [vmem:[#allocation2 + $0x310] sm:$0xff] %v2556
        %2578 = vrot.lane.b32.xlu0 %v2171, 34
        %v2579 = vpop.permute.xlu0 %2578
        %2580 = vrot.lane.b32.xlu0 %v2172, 34
        %v2581 = vpop.permute.xlu0 %2580
        %2582 = vrot.lane.b32.xlu0 %v2173, 34
        %v2583 = vpop.permute.xlu0 %2582
        %2584 = vrot.lane.b32.xlu0 %v2174, 34
        %v2585 = vpop.permute.xlu0 %2584
        %2586 = vrot.lane.b32.xlu0 %v2175, 34
        %v2587 = vpop.permute.xlu0 %2586
        %2588 = vrot.lane.b32.xlu0 %v2176, 34
        %v2589 = vpop.permute.xlu0 %2588
        %2590 = vrot.lane.b32.xlu0 %v2177, 34
        %v2591 = vpop.permute.xlu0 %2590
        %2592 = vrot.lane.b32.xlu0 %v2178, 34
        %v2593 = vpop.permute.xlu0 %2592
        %2594 = vrot.lane.b32.xlu0 %v2179, 34
        %v2595 = vpop.permute.xlu0 %2594
        %2596 = vrot.lane.b32.xlu0 %v2180, 34
        %v2597 = vpop.permute.xlu0 %2596
        %2598 = vrot.lane.b32.xlu0 %v2181, 34
        %v2599 = vpop.permute.xlu0 %2598
        %v2600 = vsel %vm743, %v2597, %v2599
        %v2601 = vsel %vm743, %v2595, %v2597
        %v2602 = vsel %vm743, %v2593, %v2595
        %v2603 = vsel %vm743, %v2591, %v2593
        %v2604 = vsel %vm743, %v2589, %v2591
        %v2605 = vsel %vm743, %v2587, %v2589
        %v2606 = vsel %vm743, %v2585, %v2587
        %v2607 = vsel %vm743, %v2583, %v2585
        %v2608 = vsel %vm743, %v2581, %v2583
        %v2609 = vsel %vm743, %v2579, %v2581
        %v2610 = vsel %vm743, %v2599, %v2579
        %2611 = vst [vmem:[#allocation2 + $0x318] sm:$0xff] %v2610
        %2612 = vst [vmem:[#allocation2 + $0x320] sm:$0xff] %v2609
        %2613 = vst [vmem:[#allocation2 + $0x328] sm:$0xff] %v2608
        %2614 = vst [vmem:[#allocation2 + $0x330] sm:$0xff] %v2607
        %2615 = vst [vmem:[#allocation2 + $0x338] sm:$0xff] %v2606
        %2616 = vst [vmem:[#allocation2 + $0x340] sm:$0xff] %v2605
        %2617 = vst [vmem:[#allocation2 + $0x348] sm:$0xff] %v2604
        %2618 = vst [vmem:[#allocation2 + $0x350] sm:$0xff] %v2603
        %2619 = vst [vmem:[#allocation2 + $0x358] sm:$0xff] %v2602
        %2620 = vst [vmem:[#allocation2 + $0x360] sm:$0xff] %v2601
        %2621 = vst [vmem:[#allocation2 + $0x368] sm:$0xff] %v2600
        %2622 = vrot.lane.b32.xlu0 %v2171, 2
        %v2623 = vpop.permute.xlu0 %2622
        %2624 = vrot.lane.b32.xlu0 %v2172, 2
        %v2625 = vpop.permute.xlu0 %2624
        %2626 = vrot.lane.b32.xlu0 %v2173, 2
        %v2627 = vpop.permute.xlu0 %2626
        %2628 = vrot.lane.b32.xlu0 %v2174, 2
        %v2629 = vpop.permute.xlu0 %2628
        %2630 = vrot.lane.b32.xlu0 %v2175, 2
        %v2631 = vpop.permute.xlu0 %2630
        %2632 = vrot.lane.b32.xlu0 %v2176, 2
        %v2633 = vpop.permute.xlu0 %2632
        %2634 = vrot.lane.b32.xlu0 %v2177, 2
        %v2635 = vpop.permute.xlu0 %2634
        %2636 = vrot.lane.b32.xlu0 %v2178, 2
        %v2637 = vpop.permute.xlu0 %2636
        %2638 = vrot.lane.b32.xlu0 %v2179, 2
        %v2639 = vpop.permute.xlu0 %2638
        %2640 = vrot.lane.b32.xlu0 %v2180, 2
        %v2641 = vpop.permute.xlu0 %2640
        %2642 = vrot.lane.b32.xlu0 %v2181, 2
        %v2643 = vpop.permute.xlu0 %2642
        %v2644 = vsel %vm788, %v2641, %v2643
        %v2645 = vsel %vm788, %v2639, %v2641
        %v2646 = vsel %vm788, %v2637, %v2639
        %v2647 = vsel %vm788, %v2635, %v2637
        %v2648 = vsel %vm788, %v2633, %v2635
        %v2649 = vsel %vm788, %v2631, %v2633
        %v2650 = vsel %vm788, %v2629, %v2631
        %v2651 = vsel %vm788, %v2627, %v2629
        %v2652 = vsel %vm788, %v2625, %v2627
        %v2653 = vsel %vm788, %v2623, %v2625
        %v2654 = vsel %vm788, %v2643, %v2623
        %2655 = vst [vmem:[#allocation2 + $0x370] sm:$0xff] %v2654
        %2656 = vst [vmem:[#allocation2 + $0x378] sm:$0xff] %v2653
        %2657 = vst [vmem:[#allocation2 + $0x380] sm:$0xff] %v2652
        %2658 = vst [vmem:[#allocation2 + $0x388] sm:$0xff] %v2651
        %2659 = vst [vmem:[#allocation2 + $0x390] sm:$0xff] %v2650
        %2660 = vst [vmem:[#allocation2 + $0x398] sm:$0xff] %v2649
        %2661 = vst [vmem:[#allocation2 + $0x3a0] sm:$0xff] %v2648
        %2662 = vst [vmem:[#allocation2 + $0x3a8] sm:$0xff] %v2647
        %2663 = vst [vmem:[#allocation2 + $0x3b0] sm:$0xff] %v2646
        %2664 = vst [vmem:[#allocation2 + $0x3b8] sm:$0xff] %v2645
        %2665 = vst [vmem:[#allocation2 + $0x3c0] sm:$0xff] %v2644
        %2666 = vrot.lane.b32.xlu0 %v2171, 1
        %v2667 = vpop.permute.xlu0 %2666
        %2668 = vrot.lane.b32.xlu0 %v2172, 1
        %v2669 = vpop.permute.xlu0 %2668
        %2670 = vrot.lane.b32.xlu0 %v2173, 1
        %v2671 = vpop.permute.xlu0 %2670
        %2672 = vrot.lane.b32.xlu0 %v2174, 1
        %v2673 = vpop.permute.xlu0 %2672
        %2674 = vrot.lane.b32.xlu0 %v2175, 1
        %v2675 = vpop.permute.xlu0 %2674
        %2676 = vrot.lane.b32.xlu0 %v2176, 1
        %v2677 = vpop.permute.xlu0 %2676
        %2678 = vrot.lane.b32.xlu0 %v2177, 1
        %v2679 = vpop.permute.xlu0 %2678
        %2680 = vrot.lane.b32.xlu0 %v2178, 1
        %v2681 = vpop.permute.xlu0 %2680
        %2682 = vrot.lane.b32.xlu0 %v2179, 1
        %v2683 = vpop.permute.xlu0 %2682
        %2684 = vrot.lane.b32.xlu0 %v2180, 1
        %v2685 = vpop.permute.xlu0 %2684
        %2686 = vrot.lane.b32.xlu0 %v2181, 1
        %v2687 = vpop.permute.xlu0 %2686
        %v2688 = vsel %vm833, %v2685, %v2687
        %v2689 = vsel %vm833, %v2683, %v2685
        %v2690 = vsel %vm833, %v2681, %v2683
        %v2691 = vsel %vm833, %v2679, %v2681
        %v2692 = vsel %vm833, %v2677, %v2679
        %v2693 = vsel %vm833, %v2675, %v2677
        %v2694 = vsel %vm833, %v2673, %v2675
        %v2695 = vsel %vm833, %v2671, %v2673
        %v2696 = vsel %vm833, %v2669, %v2671
        %v2697 = vsel %vm833, %v2667, %v2669
        %v2698 = vsel %vm833, %v2687, %v2667
        %2699 = vst [vmem:[#allocation2 + $0x3c8] sm:$0xff] %v2698
        %2700 = vst [vmem:[#allocation2 + $0x3d0] sm:$0xff] %v2697
        %2701 = vst [vmem:[#allocation2 + $0x3d8] sm:$0xff] %v2696
        %2702 = vst [vmem:[#allocation2 + $0x3e0] sm:$0xff] %v2695
        %2703 = vst [vmem:[#allocation2 + $0x3e8] sm:$0xff] %v2694
        %2704 = vst [vmem:[#allocation2 + $0x3f0] sm:$0xff] %v2693
        %2705 = vst [vmem:[#allocation2 + $0x3f8] sm:$0xff] %v2692
        %2706 = vst [vmem:[#allocation2 + $0x400] sm:$0xff] %v2691
        %2707 = vst [vmem:[#allocation2 + $0x408] sm:$0xff] %v2690
        %2708 = vst [vmem:[#allocation2 + $0x410] sm:$0xff] %v2689
        %2709 = vst [vmem:[#allocation2 + $0x418] sm:$0xff] %v2688
        %2710 = vst [vmem:[#allocation2 + $0x420] sm:$0xff] %v2171
        %2711 = vst [vmem:[#allocation2 + $0x428] sm:$0xff] %v2172
        %2712 = vst [vmem:[#allocation2 + $0x430] sm:$0xff] %v2173
        %2713 = vst [vmem:[#allocation2 + $0x438] sm:$0xff] %v2174
        %2714 = vst [vmem:[#allocation2 + $0x440] sm:$0xff] %v2175
        %2715 = vst [vmem:[#allocation2 + $0x448] sm:$0xff] %v2176
        %2716 = vst [vmem:[#allocation2 + $0x450] sm:$0xff] %v2177
        %2717 = vst [vmem:[#allocation2 + $0x458] sm:$0xff] %v2178
        %2718 = vst [vmem:[#allocation2 + $0x460] sm:$0xff] %v2179
        %2719 = vst [vmem:[#allocation2 + $0x468] sm:$0xff] %v2180
        %2720 = vst [vmem:[#allocation2 + $0x470] sm:$0xff] %v2181
        %2721 = vrot.lane.b32.xlu0 %v2171, 127
        %v2722 = vpop.permute.xlu0 %2721
        %2723 = vrot.lane.b32.xlu0 %v2172, 127
        %v2724 = vpop.permute.xlu0 %2723
        %2725 = vrot.lane.b32.xlu0 %v2173, 127
        %v2726 = vpop.permute.xlu0 %2725
        %2727 = vrot.lane.b32.xlu0 %v2174, 127
        %v2728 = vpop.permute.xlu0 %2727
        %2729 = vrot.lane.b32.xlu0 %v2175, 127
        %v2730 = vpop.permute.xlu0 %2729
        %2731 = vrot.lane.b32.xlu0 %v2176, 127
        %v2732 = vpop.permute.xlu0 %2731
        %2733 = vrot.lane.b32.xlu0 %v2177, 127
        %v2734 = vpop.permute.xlu0 %2733
        %2735 = vrot.lane.b32.xlu0 %v2178, 127
        %v2736 = vpop.permute.xlu0 %2735
        %2737 = vrot.lane.b32.xlu0 %v2179, 127
        %v2738 = vpop.permute.xlu0 %2737
        %2739 = vrot.lane.b32.xlu0 %v2180, 127
        %v2740 = vpop.permute.xlu0 %2739
        %2741 = vrot.lane.b32.xlu0 %v2181, 127
        %v2742 = vpop.permute.xlu0 %2741
        %v2743 = vsel %vm889, %v2740, %v2742
        %v2744 = vsel %vm889, %v2738, %v2740
        %v2745 = vsel %vm889, %v2736, %v2738
        %v2746 = vsel %vm889, %v2734, %v2736
        %v2747 = vsel %vm889, %v2732, %v2734
        %v2748 = vsel %vm889, %v2730, %v2732
        %v2749 = vsel %vm889, %v2728, %v2730
        %v2750 = vsel %vm889, %v2726, %v2728
        %v2751 = vsel %vm889, %v2724, %v2726
        %v2752 = vsel %vm889, %v2722, %v2724
        %v2753 = vsel %vm889, %v2742, %v2722
        %2754 = vst [vmem:[#allocation2 + $0x478] sm:$0xff] %v2752
        %2755 = vst [vmem:[#allocation2 + $0x480] sm:$0xff] %v2751
        %2756 = vst [vmem:[#allocation2 + $0x488] sm:$0xff] %v2750
        %2757 = vst [vmem:[#allocation2 + $0x490] sm:$0xff] %v2749
        %2758 = vst [vmem:[#allocation2 + $0x498] sm:$0xff] %v2748
        %2759 = vst [vmem:[#allocation2 + $0x4a0] sm:$0xff] %v2747
        %2760 = vst [vmem:[#allocation2 + $0x4a8] sm:$0xff] %v2746
        %2761 = vst [vmem:[#allocation2 + $0x4b0] sm:$0xff] %v2745
        %2762 = vst [vmem:[#allocation2 + $0x4b8] sm:$0xff] %v2744
        %2763 = vst [vmem:[#allocation2 + $0x4c0] sm:$0xff] %v2743
        %2764 = vst [vmem:[#allocation2 + $0x4c8] sm:$0xff] %v2753
        %2765 = vrot.lane.b32.xlu0 %v2171, 126
        %v2766 = vpop.permute.xlu0 %2765
        %2767 = vrot.lane.b32.xlu0 %v2172, 126
        %v2768 = vpop.permute.xlu0 %2767
        %2769 = vrot.lane.b32.xlu0 %v2173, 126
        %v2770 = vpop.permute.xlu0 %2769
        %2771 = vrot.lane.b32.xlu0 %v2174, 126
        %v2772 = vpop.permute.xlu0 %2771
        %2773 = vrot.lane.b32.xlu0 %v2175, 126
        %v2774 = vpop.permute.xlu0 %2773
        %2775 = vrot.lane.b32.xlu0 %v2176, 126
        %v2776 = vpop.permute.xlu0 %2775
        %2777 = vrot.lane.b32.xlu0 %v2177, 126
        %v2778 = vpop.permute.xlu0 %2777
        %2779 = vrot.lane.b32.xlu0 %v2178, 126
        %v2780 = vpop.permute.xlu0 %2779
        %2781 = vrot.lane.b32.xlu0 %v2179, 126
        %v2782 = vpop.permute.xlu0 %2781
        %2783 = vrot.lane.b32.xlu0 %v2180, 126
        %v2784 = vpop.permute.xlu0 %2783
        %2785 = vrot.lane.b32.xlu0 %v2181, 126
        %v2786 = vpop.permute.xlu0 %2785
        %v2787 = vsel %vm934, %v2784, %v2786
        %v2788 = vsel %vm934, %v2782, %v2784
        %v2789 = vsel %vm934, %v2780, %v2782
        %v2790 = vsel %vm934, %v2778, %v2780
        %v2791 = vsel %vm934, %v2776, %v2778
        %v2792 = vsel %vm934, %v2774, %v2776
        %v2793 = vsel %vm934, %v2772, %v2774
        %v2794 = vsel %vm934, %v2770, %v2772
        %v2795 = vsel %vm934, %v2768, %v2770
        %v2796 = vsel %vm934, %v2766, %v2768
        %v2797 = vsel %vm934, %v2786, %v2766
        %2798 = vst [vmem:[#allocation2 + $0x4d0] sm:$0xff] %v2796
        %2799 = vst [vmem:[#allocation2 + $0x4d8] sm:$0xff] %v2795
        %2800 = vst [vmem:[#allocation2 + $0x4e0] sm:$0xff] %v2794
        %2801 = vst [vmem:[#allocation2 + $0x4e8] sm:$0xff] %v2793
        %2802 = vst [vmem:[#allocation2 + $0x4f0] sm:$0xff] %v2792
        %2803 = vst [vmem:[#allocation2 + $0x4f8] sm:$0xff] %v2791
        %2804 = vst [vmem:[#allocation2 + $0x500] sm:$0xff] %v2790
        %2805 = vst [vmem:[#allocation2 + $0x508] sm:$0xff] %v2789
        %2806 = vst [vmem:[#allocation2 + $0x510] sm:$0xff] %v2788
        %2807 = vst [vmem:[#allocation2 + $0x518] sm:$0xff] %v2787
        %2808 = vst [vmem:[#allocation2 + $0x520] sm:$0xff] %v2797
        %2809 = vrot.lane.b32.xlu0 %v2171, 94
        %v2810 = vpop.permute.xlu0 %2809
        %2811 = vrot.lane.b32.xlu0 %v2172, 94
        %v2812 = vpop.permute.xlu0 %2811
        %2813 = vrot.lane.b32.xlu0 %v2173, 94
        %v2814 = vpop.permute.xlu0 %2813
        %2815 = vrot.lane.b32.xlu0 %v2174, 94
        %v2816 = vpop.permute.xlu0 %2815
        %2817 = vrot.lane.b32.xlu0 %v2175, 94
        %v2818 = vpop.permute.xlu0 %2817
        %2819 = vrot.lane.b32.xlu0 %v2176, 94
        %v2820 = vpop.permute.xlu0 %2819
        %2821 = vrot.lane.b32.xlu0 %v2177, 94
        %v2822 = vpop.permute.xlu0 %2821
        %2823 = vrot.lane.b32.xlu0 %v2178, 94
        %v2824 = vpop.permute.xlu0 %2823
        %2825 = vrot.lane.b32.xlu0 %v2179, 94
        %v2826 = vpop.permute.xlu0 %2825
        %2827 = vrot.lane.b32.xlu0 %v2180, 94
        %v2828 = vpop.permute.xlu0 %2827
        %2829 = vrot.lane.b32.xlu0 %v2181, 94
        %v2830 = vpop.permute.xlu0 %2829
        %v2831 = vsel %vm979, %v2828, %v2830
        %v2832 = vsel %vm979, %v2826, %v2828
        %v2833 = vsel %vm979, %v2824, %v2826
        %v2834 = vsel %vm979, %v2822, %v2824
        %v2835 = vsel %vm979, %v2820, %v2822
        %v2836 = vsel %vm979, %v2818, %v2820
        %v2837 = vsel %vm979, %v2816, %v2818
        %v2838 = vsel %vm979, %v2814, %v2816
        %v2839 = vsel %vm979, %v2812, %v2814
        %v2840 = vsel %vm979, %v2810, %v2812
        %v2841 = vsel %vm979, %v2830, %v2810
        %2842 = vst [vmem:[#allocation2 + $0x528] sm:$0xff] %v2840
        %2843 = vst [vmem:[#allocation2 + $0x530] sm:$0xff] %v2839
        %2844 = vst [vmem:[#allocation2 + $0x538] sm:$0xff] %v2838
        %2845 = vst [vmem:[#allocation2 + $0x540] sm:$0xff] %v2837
        %2846 = vst [vmem:[#allocation2 + $0x548] sm:$0xff] %v2836
        %2847 = vst [vmem:[#allocation2 + $0x550] sm:$0xff] %v2835
        %2848 = vst [vmem:[#allocation2 + $0x558] sm:$0xff] %v2834
        %2849 = vst [vmem:[#allocation2 + $0x560] sm:$0xff] %v2833
        %2850 = vst [vmem:[#allocation2 + $0x568] sm:$0xff] %v2832
        %2851 = vst [vmem:[#allocation2 + $0x570] sm:$0xff] %v2831
        %2852 = vst [vmem:[#allocation2 + $0x578] sm:$0xff] %v2841
        %2853 = vrot.lane.b32.xlu0 %v2171, 93
        %v2854 = vpop.permute.xlu0 %2853
        %2855 = vrot.lane.b32.xlu0 %v2172, 93
        %v2856 = vpop.permute.xlu0 %2855
        %2857 = vrot.lane.b32.xlu0 %v2173, 93
        %v2858 = vpop.permute.xlu0 %2857
        %2859 = vrot.lane.b32.xlu0 %v2174, 93
        %v2860 = vpop.permute.xlu0 %2859
        %2861 = vrot.lane.b32.xlu0 %v2175, 93
        %v2862 = vpop.permute.xlu0 %2861
        %2863 = vrot.lane.b32.xlu0 %v2176, 93
        %v2864 = vpop.permute.xlu0 %2863
        %2865 = vrot.lane.b32.xlu0 %v2177, 93
        %v2866 = vpop.permute.xlu0 %2865
        %2867 = vrot.lane.b32.xlu0 %v2178, 93
        %v2868 = vpop.permute.xlu0 %2867
        %2869 = vrot.lane.b32.xlu0 %v2179, 93
        %v2870 = vpop.permute.xlu0 %2869
        %2871 = vrot.lane.b32.xlu0 %v2180, 93
        %v2872 = vpop.permute.xlu0 %2871
        %2873 = vrot.lane.b32.xlu0 %v2181, 93
        %v2874 = vpop.permute.xlu0 %2873
        %v2875 = vsel %vm1024, %v2872, %v2874
        %v2876 = vsel %vm1024, %v2870, %v2872
        %v2877 = vsel %vm1024, %v2868, %v2870
        %v2878 = vsel %vm1024, %v2866, %v2868
        %v2879 = vsel %vm1024, %v2864, %v2866
        %v2880 = vsel %vm1024, %v2862, %v2864
        %v2881 = vsel %vm1024, %v2860, %v2862
        %v2882 = vsel %vm1024, %v2858, %v2860
        %v2883 = vsel %vm1024, %v2856, %v2858
        %v2884 = vsel %vm1024, %v2854, %v2856
        %v2885 = vsel %vm1024, %v2874, %v2854
        %2886 = vst [vmem:[#allocation2 + $0x580] sm:$0xff] %v2884
        %2887 = vst [vmem:[#allocation2 + $0x588] sm:$0xff] %v2883
        %2888 = vst [vmem:[#allocation2 + $0x590] sm:$0xff] %v2882
        %2889 = vst [vmem:[#allocation2 + $0x598] sm:$0xff] %v2881
        %2890 = vst [vmem:[#allocation2 + $0x5a0] sm:$0xff] %v2880
        %2891 = vst [vmem:[#allocation2 + $0x5a8] sm:$0xff] %v2879
        %2892 = vst [vmem:[#allocation2 + $0x5b0] sm:$0xff] %v2878
        %2893 = vst [vmem:[#allocation2 + $0x5b8] sm:$0xff] %v2877
        %2894 = vst [vmem:[#allocation2 + $0x5c0] sm:$0xff] %v2876
        %2895 = vst [vmem:[#allocation2 + $0x5c8] sm:$0xff] %v2875
        %2896 = vst [vmem:[#allocation2 + $0x5d0] sm:$0xff] %v2885
        %2897 = vrot.lane.b32.xlu0 %v2171, 92
        %v2898 = vpop.permute.xlu0 %2897
        %2899 = vrot.lane.b32.xlu0 %v2172, 92
        %v2900 = vpop.permute.xlu0 %2899
        %2901 = vrot.lane.b32.xlu0 %v2173, 92
        %v2902 = vpop.permute.xlu0 %2901
        %2903 = vrot.lane.b32.xlu0 %v2174, 92
        %v2904 = vpop.permute.xlu0 %2903
        %2905 = vrot.lane.b32.xlu0 %v2175, 92
        %v2906 = vpop.permute.xlu0 %2905
        %2907 = vrot.lane.b32.xlu0 %v2176, 92
        %v2908 = vpop.permute.xlu0 %2907
        %2909 = vrot.lane.b32.xlu0 %v2177, 92
        %v2910 = vpop.permute.xlu0 %2909
        %2911 = vrot.lane.b32.xlu0 %v2178, 92
        %v2912 = vpop.permute.xlu0 %2911
        %2913 = vrot.lane.b32.xlu0 %v2179, 92
        %v2914 = vpop.permute.xlu0 %2913
        %2915 = vrot.lane.b32.xlu0 %v2180, 92
        %v2916 = vpop.permute.xlu0 %2915
        %2917 = vrot.lane.b32.xlu0 %v2181, 92
        %v2918 = vpop.permute.xlu0 %2917
        %v2919 = vsel %vm1069, %v2916, %v2918
        %v2920 = vsel %vm1069, %v2914, %v2916
        %v2921 = vsel %vm1069, %v2912, %v2914
        %v2922 = vsel %vm1069, %v2910, %v2912
        %v2923 = vsel %vm1069, %v2908, %v2910
        %v2924 = vsel %vm1069, %v2906, %v2908
        %v2925 = vsel %vm1069, %v2904, %v2906
        %v2926 = vsel %vm1069, %v2902, %v2904
        %v2927 = vsel %vm1069, %v2900, %v2902
        %v2928 = vsel %vm1069, %v2898, %v2900
        %v2929 = vsel %vm1069, %v2918, %v2898
        %2930 = vst [vmem:[#allocation2 + $0x5d8] sm:$0xff] %v2928
        %2931 = vst [vmem:[#allocation2 + $0x5e0] sm:$0xff] %v2927
        %2932 = vst [vmem:[#allocation2 + $0x5e8] sm:$0xff] %v2926
        %2933 = vst [vmem:[#allocation2 + $0x5f0] sm:$0xff] %v2925
        %2934 = vst [vmem:[#allocation2 + $0x5f8] sm:$0xff] %v2924
        %2935 = vst [vmem:[#allocation2 + $0x600] sm:$0xff] %v2923
        %2936 = vst [vmem:[#allocation2 + $0x608] sm:$0xff] %v2922
        %2937 = vst [vmem:[#allocation2 + $0x610] sm:$0xff] %v2921
        %2938 = vst [vmem:[#allocation2 + $0x618] sm:$0xff] %v2920
        %2939 = vst [vmem:[#allocation2 + $0x620] sm:$0xff] %v2919
        %2940 = vst [vmem:[#allocation2 + $0x628] sm:$0xff] %v2929
        %2941 = vrot.lane.b32.xlu0 %v2171, 91
        %v2942 = vpop.permute.xlu0 %2941
        %2943 = vrot.lane.b32.xlu0 %v2172, 91
        %v2944 = vpop.permute.xlu0 %2943
        %2945 = vrot.lane.b32.xlu0 %v2173, 91
        %v2946 = vpop.permute.xlu0 %2945
        %2947 = vrot.lane.b32.xlu0 %v2174, 91
        %v2948 = vpop.permute.xlu0 %2947
        %2949 = vrot.lane.b32.xlu0 %v2175, 91
        %v2950 = vpop.permute.xlu0 %2949
        %2951 = vrot.lane.b32.xlu0 %v2176, 91
        %v2952 = vpop.permute.xlu0 %2951
        %2953 = vrot.lane.b32.xlu0 %v2177, 91
        %v2954 = vpop.permute.xlu0 %2953
        %2955 = vrot.lane.b32.xlu0 %v2178, 91
        %v2956 = vpop.permute.xlu0 %2955
        %2957 = vrot.lane.b32.xlu0 %v2179, 91
        %v2958 = vpop.permute.xlu0 %2957
        %2959 = vrot.lane.b32.xlu0 %v2180, 91
        %v2960 = vpop.permute.xlu0 %2959
        %2961 = vrot.lane.b32.xlu0 %v2181, 91
        %v2962 = vpop.permute.xlu0 %2961
        %v2963 = vsel %vm1114, %v2960, %v2962
        %v2964 = vsel %vm1114, %v2958, %v2960
        %v2965 = vsel %vm1114, %v2956, %v2958
        %v2966 = vsel %vm1114, %v2954, %v2956
        %v2967 = vsel %vm1114, %v2952, %v2954
        %v2968 = vsel %vm1114, %v2950, %v2952
        %v2969 = vsel %vm1114, %v2948, %v2950
        %v2970 = vsel %vm1114, %v2946, %v2948
        %v2971 = vsel %vm1114, %v2944, %v2946
        %v2972 = vsel %vm1114, %v2942, %v2944
        %v2973 = vsel %vm1114, %v2962, %v2942
        %2974 = vst [vmem:[#allocation2 + $0x630] sm:$0xff] %v2972
        %2975 = vst [vmem:[#allocation2 + $0x638] sm:$0xff] %v2971
        %2976 = vst [vmem:[#allocation2 + $0x640] sm:$0xff] %v2970
        %2977 = vst [vmem:[#allocation2 + $0x648] sm:$0xff] %v2969
        %2978 = vst [vmem:[#allocation2 + $0x650] sm:$0xff] %v2968
        %2979 = vst [vmem:[#allocation2 + $0x658] sm:$0xff] %v2967
        %2980 = vst [vmem:[#allocation2 + $0x660] sm:$0xff] %v2966
        %2981 = vst [vmem:[#allocation2 + $0x668] sm:$0xff] %v2965
        %2982 = vst [vmem:[#allocation2 + $0x670] sm:$0xff] %v2964
        %2983 = vst [vmem:[#allocation2 + $0x678] sm:$0xff] %v2963
        %2984 = vst [vmem:[#allocation2 + $0x680] sm:$0xff] %v2973
        %2985 = vrot.lane.b32.xlu0 %v2171, 90
        %v2986 = vpop.permute.xlu0 %2985
        %2987 = vrot.lane.b32.xlu0 %v2172, 90
        %v2988 = vpop.permute.xlu0 %2987
        %2989 = vrot.lane.b32.xlu0 %v2173, 90
        %v2990 = vpop.permute.xlu0 %2989
        %2991 = vrot.lane.b32.xlu0 %v2174, 90
        %v2992 = vpop.permute.xlu0 %2991
        %2993 = vrot.lane.b32.xlu0 %v2175, 90
        %v2994 = vpop.permute.xlu0 %2993
        %2995 = vrot.lane.b32.xlu0 %v2176, 90
        %v2996 = vpop.permute.xlu0 %2995
        %2997 = vrot.lane.b32.xlu0 %v2177, 90
        %v2998 = vpop.permute.xlu0 %2997
        %2999 = vrot.lane.b32.xlu0 %v2178, 90
        %v3000 = vpop.permute.xlu0 %2999
        %3001 = vrot.lane.b32.xlu0 %v2179, 90
        %v3002 = vpop.permute.xlu0 %3001
        %3003 = vrot.lane.b32.xlu0 %v2180, 90
        %v3004 = vpop.permute.xlu0 %3003
        %3005 = vrot.lane.b32.xlu0 %v2181, 90
        %v3006 = vpop.permute.xlu0 %3005
        %v3007 = vsel %vm1159, %v3004, %v3006
        %v3008 = vsel %vm1159, %v3002, %v3004
        %v3009 = vsel %vm1159, %v3000, %v3002
        %v3010 = vsel %vm1159, %v2998, %v3000
        %v3011 = vsel %vm1159, %v2996, %v2998
        %v3012 = vsel %vm1159, %v2994, %v2996
        %v3013 = vsel %vm1159, %v2992, %v2994
        %v3014 = vsel %vm1159, %v2990, %v2992
        %v3015 = vsel %vm1159, %v2988, %v2990
        %v3016 = vsel %vm1159, %v2986, %v2988
        %v3017 = vsel %vm1159, %v3006, %v2986
        %3018 = vst [vmem:[#allocation2 + $0x688] sm:$0xff] %v3016
        %3019 = vst [vmem:[#allocation2 + $0x690] sm:$0xff] %v3015
        %3020 = vst [vmem:[#allocation2 + $0x698] sm:$0xff] %v3014
        %3021 = vst [vmem:[#allocation2 + $0x6a0] sm:$0xff] %v3013
        %3022 = vst [vmem:[#allocation2 + $0x6a8] sm:$0xff] %v3012
        %3023 = vst [vmem:[#allocation2 + $0x6b0] sm:$0xff] %v3011
        %3024 = vst [vmem:[#allocation2 + $0x6b8] sm:$0xff] %v3010
        %3025 = vst [vmem:[#allocation2 + $0x6c0] sm:$0xff] %v3009
        %3026 = vst [vmem:[#allocation2 + $0x6c8] sm:$0xff] %v3008
        %3027 = vst [vmem:[#allocation2 + $0x6d0] sm:$0xff] %v3007
        %3028 = vst [vmem:[#allocation2 + $0x6d8] sm:$0xff] %v3017
        %3029 = vrot.lane.b32.xlu0 %v2171, 58
        %v3030 = vpop.permute.xlu0 %3029
        %3031 = vrot.lane.b32.xlu0 %v2172, 58
        %v3032 = vpop.permute.xlu0 %3031
        %3033 = vrot.lane.b32.xlu0 %v2173, 58
        %v3034 = vpop.permute.xlu0 %3033
        %3035 = vrot.lane.b32.xlu0 %v2174, 58
        %v3036 = vpop.permute.xlu0 %3035
        %3037 = vrot.lane.b32.xlu0 %v2175, 58
        %v3038 = vpop.permute.xlu0 %3037
        %3039 = vrot.lane.b32.xlu0 %v2176, 58
        %v3040 = vpop.permute.xlu0 %3039
        %3041 = vrot.lane.b32.xlu0 %v2177, 58
        %v3042 = vpop.permute.xlu0 %3041
        %3043 = vrot.lane.b32.xlu0 %v2178, 58
        %v3044 = vpop.permute.xlu0 %3043
        %3045 = vrot.lane.b32.xlu0 %v2179, 58
        %v3046 = vpop.permute.xlu0 %3045
        %3047 = vrot.lane.b32.xlu0 %v2180, 58
        %v3048 = vpop.permute.xlu0 %3047
        %3049 = vrot.lane.b32.xlu0 %v2181, 58
        %v3050 = vpop.permute.xlu0 %3049
        %v3051 = vsel %vm1204, %v3048, %v3050
        %v3052 = vsel %vm1204, %v3046, %v3048
        %v3053 = vsel %vm1204, %v3044, %v3046
        %v3054 = vsel %vm1204, %v3042, %v3044
        %v3055 = vsel %vm1204, %v3040, %v3042
        %v3056 = vsel %vm1204, %v3038, %v3040
        %v3057 = vsel %vm1204, %v3036, %v3038
        %v3058 = vsel %vm1204, %v3034, %v3036
        %v3059 = vsel %vm1204, %v3032, %v3034
        %v3060 = vsel %vm1204, %v3030, %v3032
        %v3061 = vsel %vm1204, %v3050, %v3030
        %3062 = vst [vmem:[#allocation2 + $0x6e0] sm:$0xff] %v3060
        %3063 = vst [vmem:[#allocation2 + $0x6e8] sm:$0xff] %v3059
        %3064 = vst [vmem:[#allocation2 + $0x6f0] sm:$0xff] %v3058
        %3065 = vst [vmem:[#allocation2 + $0x6f8] sm:$0xff] %v3057
        %3066 = vst [vmem:[#allocation2 + $0x700] sm:$0xff] %v3056
        %3067 = vst [vmem:[#allocation2 + $0x708] sm:$0xff] %v3055
        %3068 = vst [vmem:[#allocation2 + $0x710] sm:$0xff] %v3054
        %3069 = vst [vmem:[#allocation2 + $0x718] sm:$0xff] %v3053
        %3070 = vst [vmem:[#allocation2 + $0x720] sm:$0xff] %v3052
        %3071 = vst [vmem:[#allocation2 + $0x728] sm:$0xff] %v3051
        %3072 = vst [vmem:[#allocation2 + $0x730] sm:$0xff] %v3061
        %3073 = vrot.lane.b32.xlu0 %v2171, 57
        %v3074 = vpop.permute.xlu0 %3073
        %3075 = vrot.lane.b32.xlu0 %v2172, 57
        %v3076 = vpop.permute.xlu0 %3075
        %3077 = vrot.lane.b32.xlu0 %v2173, 57
        %v3078 = vpop.permute.xlu0 %3077
        %3079 = vrot.lane.b32.xlu0 %v2174, 57
        %v3080 = vpop.permute.xlu0 %3079
        %3081 = vrot.lane.b32.xlu0 %v2175, 57
        %v3082 = vpop.permute.xlu0 %3081
        %3083 = vrot.lane.b32.xlu0 %v2176, 57
        %v3084 = vpop.permute.xlu0 %3083
        %3085 = vrot.lane.b32.xlu0 %v2177, 57
        %v3086 = vpop.permute.xlu0 %3085
        %3087 = vrot.lane.b32.xlu0 %v2178, 57
        %v3088 = vpop.permute.xlu0 %3087
        %3089 = vrot.lane.b32.xlu0 %v2179, 57
        %v3090 = vpop.permute.xlu0 %3089
        %3091 = vrot.lane.b32.xlu0 %v2180, 57
        %v3092 = vpop.permute.xlu0 %3091
        %3093 = vrot.lane.b32.xlu0 %v2181, 57
        %v3094 = vpop.permute.xlu0 %3093
        %v3095 = vsel %vm1249, %v3092, %v3094
        %v3096 = vsel %vm1249, %v3090, %v3092
        %v3097 = vsel %vm1249, %v3088, %v3090
        %v3098 = vsel %vm1249, %v3086, %v3088
        %v3099 = vsel %vm1249, %v3084, %v3086
        %v3100 = vsel %vm1249, %v3082, %v3084
        %v3101 = vsel %vm1249, %v3080, %v3082
        %v3102 = vsel %vm1249, %v3078, %v3080
        %v3103 = vsel %vm1249, %v3076, %v3078
        %v3104 = vsel %vm1249, %v3074, %v3076
        %v3105 = vsel %vm1249, %v3094, %v3074
        %3106 = vst [vmem:[#allocation2 + $0x738] sm:$0xff] %v3104
        %3107 = vst [vmem:[#allocation2 + $0x740] sm:$0xff] %v3103
        %3108 = vst [vmem:[#allocation2 + $0x748] sm:$0xff] %v3102
        %3109 = vst [vmem:[#allocation2 + $0x750] sm:$0xff] %v3101
        %3110 = vst [vmem:[#allocation2 + $0x758] sm:$0xff] %v3100
        %3111 = vst [vmem:[#allocation2 + $0x760] sm:$0xff] %v3099
        %3112 = vst [vmem:[#allocation2 + $0x768] sm:$0xff] %v3098
        %3113 = vst [vmem:[#allocation2 + $0x770] sm:$0xff] %v3097
        %3114 = vst [vmem:[#allocation2 + $0x778] sm:$0xff] %v3096
        %3115 = vst [vmem:[#allocation2 + $0x780] sm:$0xff] %v3095
        %3116 = vst [vmem:[#allocation2 + $0x788] sm:$0xff] %v3105
        %3117 = vrot.lane.b32.xlu0 %v2171, 56
        %v3118 = vpop.permute.xlu0 %3117
        %3119 = vrot.lane.b32.xlu0 %v2172, 56
        %v3120 = vpop.permute.xlu0 %3119
        %3121 = vrot.lane.b32.xlu0 %v2173, 56
        %v3122 = vpop.permute.xlu0 %3121
        %3123 = vrot.lane.b32.xlu0 %v2174, 56
        %v3124 = vpop.permute.xlu0 %3123
        %3125 = vrot.lane.b32.xlu0 %v2175, 56
        %v3126 = vpop.permute.xlu0 %3125
        %3127 = vrot.lane.b32.xlu0 %v2176, 56
        %v3128 = vpop.permute.xlu0 %3127
        %3129 = vrot.lane.b32.xlu0 %v2177, 56
        %v3130 = vpop.permute.xlu0 %3129
        %3131 = vrot.lane.b32.xlu0 %v2178, 56
        %v3132 = vpop.permute.xlu0 %3131
        %3133 = vrot.lane.b32.xlu0 %v2179, 56
        %v3134 = vpop.permute.xlu0 %3133
        %3135 = vrot.lane.b32.xlu0 %v2180, 56
        %v3136 = vpop.permute.xlu0 %3135
        %3137 = vrot.lane.b32.xlu0 %v2181, 56
        %v3138 = vpop.permute.xlu0 %3137
        %v3139 = vsel %vm1294, %v3136, %v3138
        %v3140 = vsel %vm1294, %v3134, %v3136
        %v3141 = vsel %vm1294, %v3132, %v3134
        %v3142 = vsel %vm1294, %v3130, %v3132
        %v3143 = vsel %vm1294, %v3128, %v3130
        %v3144 = vsel %vm1294, %v3126, %v3128
        %v3145 = vsel %vm1294, %v3124, %v3126
        %v3146 = vsel %vm1294, %v3122, %v3124
        %v3147 = vsel %vm1294, %v3120, %v3122
        %v3148 = vsel %vm1294, %v3118, %v3120
        %v3149 = vsel %vm1294, %v3138, %v3118
        %3150 = vst [vmem:[#allocation2 + $0x790] sm:$0xff] %v3148
        %3151 = vst [vmem:[#allocation2 + $0x798] sm:$0xff] %v3147
        %3152 = vst [vmem:[#allocation2 + $0x7a0] sm:$0xff] %v3146
        %3153 = vst [vmem:[#allocation2 + $0x7a8] sm:$0xff] %v3145
        %3154 = vst [vmem:[#allocation2 + $0x7b0] sm:$0xff] %v3144
        %3155 = vst [vmem:[#allocation2 + $0x7b8] sm:$0xff] %v3143
        %3156 = vst [vmem:[#allocation2 + $0x7c0] sm:$0xff] %v3142
        %3157 = vst [vmem:[#allocation2 + $0x7c8] sm:$0xff] %v3141
        %3158 = vst [vmem:[#allocation2 + $0x7d0] sm:$0xff] %v3140
        %3159 = vst [vmem:[#allocation2 + $0x7d8] sm:$0xff] %v3139
        %3160 = vst [vmem:[#allocation2 + $0x7e0] sm:$0xff] %v3149
        %3161 = vrot.lane.b32.xlu0 %v2171, 55
        %v3162 = vpop.permute.xlu0 %3161
        %3163 = vrot.lane.b32.xlu0 %v2172, 55
        %v3164 = vpop.permute.xlu0 %3163
        %3165 = vrot.lane.b32.xlu0 %v2173, 55
        %v3166 = vpop.permute.xlu0 %3165
        %3167 = vrot.lane.b32.xlu0 %v2174, 55
        %v3168 = vpop.permute.xlu0 %3167
        %3169 = vrot.lane.b32.xlu0 %v2175, 55
        %v3170 = vpop.permute.xlu0 %3169
        %3171 = vrot.lane.b32.xlu0 %v2176, 55
        %v3172 = vpop.permute.xlu0 %3171
        %3173 = vrot.lane.b32.xlu0 %v2177, 55
        %v3174 = vpop.permute.xlu0 %3173
        %3175 = vrot.lane.b32.xlu0 %v2178, 55
        %v3176 = vpop.permute.xlu0 %3175
        %3177 = vrot.lane.b32.xlu0 %v2179, 55
        %v3178 = vpop.permute.xlu0 %3177
        %3179 = vrot.lane.b32.xlu0 %v2180, 55
        %v3180 = vpop.permute.xlu0 %3179
        %3181 = vrot.lane.b32.xlu0 %v2181, 55
        %v3182 = vpop.permute.xlu0 %3181
        %v3183 = vsel %vm1339, %v3180, %v3182
        %v3184 = vsel %vm1339, %v3178, %v3180
        %v3185 = vsel %vm1339, %v3176, %v3178
        %v3186 = vsel %vm1339, %v3174, %v3176
        %v3187 = vsel %vm1339, %v3172, %v3174
        %v3188 = vsel %vm1339, %v3170, %v3172
        %v3189 = vsel %vm1339, %v3168, %v3170
        %v3190 = vsel %vm1339, %v3166, %v3168
        %v3191 = vsel %vm1339, %v3164, %v3166
        %v3192 = vsel %vm1339, %v3162, %v3164
        %v3193 = vsel %vm1339, %v3182, %v3162
        %3194 = vst [vmem:[#allocation2 + $0x7e8] sm:$0xff] %v3192
        %3195 = vst [vmem:[#allocation2 + $0x7f0] sm:$0xff] %v3191
        %3196 = vst [vmem:[#allocation2 + $0x7f8] sm:$0xff] %v3190
        %3197 = vst [vmem:[#allocation2 + $0x800] sm:$0xff] %v3189
        %3198 = vst [vmem:[#allocation2 + $0x808] sm:$0xff] %v3188
        %3199 = vst [vmem:[#allocation2 + $0x810] sm:$0xff] %v3187
        %3200 = vst [vmem:[#allocation2 + $0x818] sm:$0xff] %v3186
        %3201 = vst [vmem:[#allocation2 + $0x820] sm:$0xff] %v3185
        %3202 = vst [vmem:[#allocation2 + $0x828] sm:$0xff] %v3184
        %3203 = vst [vmem:[#allocation2 + $0x830] sm:$0xff] %v3183
        %3204 = vst [vmem:[#allocation2 + $0x838] sm:$0xff] %v3193
        %3205 = vrot.lane.b32.xlu0 %v2171, 54
        %v3206 = vpop.permute.xlu0 %3205
        %3207 = vrot.lane.b32.xlu0 %v2172, 54
        %v3208 = vpop.permute.xlu0 %3207
        %3209 = vrot.lane.b32.xlu0 %v2173, 54
        %v3210 = vpop.permute.xlu0 %3209
        %3211 = vrot.lane.b32.xlu0 %v2174, 54
        %v3212 = vpop.permute.xlu0 %3211
        %3213 = vrot.lane.b32.xlu0 %v2175, 54
        %v3214 = vpop.permute.xlu0 %3213
        %3215 = vrot.lane.b32.xlu0 %v2176, 54
        %v3216 = vpop.permute.xlu0 %3215
        %3217 = vrot.lane.b32.xlu0 %v2177, 54
        %v3218 = vpop.permute.xlu0 %3217
        %3219 = vrot.lane.b32.xlu0 %v2178, 54
        %v3220 = vpop.permute.xlu0 %3219
        %3221 = vrot.lane.b32.xlu0 %v2179, 54
        %v3222 = vpop.permute.xlu0 %3221
        %3223 = vrot.lane.b32.xlu0 %v2180, 54
        %v3224 = vpop.permute.xlu0 %3223
        %3225 = vrot.lane.b32.xlu0 %v2181, 54
        %v3226 = vpop.permute.xlu0 %3225
        %v3227 = vsel %vm1384, %v3224, %v3226
        %v3228 = vsel %vm1384, %v3222, %v3224
        %v3229 = vsel %vm1384, %v3220, %v3222
        %v3230 = vsel %vm1384, %v3218, %v3220
        %v3231 = vsel %vm1384, %v3216, %v3218
        %v3232 = vsel %vm1384, %v3214, %v3216
        %v3233 = vsel %vm1384, %v3212, %v3214
        %v3234 = vsel %vm1384, %v3210, %v3212
        %v3235 = vsel %vm1384, %v3208, %v3210
        %v3236 = vsel %vm1384, %v3206, %v3208
        %v3237 = vsel %vm1384, %v3226, %v3206
        %3238 = vst [vmem:[#allocation2 + $0x840] sm:$0xff] %v3236
        %3239 = vst [vmem:[#allocation2 + $0x848] sm:$0xff] %v3235
        %3240 = vst [vmem:[#allocation2 + $0x850] sm:$0xff] %v3234
        %3241 = vst [vmem:[#allocation2 + $0x858] sm:$0xff] %v3233
        %3242 = vst [vmem:[#allocation2 + $0x860] sm:$0xff] %v3232
        %3243 = vst [vmem:[#allocation2 + $0x868] sm:$0xff] %v3231
        %3244 = vst [vmem:[#allocation2 + $0x870] sm:$0xff] %v3230
        %3245 = vst [vmem:[#allocation2 + $0x878] sm:$0xff] %v3229
        %3246 = vst [vmem:[#allocation2 + $0x880] sm:$0xff] %v3228
        %3247 = vst [vmem:[#allocation2 + $0x888] sm:$0xff] %v3227
        %3248 = vst [vmem:[#allocation2 + $0x890] sm:$0xff] %v3237
        %v3249 = vld [vmem:[%s4] sm:$0xff]
        %v3250 = vld [vmem:[%s4 + $0x8] sm:$0xff]
        %v3251 = vld [vmem:[#allocation2] sm:$0xff]
        %v3252 = vld [vmem:[#allocation2 + $0x8] sm:$0xff]
        %v3253 = vld [vmem:[#allocation2 + $0x10] sm:$0xff]
        %v3254 = vld [vmem:[#allocation2 + $0x18] sm:$0xff]
        %v3255 = vld [vmem:[#allocation2 + $0x20] sm:$0xff]
        %v3256 = vld [vmem:[#allocation2 + $0x28] sm:$0xff]
        %v3257 = vld [vmem:[#allocation2 + $0x30] sm:$0xff]
        %v3258 = vld [vmem:[#allocation2 + $0x38] sm:$0xff]
        %v3259 = vld [vmem:[#allocation2 + $0x40] sm:$0xff]
        %v3260 = vld [vmem:[#allocation2 + $0x48] sm:$0xff]
        %v3261 = vld [vmem:[#allocation2 + $0x50] sm:$0xff]
        %v3262 = vld [vmem:[#allocation2 + $0x58] sm:$0xff]
        %v3263 = vld [vmem:[#allocation2 + $0x60] sm:$0xff]
        %v3264 = vld [vmem:[#allocation2 + $0x68] sm:$0xff]
        %v3265 = vld [vmem:[#allocation2 + $0x70] sm:$0xff]
        %v3266 = vld [vmem:[#allocation2 + $0x78] sm:$0xff]
        %v3267 = vld [vmem:[#allocation2 + $0x80] sm:$0xff]
        %v3268 = vld [vmem:[#allocation2 + $0x88] sm:$0xff]
        %v3269 = vld [vmem:[#allocation2 + $0x90] sm:$0xff]
        %v3270 = vld [vmem:[#allocation2 + $0x98] sm:$0xff]
        %v3271 = vld [vmem:[#allocation2 + $0xa0] sm:$0xff]
        %v3272 = vld [vmem:[#allocation2 + $0xa8] sm:$0xff]
        %v3273 = vld [vmem:[#allocation2 + $0xb0] sm:$0xff]
        %v3274 = vld [vmem:[#allocation2 + $0xb8] sm:$0xff]
        %v3275 = vld [vmem:[#allocation2 + $0xc0] sm:$0xff]
        %v3276 = vld [vmem:[#allocation2 + $0xc8] sm:$0xff]
        %v3277 = vld [vmem:[#allocation2 + $0xd0] sm:$0xff]
        %v3278 = vld [vmem:[#allocation2 + $0xd8] sm:$0xff]
        %v3279 = vld [vmem:[#allocation2 + $0xe0] sm:$0xff]
        %v3280 = vld [vmem:[#allocation2 + $0xe8] sm:$0xff]
        %v3281 = vld [vmem:[#allocation2 + $0xf0] sm:$0xff]
        %v3282 = vld [vmem:[#allocation2 + $0xf8] sm:$0xff]
        %v3283 = vld [vmem:[#allocation2 + $0x100] sm:$0xff]
        %v3284 = vld [vmem:[#allocation2 + $0x108] sm:$0xff]
        %v3285 = vld [vmem:[#allocation2 + $0x110] sm:$0xff]
        %v3286 = vld [vmem:[#allocation2 + $0x118] sm:$0xff]
        %v3287 = vld [vmem:[#allocation2 + $0x120] sm:$0xff]
        %v3288 = vld [vmem:[#allocation2 + $0x128] sm:$0xff]
        %v3289 = vld [vmem:[#allocation2 + $0x130] sm:$0xff]
        %v3290 = vld [vmem:[#allocation2 + $0x138] sm:$0xff]
        %v3291 = vld [vmem:[#allocation2 + $0x140] sm:$0xff]
        %v3292 = vld [vmem:[#allocation2 + $0x148] sm:$0xff]
        %v3293 = vld [vmem:[#allocation2 + $0x150] sm:$0xff]
        %v3294 = vld [vmem:[#allocation2 + $0x158] sm:$0xff]
        %v3295 = vld [vmem:[#allocation2 + $0x160] sm:$0xff]
        %v3296 = vld [vmem:[#allocation2 + $0x168] sm:$0xff]
        %v3297 = vld [vmem:[#allocation2 + $0x170] sm:$0xff]
        %v3298 = vld [vmem:[#allocation2 + $0x178] sm:$0xff]
        %v3299 = vld [vmem:[#allocation2 + $0x180] sm:$0xff]
        %v3300 = vld [vmem:[#allocation2 + $0x188] sm:$0xff]
        %v3301 = vld [vmem:[#allocation2 + $0x190] sm:$0xff]
        %v3302 = vld [vmem:[#allocation2 + $0x198] sm:$0xff]
        %v3303 = vld [vmem:[#allocation2 + $0x1a0] sm:$0xff]
        %v3304 = vld [vmem:[#allocation2 + $0x1a8] sm:$0xff]
        %v3305 = vld [vmem:[#allocation2 + $0x1b0] sm:$0xff]
        %v3306 = vld [vmem:[#allocation2 + $0x1b8] sm:$0xff]
        %v3307 = vld [vmem:[#allocation2 + $0x1c0] sm:$0xff]
        %v3308 = vld [vmem:[#allocation2 + $0x1c8] sm:$0xff]
        %v3309 = vld [vmem:[#allocation2 + $0x1d0] sm:$0xff]
        %v3310 = vld [vmem:[#allocation2 + $0x1d8] sm:$0xff]
        %v3311 = vld [vmem:[#allocation2 + $0x1e0] sm:$0xff]
        %v3312 = vld [vmem:[#allocation2 + $0x1e8] sm:$0xff]
        %v3313 = vld [vmem:[#allocation2 + $0x1f0] sm:$0xff]
        %v3314 = vld [vmem:[#allocation2 + $0x1f8] sm:$0xff]
        %v3315 = vld [vmem:[#allocation2 + $0x200] sm:$0xff]
        %v3316 = vld [vmem:[#allocation2 + $0x208] sm:$0xff]
        %v3317 = vld [vmem:[#allocation2 + $0x210] sm:$0xff]
        %v3318 = vld [vmem:[#allocation2 + $0x218] sm:$0xff]
        %v3319 = vld [vmem:[#allocation2 + $0x220] sm:$0xff]
        %v3320 = vld [vmem:[#allocation2 + $0x228] sm:$0xff]
        %v3321 = vld [vmem:[#allocation2 + $0x230] sm:$0xff]
        %v3322 = vld [vmem:[#allocation2 + $0x238] sm:$0xff]
        %v3323 = vld [vmem:[#allocation2 + $0x240] sm:$0xff]
        %v3324 = vld [vmem:[#allocation2 + $0x248] sm:$0xff]
        %v3325 = vld [vmem:[#allocation2 + $0x250] sm:$0xff]
        %v3326 = vld [vmem:[#allocation2 + $0x258] sm:$0xff]
        %v3327 = vld [vmem:[#allocation2 + $0x260] sm:$0xff]
        %v3328 = vld [vmem:[#allocation2 + $0x268] sm:$0xff]
        %v3329 = vld [vmem:[#allocation2 + $0x270] sm:$0xff]
        %v3330 = vld [vmem:[#allocation2 + $0x278] sm:$0xff]
        %v3331 = vld [vmem:[#allocation2 + $0x280] sm:$0xff]
        %v3332 = vld [vmem:[#allocation2 + $0x288] sm:$0xff]
        %v3333 = vld [vmem:[#allocation2 + $0x290] sm:$0xff]
        %v3334 = vld [vmem:[#allocation2 + $0x298] sm:$0xff]
        %v3335 = vld [vmem:[#allocation2 + $0x2a0] sm:$0xff]
        %v3336 = vld [vmem:[#allocation2 + $0x2a8] sm:$0xff]
        %v3337 = vld [vmem:[#allocation2 + $0x2b0] sm:$0xff]
        %v3338 = vld [vmem:[#allocation2 + $0x2b8] sm:$0xff]
        %v3339 = vld [vmem:[#allocation2 + $0x2c0] sm:$0xff]
        %v3340 = vld [vmem:[#allocation2 + $0x2c8] sm:$0xff]
        %v3341 = vld [vmem:[#allocation2 + $0x2d0] sm:$0xff]
        %v3342 = vld [vmem:[#allocation2 + $0x2d8] sm:$0xff]
        %v3343 = vld [vmem:[#allocation2 + $0x2e0] sm:$0xff]
        %v3344 = vld [vmem:[#allocation2 + $0x2e8] sm:$0xff]
        %v3345 = vld [vmem:[#allocation2 + $0x2f0] sm:$0xff]
        %v3346 = vld [vmem:[#allocation2 + $0x2f8] sm:$0xff]
        %v3347 = vld [vmem:[#allocation2 + $0x300] sm:$0xff]
        %v3348 = vld [vmem:[#allocation2 + $0x308] sm:$0xff]
        %v3349 = vld [vmem:[#allocation2 + $0x310] sm:$0xff]
        %v3350 = vld [vmem:[#allocation2 + $0x318] sm:$0xff]
        %v3351 = vld [vmem:[#allocation2 + $0x320] sm:$0xff]
        %v3352 = vld [vmem:[#allocation2 + $0x328] sm:$0xff]
        %v3353 = vld [vmem:[#allocation2 + $0x330] sm:$0xff]
        %v3354 = vld [vmem:[#allocation2 + $0x338] sm:$0xff]
        %v3355 = vld [vmem:[#allocation2 + $0x340] sm:$0xff]
        %v3356 = vld [vmem:[#allocation2 + $0x348] sm:$0xff]
        %v3357 = vld [vmem:[#allocation2 + $0x350] sm:$0xff]
        %v3358 = vld [vmem:[#allocation2 + $0x358] sm:$0xff]
        %v3359 = vld [vmem:[#allocation2 + $0x360] sm:$0xff]
        %v3360 = vld [vmem:[#allocation2 + $0x368] sm:$0xff]
        %v3361 = vld [vmem:[#allocation2 + $0x370] sm:$0xff]
        %v3362 = vld [vmem:[#allocation2 + $0x378] sm:$0xff]
        %v3363 = vld [vmem:[#allocation2 + $0x380] sm:$0xff]
        %v3364 = vld [vmem:[#allocation2 + $0x388] sm:$0xff]
        %v3365 = vld [vmem:[#allocation2 + $0x390] sm:$0xff]
        %v3366 = vld [vmem:[#allocation2 + $0x398] sm:$0xff]
        %v3367 = vld [vmem:[#allocation2 + $0x3a0] sm:$0xff]
        %v3368 = vld [vmem:[#allocation2 + $0x3a8] sm:$0xff]
        %v3369 = vld [vmem:[#allocation2 + $0x3b0] sm:$0xff]
        %v3370 = vld [vmem:[#allocation2 + $0x3b8] sm:$0xff]
        %v3371 = vld [vmem:[#allocation2 + $0x3c0] sm:$0xff]
        %v3372 = vld [vmem:[#allocation2 + $0x3c8] sm:$0xff]
        %v3373 = vld [vmem:[#allocation2 + $0x3d0] sm:$0xff]
        %v3374 = vld [vmem:[#allocation2 + $0x3d8] sm:$0xff]
        %v3375 = vld [vmem:[#allocation2 + $0x3e0] sm:$0xff]
        %v3376 = vld [vmem:[#allocation2 + $0x3e8] sm:$0xff]
        %v3377 = vld [vmem:[#allocation2 + $0x3f0] sm:$0xff]
        %v3378 = vld [vmem:[#allocation2 + $0x3f8] sm:$0xff]
        %v3379 = vld [vmem:[#allocation2 + $0x400] sm:$0xff]
        %v3380 = vld [vmem:[#allocation2 + $0x408] sm:$0xff]
        %v3381 = vld [vmem:[#allocation2 + $0x410] sm:$0xff]
        %v3382 = vld [vmem:[#allocation2 + $0x418] sm:$0xff]
        %v3383 = vld [vmem:[#allocation2 + $0x420] sm:$0xff]
        %v3384 = vld [vmem:[#allocation2 + $0x428] sm:$0xff]
        %v3385 = vld [vmem:[#allocation2 + $0x430] sm:$0xff]
        %v3386 = vld [vmem:[#allocation2 + $0x438] sm:$0xff]
        %v3387 = vld [vmem:[#allocation2 + $0x440] sm:$0xff]
        %v3388 = vld [vmem:[#allocation2 + $0x448] sm:$0xff]
        %v3389 = vld [vmem:[#allocation2 + $0x450] sm:$0xff]
        %v3390 = vld [vmem:[#allocation2 + $0x458] sm:$0xff]
        %v3391 = vld [vmem:[#allocation2 + $0x460] sm:$0xff]
        %v3392 = vld [vmem:[#allocation2 + $0x468] sm:$0xff]
        %v3393 = vld [vmem:[#allocation2 + $0x470] sm:$0xff]
        %v3394 = vld [vmem:[#allocation2 + $0x478] sm:$0xff]
        %v3395 = vld [vmem:[#allocation2 + $0x480] sm:$0xff]
        %v3396 = vld [vmem:[#allocation2 + $0x488] sm:$0xff]
        %v3397 = vld [vmem:[#allocation2 + $0x490] sm:$0xff]
        %v3398 = vld [vmem:[#allocation2 + $0x498] sm:$0xff]
        %v3399 = vld [vmem:[#allocation2 + $0x4a0] sm:$0xff]
        %v3400 = vld [vmem:[#allocation2 + $0x4a8] sm:$0xff]
        %v3401 = vld [vmem:[#allocation2 + $0x4b0] sm:$0xff]
        %v3402 = vld [vmem:[#allocation2 + $0x4b8] sm:$0xff]
        %v3403 = vld [vmem:[#allocation2 + $0x4c0] sm:$0xff]
        %v3404 = vld [vmem:[#allocation2 + $0x4c8] sm:$0xff]
        %v3405 = vld [vmem:[#allocation2 + $0x4d0] sm:$0xff]
        %v3406 = vld [vmem:[#allocation2 + $0x4d8] sm:$0xff]
        %v3407 = vld [vmem:[#allocation2 + $0x4e0] sm:$0xff]
        %v3408 = vld [vmem:[#allocation2 + $0x4e8] sm:$0xff]
        %v3409 = vld [vmem:[#allocation2 + $0x4f0] sm:$0xff]
        %v3410 = vld [vmem:[#allocation2 + $0x4f8] sm:$0xff]
        %v3411 = vld [vmem:[#allocation2 + $0x500] sm:$0xff]
        %v3412 = vld [vmem:[#allocation2 + $0x508] sm:$0xff]
        %v3413 = vld [vmem:[#allocation2 + $0x510] sm:$0xff]
        %v3414 = vld [vmem:[#allocation2 + $0x518] sm:$0xff]
        %v3415 = vld [vmem:[#allocation2 + $0x520] sm:$0xff]
        %v3416 = vld [vmem:[#allocation2 + $0x528] sm:$0xff]
        %v3417 = vld [vmem:[#allocation2 + $0x530] sm:$0xff]
        %v3418 = vld [vmem:[#allocation2 + $0x538] sm:$0xff]
        %v3419 = vld [vmem:[#allocation2 + $0x540] sm:$0xff]
        %v3420 = vld [vmem:[#allocation2 + $0x548] sm:$0xff]
        %v3421 = vld [vmem:[#allocation2 + $0x550] sm:$0xff]
        %v3422 = vld [vmem:[#allocation2 + $0x558] sm:$0xff]
        %v3423 = vld [vmem:[#allocation2 + $0x560] sm:$0xff]
        %v3424 = vld [vmem:[#allocation2 + $0x568] sm:$0xff]
        %v3425 = vld [vmem:[#allocation2 + $0x570] sm:$0xff]
        %v3426 = vld [vmem:[#allocation2 + $0x578] sm:$0xff]
        %v3427 = vld [vmem:[#allocation2 + $0x580] sm:$0xff]
        %v3428 = vld [vmem:[#allocation2 + $0x588] sm:$0xff]
        %v3429 = vld [vmem:[#allocation2 + $0x590] sm:$0xff]
        %v3430 = vld [vmem:[#allocation2 + $0x598] sm:$0xff]
        %v3431 = vld [vmem:[#allocation2 + $0x5a0] sm:$0xff]
        %v3432 = vld [vmem:[#allocation2 + $0x5a8] sm:$0xff]
        %v3433 = vld [vmem:[#allocation2 + $0x5b0] sm:$0xff]
        %v3434 = vld [vmem:[#allocation2 + $0x5b8] sm:$0xff]
        %v3435 = vld [vmem:[#allocation2 + $0x5c0] sm:$0xff]
        %v3436 = vld [vmem:[#allocation2 + $0x5c8] sm:$0xff]
        %v3437 = vld [vmem:[#allocation2 + $0x5d0] sm:$0xff]
        %v3438 = vld [vmem:[#allocation2 + $0x5d8] sm:$0xff]
        %v3439 = vld [vmem:[#allocation2 + $0x5e0] sm:$0xff]
        %v3440 = vld [vmem:[#allocation2 + $0x5e8] sm:$0xff]
        %v3441 = vld [vmem:[#allocation2 + $0x5f0] sm:$0xff]
        %v3442 = vld [vmem:[#allocation2 + $0x5f8] sm:$0xff]
        %v3443 = vld [vmem:[#allocation2 + $0x600] sm:$0xff]
        %v3444 = vld [vmem:[#allocation2 + $0x608] sm:$0xff]
        %v3445 = vld [vmem:[#allocation2 + $0x610] sm:$0xff]
        %v3446 = vld [vmem:[#allocation2 + $0x618] sm:$0xff]
        %v3447 = vld [vmem:[#allocation2 + $0x620] sm:$0xff]
        %v3448 = vld [vmem:[#allocation2 + $0x628] sm:$0xff]
        %v3449 = vld [vmem:[#allocation2 + $0x630] sm:$0xff]
        %v3450 = vld [vmem:[#allocation2 + $0x638] sm:$0xff]
        %v3451 = vld [vmem:[#allocation2 + $0x640] sm:$0xff]
        %v3452 = vld [vmem:[#allocation2 + $0x648] sm:$0xff]
        %v3453 = vld [vmem:[#allocation2 + $0x650] sm:$0xff]
        %v3454 = vld [vmem:[#allocation2 + $0x658] sm:$0xff]
        %v3455 = vld [vmem:[#allocation2 + $0x660] sm:$0xff]
        %v3456 = vld [vmem:[#allocation2 + $0x668] sm:$0xff]
        %v3457 = vld [vmem:[#allocation2 + $0x670] sm:$0xff]
        %v3458 = vld [vmem:[#allocation2 + $0x678] sm:$0xff]
        %v3459 = vld [vmem:[#allocation2 + $0x680] sm:$0xff]
        %v3460 = vld [vmem:[#allocation2 + $0x688] sm:$0xff]
        %v3461 = vld [vmem:[#allocation2 + $0x690] sm:$0xff]
        %v3462 = vld [vmem:[#allocation2 + $0x698] sm:$0xff]
        %v3463 = vld [vmem:[#allocation2 + $0x6a0] sm:$0xff]
        %v3464 = vld [vmem:[#allocation2 + $0x6a8] sm:$0xff]
        %v3465 = vld [vmem:[#allocation2 + $0x6b0] sm:$0xff]
        %v3466 = vld [vmem:[#allocation2 + $0x6b8] sm:$0xff]
        %v3467 = vld [vmem:[#allocation2 + $0x6c0] sm:$0xff]
        %v3468 = vld [vmem:[#allocation2 + $0x6c8] sm:$0xff]
        %v3469 = vld [vmem:[#allocation2 + $0x6d0] sm:$0xff]
        %v3470 = vld [vmem:[#allocation2 + $0x6d8] sm:$0xff]
        %v3471 = vld [vmem:[#allocation2 + $0x6e0] sm:$0xff]
        %v3472 = vld [vmem:[#allocation2 + $0x6e8] sm:$0xff]
        %v3473 = vld [vmem:[#allocation2 + $0x6f0] sm:$0xff]
        %v3474 = vld [vmem:[#allocation2 + $0x6f8] sm:$0xff]
        %v3475 = vld [vmem:[#allocation2 + $0x700] sm:$0xff]
        %v3476 = vld [vmem:[#allocation2 + $0x708] sm:$0xff]
        %v3477 = vld [vmem:[#allocation2 + $0x710] sm:$0xff]
        %v3478 = vld [vmem:[#allocation2 + $0x718] sm:$0xff]
        %v3479 = vld [vmem:[#allocation2 + $0x720] sm:$0xff]
        %v3480 = vld [vmem:[#allocation2 + $0x728] sm:$0xff]
        %v3481 = vld [vmem:[#allocation2 + $0x730] sm:$0xff]
        %v3482 = vld [vmem:[#allocation2 + $0x738] sm:$0xff]
        %v3483 = vld [vmem:[#allocation2 + $0x740] sm:$0xff]
        %v3484 = vld [vmem:[#allocation2 + $0x748] sm:$0xff]
        %v3485 = vld [vmem:[#allocation2 + $0x750] sm:$0xff]
        %v3486 = vld [vmem:[#allocation2 + $0x758] sm:$0xff]
        %v3487 = vld [vmem:[#allocation2 + $0x760] sm:$0xff]
        %v3488 = vld [vmem:[#allocation2 + $0x768] sm:$0xff]
        %v3489 = vld [vmem:[#allocation2 + $0x770] sm:$0xff]
        %v3490 = vld [vmem:[#allocation2 + $0x778] sm:$0xff]
        %v3491 = vld [vmem:[#allocation2 + $0x780] sm:$0xff]
        %v3492 = vld [vmem:[#allocation2 + $0x788] sm:$0xff]
        %v3493 = vld [vmem:[#allocation2 + $0x790] sm:$0xff]
        %v3494 = vld [vmem:[#allocation2 + $0x798] sm:$0xff]
        %v3495 = vld [vmem:[#allocation2 + $0x7a0] sm:$0xff]
        %v3496 = vld [vmem:[#allocation2 + $0x7a8] sm:$0xff]
        %v3497 = vld [vmem:[#allocation2 + $0x7b0] sm:$0xff]
        %v3498 = vld [vmem:[#allocation2 + $0x7b8] sm:$0xff]
        %v3499 = vld [vmem:[#allocation2 + $0x7c0] sm:$0xff]
        %v3500 = vld [vmem:[#allocation2 + $0x7c8] sm:$0xff]
        %v3501 = vld [vmem:[#allocation2 + $0x7d0] sm:$0xff]
        %v3502 = vld [vmem:[#allocation2 + $0x7d8] sm:$0xff]
        %v3503 = vld [vmem:[#allocation2 + $0x7e0] sm:$0xff]
        %v3504 = vld [vmem:[#allocation2 + $0x7e8] sm:$0xff]
        %v3505 = vld [vmem:[#allocation2 + $0x7f0] sm:$0xff]
        %v3506 = vld [vmem:[#allocation2 + $0x7f8] sm:$0xff]
        %v3507 = vld [vmem:[#allocation2 + $0x800] sm:$0xff]
        %v3508 = vld [vmem:[#allocation2 + $0x808] sm:$0xff]
        %v3509 = vld [vmem:[#allocation2 + $0x810] sm:$0xff]
        %v3510 = vld [vmem:[#allocation2 + $0x818] sm:$0xff]
        %v3511 = vld [vmem:[#allocation2 + $0x820] sm:$0xff]
        %v3512 = vld [vmem:[#allocation2 + $0x828] sm:$0xff]
        %v3513 = vld [vmem:[#allocation2 + $0x830] sm:$0xff]
        %v3514 = vld [vmem:[#allocation2 + $0x838] sm:$0xff]
        %v3515 = vld [vmem:[#allocation2 + $0x840] sm:$0xff]
        %v3516 = vld [vmem:[#allocation2 + $0x848] sm:$0xff]
        %v3517 = vld [vmem:[#allocation2 + $0x850] sm:$0xff]
        %v3518 = vld [vmem:[#allocation2 + $0x858] sm:$0xff]
        %v3519 = vld [vmem:[#allocation2 + $0x860] sm:$0xff]
        %v3520 = vld [vmem:[#allocation2 + $0x868] sm:$0xff]
        %v3521 = vld [vmem:[#allocation2 + $0x870] sm:$0xff]
        %v3522 = vld [vmem:[#allocation2 + $0x878] sm:$0xff]
        %v3523 = vld [vmem:[#allocation2 + $0x880] sm:$0xff]
        %v3524 = vld [vmem:[#allocation2 + $0x888] sm:$0xff]
        %v3525 = vld [vmem:[#allocation2 + $0x890] sm:$0xff]
        %v3526 = vld [vmem:[%s5] sm:$0xff]
        %3528 = vset.pattern.permute.xlu0 0
        %3529 = vperm.xlu0 %3528, %v3526
        %v3530 = vpop.permute.xlu0 %3529
        %v3533 = vsel %vm1690, %v3250, 0
        %3535 = vmatpush.msra.mxu0 %v3416
        %3536 = vmatpush.msra.mxu0 %v3405
        %3537 = vmatpush.msra.mxu0 %v3394
        %3538 = vmatpush.msra.mxu0 %v3383
        %3539 = vmatpush.msra.mxu0 %v3372
        %3540 = vmatpush.msra.mxu0 %v3361
        %3541 = vmatpush.msra.mxu0 %v3350
        %3542 = vmatpush.msra.mxu0 %v3339
        %3543 = vmatpush.msra.mxu0 %v3328
        %3544 = vmatpush.msra.mxu0 %v3317
        %3545 = vmatpush.msra.mxu0 %v3306
        %3546 = vmatpush.msra.mxu0 %v3295
        %3547 = vmatpush.msra.mxu0 %v3284
        %3548 = vmatpush.msra.mxu0 %v3273
        %3549 = vmatpush.msra.mxu0 %v3262
        %3550 = vmatpush.msra.mxu0 %v3251
        %3551 = vmatmul.f32.gmra.mxu0 %v3249
        %v3552 = vpop.f32.mrf.mxu0
        %v3553 = vadd.f32 %v3530, %v3552
        %3554 = vdwg.mxu0
        %3555 = vmatpush.msra.mxu0 0.0
        %3556 = vmatpush.msra.mxu0 0.0
        %3557 = vmatpush.msra.mxu0 0.0
        %3558 = vmatpush.msra.mxu0 0.0
        %3559 = vmatpush.msra.mxu0 0.0
        %3560 = vmatpush.msra.mxu0 0.0
        %3561 = vmatpush.msra.mxu0 0.0
        %3562 = vmatpush.msra.mxu0 %v3515
        %3563 = vmatpush.msra.mxu0 %v3504
        %3564 = vmatpush.msra.mxu0 %v3493
        %3565 = vmatpush.msra.mxu0 %v3482
        %3566 = vmatpush.msra.mxu0 %v3471
        %3567 = vmatpush.msra.mxu0 %v3460
        %3568 = vmatpush.msra.mxu0 %v3449
        %3569 = vmatpush.msra.mxu0 %v3438
        %3570 = vmatpush.msra.mxu0 %v3427
        %3571 = vmatmul.f32.gmra.mxu0 %v3533
        %v3572 = vpop.f32.mrf.mxu0
        %v3573 = vadd.f32 %v3553, %v3572
        %3574 = vdwg.mxu0
        %3575 = vmatpush.msra.mxu0 %v3417
        %3576 = vmatpush.msra.mxu0 %v3406
        %3577 = vmatpush.msra.mxu0 %v3395
        %3578 = vmatpush.msra.mxu0 %v3384
        %3579 = vmatpush.msra.mxu0 %v3373
        %3580 = vmatpush.msra.mxu0 %v3362
        %3581 = vmatpush.msra.mxu0 %v3351
        %3582 = vmatpush.msra.mxu0 %v3340
        %3583 = vmatpush.msra.mxu0 %v3329
        %3584 = vmatpush.msra.mxu0 %v3318
        %3585 = vmatpush.msra.mxu0 %v3307
        %3586 = vmatpush.msra.mxu0 %v3296
        %3587 = vmatpush.msra.mxu0 %v3285
        %3588 = vmatpush.msra.mxu0 %v3274
        %3589 = vmatpush.msra.mxu0 %v3263
        %3590 = vmatpush.msra.mxu0 %v3252
        %3591 = vmatmul.f32.gmra.mxu0 %v3249
        %v3592 = vpop.f32.mrf.mxu0
        %v3593 = vadd.f32 %v3530, %v3592
        %3594 = vdwg.mxu0
        %3595 = vmatpush.msra.mxu0 0.0
        %3596 = vmatpush.msra.mxu0 0.0
        %3597 = vmatpush.msra.mxu0 0.0
        %3598 = vmatpush.msra.mxu0 0.0
        %3599 = vmatpush.msra.mxu0 0.0
        %3600 = vmatpush.msra.mxu0 0.0
        %3601 = vmatpush.msra.mxu0 0.0
        %3602 = vmatpush.msra.mxu0 %v3516
        %3603 = vmatpush.msra.mxu0 %v3505
        %3604 = vmatpush.msra.mxu0 %v3494
        %3605 = vmatpush.msra.mxu0 %v3483
        %3606 = vmatpush.msra.mxu0 %v3472
        %3607 = vmatpush.msra.mxu0 %v3461
        %3608 = vmatpush.msra.mxu0 %v3450
        %3609 = vmatpush.msra.mxu0 %v3439
        %3610 = vmatpush.msra.mxu0 %v3428
        %3611 = vmatmul.f32.gmra.mxu0 %v3533
        %v3612 = vpop.f32.mrf.mxu0
        %v3613 = vadd.f32 %v3593, %v3612
        %3614 = vdwg.mxu0
        %3615 = vmatpush.msra.mxu0 %v3418
        %3616 = vmatpush.msra.mxu0 %v3407
        %3617 = vmatpush.msra.mxu0 %v3396
        %3618 = vmatpush.msra.mxu0 %v3385
        %3619 = vmatpush.msra.mxu0 %v3374
        %3620 = vmatpush.msra.mxu0 %v3363
        %3621 = vmatpush.msra.mxu0 %v3352
        %3622 = vmatpush.msra.mxu0 %v3341
        %3623 = vmatpush.msra.mxu0 %v3330
        %3624 = vmatpush.msra.mxu0 %v3319
        %3625 = vmatpush.msra.mxu0 %v3308
        %3626 = vmatpush.msra.mxu0 %v3297
        %3627 = vmatpush.msra.mxu0 %v3286
        %3628 = vmatpush.msra.mxu0 %v3275
        %3629 = vmatpush.msra.mxu0 %v3264
        %3630 = vmatpush.msra.mxu0 %v3253
        %3631 = vmatmul.f32.gmra.mxu0 %v3249
        %v3632 = vpop.f32.mrf.mxu0
        %v3633 = vadd.f32 %v3530, %v3632
        %3634 = vdwg.mxu0
        %3635 = vmatpush.msra.mxu0 0.0
        %3636 = vmatpush.msra.mxu0 0.0
        %3637 = vmatpush.msra.mxu0 0.0
        %3638 = vmatpush.msra.mxu0 0.0
        %3639 = vmatpush.msra.mxu0 0.0
        %3640 = vmatpush.msra.mxu0 0.0
        %3641 = vmatpush.msra.mxu0 0.0
        %3642 = vmatpush.msra.mxu0 %v3517
        %3643 = vmatpush.msra.mxu0 %v3506
        %3644 = vmatpush.msra.mxu0 %v3495
        %3645 = vmatpush.msra.mxu0 %v3484
        %3646 = vmatpush.msra.mxu0 %v3473
        %3647 = vmatpush.msra.mxu0 %v3462
        %3648 = vmatpush.msra.mxu0 %v3451
        %3649 = vmatpush.msra.mxu0 %v3440
        %3650 = vmatpush.msra.mxu0 %v3429
        %3651 = vmatmul.f32.gmra.mxu0 %v3533
        %v3652 = vpop.f32.mrf.mxu0
        %v3653 = vadd.f32 %v3633, %v3652
        %3654 = vdwg.mxu0
        %3655 = vmatpush.msra.mxu0 %v3419
        %3656 = vmatpush.msra.mxu0 %v3408
        %3657 = vmatpush.msra.mxu0 %v3397
        %3658 = vmatpush.msra.mxu0 %v3386
        %3659 = vmatpush.msra.mxu0 %v3375
        %3660 = vmatpush.msra.mxu0 %v3364
        %3661 = vmatpush.msra.mxu0 %v3353
        %3662 = vmatpush.msra.mxu0 %v3342
        %3663 = vmatpush.msra.mxu0 %v3331
        %3664 = vmatpush.msra.mxu0 %v3320
        %3665 = vmatpush.msra.mxu0 %v3309
        %3666 = vmatpush.msra.mxu0 %v3298
        %3667 = vmatpush.msra.mxu0 %v3287
        %3668 = vmatpush.msra.mxu0 %v3276
        %3669 = vmatpush.msra.mxu0 %v3265
        %3670 = vmatpush.msra.mxu0 %v3254
        %3671 = vmatmul.f32.gmra.mxu0 %v3249
        %v3672 = vpop.f32.mrf.mxu0
        %v3673 = vadd.f32 %v3530, %v3672
        %3674 = vdwg.mxu0
        %3675 = vmatpush.msra.mxu0 0.0
        %3676 = vmatpush.msra.mxu0 0.0
        %3677 = vmatpush.msra.mxu0 0.0
        %3678 = vmatpush.msra.mxu0 0.0
        %3679 = vmatpush.msra.mxu0 0.0
        %3680 = vmatpush.msra.mxu0 0.0
        %3681 = vmatpush.msra.mxu0 0.0
        %3682 = vmatpush.msra.mxu0 %v3518
        %3683 = vmatpush.msra.mxu0 %v3507
        %3684 = vmatpush.msra.mxu0 %v3496
        %3685 = vmatpush.msra.mxu0 %v3485
        %3686 = vmatpush.msra.mxu0 %v3474
        %3687 = vmatpush.msra.mxu0 %v3463
        %3688 = vmatpush.msra.mxu0 %v3452
        %3689 = vmatpush.msra.mxu0 %v3441
        %3690 = vmatpush.msra.mxu0 %v3430
        %3691 = vmatmul.f32.gmra.mxu0 %v3533
        %v3692 = vpop.f32.mrf.mxu0
        %v3693 = vadd.f32 %v3673, %v3692
        %3694 = vdwg.mxu0
        %3695 = vmatpush.msra.mxu0 %v3420
        %3696 = vmatpush.msra.mxu0 %v3409
        %3697 = vmatpush.msra.mxu0 %v3398
        %3698 = vmatpush.msra.mxu0 %v3387
        %3699 = vmatpush.msra.mxu0 %v3376
        %3700 = vmatpush.msra.mxu0 %v3365
        %3701 = vmatpush.msra.mxu0 %v3354
        %3702 = vmatpush.msra.mxu0 %v3343
        %3703 = vmatpush.msra.mxu0 %v3332
        %3704 = vmatpush.msra.mxu0 %v3321
        %3705 = vmatpush.msra.mxu0 %v3310
        %3706 = vmatpush.msra.mxu0 %v3299
        %3707 = vmatpush.msra.mxu0 %v3288
        %3708 = vmatpush.msra.mxu0 %v3277
        %3709 = vmatpush.msra.mxu0 %v3266
        %3710 = vmatpush.msra.mxu0 %v3255
        %3711 = vmatmul.f32.gmra.mxu0 %v3249
        %v3712 = vpop.f32.mrf.mxu0
        %v3713 = vadd.f32 %v3530, %v3712
        %3714 = vdwg.mxu0
        %3715 = vmatpush.msra.mxu0 0.0
        %3716 = vmatpush.msra.mxu0 0.0
        %3717 = vmatpush.msra.mxu0 0.0
        %3718 = vmatpush.msra.mxu0 0.0
        %3719 = vmatpush.msra.mxu0 0.0
        %3720 = vmatpush.msra.mxu0 0.0
        %3721 = vmatpush.msra.mxu0 0.0
        %3722 = vmatpush.msra.mxu0 %v3519
        %3723 = vmatpush.msra.mxu0 %v3508
        %3724 = vmatpush.msra.mxu0 %v3497
        %3725 = vmatpush.msra.mxu0 %v3486
        %3726 = vmatpush.msra.mxu0 %v3475
        %3727 = vmatpush.msra.mxu0 %v3464
        %3728 = vmatpush.msra.mxu0 %v3453
        %3729 = vmatpush.msra.mxu0 %v3442
        %3730 = vmatpush.msra.mxu0 %v3431
        %3731 = vmatmul.f32.gmra.mxu0 %v3533
        %v3732 = vpop.f32.mrf.mxu0
        %v3733 = vadd.f32 %v3713, %v3732
        %3734 = vdwg.mxu0
        %3735 = vmatpush.msra.mxu0 %v3421
        %3736 = vmatpush.msra.mxu0 %v3410
        %3737 = vmatpush.msra.mxu0 %v3399
        %3738 = vmatpush.msra.mxu0 %v3388
        %3739 = vmatpush.msra.mxu0 %v3377
        %3740 = vmatpush.msra.mxu0 %v3366
        %3741 = vmatpush.msra.mxu0 %v3355
        %3742 = vmatpush.msra.mxu0 %v3344
        %3743 = vmatpush.msra.mxu0 %v3333
        %3744 = vmatpush.msra.mxu0 %v3322
        %3745 = vmatpush.msra.mxu0 %v3311
        %3746 = vmatpush.msra.mxu0 %v3300
        %3747 = vmatpush.msra.mxu0 %v3289
        %3748 = vmatpush.msra.mxu0 %v3278
        %3749 = vmatpush.msra.mxu0 %v3267
        %3750 = vmatpush.msra.mxu0 %v3256
        %3751 = vmatmul.f32.gmra.mxu0 %v3249
        %v3752 = vpop.f32.mrf.mxu0
        %v3753 = vadd.f32 %v3530, %v3752
        %3754 = vdwg.mxu0
        %3755 = vmatpush.msra.mxu0 0.0
        %3756 = vmatpush.msra.mxu0 0.0
        %3757 = vmatpush.msra.mxu0 0.0
        %3758 = vmatpush.msra.mxu0 0.0
        %3759 = vmatpush.msra.mxu0 0.0
        %3760 = vmatpush.msra.mxu0 0.0
        %3761 = vmatpush.msra.mxu0 0.0
        %3762 = vmatpush.msra.mxu0 %v3520
        %3763 = vmatpush.msra.mxu0 %v3509
        %3764 = vmatpush.msra.mxu0 %v3498
        %3765 = vmatpush.msra.mxu0 %v3487
        %3766 = vmatpush.msra.mxu0 %v3476
        %3767 = vmatpush.msra.mxu0 %v3465
        %3768 = vmatpush.msra.mxu0 %v3454
        %3769 = vmatpush.msra.mxu0 %v3443
        %3770 = vmatpush.msra.mxu0 %v3432
        %3771 = vmatmul.f32.gmra.mxu0 %v3533
        %v3772 = vpop.f32.mrf.mxu0
        %v3773 = vadd.f32 %v3753, %v3772
        %3774 = vdwg.mxu0
        %3775 = vmatpush.msra.mxu0 %v3422
        %3776 = vmatpush.msra.mxu0 %v3411
        %3777 = vmatpush.msra.mxu0 %v3400
        %3778 = vmatpush.msra.mxu0 %v3389
        %3779 = vmatpush.msra.mxu0 %v3378
        %3780 = vmatpush.msra.mxu0 %v3367
        %3781 = vmatpush.msra.mxu0 %v3356
        %3782 = vmatpush.msra.mxu0 %v3345
        %3783 = vmatpush.msra.mxu0 %v3334
        %3784 = vmatpush.msra.mxu0 %v3323
        %3785 = vmatpush.msra.mxu0 %v3312
        %3786 = vmatpush.msra.mxu0 %v3301
        %3787 = vmatpush.msra.mxu0 %v3290
        %3788 = vmatpush.msra.mxu0 %v3279
        %3789 = vmatpush.msra.mxu0 %v3268
        %3790 = vmatpush.msra.mxu0 %v3257
        %3791 = vmatmul.f32.gmra.mxu0 %v3249
        %v3792 = vpop.f32.mrf.mxu0
        %v3793 = vadd.f32 %v3530, %v3792
        %3794 = vdwg.mxu0
        %3795 = vmatpush.msra.mxu0 0.0
        %3796 = vmatpush.msra.mxu0 0.0
        %3797 = vmatpush.msra.mxu0 0.0
        %3798 = vmatpush.msra.mxu0 0.0
        %3799 = vmatpush.msra.mxu0 0.0
        %3800 = vmatpush.msra.mxu0 0.0
        %3801 = vmatpush.msra.mxu0 0.0
        %3802 = vmatpush.msra.mxu0 %v3521
        %3803 = vmatpush.msra.mxu0 %v3510
        %3804 = vmatpush.msra.mxu0 %v3499
        %3805 = vmatpush.msra.mxu0 %v3488
        %3806 = vmatpush.msra.mxu0 %v3477
        %3807 = vmatpush.msra.mxu0 %v3466
        %3808 = vmatpush.msra.mxu0 %v3455
        %3809 = vmatpush.msra.mxu0 %v3444
        %3810 = vmatpush.msra.mxu0 %v3433
        %3811 = vmatmul.f32.gmra.mxu0 %v3533
        %v3812 = vpop.f32.mrf.mxu0
        %v3813 = vadd.f32 %v3793, %v3812
        %3814 = vdwg.mxu0
        %3815 = vmatpush.msra.mxu0 %v3423
        %3816 = vmatpush.msra.mxu0 %v3412
        %3817 = vmatpush.msra.mxu0 %v3401
        %3818 = vmatpush.msra.mxu0 %v3390
        %3819 = vmatpush.msra.mxu0 %v3379
        %3820 = vmatpush.msra.mxu0 %v3368
        %3821 = vmatpush.msra.mxu0 %v3357
        %3822 = vmatpush.msra.mxu0 %v3346
        %3823 = vmatpush.msra.mxu0 %v3335
        %3824 = vmatpush.msra.mxu0 %v3324
        %3825 = vmatpush.msra.mxu0 %v3313
        %3826 = vmatpush.msra.mxu0 %v3302
        %3827 = vmatpush.msra.mxu0 %v3291
        %3828 = vmatpush.msra.mxu0 %v3280
        %3829 = vmatpush.msra.mxu0 %v3269
        %3830 = vmatpush.msra.mxu0 %v3258
        %3831 = vmatmul.f32.gmra.mxu0 %v3249
        %v3832 = vpop.f32.mrf.mxu0
        %v3833 = vadd.f32 %v3530, %v3832
        %3834 = vdwg.mxu0
        %3835 = vmatpush.msra.mxu0 0.0
        %3836 = vmatpush.msra.mxu0 0.0
        %3837 = vmatpush.msra.mxu0 0.0
        %3838 = vmatpush.msra.mxu0 0.0
        %3839 = vmatpush.msra.mxu0 0.0
        %3840 = vmatpush.msra.mxu0 0.0
        %3841 = vmatpush.msra.mxu0 0.0
        %3842 = vmatpush.msra.mxu0 %v3522
        %3843 = vmatpush.msra.mxu0 %v3511
        %3844 = vmatpush.msra.mxu0 %v3500
        %3845 = vmatpush.msra.mxu0 %v3489
        %3846 = vmatpush.msra.mxu0 %v3478
        %3847 = vmatpush.msra.mxu0 %v3467
        %3848 = vmatpush.msra.mxu0 %v3456
        %3849 = vmatpush.msra.mxu0 %v3445
        %3850 = vmatpush.msra.mxu0 %v3434
        %3851 = vmatmul.f32.gmra.mxu0 %v3533
        %v3852 = vpop.f32.mrf.mxu0
        %v3853 = vadd.f32 %v3833, %v3852
        %3854 = vdwg.mxu0
        %3855 = vmatpush.msra.mxu0 %v3424
        %3856 = vmatpush.msra.mxu0 %v3413
        %3857 = vmatpush.msra.mxu0 %v3402
        %3858 = vmatpush.msra.mxu0 %v3391
        %3859 = vmatpush.msra.mxu0 %v3380
        %3860 = vmatpush.msra.mxu0 %v3369
        %3861 = vmatpush.msra.mxu0 %v3358
        %3862 = vmatpush.msra.mxu0 %v3347
        %3863 = vmatpush.msra.mxu0 %v3336
        %3864 = vmatpush.msra.mxu0 %v3325
        %3865 = vmatpush.msra.mxu0 %v3314
        %3866 = vmatpush.msra.mxu0 %v3303
        %3867 = vmatpush.msra.mxu0 %v3292
        %3868 = vmatpush.msra.mxu0 %v3281
        %3869 = vmatpush.msra.mxu0 %v3270
        %3870 = vmatpush.msra.mxu0 %v3259
        %3871 = vmatmul.f32.gmra.mxu0 %v3249
        %v3872 = vpop.f32.mrf.mxu0
        %v3873 = vadd.f32 %v3530, %v3872
        %3874 = vdwg.mxu0
        %3875 = vmatpush.msra.mxu0 0.0
        %3876 = vmatpush.msra.mxu0 0.0
        %3877 = vmatpush.msra.mxu0 0.0
        %3878 = vmatpush.msra.mxu0 0.0
        %3879 = vmatpush.msra.mxu0 0.0
        %3880 = vmatpush.msra.mxu0 0.0
        %3881 = vmatpush.msra.mxu0 0.0
        %3882 = vmatpush.msra.mxu0 %v3523
        %3883 = vmatpush.msra.mxu0 %v3512
        %3884 = vmatpush.msra.mxu0 %v3501
        %3885 = vmatpush.msra.mxu0 %v3490
        %3886 = vmatpush.msra.mxu0 %v3479
        %3887 = vmatpush.msra.mxu0 %v3468
        %3888 = vmatpush.msra.mxu0 %v3457
        %3889 = vmatpush.msra.mxu0 %v3446
        %3890 = vmatpush.msra.mxu0 %v3435
        %3891 = vmatmul.f32.gmra.mxu0 %v3533
        %v3892 = vpop.f32.mrf.mxu0
        %v3893 = vadd.f32 %v3873, %v3892
        %3894 = vdwg.mxu0
        %3895 = vmatpush.msra.mxu0 %v3425
        %3896 = vmatpush.msra.mxu0 %v3414
        %3897 = vmatpush.msra.mxu0 %v3403
        %3898 = vmatpush.msra.mxu0 %v3392
        %3899 = vmatpush.msra.mxu0 %v3381
        %3900 = vmatpush.msra.mxu0 %v3370
        %3901 = vmatpush.msra.mxu0 %v3359
        %3902 = vmatpush.msra.mxu0 %v3348
        %3903 = vmatpush.msra.mxu0 %v3337
        %3904 = vmatpush.msra.mxu0 %v3326
        %3905 = vmatpush.msra.mxu0 %v3315
        %3906 = vmatpush.msra.mxu0 %v3304
        %3907 = vmatpush.msra.mxu0 %v3293
        %3908 = vmatpush.msra.mxu0 %v3282
        %3909 = vmatpush.msra.mxu0 %v3271
        %3910 = vmatpush.msra.mxu0 %v3260
        %3911 = vmatmul.f32.gmra.mxu0 %v3249
        %v3912 = vpop.f32.mrf.mxu0
        %v3913 = vadd.f32 %v3530, %v3912
        %3914 = vdwg.mxu0
        %3915 = vmatpush.msra.mxu0 0.0
        %3916 = vmatpush.msra.mxu0 0.0
        %3917 = vmatpush.msra.mxu0 0.0
        %3918 = vmatpush.msra.mxu0 0.0
        %3919 = vmatpush.msra.mxu0 0.0
        %3920 = vmatpush.msra.mxu0 0.0
        %3921 = vmatpush.msra.mxu0 0.0
        %3922 = vmatpush.msra.mxu0 %v3524
        %3923 = vmatpush.msra.mxu0 %v3513
        %3924 = vmatpush.msra.mxu0 %v3502
        %3925 = vmatpush.msra.mxu0 %v3491
        %3926 = vmatpush.msra.mxu0 %v3480
        %3927 = vmatpush.msra.mxu0 %v3469
        %3928 = vmatpush.msra.mxu0 %v3458
        %3929 = vmatpush.msra.mxu0 %v3447
        %3930 = vmatpush.msra.mxu0 %v3436
        %3931 = vmatmul.f32.gmra.mxu0 %v3533
        %v3932 = vpop.f32.mrf.mxu0
        %v3933 = vadd.f32 %v3913, %v3932
        %3934 = vdwg.mxu0
        %3935 = vmatpush.msra.mxu0 %v3426
        %3936 = vmatpush.msra.mxu0 %v3415
        %3937 = vmatpush.msra.mxu0 %v3404
        %3938 = vmatpush.msra.mxu0 %v3393
        %3939 = vmatpush.msra.mxu0 %v3382
        %3940 = vmatpush.msra.mxu0 %v3371
        %3941 = vmatpush.msra.mxu0 %v3360
        %3942 = vmatpush.msra.mxu0 %v3349
        %3943 = vmatpush.msra.mxu0 %v3338
        %3944 = vmatpush.msra.mxu0 %v3327
        %3945 = vmatpush.msra.mxu0 %v3316
        %3946 = vmatpush.msra.mxu0 %v3305
        %3947 = vmatpush.msra.mxu0 %v3294
        %3948 = vmatpush.msra.mxu0 %v3283
        %3949 = vmatpush.msra.mxu0 %v3272
        %3950 = vmatpush.msra.mxu0 %v3261
        %3951 = vmatmul.f32.gmra.mxu0 %v3249
        %v3952 = vpop.f32.mrf.mxu0
        %v3953 = vadd.f32 %v3530, %v3952
        %3954 = vdwg.mxu0
        %3955 = vmatpush.msra.mxu0 0.0
        %3956 = vmatpush.msra.mxu0 0.0
        %3957 = vmatpush.msra.mxu0 0.0
        %3958 = vmatpush.msra.mxu0 0.0
        %3959 = vmatpush.msra.mxu0 0.0
        %3960 = vmatpush.msra.mxu0 0.0
        %3961 = vmatpush.msra.mxu0 0.0
        %3962 = vmatpush.msra.mxu0 %v3525
        %3963 = vmatpush.msra.mxu0 %v3514
        %3964 = vmatpush.msra.mxu0 %v3503
        %3965 = vmatpush.msra.mxu0 %v3492
        %3966 = vmatpush.msra.mxu0 %v3481
        %3967 = vmatpush.msra.mxu0 %v3470
        %3968 = vmatpush.msra.mxu0 %v3459
        %3969 = vmatpush.msra.mxu0 %v3448
        %3970 = vmatpush.msra.mxu0 %v3437
        %3971 = vmatmul.f32.gmra.mxu0 %v3533
        %v3972 = vpop.f32.mrf.mxu0
        %v3973 = vadd.f32 %v3953, %v3972
        %3974 = vdwg.mxu0
        %v3975 = vmax.f32 %v3573, 0.0
        %v3976 = vmax.f32 %v3613, 0.0
        %v3977 = vmax.f32 %v3653, 0.0
        %v3978 = vmax.f32 %v3693, 0.0
        %v3979 = vmax.f32 %v3733, 0.0
        %v3980 = vmax.f32 %v3773, 0.0
        %v3981 = vmax.f32 %v3813, 0.0
        %v3982 = vmax.f32 %v3853, 0.0
        %v3983 = vmax.f32 %v3893, 0.0
        %v3984 = vmax.f32 %v3933, 0.0
        %v3985 = vmax.f32 %v3973, 0.0
        %v3986 = vld [vmem:[%s7] sm:$0x1]
        %v3987 = vpack.c.bf16 %v3975, %v3975
        %v3988 = vpack.c.bf16 %v3976, %v3976
        %v3989 = vpack.c.bf16 %v3977, %v3977
        %v3990 = vpack.c.bf16 %v3978, %v3978
        %v3991 = vpack.c.bf16 %v3979, %v3979
        %v3992 = vpack.c.bf16 %v3980, %v3980
        %v3993 = vpack.c.bf16 %v3981, %v3981
        %v3994 = vpack.c.bf16 %v3982, %v3982
        %v3995 = vpack.c.bf16 %v3983, %v3983
        %v3996 = vpack.c.bf16 %v3984, %v3984
        %v3997 = vpack.c.bf16 %v3985, %v3985
        %v3998 = vld [vmem:[%s6] sm:$0xf]
        %v3999 = vld [vmem:[%s6 + $0x4] sm:$0xf]
        %v4000 = vld [vmem:[%s6 + $0x8] sm:$0xf]
        %v4001 = vld [vmem:[%s6 + $0xc] sm:$0xf]
        %v4002 = vld [vmem:[%s6 + $0x10] sm:$0xf]
        %v4003 = vld [vmem:[%s6 + $0x14] sm:$0xf]
        %v4004 = vld [vmem:[%s6 + $0x18] sm:$0xf]
        %v4005 = vld [vmem:[%s6 + $0x1c] sm:$0xf]
        %v4006 = vld [vmem:[%s6 + $0x20] sm:$0xf]
        %v4007 = vld [vmem:[%s6 + $0x24] sm:$0xf]
        %v4008 = vld [vmem:[%s6 + $0x28] sm:$0xf]
        %v4009 = vld [vmem:[%s6 + $0x2c] sm:$0xf]
        %v4010 = vld [vmem:[%s6 + $0x30] sm:$0xf]
        %v4011 = vld [vmem:[%s6 + $0x34] sm:$0xf]
        %v4012 = vld [vmem:[%s6 + $0x38] sm:$0xf]
        %v4013 = vld [vmem:[%s6 + $0x3c] sm:$0xf]
        %v4014 = vld [vmem:[%s6 + $0x40] sm:$0xf]
        %v4015 = vld [vmem:[%s6 + $0x44] sm:$0xf]
        %v4016 = vld [vmem:[%s6 + $0x48] sm:$0xf]
        %v4017 = vld [vmem:[%s6 + $0x4c] sm:$0xf]
        %v4018 = vld [vmem:[%s6 + $0x50] sm:$0xf]
        %v4019 = vld [vmem:[%s6 + $0x54] sm:$0xf]
        %v4020 = vld [vmem:[%s6 + $0x58] sm:$0xf]
        %v4021 = vld [vmem:[%s6 + $0x5c] sm:$0xf]
        %v4022 = vld [vmem:[%s6 + $0x60] sm:$0xf]
        %v4023 = vld [vmem:[%s6 + $0x64] sm:$0xf]
        %v4024 = vld [vmem:[%s6 + $0x68] sm:$0xf]
        %v4025 = vld [vmem:[%s6 + $0x6c] sm:$0xf]
        %v4026 = vld [vmem:[%s6 + $0x70] sm:$0xf]
        %v4027 = vld [vmem:[%s6 + $0x74] sm:$0xf]
        %v4028 = vld [vmem:[%s6 + $0x78] sm:$0xf]
        %v4029 = vld [vmem:[%s6 + $0x7c] sm:$0xf]
        %v4030 = vld [vmem:[%s6 + $0x80] sm:$0xf]
        %v4031 = vld [vmem:[%s6 + $0x84] sm:$0xf]
        %v4032 = vld [vmem:[%s6 + $0x88] sm:$0xf]
        %v4033 = vld [vmem:[%s6 + $0x8c] sm:$0xf]
        %v4034 = vld [vmem:[%s6 + $0x90] sm:$0xf]
        %v4035 = vld [vmem:[%s6 + $0x94] sm:$0xf]
        %v4036 = vld [vmem:[%s6 + $0x98] sm:$0xf]
        %v4037 = vld [vmem:[%s6 + $0x9c] sm:$0xf]
        %v4038 = vld [vmem:[%s6 + $0xa0] sm:$0xf]
        %v4039 = vld [vmem:[%s6 + $0xa4] sm:$0xf]
        %v4040 = vld [vmem:[%s6 + $0xa8] sm:$0xf]
        %v4041 = vld [vmem:[%s6 + $0xac] sm:$0xf]
        %v4042 = vld [vmem:[%s6 + $0xb0] sm:$0xf]
        %v4043 = vld [vmem:[%s6 + $0xb4] sm:$0xf]
        %v4044 = vld [vmem:[%s6 + $0xb8] sm:$0xf]
        %v4045 = vld [vmem:[%s6 + $0xbc] sm:$0xf]
        %v4046 = vld [vmem:[%s6 + $0xc0] sm:$0xf]
        %v4047 = vld [vmem:[%s6 + $0xc4] sm:$0xf]
        %v4048 = vld [vmem:[%s6 + $0xc8] sm:$0xf]
        %v4049 = vld [vmem:[%s6 + $0xcc] sm:$0xf]
        %v4050 = vld [vmem:[%s6 + $0xd0] sm:$0xf]
        %v4051 = vld [vmem:[%s6 + $0xd4] sm:$0xf]
        %v4052 = vld [vmem:[%s6 + $0xd8] sm:$0xf]
        %v4053 = vld [vmem:[%s6 + $0xdc] sm:$0xf]
        %v4054 = vld [vmem:[%s6 + $0xe0] sm:$0xf]
        %v4055 = vld [vmem:[%s6 + $0xe4] sm:$0xf]
        %v4056 = vld [vmem:[%s6 + $0xe8] sm:$0xf]
        %v4057 = vld [vmem:[%s6 + $0xec] sm:$0xf]
        %v4058 = vld [vmem:[%s6 + $0xf0] sm:$0xf]
        %v4059 = vld [vmem:[%s6 + $0xf4] sm:$0xf]
        %v4060 = vld [vmem:[%s6 + $0xf8] sm:$0xf]
        %v4061 = vld [vmem:[%s6 + $0xfc] sm:$0xf]
        %v4062 = vld [vmem:[%s6 + $0x100] sm:$0xf]
        %v4063 = vld [vmem:[%s6 + $0x104] sm:$0xf]
        %v4064 = vld [vmem:[%s6 + $0x108] sm:$0xf]
        %v4065 = vld [vmem:[%s6 + $0x10c] sm:$0xf]
        %v4066 = vld [vmem:[%s6 + $0x110] sm:$0xf]
        %v4067 = vld [vmem:[%s6 + $0x114] sm:$0xf]
        %v4068 = vld [vmem:[%s6 + $0x118] sm:$0xf]
        %v4069 = vld [vmem:[%s6 + $0x11c] sm:$0xf]
        %v4070 = vld [vmem:[%s6 + $0x120] sm:$0xf]
        %v4071 = vld [vmem:[%s6 + $0x124] sm:$0xf]
        %v4072 = vld [vmem:[%s6 + $0x128] sm:$0xf]
        %v4073 = vld [vmem:[%s6 + $0x12c] sm:$0xf]
        %v4074 = vld [vmem:[%s6 + $0x130] sm:$0xf]
        %v4075 = vld [vmem:[%s6 + $0x134] sm:$0xf]
        %v4076 = vld [vmem:[%s6 + $0x138] sm:$0xf]
        %v4077 = vld [vmem:[%s6 + $0x13c] sm:$0xf]
        %v4078 = vld [vmem:[%s6 + $0x140] sm:$0xf]
        %v4079 = vld [vmem:[%s6 + $0x144] sm:$0xf]
        %v4080 = vld [vmem:[%s6 + $0x148] sm:$0xf]
        %v4081 = vld [vmem:[%s6 + $0x14c] sm:$0xf]
        %v4082 = vld [vmem:[%s6 + $0x150] sm:$0xf]
        %v4083 = vld [vmem:[%s6 + $0x154] sm:$0xf]
        %v4084 = vld [vmem:[%s6 + $0x158] sm:$0xf]
        %v4085 = vld [vmem:[%s6 + $0x15c] sm:$0xf]
        %v4086 = vld [vmem:[%s6 + $0x160] sm:$0xf]
        %v4087 = vld [vmem:[%s6 + $0x164] sm:$0xf]
        %v4088 = vld [vmem:[%s6 + $0x168] sm:$0xf]
        %v4089 = vld [vmem:[%s6 + $0x16c] sm:$0xf]
        %v4090 = vld [vmem:[%s6 + $0x170] sm:$0xf]
        %v4091 = vld [vmem:[%s6 + $0x174] sm:$0xf]
        %v4092 = vld [vmem:[%s6 + $0x178] sm:$0xf]
        %v4093 = vld [vmem:[%s6 + $0x17c] sm:$0xf]
        %v4094 = vld [vmem:[%s6 + $0x180] sm:$0xf]
        %v4095 = vld [vmem:[%s6 + $0x184] sm:$0xf]
        %v4096 = vld [vmem:[%s6 + $0x188] sm:$0xf]
        %v4097 = vld [vmem:[%s6 + $0x18c] sm:$0xf]
        %v4098 = vld [vmem:[%s6 + $0x190] sm:$0xf]
        %v4099 = vld [vmem:[%s6 + $0x194] sm:$0xf]
        %v4100 = vld [vmem:[%s6 + $0x198] sm:$0xf]
        %v4101 = vld [vmem:[%s6 + $0x19c] sm:$0xf]
        %v4102 = vld [vmem:[%s6 + $0x1a0] sm:$0xf]
        %v4103 = vld [vmem:[%s6 + $0x1a4] sm:$0xf]
        %v4104 = vld [vmem:[%s6 + $0x1a8] sm:$0xf]
        %v4105 = vld [vmem:[%s6 + $0x1ac] sm:$0xf]
        %v4106 = vld [vmem:[%s6 + $0x1b0] sm:$0xf]
        %v4107 = vld [vmem:[%s6 + $0x1b4] sm:$0xf]
        %v4108 = vld [vmem:[%s6 + $0x1b8] sm:$0xf]
        %v4109 = vld [vmem:[%s6 + $0x1bc] sm:$0xf]
        %v4110 = vld [vmem:[%s6 + $0x1c0] sm:$0xf]
        %v4111 = vld [vmem:[%s6 + $0x1c4] sm:$0xf]
        %v4112 = vld [vmem:[%s6 + $0x1c8] sm:$0xf]
        %v4113 = vld [vmem:[%s6 + $0x1cc] sm:$0xf]
        %v4114 = vld [vmem:[%s6 + $0x1d0] sm:$0xf]
        %v4115 = vld [vmem:[%s6 + $0x1d4] sm:$0xf]
        %v4116 = vld [vmem:[%s6 + $0x1d8] sm:$0xf]
        %v4117 = vld [vmem:[%s6 + $0x1dc] sm:$0xf]
        %v4118 = vld [vmem:[%s6 + $0x1e0] sm:$0xf]
        %v4119 = vld [vmem:[%s6 + $0x1e4] sm:$0xf]
        %v4120 = vld [vmem:[%s6 + $0x1e8] sm:$0xf]
        %v4121 = vld [vmem:[%s6 + $0x1ec] sm:$0xf]
        %v4122 = vld [vmem:[%s6 + $0x1f0] sm:$0xf]
        %v4123 = vld [vmem:[%s6 + $0x1f4] sm:$0xf]
        %v4124 = vld [vmem:[%s6 + $0x1f8] sm:$0xf]
        %v4125 = vld [vmem:[%s6 + $0x1fc] sm:$0xf]
        %v4126 = vld [vmem:[%s6 + $0x200] sm:$0xf]
        %v4127 = vld [vmem:[%s6 + $0x204] sm:$0xf]
        %v4128 = vld [vmem:[%s6 + $0x208] sm:$0xf]
        %v4129 = vld [vmem:[%s6 + $0x20c] sm:$0xf]
        %v4130 = vld [vmem:[%s6 + $0x210] sm:$0xf]
        %v4131 = vld [vmem:[%s6 + $0x214] sm:$0xf]
        %v4132 = vld [vmem:[%s6 + $0x218] sm:$0xf]
        %v4133 = vld [vmem:[%s6 + $0x21c] sm:$0xf]
        %v4134 = vld [vmem:[%s6 + $0x220] sm:$0xf]
        %v4135 = vld [vmem:[%s6 + $0x224] sm:$0xf]
        %v4136 = vld [vmem:[%s6 + $0x228] sm:$0xf]
        %v4137 = vld [vmem:[%s6 + $0x22c] sm:$0xf]
        %v4138 = vld [vmem:[%s6 + $0x230] sm:$0xf]
        %v4139 = vld [vmem:[%s6 + $0x234] sm:$0xf]
        %v4140 = vld [vmem:[%s6 + $0x238] sm:$0xf]
        %v4141 = vld [vmem:[%s6 + $0x23c] sm:$0xf]
        %v4142 = vld [vmem:[%s6 + $0x240] sm:$0xf]
        %v4143 = vld [vmem:[%s6 + $0x244] sm:$0xf]
        %v4144 = vld [vmem:[%s6 + $0x248] sm:$0xf]
        %v4145 = vld [vmem:[%s6 + $0x24c] sm:$0xf]
        %v4146 = vld [vmem:[%s6 + $0x250] sm:$0xf]
        %v4147 = vld [vmem:[%s6 + $0x254] sm:$0xf]
        %v4148 = vld [vmem:[%s6 + $0x258] sm:$0xf]
        %v4149 = vld [vmem:[%s6 + $0x25c] sm:$0xf]
        %v4150 = vld [vmem:[%s6 + $0x260] sm:$0xf]
        %v4151 = vld [vmem:[%s6 + $0x264] sm:$0xf]
        %v4152 = vld [vmem:[%s6 + $0x268] sm:$0xf]
        %v4153 = vld [vmem:[%s6 + $0x26c] sm:$0xf]
        %v4154 = vld [vmem:[%s6 + $0x270] sm:$0xf]
        %v4155 = vld [vmem:[%s6 + $0x274] sm:$0xf]
        %v4156 = vld [vmem:[%s6 + $0x278] sm:$0xf]
        %v4157 = vld [vmem:[%s6 + $0x27c] sm:$0xf]
        %v4158 = vld [vmem:[%s6 + $0x280] sm:$0xf]
        %v4159 = vld [vmem:[%s6 + $0x284] sm:$0xf]
        %v4160 = vld [vmem:[%s6 + $0x288] sm:$0xf]
        %v4161 = vld [vmem:[%s6 + $0x28c] sm:$0xf]
        %v4162 = vld [vmem:[%s6 + $0x290] sm:$0xf]
        %v4163 = vld [vmem:[%s6 + $0x294] sm:$0xf]
        %v4164 = vld [vmem:[%s6 + $0x298] sm:$0xf]
        %v4165 = vld [vmem:[%s6 + $0x29c] sm:$0xf]
        %v4166 = vld [vmem:[%s6 + $0x2a0] sm:$0xf]
        %v4167 = vld [vmem:[%s6 + $0x2a4] sm:$0xf]
        %v4168 = vld [vmem:[%s6 + $0x2a8] sm:$0xf]
        %v4169 = vld [vmem:[%s6 + $0x2ac] sm:$0xf]
        %v4170 = vld [vmem:[%s6 + $0x2b0] sm:$0xf]
        %v4171 = vld [vmem:[%s6 + $0x2b4] sm:$0xf]
        %v4172 = vld [vmem:[%s6 + $0x2b8] sm:$0xf]
        %v4173 = vld [vmem:[%s6 + $0x2bc] sm:$0xf]
        %v4350 = vunpack.c.l.b16 %v3998
        %v4351 = vunpack.c.l.b16 %v3999
        %v4352 = vunpack.c.l.b16 %v4000
        %v4353 = vunpack.c.l.b16 %v4001
        %v4354 = vunpack.c.l.b16 %v4002
        %v4355 = vunpack.c.l.b16 %v4003
        %v4356 = vunpack.c.l.b16 %v4004
        %v4357 = vunpack.c.l.b16 %v4005
        %v4358 = vunpack.c.l.b16 %v4006
        %v4359 = vunpack.c.l.b16 %v4007
        %v4360 = vunpack.c.l.b16 %v4008
        %v4361 = vunpack.c.l.b16 %v4009
        %v4362 = vunpack.c.l.b16 %v4010
        %v4363 = vunpack.c.l.b16 %v4011
        %v4364 = vunpack.c.l.b16 %v4012
        %v4365 = vunpack.c.l.b16 %v4013
        %v4366 = vunpack.c.l.b16 %v4014
        %v4367 = vunpack.c.l.b16 %v4015
        %v4368 = vunpack.c.l.b16 %v4016
        %v4369 = vunpack.c.l.b16 %v4017
        %v4370 = vunpack.c.l.b16 %v4018
        %v4371 = vunpack.c.l.b16 %v4019
        %v4372 = vunpack.c.l.b16 %v4020
        %v4373 = vunpack.c.l.b16 %v4021
        %v4374 = vunpack.c.l.b16 %v4022
        %v4375 = vunpack.c.l.b16 %v4023
        %v4376 = vunpack.c.l.b16 %v4024
        %v4377 = vunpack.c.l.b16 %v4025
        %v4378 = vunpack.c.l.b16 %v4026
        %v4379 = vunpack.c.l.b16 %v4027
        %v4380 = vunpack.c.l.b16 %v4028
        %v4381 = vunpack.c.l.b16 %v4029
        %v4382 = vunpack.c.l.b16 %v4030
        %v4383 = vunpack.c.l.b16 %v4031
        %v4384 = vunpack.c.l.b16 %v4032
        %v4385 = vunpack.c.l.b16 %v4033
        %v4386 = vunpack.c.l.b16 %v4034
        %v4387 = vunpack.c.l.b16 %v4035
        %v4388 = vunpack.c.l.b16 %v4036
        %v4389 = vunpack.c.l.b16 %v4037
        %v4390 = vunpack.c.l.b16 %v4038
        %v4391 = vunpack.c.l.b16 %v4039
        %v4392 = vunpack.c.l.b16 %v4040
        %v4393 = vunpack.c.l.b16 %v4041
        %v4394 = vunpack.c.l.b16 %v4042
        %v4395 = vunpack.c.l.b16 %v4043
        %v4396 = vunpack.c.l.b16 %v4044
        %v4397 = vunpack.c.l.b16 %v4045
        %v4398 = vunpack.c.l.b16 %v4046
        %v4399 = vunpack.c.l.b16 %v4047
        %v4400 = vunpack.c.l.b16 %v4048
        %v4401 = vunpack.c.l.b16 %v4049
        %v4402 = vunpack.c.l.b16 %v4050
        %v4403 = vunpack.c.l.b16 %v4051
        %v4404 = vunpack.c.l.b16 %v4052
        %v4405 = vunpack.c.l.b16 %v4053
        %v4406 = vunpack.c.l.b16 %v4054
        %v4407 = vunpack.c.l.b16 %v4055
        %v4408 = vunpack.c.l.b16 %v4056
        %v4409 = vunpack.c.l.b16 %v4057
        %v4410 = vunpack.c.l.b16 %v4058
        %v4411 = vunpack.c.l.b16 %v4059
        %v4412 = vunpack.c.l.b16 %v4060
        %v4413 = vunpack.c.l.b16 %v4061
        %v4414 = vunpack.c.l.b16 %v4062
        %v4415 = vunpack.c.l.b16 %v4063
        %v4416 = vunpack.c.l.b16 %v4064
        %v4417 = vunpack.c.l.b16 %v4065
        %v4418 = vunpack.c.l.b16 %v4066
        %v4419 = vunpack.c.l.b16 %v4067
        %v4420 = vunpack.c.l.b16 %v4068
        %v4421 = vunpack.c.l.b16 %v4069
        %v4422 = vunpack.c.l.b16 %v4070
        %v4423 = vunpack.c.l.b16 %v4071
        %v4424 = vunpack.c.l.b16 %v4072
        %v4425 = vunpack.c.l.b16 %v4073
        %v4426 = vunpack.c.l.b16 %v4074
        %v4427 = vunpack.c.l.b16 %v4075
        %v4428 = vunpack.c.l.b16 %v4076
        %v4429 = vunpack.c.l.b16 %v4077
        %v4430 = vunpack.c.l.b16 %v4078
        %v4431 = vunpack.c.l.b16 %v4079
        %v4432 = vunpack.c.l.b16 %v4080
        %v4433 = vunpack.c.l.b16 %v4081
        %v4434 = vunpack.c.l.b16 %v4082
        %v4435 = vunpack.c.l.b16 %v4083
        %v4436 = vunpack.c.l.b16 %v4084
        %v4437 = vunpack.c.l.b16 %v4085
        %v4438 = vunpack.c.l.b16 %v4086
        %v4439 = vunpack.c.l.b16 %v4087
        %v4440 = vunpack.c.l.b16 %v4088
        %v4441 = vunpack.c.l.b16 %v4089
        %v4442 = vunpack.c.l.b16 %v4090
        %v4443 = vunpack.c.l.b16 %v4091
        %v4444 = vunpack.c.l.b16 %v4092
        %v4445 = vunpack.c.l.b16 %v4093
        %v4446 = vunpack.c.l.b16 %v4094
        %v4447 = vunpack.c.l.b16 %v4095
        %v4448 = vunpack.c.l.b16 %v4096
        %v4449 = vunpack.c.l.b16 %v4097
        %v4450 = vunpack.c.l.b16 %v4098
        %v4451 = vunpack.c.l.b16 %v4099
        %v4452 = vunpack.c.l.b16 %v4100
        %v4453 = vunpack.c.l.b16 %v4101
        %v4454 = vunpack.c.l.b16 %v4102
        %v4455 = vunpack.c.l.b16 %v4103
        %v4456 = vunpack.c.l.b16 %v4104
        %v4457 = vunpack.c.l.b16 %v4105
        %v4458 = vunpack.c.l.b16 %v4106
        %v4459 = vunpack.c.l.b16 %v4107
        %v4460 = vunpack.c.l.b16 %v4108
        %v4461 = vunpack.c.l.b16 %v4109
        %v4462 = vunpack.c.l.b16 %v4110
        %v4463 = vunpack.c.l.b16 %v4111
        %v4464 = vunpack.c.l.b16 %v4112
        %v4465 = vunpack.c.l.b16 %v4113
        %v4466 = vunpack.c.l.b16 %v4114
        %v4467 = vunpack.c.l.b16 %v4115
        %v4468 = vunpack.c.l.b16 %v4116
        %v4469 = vunpack.c.l.b16 %v4117
        %v4470 = vunpack.c.l.b16 %v4118
        %v4471 = vunpack.c.l.b16 %v4119
        %v4472 = vunpack.c.l.b16 %v4120
        %v4473 = vunpack.c.l.b16 %v4121
        %v4474 = vunpack.c.l.b16 %v4122
        %v4475 = vunpack.c.l.b16 %v4123
        %v4476 = vunpack.c.l.b16 %v4124
        %v4477 = vunpack.c.l.b16 %v4125
        %v4478 = vunpack.c.l.b16 %v4126
        %v4479 = vunpack.c.l.b16 %v4127
        %v4480 = vunpack.c.l.b16 %v4128
        %v4481 = vunpack.c.l.b16 %v4129
        %v4482 = vunpack.c.l.b16 %v4130
        %v4483 = vunpack.c.l.b16 %v4131
        %v4484 = vunpack.c.l.b16 %v4132
        %v4485 = vunpack.c.l.b16 %v4133
        %v4486 = vunpack.c.l.b16 %v4134
        %v4487 = vunpack.c.l.b16 %v4135
        %v4488 = vunpack.c.l.b16 %v4136
        %v4489 = vunpack.c.l.b16 %v4137
        %v4490 = vunpack.c.l.b16 %v4138
        %v4491 = vunpack.c.l.b16 %v4139
        %v4492 = vunpack.c.l.b16 %v4140
        %v4493 = vunpack.c.l.b16 %v4141
        %v4494 = vunpack.c.l.b16 %v4142
        %v4495 = vunpack.c.l.b16 %v4143
        %v4496 = vunpack.c.l.b16 %v4144
        %v4497 = vunpack.c.l.b16 %v4145
        %v4498 = vunpack.c.l.b16 %v4146
        %v4499 = vunpack.c.l.b16 %v4147
        %v4500 = vunpack.c.l.b16 %v4148
        %v4501 = vunpack.c.l.b16 %v4149
        %v4502 = vunpack.c.l.b16 %v4150
        %v4503 = vunpack.c.l.b16 %v4151
        %v4504 = vunpack.c.l.b16 %v4152
        %v4505 = vunpack.c.l.b16 %v4153
        %v4506 = vunpack.c.l.b16 %v4154
        %v4507 = vunpack.c.l.b16 %v4155
        %v4508 = vunpack.c.l.b16 %v4156
        %v4509 = vunpack.c.l.b16 %v4157
        %v4510 = vunpack.c.l.b16 %v4158
        %v4511 = vunpack.c.l.b16 %v4159
        %v4512 = vunpack.c.l.b16 %v4160
        %v4513 = vunpack.c.l.b16 %v4161
        %v4514 = vunpack.c.l.b16 %v4162
        %v4515 = vunpack.c.l.b16 %v4163
        %v4516 = vunpack.c.l.b16 %v4164
        %v4517 = vunpack.c.l.b16 %v4165
        %v4518 = vunpack.c.l.b16 %v4166
        %v4519 = vunpack.c.l.b16 %v4167
        %v4520 = vunpack.c.l.b16 %v4168
        %v4521 = vunpack.c.l.b16 %v4169
        %v4522 = vunpack.c.l.b16 %v4170
        %v4523 = vunpack.c.l.b16 %v4171
        %v4524 = vunpack.c.l.b16 %v4172
        %v4525 = vunpack.c.l.b16 %v4173
        %v4526 = vpack.c.b16 %v4351, %v4350
        %v4527 = vpack.c.b16 %v4353, %v4352
        %v4528 = vpack.c.b16 %v4355, %v4354
        %v4529 = vpack.c.b16 %v4357, %v4356
        %v4530 = vpack.c.b16 %v4359, %v4358
        %v4531 = vpack.c.b16 %v4361, %v4360
        %v4532 = vpack.c.b16 %v4363, %v4362
        %v4533 = vpack.c.b16 %v4365, %v4364
        %v4534 = vpack.c.b16 %v4367, %v4366
        %v4535 = vpack.c.b16 %v4369, %v4368
        %v4536 = vpack.c.b16 %v4371, %v4370
        %v4537 = vpack.c.b16 %v4373, %v4372
        %v4538 = vpack.c.b16 %v4375, %v4374
        %v4539 = vpack.c.b16 %v4377, %v4376
        %v4540 = vpack.c.b16 %v4379, %v4378
        %v4541 = vpack.c.b16 %v4381, %v4380
        %v4542 = vpack.c.b16 %v4383, %v4382
        %v4543 = vpack.c.b16 %v4385, %v4384
        %v4544 = vpack.c.b16 %v4387, %v4386
        %v4545 = vpack.c.b16 %v4389, %v4388
        %v4546 = vpack.c.b16 %v4391, %v4390
        %v4547 = vpack.c.b16 %v4393, %v4392
        %v4548 = vpack.c.b16 %v4395, %v4394
        %v4549 = vpack.c.b16 %v4397, %v4396
        %v4550 = vpack.c.b16 %v4399, %v4398
        %v4551 = vpack.c.b16 %v4401, %v4400
        %v4552 = vpack.c.b16 %v4403, %v4402
        %v4553 = vpack.c.b16 %v4405, %v4404
        %v4554 = vpack.c.b16 %v4407, %v4406
        %v4555 = vpack.c.b16 %v4409, %v4408
        %v4556 = vpack.c.b16 %v4411, %v4410
        %v4557 = vpack.c.b16 %v4413, %v4412
        %v4558 = vpack.c.b16 %v4415, %v4414
        %v4559 = vpack.c.b16 %v4417, %v4416
        %v4560 = vpack.c.b16 %v4419, %v4418
        %v4561 = vpack.c.b16 %v4421, %v4420
        %v4562 = vpack.c.b16 %v4423, %v4422
        %v4563 = vpack.c.b16 %v4425, %v4424
        %v4564 = vpack.c.b16 %v4427, %v4426
        %v4565 = vpack.c.b16 %v4429, %v4428
        %v4566 = vpack.c.b16 %v4431, %v4430
        %v4567 = vpack.c.b16 %v4433, %v4432
        %v4568 = vpack.c.b16 %v4435, %v4434
        %v4569 = vpack.c.b16 %v4437, %v4436
        %v4570 = vpack.c.b16 %v4439, %v4438
        %v4571 = vpack.c.b16 %v4441, %v4440
        %v4572 = vpack.c.b16 %v4443, %v4442
        %v4573 = vpack.c.b16 %v4445, %v4444
        %v4574 = vpack.c.b16 %v4447, %v4446
        %v4575 = vpack.c.b16 %v4449, %v4448
        %v4576 = vpack.c.b16 %v4451, %v4450
        %v4577 = vpack.c.b16 %v4453, %v4452
        %v4578 = vpack.c.b16 %v4455, %v4454
        %v4579 = vpack.c.b16 %v4457, %v4456
        %v4580 = vpack.c.b16 %v4459, %v4458
        %v4581 = vpack.c.b16 %v4461, %v4460
        %v4582 = vpack.c.b16 %v4463, %v4462
        %v4583 = vpack.c.b16 %v4465, %v4464
        %v4584 = vpack.c.b16 %v4467, %v4466
        %v4585 = vpack.c.b16 %v4469, %v4468
        %v4586 = vpack.c.b16 %v4471, %v4470
        %v4587 = vpack.c.b16 %v4473, %v4472
        %v4588 = vpack.c.b16 %v4475, %v4474
        %v4589 = vpack.c.b16 %v4477, %v4476
        %v4590 = vpack.c.b16 %v4479, %v4478
        %v4591 = vpack.c.b16 %v4481, %v4480
        %v4592 = vpack.c.b16 %v4483, %v4482
        %v4593 = vpack.c.b16 %v4485, %v4484
        %v4594 = vpack.c.b16 %v4487, %v4486
        %v4595 = vpack.c.b16 %v4489, %v4488
        %v4596 = vpack.c.b16 %v4491, %v4490
        %v4597 = vpack.c.b16 %v4493, %v4492
        %v4598 = vpack.c.b16 %v4495, %v4494
        %v4599 = vpack.c.b16 %v4497, %v4496
        %v4600 = vpack.c.b16 %v4499, %v4498
        %v4601 = vpack.c.b16 %v4501, %v4500
        %v4602 = vpack.c.b16 %v4503, %v4502
        %v4603 = vpack.c.b16 %v4505, %v4504
        %v4604 = vpack.c.b16 %v4507, %v4506
        %v4605 = vpack.c.b16 %v4509, %v4508
        %v4606 = vpack.c.b16 %v4511, %v4510
        %v4607 = vpack.c.b16 %v4513, %v4512
        %v4608 = vpack.c.b16 %v4515, %v4514
        %v4609 = vpack.c.b16 %v4517, %v4516
        %v4610 = vpack.c.b16 %v4519, %v4518
        %v4611 = vpack.c.b16 %v4521, %v4520
        %v4612 = vpack.c.b16 %v4523, %v4522
        %v4613 = vpack.c.b16 %v4525, %v4524
        %4702 = vmatpush.bf16.msra.mxu0 %v4533
        %4703 = vmatpush.bf16.msra.mxu0 %v4532
        %4704 = vmatpush.bf16.msra.mxu0 %v4531
        %4705 = vmatpush.bf16.msra.mxu0 %v4530
        %4706 = vmatpush.bf16.msra.mxu0 %v4529
        %4707 = vmatpush.bf16.msra.mxu0 %v4528
        %4708 = vmatpush.bf16.msra.mxu0 %v4527
        %4709 = vmatpush.bf16.msra.mxu0 %v4526
        %4710 = vmatmul.bf16.gmra.mxu0 %v3987
        %v4711 = vpop.f32.mrf.mxu0
        %v4712 = vadd.f32 0.0, %v4711
        %v4713 = vpop.f32.mrf.mxu0
        %4714 = vdwg.mxu0
        %4715 = vmatpush.bf16.msra.mxu0 %v4541
        %4716 = vmatpush.bf16.msra.mxu0 %v4540
        %4717 = vmatpush.bf16.msra.mxu0 %v4539
        %4718 = vmatpush.bf16.msra.mxu0 %v4538
        %4719 = vmatpush.bf16.msra.mxu0 %v4537
        %4720 = vmatpush.bf16.msra.mxu0 %v4536
        %4721 = vmatpush.bf16.msra.mxu0 %v4535
        %4722 = vmatpush.bf16.msra.mxu0 %v4534
        %4723 = vmatmul.bf16.gmra.mxu0 %v3988
        %v4724 = vpop.f32.mrf.mxu0
        %v4725 = vadd.f32 %v4712, %v4724
        %v4726 = vpop.f32.mrf.mxu0
        %4727 = vdwg.mxu0
        %4728 = vmatpush.bf16.msra.mxu0 %v4549
        %4729 = vmatpush.bf16.msra.mxu0 %v4548
        %4730 = vmatpush.bf16.msra.mxu0 %v4547
        %4731 = vmatpush.bf16.msra.mxu0 %v4546
        %4732 = vmatpush.bf16.msra.mxu0 %v4545
        %4733 = vmatpush.bf16.msra.mxu0 %v4544
        %4734 = vmatpush.bf16.msra.mxu0 %v4543
        %4735 = vmatpush.bf16.msra.mxu0 %v4542
        %4736 = vmatmul.bf16.gmra.mxu0 %v3989
        %v4737 = vpop.f32.mrf.mxu0
        %v4738 = vadd.f32 %v4725, %v4737
        %v4739 = vpop.f32.mrf.mxu0
        %4740 = vdwg.mxu0
        %4741 = vmatpush.bf16.msra.mxu0 %v4557
        %4742 = vmatpush.bf16.msra.mxu0 %v4556
        %4743 = vmatpush.bf16.msra.mxu0 %v4555
        %4744 = vmatpush.bf16.msra.mxu0 %v4554
        %4745 = vmatpush.bf16.msra.mxu0 %v4553
        %4746 = vmatpush.bf16.msra.mxu0 %v4552
        %4747 = vmatpush.bf16.msra.mxu0 %v4551
        %4748 = vmatpush.bf16.msra.mxu0 %v4550
        %4749 = vmatmul.bf16.gmra.mxu0 %v3990
        %v4750 = vpop.f32.mrf.mxu0
        %v4751 = vadd.f32 %v4738, %v4750
        %v4752 = vpop.f32.mrf.mxu0
        %4753 = vdwg.mxu0
        %4754 = vmatpush.bf16.msra.mxu0 %v4565
        %4755 = vmatpush.bf16.msra.mxu0 %v4564
        %4756 = vmatpush.bf16.msra.mxu0 %v4563
        %4757 = vmatpush.bf16.msra.mxu0 %v4562
        %4758 = vmatpush.bf16.msra.mxu0 %v4561
        %4759 = vmatpush.bf16.msra.mxu0 %v4560
        %4760 = vmatpush.bf16.msra.mxu0 %v4559
        %4761 = vmatpush.bf16.msra.mxu0 %v4558
        %4762 = vmatmul.bf16.gmra.mxu0 %v3991
        %v4763 = vpop.f32.mrf.mxu0
        %v4764 = vadd.f32 %v4751, %v4763
        %v4765 = vpop.f32.mrf.mxu0
        %4766 = vdwg.mxu0
        %4767 = vmatpush.bf16.msra.mxu0 %v4573
        %4768 = vmatpush.bf16.msra.mxu0 %v4572
        %4769 = vmatpush.bf16.msra.mxu0 %v4571
        %4770 = vmatpush.bf16.msra.mxu0 %v4570
        %4771 = vmatpush.bf16.msra.mxu0 %v4569
        %4772 = vmatpush.bf16.msra.mxu0 %v4568
        %4773 = vmatpush.bf16.msra.mxu0 %v4567
        %4774 = vmatpush.bf16.msra.mxu0 %v4566
        %4775 = vmatmul.bf16.gmra.mxu0 %v3992
        %v4776 = vpop.f32.mrf.mxu0
        %v4777 = vadd.f32 %v4764, %v4776
        %v4778 = vpop.f32.mrf.mxu0
        %4779 = vdwg.mxu0
        %4780 = vmatpush.bf16.msra.mxu0 %v4581
        %4781 = vmatpush.bf16.msra.mxu0 %v4580
        %4782 = vmatpush.bf16.msra.mxu0 %v4579
        %4783 = vmatpush.bf16.msra.mxu0 %v4578
        %4784 = vmatpush.bf16.msra.mxu0 %v4577
        %4785 = vmatpush.bf16.msra.mxu0 %v4576
        %4786 = vmatpush.bf16.msra.mxu0 %v4575
        %4787 = vmatpush.bf16.msra.mxu0 %v4574
        %4788 = vmatmul.bf16.gmra.mxu0 %v3993
        %v4789 = vpop.f32.mrf.mxu0
        %v4790 = vadd.f32 %v4777, %v4789
        %v4791 = vpop.f32.mrf.mxu0
        %4792 = vdwg.mxu0
        %4793 = vmatpush.bf16.msra.mxu0 %v4589
        %4794 = vmatpush.bf16.msra.mxu0 %v4588
        %4795 = vmatpush.bf16.msra.mxu0 %v4587
        %4796 = vmatpush.bf16.msra.mxu0 %v4586
        %4797 = vmatpush.bf16.msra.mxu0 %v4585
        %4798 = vmatpush.bf16.msra.mxu0 %v4584
        %4799 = vmatpush.bf16.msra.mxu0 %v4583
        %4800 = vmatpush.bf16.msra.mxu0 %v4582
        %4801 = vmatmul.bf16.gmra.mxu0 %v3994
        %v4802 = vpop.f32.mrf.mxu0
        %v4803 = vadd.f32 %v4790, %v4802
        %v4804 = vpop.f32.mrf.mxu0
        %4805 = vdwg.mxu0
        %4806 = vmatpush.bf16.msra.mxu0 %v4597
        %4807 = vmatpush.bf16.msra.mxu0 %v4596
        %4808 = vmatpush.bf16.msra.mxu0 %v4595
        %4809 = vmatpush.bf16.msra.mxu0 %v4594
        %4810 = vmatpush.bf16.msra.mxu0 %v4593
        %4811 = vmatpush.bf16.msra.mxu0 %v4592
        %4812 = vmatpush.bf16.msra.mxu0 %v4591
        %4813 = vmatpush.bf16.msra.mxu0 %v4590
        %4814 = vmatmul.bf16.gmra.mxu0 %v3995
        %v4815 = vpop.f32.mrf.mxu0
        %v4816 = vadd.f32 %v4803, %v4815
        %v4817 = vpop.f32.mrf.mxu0
        %4818 = vdwg.mxu0
        %4819 = vmatpush.bf16.msra.mxu0 %v4605
        %4820 = vmatpush.bf16.msra.mxu0 %v4604
        %4821 = vmatpush.bf16.msra.mxu0 %v4603
        %4822 = vmatpush.bf16.msra.mxu0 %v4602
        %4823 = vmatpush.bf16.msra.mxu0 %v4601
        %4824 = vmatpush.bf16.msra.mxu0 %v4600
        %4825 = vmatpush.bf16.msra.mxu0 %v4599
        %4826 = vmatpush.bf16.msra.mxu0 %v4598
        %4827 = vmatmul.bf16.gmra.mxu0 %v3996
        %v4828 = vpop.f32.mrf.mxu0
        %v4829 = vadd.f32 %v4816, %v4828
        %v4830 = vpop.f32.mrf.mxu0
        %4831 = vdwg.mxu0
        %4832 = vmatpush.bf16.msra.mxu0 %v4613
        %4833 = vmatpush.bf16.msra.mxu0 %v4612
        %4834 = vmatpush.bf16.msra.mxu0 %v4611
        %4835 = vmatpush.bf16.msra.mxu0 %v4610
        %4836 = vmatpush.bf16.msra.mxu0 %v4609
        %4837 = vmatpush.bf16.msra.mxu0 %v4608
        %4838 = vmatpush.bf16.msra.mxu0 %v4607
        %4839 = vmatpush.bf16.msra.mxu0 %v4606
        %4840 = vmatmul.bf16.gmra.mxu0 %v3997
        %v4841 = vpop.f32.mrf.mxu0
        %v4842 = vadd.f32 %v4829, %v4841
        %v4843 = vpop.f32.mrf.mxu0
        %4844 = vdwg.mxu0
        %v4845 = vadd.f32 %v3986, %v4842
        %s4846 = scalar_lea.vmem %s6, 704
        %v4847 = vld [vmem:[%s4846] sm:$0xf]
        %v4848 = vld [vmem:[%s4846 + $0x4] sm:$0xf]
        %v4849 = vld [vmem:[%s4846 + $0x8] sm:$0xf]
        %v4850 = vld [vmem:[%s4846 + $0xc] sm:$0xf]
        %v4851 = vld [vmem:[%s4846 + $0x10] sm:$0xf]
        %v4852 = vld [vmem:[%s4846 + $0x14] sm:$0xf]
        %v4853 = vld [vmem:[%s4846 + $0x18] sm:$0xf]
        %v4854 = vld [vmem:[%s4846 + $0x1c] sm:$0xf]
        %v4855 = vld [vmem:[%s4846 + $0x20] sm:$0xf]
        %v4856 = vld [vmem:[%s4846 + $0x24] sm:$0xf]
        %v4857 = vld [vmem:[%s4846 + $0x28] sm:$0xf]
        %v4858 = vld [vmem:[%s4846 + $0x2c] sm:$0xf]
        %v4859 = vld [vmem:[%s4846 + $0x30] sm:$0xf]
        %v4860 = vld [vmem:[%s4846 + $0x34] sm:$0xf]
        %v4861 = vld [vmem:[%s4846 + $0x38] sm:$0xf]
        %v4862 = vld [vmem:[%s4846 + $0x3c] sm:$0xf]
        %v4863 = vld [vmem:[%s4846 + $0x40] sm:$0xf]
        %v4864 = vld [vmem:[%s4846 + $0x44] sm:$0xf]
        %v4865 = vld [vmem:[%s4846 + $0x48] sm:$0xf]
        %v4866 = vld [vmem:[%s4846 + $0x4c] sm:$0xf]
        %v4867 = vld [vmem:[%s4846 + $0x50] sm:$0xf]
        %v4868 = vld [vmem:[%s4846 + $0x54] sm:$0xf]
        %v4869 = vld [vmem:[%s4846 + $0x58] sm:$0xf]
        %v4870 = vld [vmem:[%s4846 + $0x5c] sm:$0xf]
        %v4871 = vld [vmem:[%s4846 + $0x60] sm:$0xf]
        %v4872 = vld [vmem:[%s4846 + $0x64] sm:$0xf]
        %v4873 = vld [vmem:[%s4846 + $0x68] sm:$0xf]
        %v4874 = vld [vmem:[%s4846 + $0x6c] sm:$0xf]
        %v4875 = vld [vmem:[%s4846 + $0x70] sm:$0xf]
        %v4876 = vld [vmem:[%s4846 + $0x74] sm:$0xf]
        %v4877 = vld [vmem:[%s4846 + $0x78] sm:$0xf]
        %v4878 = vld [vmem:[%s4846 + $0x7c] sm:$0xf]
        %v4879 = vld [vmem:[%s4846 + $0x80] sm:$0xf]
        %v4880 = vld [vmem:[%s4846 + $0x84] sm:$0xf]
        %v4881 = vld [vmem:[%s4846 + $0x88] sm:$0xf]
        %v4882 = vld [vmem:[%s4846 + $0x8c] sm:$0xf]
        %v4883 = vld [vmem:[%s4846 + $0x90] sm:$0xf]
        %v4884 = vld [vmem:[%s4846 + $0x94] sm:$0xf]
        %v4885 = vld [vmem:[%s4846 + $0x98] sm:$0xf]
        %v4886 = vld [vmem:[%s4846 + $0x9c] sm:$0xf]
        %v4887 = vld [vmem:[%s4846 + $0xa0] sm:$0xf]
        %v4888 = vld [vmem:[%s4846 + $0xa4] sm:$0xf]
        %v4889 = vld [vmem:[%s4846 + $0xa8] sm:$0xf]
        %v4890 = vld [vmem:[%s4846 + $0xac] sm:$0xf]
        %v4891 = vld [vmem:[%s4846 + $0xb0] sm:$0xf]
        %v4892 = vld [vmem:[%s4846 + $0xb4] sm:$0xf]
        %v4893 = vld [vmem:[%s4846 + $0xb8] sm:$0xf]
        %v4894 = vld [vmem:[%s4846 + $0xbc] sm:$0xf]
        %v4895 = vld [vmem:[%s4846 + $0xc0] sm:$0xf]
        %v4896 = vld [vmem:[%s4846 + $0xc4] sm:$0xf]
        %v4897 = vld [vmem:[%s4846 + $0xc8] sm:$0xf]
        %v4898 = vld [vmem:[%s4846 + $0xcc] sm:$0xf]
        %v4899 = vld [vmem:[%s4846 + $0xd0] sm:$0xf]
        %v4900 = vld [vmem:[%s4846 + $0xd4] sm:$0xf]
        %v4901 = vld [vmem:[%s4846 + $0xd8] sm:$0xf]
        %v4902 = vld [vmem:[%s4846 + $0xdc] sm:$0xf]
        %v4903 = vld [vmem:[%s4846 + $0xe0] sm:$0xf]
        %v4904 = vld [vmem:[%s4846 + $0xe4] sm:$0xf]
        %v4905 = vld [vmem:[%s4846 + $0xe8] sm:$0xf]
        %v4906 = vld [vmem:[%s4846 + $0xec] sm:$0xf]
        %v4907 = vld [vmem:[%s4846 + $0xf0] sm:$0xf]
        %v4908 = vld [vmem:[%s4846 + $0xf4] sm:$0xf]
        %v4909 = vld [vmem:[%s4846 + $0xf8] sm:$0xf]
        %v4910 = vld [vmem:[%s4846 + $0xfc] sm:$0xf]
        %v4911 = vld [vmem:[%s4846 + $0x100] sm:$0xf]
        %v4912 = vld [vmem:[%s4846 + $0x104] sm:$0xf]
        %v4913 = vld [vmem:[%s4846 + $0x108] sm:$0xf]
        %v4914 = vld [vmem:[%s4846 + $0x10c] sm:$0xf]
        %v4915 = vld [vmem:[%s4846 + $0x110] sm:$0xf]
        %v4916 = vld [vmem:[%s4846 + $0x114] sm:$0xf]
        %v4917 = vld [vmem:[%s4846 + $0x118] sm:$0xf]
        %v4918 = vld [vmem:[%s4846 + $0x11c] sm:$0xf]
        %v4919 = vld [vmem:[%s4846 + $0x120] sm:$0xf]
        %v4920 = vld [vmem:[%s4846 + $0x124] sm:$0xf]
        %v4921 = vld [vmem:[%s4846 + $0x128] sm:$0xf]
        %v4922 = vld [vmem:[%s4846 + $0x12c] sm:$0xf]
        %v4923 = vld [vmem:[%s4846 + $0x130] sm:$0xf]
        %v4924 = vld [vmem:[%s4846 + $0x134] sm:$0xf]
        %v4925 = vld [vmem:[%s4846 + $0x138] sm:$0xf]
        %v4926 = vld [vmem:[%s4846 + $0x13c] sm:$0xf]
        %v4927 = vld [vmem:[%s4846 + $0x140] sm:$0xf]
        %v4928 = vld [vmem:[%s4846 + $0x144] sm:$0xf]
        %v4929 = vld [vmem:[%s4846 + $0x148] sm:$0xf]
        %v4930 = vld [vmem:[%s4846 + $0x14c] sm:$0xf]
        %v4931 = vld [vmem:[%s4846 + $0x150] sm:$0xf]
        %v4932 = vld [vmem:[%s4846 + $0x154] sm:$0xf]
        %v4933 = vld [vmem:[%s4846 + $0x158] sm:$0xf]
        %v4934 = vld [vmem:[%s4846 + $0x15c] sm:$0xf]
        %v4935 = vld [vmem:[%s4846 + $0x160] sm:$0xf]
        %v4936 = vld [vmem:[%s4846 + $0x164] sm:$0xf]
        %v4937 = vld [vmem:[%s4846 + $0x168] sm:$0xf]
        %v4938 = vld [vmem:[%s4846 + $0x16c] sm:$0xf]
        %v4939 = vld [vmem:[%s4846 + $0x170] sm:$0xf]
        %v4940 = vld [vmem:[%s4846 + $0x174] sm:$0xf]
        %v4941 = vld [vmem:[%s4846 + $0x178] sm:$0xf]
        %v4942 = vld [vmem:[%s4846 + $0x17c] sm:$0xf]
        %v4943 = vld [vmem:[%s4846 + $0x180] sm:$0xf]
        %v4944 = vld [vmem:[%s4846 + $0x184] sm:$0xf]
        %v4945 = vld [vmem:[%s4846 + $0x188] sm:$0xf]
        %v4946 = vld [vmem:[%s4846 + $0x18c] sm:$0xf]
        %v4947 = vld [vmem:[%s4846 + $0x190] sm:$0xf]
        %v4948 = vld [vmem:[%s4846 + $0x194] sm:$0xf]
        %v4949 = vld [vmem:[%s4846 + $0x198] sm:$0xf]
        %v4950 = vld [vmem:[%s4846 + $0x19c] sm:$0xf]
        %v4951 = vld [vmem:[%s4846 + $0x1a0] sm:$0xf]
        %v4952 = vld [vmem:[%s4846 + $0x1a4] sm:$0xf]
        %v4953 = vld [vmem:[%s4846 + $0x1a8] sm:$0xf]
        %v4954 = vld [vmem:[%s4846 + $0x1ac] sm:$0xf]
        %v4955 = vld [vmem:[%s4846 + $0x1b0] sm:$0xf]
        %v4956 = vld [vmem:[%s4846 + $0x1b4] sm:$0xf]
        %v4957 = vld [vmem:[%s4846 + $0x1b8] sm:$0xf]
        %v4958 = vld [vmem:[%s4846 + $0x1bc] sm:$0xf]
        %v4959 = vld [vmem:[%s4846 + $0x1c0] sm:$0xf]
        %v4960 = vld [vmem:[%s4846 + $0x1c4] sm:$0xf]
        %v4961 = vld [vmem:[%s4846 + $0x1c8] sm:$0xf]
        %v4962 = vld [vmem:[%s4846 + $0x1cc] sm:$0xf]
        %v4963 = vld [vmem:[%s4846 + $0x1d0] sm:$0xf]
        %v4964 = vld [vmem:[%s4846 + $0x1d4] sm:$0xf]
        %v4965 = vld [vmem:[%s4846 + $0x1d8] sm:$0xf]
        %v4966 = vld [vmem:[%s4846 + $0x1dc] sm:$0xf]
        %v4967 = vld [vmem:[%s4846 + $0x1e0] sm:$0xf]
        %v4968 = vld [vmem:[%s4846 + $0x1e4] sm:$0xf]
        %v4969 = vld [vmem:[%s4846 + $0x1e8] sm:$0xf]
        %v4970 = vld [vmem:[%s4846 + $0x1ec] sm:$0xf]
        %v4971 = vld [vmem:[%s4846 + $0x1f0] sm:$0xf]
        %v4972 = vld [vmem:[%s4846 + $0x1f4] sm:$0xf]
        %v4973 = vld [vmem:[%s4846 + $0x1f8] sm:$0xf]
        %v4974 = vld [vmem:[%s4846 + $0x1fc] sm:$0xf]
        %v4975 = vld [vmem:[%s4846 + $0x200] sm:$0xf]
        %v4976 = vld [vmem:[%s4846 + $0x204] sm:$0xf]
        %v4977 = vld [vmem:[%s4846 + $0x208] sm:$0xf]
        %v4978 = vld [vmem:[%s4846 + $0x20c] sm:$0xf]
        %v4979 = vld [vmem:[%s4846 + $0x210] sm:$0xf]
        %v4980 = vld [vmem:[%s4846 + $0x214] sm:$0xf]
        %v4981 = vld [vmem:[%s4846 + $0x218] sm:$0xf]
        %v4982 = vld [vmem:[%s4846 + $0x21c] sm:$0xf]
        %v4983 = vld [vmem:[%s4846 + $0x220] sm:$0xf]
        %v4984 = vld [vmem:[%s4846 + $0x224] sm:$0xf]
        %v4985 = vld [vmem:[%s4846 + $0x228] sm:$0xf]
        %v4986 = vld [vmem:[%s4846 + $0x22c] sm:$0xf]
        %v4987 = vld [vmem:[%s4846 + $0x230] sm:$0xf]
        %v4988 = vld [vmem:[%s4846 + $0x234] sm:$0xf]
        %v4989 = vld [vmem:[%s4846 + $0x238] sm:$0xf]
        %v4990 = vld [vmem:[%s4846 + $0x23c] sm:$0xf]
        %v4991 = vld [vmem:[%s4846 + $0x240] sm:$0xf]
        %v4992 = vld [vmem:[%s4846 + $0x244] sm:$0xf]
        %v4993 = vld [vmem:[%s4846 + $0x248] sm:$0xf]
        %v4994 = vld [vmem:[%s4846 + $0x24c] sm:$0xf]
        %v4995 = vld [vmem:[%s4846 + $0x250] sm:$0xf]
        %v4996 = vld [vmem:[%s4846 + $0x254] sm:$0xf]
        %v4997 = vld [vmem:[%s4846 + $0x258] sm:$0xf]
        %v4998 = vld [vmem:[%s4846 + $0x25c] sm:$0xf]
        %v4999 = vld [vmem:[%s4846 + $0x260] sm:$0xf]
        %v5000 = vld [vmem:[%s4846 + $0x264] sm:$0xf]
        %v5001 = vld [vmem:[%s4846 + $0x268] sm:$0xf]
        %v5002 = vld [vmem:[%s4846 + $0x26c] sm:$0xf]
        %v5003 = vld [vmem:[%s4846 + $0x270] sm:$0xf]
        %v5004 = vld [vmem:[%s4846 + $0x274] sm:$0xf]
        %v5005 = vld [vmem:[%s4846 + $0x278] sm:$0xf]
        %v5006 = vld [vmem:[%s4846 + $0x27c] sm:$0xf]
        %v5007 = vld [vmem:[%s4846 + $0x280] sm:$0xf]
        %v5008 = vld [vmem:[%s4846 + $0x284] sm:$0xf]
        %v5009 = vld [vmem:[%s4846 + $0x288] sm:$0xf]
        %v5010 = vld [vmem:[%s4846 + $0x28c] sm:$0xf]
        %v5011 = vld [vmem:[%s4846 + $0x290] sm:$0xf]
        %v5012 = vld [vmem:[%s4846 + $0x294] sm:$0xf]
        %v5013 = vld [vmem:[%s4846 + $0x298] sm:$0xf]
        %v5014 = vld [vmem:[%s4846 + $0x29c] sm:$0xf]
        %v5015 = vld [vmem:[%s4846 + $0x2a0] sm:$0xf]
        %v5016 = vld [vmem:[%s4846 + $0x2a4] sm:$0xf]
        %v5017 = vld [vmem:[%s4846 + $0x2a8] sm:$0xf]
        %v5018 = vld [vmem:[%s4846 + $0x2ac] sm:$0xf]
        %v5019 = vld [vmem:[%s4846 + $0x2b0] sm:$0xf]
        %v5020 = vld [vmem:[%s4846 + $0x2b4] sm:$0xf]
        %v5021 = vld [vmem:[%s4846 + $0x2b8] sm:$0xf]
        %v5022 = vld [vmem:[%s4846 + $0x2bc] sm:$0xf]
        %v5024 = vshrl.u32 %v3987, 16
        %v5027 = vshrl.u32 %v3988, 16
        %v5030 = vshrl.u32 %v3989, 16
        %v5033 = vshrl.u32 %v3990, 16
        %v5036 = vshrl.u32 %v3991, 16
        %v5039 = vshrl.u32 %v3992, 16
        %v5042 = vshrl.u32 %v3993, 16
        %v5045 = vshrl.u32 %v3994, 16
        %v5048 = vshrl.u32 %v3995, 16
        %v5051 = vshrl.u32 %v3996, 16
        %v5054 = vshrl.u32 %v3997, 16
        %v5243 = vunpack.c.l.b16 %v4847
        %v5244 = vunpack.c.l.b16 %v4848
        %v5245 = vunpack.c.l.b16 %v4849
        %v5246 = vunpack.c.l.b16 %v4850
        %v5247 = vunpack.c.l.b16 %v4851
        %v5248 = vunpack.c.l.b16 %v4852
        %v5249 = vunpack.c.l.b16 %v4853
        %v5250 = vunpack.c.l.b16 %v4854
        %v5251 = vunpack.c.l.b16 %v4855
        %v5252 = vunpack.c.l.b16 %v4856
        %v5253 = vunpack.c.l.b16 %v4857
        %v5254 = vunpack.c.l.b16 %v4858
        %v5255 = vunpack.c.l.b16 %v4859
        %v5256 = vunpack.c.l.b16 %v4860
        %v5257 = vunpack.c.l.b16 %v4861
        %v5258 = vunpack.c.l.b16 %v4862
        %v5259 = vunpack.c.l.b16 %v4863
        %v5260 = vunpack.c.l.b16 %v4864
        %v5261 = vunpack.c.l.b16 %v4865
        %v5262 = vunpack.c.l.b16 %v4866
        %v5263 = vunpack.c.l.b16 %v4867
        %v5264 = vunpack.c.l.b16 %v4868
        %v5265 = vunpack.c.l.b16 %v4869
        %v5266 = vunpack.c.l.b16 %v4870
        %v5267 = vunpack.c.l.b16 %v4871
        %v5268 = vunpack.c.l.b16 %v4872
        %v5269 = vunpack.c.l.b16 %v4873
        %v5270 = vunpack.c.l.b16 %v4874
        %v5271 = vunpack.c.l.b16 %v4875
        %v5272 = vunpack.c.l.b16 %v4876
        %v5273 = vunpack.c.l.b16 %v4877
        %v5274 = vunpack.c.l.b16 %v4878
        %v5275 = vunpack.c.l.b16 %v4879
        %v5276 = vunpack.c.l.b16 %v4880
        %v5277 = vunpack.c.l.b16 %v4881
        %v5278 = vunpack.c.l.b16 %v4882
        %v5279 = vunpack.c.l.b16 %v4883
        %v5280 = vunpack.c.l.b16 %v4884
        %v5281 = vunpack.c.l.b16 %v4885
        %v5282 = vunpack.c.l.b16 %v4886
        %v5283 = vunpack.c.l.b16 %v4887
        %v5284 = vunpack.c.l.b16 %v4888
        %v5285 = vunpack.c.l.b16 %v4889
        %v5286 = vunpack.c.l.b16 %v4890
        %v5287 = vunpack.c.l.b16 %v4891
        %v5288 = vunpack.c.l.b16 %v4892
        %v5289 = vunpack.c.l.b16 %v4893
        %v5290 = vunpack.c.l.b16 %v4894
        %v5291 = vunpack.c.l.b16 %v4895
        %v5292 = vunpack.c.l.b16 %v4896
        %v5293 = vunpack.c.l.b16 %v4897
        %v5294 = vunpack.c.l.b16 %v4898
        %v5295 = vunpack.c.l.b16 %v4899
        %v5296 = vunpack.c.l.b16 %v4900
        %v5297 = vunpack.c.l.b16 %v4901
        %v5298 = vunpack.c.l.b16 %v4902
        %v5299 = vunpack.c.l.b16 %v4903
        %v5300 = vunpack.c.l.b16 %v4904
        %v5301 = vunpack.c.l.b16 %v4905
        %v5302 = vunpack.c.l.b16 %v4906
        %v5303 = vunpack.c.l.b16 %v4907
        %v5304 = vunpack.c.l.b16 %v4908
        %v5305 = vunpack.c.l.b16 %v4909
        %v5306 = vunpack.c.l.b16 %v4910
        %v5307 = vunpack.c.l.b16 %v4911
        %v5308 = vunpack.c.l.b16 %v4912
        %v5309 = vunpack.c.l.b16 %v4913
        %v5310 = vunpack.c.l.b16 %v4914
        %v5311 = vunpack.c.l.b16 %v4915
        %v5312 = vunpack.c.l.b16 %v4916
        %v5313 = vunpack.c.l.b16 %v4917
        %v5314 = vunpack.c.l.b16 %v4918
        %v5315 = vunpack.c.l.b16 %v4919
        %v5316 = vunpack.c.l.b16 %v4920
        %v5317 = vunpack.c.l.b16 %v4921
        %v5318 = vunpack.c.l.b16 %v4922
        %v5319 = vunpack.c.l.b16 %v4923
        %v5320 = vunpack.c.l.b16 %v4924
        %v5321 = vunpack.c.l.b16 %v4925
        %v5322 = vunpack.c.l.b16 %v4926
        %v5323 = vunpack.c.l.b16 %v4927
        %v5324 = vunpack.c.l.b16 %v4928
        %v5325 = vunpack.c.l.b16 %v4929
        %v5326 = vunpack.c.l.b16 %v4930
        %v5327 = vunpack.c.l.b16 %v4931
        %v5328 = vunpack.c.l.b16 %v4932
        %v5329 = vunpack.c.l.b16 %v4933
        %v5330 = vunpack.c.l.b16 %v4934
        %v5331 = vunpack.c.l.b16 %v4935
        %v5332 = vunpack.c.l.b16 %v4936
        %v5333 = vunpack.c.l.b16 %v4937
        %v5334 = vunpack.c.l.b16 %v4938
        %v5335 = vunpack.c.l.b16 %v4939
        %v5336 = vunpack.c.l.b16 %v4940
        %v5337 = vunpack.c.l.b16 %v4941
        %v5338 = vunpack.c.l.b16 %v4942
        %v5339 = vunpack.c.l.b16 %v4943
        %v5340 = vunpack.c.l.b16 %v4944
        %v5341 = vunpack.c.l.b16 %v4945
        %v5342 = vunpack.c.l.b16 %v4946
        %v5343 = vunpack.c.l.b16 %v4947
        %v5344 = vunpack.c.l.b16 %v4948
        %v5345 = vunpack.c.l.b16 %v4949
        %v5346 = vunpack.c.l.b16 %v4950
        %v5347 = vunpack.c.l.b16 %v4951
        %v5348 = vunpack.c.l.b16 %v4952
        %v5349 = vunpack.c.l.b16 %v4953
        %v5350 = vunpack.c.l.b16 %v4954
        %v5351 = vunpack.c.l.b16 %v4955
        %v5352 = vunpack.c.l.b16 %v4956
        %v5353 = vunpack.c.l.b16 %v4957
        %v5354 = vunpack.c.l.b16 %v4958
        %v5355 = vunpack.c.l.b16 %v4959
        %v5356 = vunpack.c.l.b16 %v4960
        %v5357 = vunpack.c.l.b16 %v4961
        %v5358 = vunpack.c.l.b16 %v4962
        %v5359 = vunpack.c.l.b16 %v4963
        %v5360 = vunpack.c.l.b16 %v4964
        %v5361 = vunpack.c.l.b16 %v4965
        %v5362 = vunpack.c.l.b16 %v4966
        %v5363 = vunpack.c.l.b16 %v4967
        %v5364 = vunpack.c.l.b16 %v4968
        %v5365 = vunpack.c.l.b16 %v4969
        %v5366 = vunpack.c.l.b16 %v4970
        %v5367 = vunpack.c.l.b16 %v4971
        %v5368 = vunpack.c.l.b16 %v4972
        %v5369 = vunpack.c.l.b16 %v4973
        %v5370 = vunpack.c.l.b16 %v4974
        %v5371 = vunpack.c.l.b16 %v4975
        %v5372 = vunpack.c.l.b16 %v4976
        %v5373 = vunpack.c.l.b16 %v4977
        %v5374 = vunpack.c.l.b16 %v4978
        %v5375 = vunpack.c.l.b16 %v4979
        %v5376 = vunpack.c.l.b16 %v4980
        %v5377 = vunpack.c.l.b16 %v4981
        %v5378 = vunpack.c.l.b16 %v4982
        %v5379 = vunpack.c.l.b16 %v4983
        %v5380 = vunpack.c.l.b16 %v4984
        %v5381 = vunpack.c.l.b16 %v4985
        %v5382 = vunpack.c.l.b16 %v4986
        %v5383 = vunpack.c.l.b16 %v4987
        %v5384 = vunpack.c.l.b16 %v4988
        %v5385 = vunpack.c.l.b16 %v4989
        %v5386 = vunpack.c.l.b16 %v4990
        %v5387 = vunpack.c.l.b16 %v4991
        %v5388 = vunpack.c.l.b16 %v4992
        %v5389 = vunpack.c.l.b16 %v4993
        %v5390 = vunpack.c.l.b16 %v4994
        %v5391 = vunpack.c.l.b16 %v4995
        %v5392 = vunpack.c.l.b16 %v4996
        %v5393 = vunpack.c.l.b16 %v4997
        %v5394 = vunpack.c.l.b16 %v4998
        %v5395 = vunpack.c.l.b16 %v4999
        %v5396 = vunpack.c.l.b16 %v5000
        %v5397 = vunpack.c.l.b16 %v5001
        %v5398 = vunpack.c.l.b16 %v5002
        %v5399 = vunpack.c.l.b16 %v5003
        %v5400 = vunpack.c.l.b16 %v5004
        %v5401 = vunpack.c.l.b16 %v5005
        %v5402 = vunpack.c.l.b16 %v5006
        %v5403 = vunpack.c.l.b16 %v5007
        %v5404 = vunpack.c.l.b16 %v5008
        %v5405 = vunpack.c.l.b16 %v5009
        %v5406 = vunpack.c.l.b16 %v5010
        %v5407 = vunpack.c.l.b16 %v5011
        %v5408 = vunpack.c.l.b16 %v5012
        %v5409 = vunpack.c.l.b16 %v5013
        %v5410 = vunpack.c.l.b16 %v5014
        %v5411 = vunpack.c.l.b16 %v5015
        %v5412 = vunpack.c.l.b16 %v5016
        %v5413 = vunpack.c.l.b16 %v5017
        %v5414 = vunpack.c.l.b16 %v5018
        %v5415 = vunpack.c.l.b16 %v5019
        %v5416 = vunpack.c.l.b16 %v5020
        %v5417 = vunpack.c.l.b16 %v5021
        %v5418 = vunpack.c.l.b16 %v5022
        %v5419 = vpack.c.b16 %v5244, %v5243
        %v5420 = vpack.c.b16 %v5246, %v5245
        %v5421 = vpack.c.b16 %v5248, %v5247
        %v5422 = vpack.c.b16 %v5250, %v5249
        %v5423 = vpack.c.b16 %v5252, %v5251
        %v5424 = vpack.c.b16 %v5254, %v5253
        %v5425 = vpack.c.b16 %v5256, %v5255
        %v5426 = vpack.c.b16 %v5258, %v5257
        %v5427 = vpack.c.b16 %v5260, %v5259
        %v5428 = vpack.c.b16 %v5262, %v5261
        %v5429 = vpack.c.b16 %v5264, %v5263
        %v5430 = vpack.c.b16 %v5266, %v5265
        %v5431 = vpack.c.b16 %v5268, %v5267
        %v5432 = vpack.c.b16 %v5270, %v5269
        %v5433 = vpack.c.b16 %v5272, %v5271
        %v5434 = vpack.c.b16 %v5274, %v5273
        %v5435 = vpack.c.b16 %v5276, %v5275
        %v5436 = vpack.c.b16 %v5278, %v5277
        %v5437 = vpack.c.b16 %v5280, %v5279
        %v5438 = vpack.c.b16 %v5282, %v5281
        %v5439 = vpack.c.b16 %v5284, %v5283
        %v5440 = vpack.c.b16 %v5286, %v5285
        %v5441 = vpack.c.b16 %v5288, %v5287
        %v5442 = vpack.c.b16 %v5290, %v5289
        %v5443 = vpack.c.b16 %v5292, %v5291
        %v5444 = vpack.c.b16 %v5294, %v5293
        %v5445 = vpack.c.b16 %v5296, %v5295
        %v5446 = vpack.c.b16 %v5298, %v5297
        %v5447 = vpack.c.b16 %v5300, %v5299
        %v5448 = vpack.c.b16 %v5302, %v5301
        %v5449 = vpack.c.b16 %v5304, %v5303
        %v5450 = vpack.c.b16 %v5306, %v5305
        %v5451 = vpack.c.b16 %v5308, %v5307
        %v5452 = vpack.c.b16 %v5310, %v5309
        %v5453 = vpack.c.b16 %v5312, %v5311
        %v5454 = vpack.c.b16 %v5314, %v5313
        %v5455 = vpack.c.b16 %v5316, %v5315
        %v5456 = vpack.c.b16 %v5318, %v5317
        %v5457 = vpack.c.b16 %v5320, %v5319
        %v5458 = vpack.c.b16 %v5322, %v5321
        %v5459 = vpack.c.b16 %v5324, %v5323
        %v5460 = vpack.c.b16 %v5326, %v5325
        %v5461 = vpack.c.b16 %v5328, %v5327
        %v5462 = vpack.c.b16 %v5330, %v5329
        %v5463 = vpack.c.b16 %v5332, %v5331
        %v5464 = vpack.c.b16 %v5334, %v5333
        %v5465 = vpack.c.b16 %v5336, %v5335
        %v5466 = vpack.c.b16 %v5338, %v5337
        %v5467 = vpack.c.b16 %v5340, %v5339
        %v5468 = vpack.c.b16 %v5342, %v5341
        %v5469 = vpack.c.b16 %v5344, %v5343
        %v5470 = vpack.c.b16 %v5346, %v5345
        %v5471 = vpack.c.b16 %v5348, %v5347
        %v5472 = vpack.c.b16 %v5350, %v5349
        %v5473 = vpack.c.b16 %v5352, %v5351
        %v5474 = vpack.c.b16 %v5354, %v5353
        %v5475 = vpack.c.b16 %v5356, %v5355
        %v5476 = vpack.c.b16 %v5358, %v5357
        %v5477 = vpack.c.b16 %v5360, %v5359
        %v5478 = vpack.c.b16 %v5362, %v5361
        %v5479 = vpack.c.b16 %v5364, %v5363
        %v5480 = vpack.c.b16 %v5366, %v5365
        %v5481 = vpack.c.b16 %v5368, %v5367
        %v5482 = vpack.c.b16 %v5370, %v5369
        %v5483 = vpack.c.b16 %v5372, %v5371
        %v5484 = vpack.c.b16 %v5374, %v5373
        %v5485 = vpack.c.b16 %v5376, %v5375
        %v5486 = vpack.c.b16 %v5378, %v5377
        %v5487 = vpack.c.b16 %v5380, %v5379
        %v5488 = vpack.c.b16 %v5382, %v5381
        %v5489 = vpack.c.b16 %v5384, %v5383
        %v5490 = vpack.c.b16 %v5386, %v5385
        %v5491 = vpack.c.b16 %v5388, %v5387
        %v5492 = vpack.c.b16 %v5390, %v5389
        %v5493 = vpack.c.b16 %v5392, %v5391
        %v5494 = vpack.c.b16 %v5394, %v5393
        %v5495 = vpack.c.b16 %v5396, %v5395
        %v5496 = vpack.c.b16 %v5398, %v5397
        %v5497 = vpack.c.b16 %v5400, %v5399
        %v5498 = vpack.c.b16 %v5402, %v5401
        %v5499 = vpack.c.b16 %v5404, %v5403
        %v5500 = vpack.c.b16 %v5406, %v5405
        %v5501 = vpack.c.b16 %v5408, %v5407
        %v5502 = vpack.c.b16 %v5410, %v5409
        %v5503 = vpack.c.b16 %v5412, %v5411
        %v5504 = vpack.c.b16 %v5414, %v5413
        %v5505 = vpack.c.b16 %v5416, %v5415
        %v5506 = vpack.c.b16 %v5418, %v5417
        %5595 = vmatpush.bf16.msra.mxu0 %v5426
        %5596 = vmatpush.bf16.msra.mxu0 %v5425
        %5597 = vmatpush.bf16.msra.mxu0 %v5424
        %5598 = vmatpush.bf16.msra.mxu0 %v5423
        %5599 = vmatpush.bf16.msra.mxu0 %v5422
        %5600 = vmatpush.bf16.msra.mxu0 %v5421
        %5601 = vmatpush.bf16.msra.mxu0 %v5420
        %5602 = vmatpush.bf16.msra.mxu0 %v5419
        %5603 = vmatmul.bf16.gmra.mxu0 %v5024
        %v5604 = vpop.f32.mrf.mxu0
        %v5605 = vadd.f32 0.0, %v5604
        %v5606 = vpop.f32.mrf.mxu0
        %5607 = vdwg.mxu0
        %5608 = vmatpush.bf16.msra.mxu0 %v5434
        %5609 = vmatpush.bf16.msra.mxu0 %v5433
        %5610 = vmatpush.bf16.msra.mxu0 %v5432
        %5611 = vmatpush.bf16.msra.mxu0 %v5431
        %5612 = vmatpush.bf16.msra.mxu0 %v5430
        %5613 = vmatpush.bf16.msra.mxu0 %v5429
        %5614 = vmatpush.bf16.msra.mxu0 %v5428
        %5615 = vmatpush.bf16.msra.mxu0 %v5427
        %5616 = vmatmul.bf16.gmra.mxu0 %v5027
        %v5617 = vpop.f32.mrf.mxu0
        %v5618 = vadd.f32 %v5605, %v5617
        %v5619 = vpop.f32.mrf.mxu0
        %5620 = vdwg.mxu0
        %5621 = vmatpush.bf16.msra.mxu0 %v5442
        %5622 = vmatpush.bf16.msra.mxu0 %v5441
        %5623 = vmatpush.bf16.msra.mxu0 %v5440
        %5624 = vmatpush.bf16.msra.mxu0 %v5439
        %5625 = vmatpush.bf16.msra.mxu0 %v5438
        %5626 = vmatpush.bf16.msra.mxu0 %v5437
        %5627 = vmatpush.bf16.msra.mxu0 %v5436
        %5628 = vmatpush.bf16.msra.mxu0 %v5435
        %5629 = vmatmul.bf16.gmra.mxu0 %v5030
        %v5630 = vpop.f32.mrf.mxu0
        %v5631 = vadd.f32 %v5618, %v5630
        %v5632 = vpop.f32.mrf.mxu0
        %5633 = vdwg.mxu0
        %5634 = vmatpush.bf16.msra.mxu0 %v5450
        %5635 = vmatpush.bf16.msra.mxu0 %v5449
        %5636 = vmatpush.bf16.msra.mxu0 %v5448
        %5637 = vmatpush.bf16.msra.mxu0 %v5447
        %5638 = vmatpush.bf16.msra.mxu0 %v5446
        %5639 = vmatpush.bf16.msra.mxu0 %v5445
        %5640 = vmatpush.bf16.msra.mxu0 %v5444
        %5641 = vmatpush.bf16.msra.mxu0 %v5443
        %5642 = vmatmul.bf16.gmra.mxu0 %v5033
        %v5643 = vpop.f32.mrf.mxu0
        %v5644 = vadd.f32 %v5631, %v5643
        %v5645 = vpop.f32.mrf.mxu0
        %5646 = vdwg.mxu0
        %5647 = vmatpush.bf16.msra.mxu0 %v5458
        %5648 = vmatpush.bf16.msra.mxu0 %v5457
        %5649 = vmatpush.bf16.msra.mxu0 %v5456
        %5650 = vmatpush.bf16.msra.mxu0 %v5455
        %5651 = vmatpush.bf16.msra.mxu0 %v5454
        %5652 = vmatpush.bf16.msra.mxu0 %v5453
        %5653 = vmatpush.bf16.msra.mxu0 %v5452
        %5654 = vmatpush.bf16.msra.mxu0 %v5451
        %5655 = vmatmul.bf16.gmra.mxu0 %v5036
        %v5656 = vpop.f32.mrf.mxu0
        %v5657 = vadd.f32 %v5644, %v5656
        %v5658 = vpop.f32.mrf.mxu0
        %5659 = vdwg.mxu0
        %5660 = vmatpush.bf16.msra.mxu0 %v5466
        %5661 = vmatpush.bf16.msra.mxu0 %v5465
        %5662 = vmatpush.bf16.msra.mxu0 %v5464
        %5663 = vmatpush.bf16.msra.mxu0 %v5463
        %5664 = vmatpush.bf16.msra.mxu0 %v5462
        %5665 = vmatpush.bf16.msra.mxu0 %v5461
        %5666 = vmatpush.bf16.msra.mxu0 %v5460
        %5667 = vmatpush.bf16.msra.mxu0 %v5459
        %5668 = vmatmul.bf16.gmra.mxu0 %v5039
        %v5669 = vpop.f32.mrf.mxu0
        %v5670 = vadd.f32 %v5657, %v5669
        %v5671 = vpop.f32.mrf.mxu0
        %5672 = vdwg.mxu0
        %5673 = vmatpush.bf16.msra.mxu0 %v5474
        %5674 = vmatpush.bf16.msra.mxu0 %v5473
        %5675 = vmatpush.bf16.msra.mxu0 %v5472
        %5676 = vmatpush.bf16.msra.mxu0 %v5471
        %5677 = vmatpush.bf16.msra.mxu0 %v5470
        %5678 = vmatpush.bf16.msra.mxu0 %v5469
        %5679 = vmatpush.bf16.msra.mxu0 %v5468
        %5680 = vmatpush.bf16.msra.mxu0 %v5467
        %5681 = vmatmul.bf16.gmra.mxu0 %v5042
        %v5682 = vpop.f32.mrf.mxu0
        %v5683 = vadd.f32 %v5670, %v5682
        %v5684 = vpop.f32.mrf.mxu0
        %5685 = vdwg.mxu0
        %5686 = vmatpush.bf16.msra.mxu0 %v5482
        %5687 = vmatpush.bf16.msra.mxu0 %v5481
        %5688 = vmatpush.bf16.msra.mxu0 %v5480
        %5689 = vmatpush.bf16.msra.mxu0 %v5479
        %5690 = vmatpush.bf16.msra.mxu0 %v5478
        %5691 = vmatpush.bf16.msra.mxu0 %v5477
        %5692 = vmatpush.bf16.msra.mxu0 %v5476
        %5693 = vmatpush.bf16.msra.mxu0 %v5475
        %5694 = vmatmul.bf16.gmra.mxu0 %v5045
        %v5695 = vpop.f32.mrf.mxu0
        %v5696 = vadd.f32 %v5683, %v5695
        %v5697 = vpop.f32.mrf.mxu0
        %5698 = vdwg.mxu0
        %5699 = vmatpush.bf16.msra.mxu0 %v5490
        %5700 = vmatpush.bf16.msra.mxu0 %v5489
        %5701 = vmatpush.bf16.msra.mxu0 %v5488
        %5702 = vmatpush.bf16.msra.mxu0 %v5487
        %5703 = vmatpush.bf16.msra.mxu0 %v5486
        %5704 = vmatpush.bf16.msra.mxu0 %v5485
        %5705 = vmatpush.bf16.msra.mxu0 %v5484
        %5706 = vmatpush.bf16.msra.mxu0 %v5483
        %5707 = vmatmul.bf16.gmra.mxu0 %v5048
        %v5708 = vpop.f32.mrf.mxu0
        %v5709 = vadd.f32 %v5696, %v5708
        %v5710 = vpop.f32.mrf.mxu0
        %5711 = vdwg.mxu0
        %5712 = vmatpush.bf16.msra.mxu0 %v5498
        %5713 = vmatpush.bf16.msra.mxu0 %v5497
        %5714 = vmatpush.bf16.msra.mxu0 %v5496
        %5715 = vmatpush.bf16.msra.mxu0 %v5495
        %5716 = vmatpush.bf16.msra.mxu0 %v5494
        %5717 = vmatpush.bf16.msra.mxu0 %v5493
        %5718 = vmatpush.bf16.msra.mxu0 %v5492
        %5719 = vmatpush.bf16.msra.mxu0 %v5491
        %5720 = vmatmul.bf16.gmra.mxu0 %v5051
        %v5721 = vpop.f32.mrf.mxu0
        %v5722 = vadd.f32 %v5709, %v5721
        %v5723 = vpop.f32.mrf.mxu0
        %5724 = vdwg.mxu0
        %5725 = vmatpush.bf16.msra.mxu0 %v5506
        %5726 = vmatpush.bf16.msra.mxu0 %v5505
        %5727 = vmatpush.bf16.msra.mxu0 %v5504
        %5728 = vmatpush.bf16.msra.mxu0 %v5503
        %5729 = vmatpush.bf16.msra.mxu0 %v5502
        %5730 = vmatpush.bf16.msra.mxu0 %v5501
        %5731 = vmatpush.bf16.msra.mxu0 %v5500
        %5732 = vmatpush.bf16.msra.mxu0 %v5499
        %5733 = vmatmul.bf16.gmra.mxu0 %v5054
        %v5734 = vpop.f32.mrf.mxu0
        %v5735 = vadd.f32 %v5722, %v5734
        %v5736 = vpop.f32.mrf.mxu0
        %5737 = vdwg.mxu0
        %v5738 = vadd.f32 %v4845, %v5735
        %s5739 = scalar_lea.vmem %s6, 1408
        %v5740 = vld [vmem:[%s5739] sm:$0xf]
        %v5741 = vld [vmem:[%s5739 + $0x4] sm:$0xf]
        %v5742 = vld [vmem:[%s5739 + $0x8] sm:$0xf]
        %v5743 = vld [vmem:[%s5739 + $0xc] sm:$0xf]
        %v5744 = vld [vmem:[%s5739 + $0x10] sm:$0xf]
        %v5745 = vld [vmem:[%s5739 + $0x14] sm:$0xf]
        %v5746 = vld [vmem:[%s5739 + $0x18] sm:$0xf]
        %v5747 = vld [vmem:[%s5739 + $0x1c] sm:$0xf]
        %v5748 = vld [vmem:[%s5739 + $0x20] sm:$0xf]
        %v5749 = vld [vmem:[%s5739 + $0x24] sm:$0xf]
        %v5750 = vld [vmem:[%s5739 + $0x28] sm:$0xf]
        %v5751 = vld [vmem:[%s5739 + $0x2c] sm:$0xf]
        %v5752 = vld [vmem:[%s5739 + $0x30] sm:$0xf]
        %v5753 = vld [vmem:[%s5739 + $0x34] sm:$0xf]
        %v5754 = vld [vmem:[%s5739 + $0x38] sm:$0xf]
        %v5755 = vld [vmem:[%s5739 + $0x3c] sm:$0xf]
        %v5756 = vld [vmem:[%s5739 + $0x40] sm:$0xf]
        %v5757 = vld [vmem:[%s5739 + $0x44] sm:$0xf]
        %v5758 = vld [vmem:[%s5739 + $0x48] sm:$0xf]
        %v5759 = vld [vmem:[%s5739 + $0x4c] sm:$0xf]
        %v5760 = vld [vmem:[%s5739 + $0x50] sm:$0xf]
        %v5761 = vld [vmem:[%s5739 + $0x54] sm:$0xf]
        %v5762 = vld [vmem:[%s5739 + $0x58] sm:$0xf]
        %v5763 = vld [vmem:[%s5739 + $0x5c] sm:$0xf]
        %v5764 = vld [vmem:[%s5739 + $0x60] sm:$0xf]
        %v5765 = vld [vmem:[%s5739 + $0x64] sm:$0xf]
        %v5766 = vld [vmem:[%s5739 + $0x68] sm:$0xf]
        %v5767 = vld [vmem:[%s5739 + $0x6c] sm:$0xf]
        %v5768 = vld [vmem:[%s5739 + $0x70] sm:$0xf]
        %v5769 = vld [vmem:[%s5739 + $0x74] sm:$0xf]
        %v5770 = vld [vmem:[%s5739 + $0x78] sm:$0xf]
        %v5771 = vld [vmem:[%s5739 + $0x7c] sm:$0xf]
        %v5772 = vld [vmem:[%s5739 + $0x80] sm:$0xf]
        %v5773 = vld [vmem:[%s5739 + $0x84] sm:$0xf]
        %v5774 = vld [vmem:[%s5739 + $0x88] sm:$0xf]
        %v5775 = vld [vmem:[%s5739 + $0x8c] sm:$0xf]
        %v5776 = vld [vmem:[%s5739 + $0x90] sm:$0xf]
        %v5777 = vld [vmem:[%s5739 + $0x94] sm:$0xf]
        %v5778 = vld [vmem:[%s5739 + $0x98] sm:$0xf]
        %v5779 = vld [vmem:[%s5739 + $0x9c] sm:$0xf]
        %v5780 = vld [vmem:[%s5739 + $0xa0] sm:$0xf]
        %v5781 = vld [vmem:[%s5739 + $0xa4] sm:$0xf]
        %v5782 = vld [vmem:[%s5739 + $0xa8] sm:$0xf]
        %v5783 = vld [vmem:[%s5739 + $0xac] sm:$0xf]
        %v5784 = vld [vmem:[%s5739 + $0xb0] sm:$0xf]
        %v5785 = vld [vmem:[%s5739 + $0xb4] sm:$0xf]
        %v5786 = vld [vmem:[%s5739 + $0xb8] sm:$0xf]
        %v5787 = vld [vmem:[%s5739 + $0xbc] sm:$0xf]
        %v5788 = vld [vmem:[%s5739 + $0xc0] sm:$0xf]
        %v5789 = vld [vmem:[%s5739 + $0xc4] sm:$0xf]
        %v5790 = vld [vmem:[%s5739 + $0xc8] sm:$0xf]
        %v5791 = vld [vmem:[%s5739 + $0xcc] sm:$0xf]
        %v5792 = vld [vmem:[%s5739 + $0xd0] sm:$0xf]
        %v5793 = vld [vmem:[%s5739 + $0xd4] sm:$0xf]
        %v5794 = vld [vmem:[%s5739 + $0xd8] sm:$0xf]
        %v5795 = vld [vmem:[%s5739 + $0xdc] sm:$0xf]
        %v5796 = vld [vmem:[%s5739 + $0xe0] sm:$0xf]
        %v5797 = vld [vmem:[%s5739 + $0xe4] sm:$0xf]
        %v5798 = vld [vmem:[%s5739 + $0xe8] sm:$0xf]
        %v5799 = vld [vmem:[%s5739 + $0xec] sm:$0xf]
        %v5800 = vld [vmem:[%s5739 + $0xf0] sm:$0xf]
        %v5801 = vld [vmem:[%s5739 + $0xf4] sm:$0xf]
        %v5802 = vld [vmem:[%s5739 + $0xf8] sm:$0xf]
        %v5803 = vld [vmem:[%s5739 + $0xfc] sm:$0xf]
        %v5804 = vld [vmem:[%s5739 + $0x100] sm:$0xf]
        %v5805 = vld [vmem:[%s5739 + $0x104] sm:$0xf]
        %v5806 = vld [vmem:[%s5739 + $0x108] sm:$0xf]
        %v5807 = vld [vmem:[%s5739 + $0x10c] sm:$0xf]
        %v5808 = vld [vmem:[%s5739 + $0x110] sm:$0xf]
        %v5809 = vld [vmem:[%s5739 + $0x114] sm:$0xf]
        %v5810 = vld [vmem:[%s5739 + $0x118] sm:$0xf]
        %v5811 = vld [vmem:[%s5739 + $0x11c] sm:$0xf]
        %v5812 = vld [vmem:[%s5739 + $0x120] sm:$0xf]
        %v5813 = vld [vmem:[%s5739 + $0x124] sm:$0xf]
        %v5814 = vld [vmem:[%s5739 + $0x128] sm:$0xf]
        %v5815 = vld [vmem:[%s5739 + $0x12c] sm:$0xf]
        %v5816 = vld [vmem:[%s5739 + $0x130] sm:$0xf]
        %v5817 = vld [vmem:[%s5739 + $0x134] sm:$0xf]
        %v5818 = vld [vmem:[%s5739 + $0x138] sm:$0xf]
        %v5819 = vld [vmem:[%s5739 + $0x13c] sm:$0xf]
        %v5820 = vld [vmem:[%s5739 + $0x140] sm:$0xf]
        %v5821 = vld [vmem:[%s5739 + $0x144] sm:$0xf]
        %v5822 = vld [vmem:[%s5739 + $0x148] sm:$0xf]
        %v5823 = vld [vmem:[%s5739 + $0x14c] sm:$0xf]
        %v5824 = vld [vmem:[%s5739 + $0x150] sm:$0xf]
        %v5825 = vld [vmem:[%s5739 + $0x154] sm:$0xf]
        %v5826 = vld [vmem:[%s5739 + $0x158] sm:$0xf]
        %v5827 = vld [vmem:[%s5739 + $0x15c] sm:$0xf]
        %v5828 = vld [vmem:[%s5739 + $0x160] sm:$0xf]
        %v5829 = vld [vmem:[%s5739 + $0x164] sm:$0xf]
        %v5830 = vld [vmem:[%s5739 + $0x168] sm:$0xf]
        %v5831 = vld [vmem:[%s5739 + $0x16c] sm:$0xf]
        %v5832 = vld [vmem:[%s5739 + $0x170] sm:$0xf]
        %v5833 = vld [vmem:[%s5739 + $0x174] sm:$0xf]
        %v5834 = vld [vmem:[%s5739 + $0x178] sm:$0xf]
        %v5835 = vld [vmem:[%s5739 + $0x17c] sm:$0xf]
        %v5836 = vld [vmem:[%s5739 + $0x180] sm:$0xf]
        %v5837 = vld [vmem:[%s5739 + $0x184] sm:$0xf]
        %v5838 = vld [vmem:[%s5739 + $0x188] sm:$0xf]
        %v5839 = vld [vmem:[%s5739 + $0x18c] sm:$0xf]
        %v5840 = vld [vmem:[%s5739 + $0x190] sm:$0xf]
        %v5841 = vld [vmem:[%s5739 + $0x194] sm:$0xf]
        %v5842 = vld [vmem:[%s5739 + $0x198] sm:$0xf]
        %v5843 = vld [vmem:[%s5739 + $0x19c] sm:$0xf]
        %v5844 = vld [vmem:[%s5739 + $0x1a0] sm:$0xf]
        %v5845 = vld [vmem:[%s5739 + $0x1a4] sm:$0xf]
        %v5846 = vld [vmem:[%s5739 + $0x1a8] sm:$0xf]
        %v5847 = vld [vmem:[%s5739 + $0x1ac] sm:$0xf]
        %v5848 = vld [vmem:[%s5739 + $0x1b0] sm:$0xf]
        %v5849 = vld [vmem:[%s5739 + $0x1b4] sm:$0xf]
        %v5850 = vld [vmem:[%s5739 + $0x1b8] sm:$0xf]
        %v5851 = vld [vmem:[%s5739 + $0x1bc] sm:$0xf]
        %v5852 = vld [vmem:[%s5739 + $0x1c0] sm:$0xf]
        %v5853 = vld [vmem:[%s5739 + $0x1c4] sm:$0xf]
        %v5854 = vld [vmem:[%s5739 + $0x1c8] sm:$0xf]
        %v5855 = vld [vmem:[%s5739 + $0x1cc] sm:$0xf]
        %v5856 = vld [vmem:[%s5739 + $0x1d0] sm:$0xf]
        %v5857 = vld [vmem:[%s5739 + $0x1d4] sm:$0xf]
        %v5858 = vld [vmem:[%s5739 + $0x1d8] sm:$0xf]
        %v5859 = vld [vmem:[%s5739 + $0x1dc] sm:$0xf]
        %v5860 = vld [vmem:[%s5739 + $0x1e0] sm:$0xf]
        %v5861 = vld [vmem:[%s5739 + $0x1e4] sm:$0xf]
        %v5862 = vld [vmem:[%s5739 + $0x1e8] sm:$0xf]
        %v5863 = vld [vmem:[%s5739 + $0x1ec] sm:$0xf]
        %v5864 = vld [vmem:[%s5739 + $0x1f0] sm:$0xf]
        %v5865 = vld [vmem:[%s5739 + $0x1f4] sm:$0xf]
        %v5866 = vld [vmem:[%s5739 + $0x1f8] sm:$0xf]
        %v5867 = vld [vmem:[%s5739 + $0x1fc] sm:$0xf]
        %v5868 = vld [vmem:[%s5739 + $0x200] sm:$0xf]
        %v5869 = vld [vmem:[%s5739 + $0x204] sm:$0xf]
        %v5870 = vld [vmem:[%s5739 + $0x208] sm:$0xf]
        %v5871 = vld [vmem:[%s5739 + $0x20c] sm:$0xf]
        %v5872 = vld [vmem:[%s5739 + $0x210] sm:$0xf]
        %v5873 = vld [vmem:[%s5739 + $0x214] sm:$0xf]
        %v5874 = vld [vmem:[%s5739 + $0x218] sm:$0xf]
        %v5875 = vld [vmem:[%s5739 + $0x21c] sm:$0xf]
        %v5876 = vld [vmem:[%s5739 + $0x220] sm:$0xf]
        %v5877 = vld [vmem:[%s5739 + $0x224] sm:$0xf]
        %v5878 = vld [vmem:[%s5739 + $0x228] sm:$0xf]
        %v5879 = vld [vmem:[%s5739 + $0x22c] sm:$0xf]
        %v5880 = vld [vmem:[%s5739 + $0x230] sm:$0xf]
        %v5881 = vld [vmem:[%s5739 + $0x234] sm:$0xf]
        %v5882 = vld [vmem:[%s5739 + $0x238] sm:$0xf]
        %v5883 = vld [vmem:[%s5739 + $0x23c] sm:$0xf]
        %v5884 = vld [vmem:[%s5739 + $0x240] sm:$0xf]
        %v5885 = vld [vmem:[%s5739 + $0x244] sm:$0xf]
        %v5886 = vld [vmem:[%s5739 + $0x248] sm:$0xf]
        %v5887 = vld [vmem:[%s5739 + $0x24c] sm:$0xf]
        %v5888 = vld [vmem:[%s5739 + $0x250] sm:$0xf]
        %v5889 = vld [vmem:[%s5739 + $0x254] sm:$0xf]
        %v5890 = vld [vmem:[%s5739 + $0x258] sm:$0xf]
        %v5891 = vld [vmem:[%s5739 + $0x25c] sm:$0xf]
        %v5892 = vld [vmem:[%s5739 + $0x260] sm:$0xf]
        %v5893 = vld [vmem:[%s5739 + $0x264] sm:$0xf]
        %v5894 = vld [vmem:[%s5739 + $0x268] sm:$0xf]
        %v5895 = vld [vmem:[%s5739 + $0x26c] sm:$0xf]
        %v5896 = vld [vmem:[%s5739 + $0x270] sm:$0xf]
        %v5897 = vld [vmem:[%s5739 + $0x274] sm:$0xf]
        %v5898 = vld [vmem:[%s5739 + $0x278] sm:$0xf]
        %v5899 = vld [vmem:[%s5739 + $0x27c] sm:$0xf]
        %v5900 = vld [vmem:[%s5739 + $0x280] sm:$0xf]
        %v5901 = vld [vmem:[%s5739 + $0x284] sm:$0xf]
        %v5902 = vld [vmem:[%s5739 + $0x288] sm:$0xf]
        %v5903 = vld [vmem:[%s5739 + $0x28c] sm:$0xf]
        %v5904 = vld [vmem:[%s5739 + $0x290] sm:$0xf]
        %v5905 = vld [vmem:[%s5739 + $0x294] sm:$0xf]
        %v5906 = vld [vmem:[%s5739 + $0x298] sm:$0xf]
        %v5907 = vld [vmem:[%s5739 + $0x29c] sm:$0xf]
        %v5908 = vld [vmem:[%s5739 + $0x2a0] sm:$0xf]
        %v5909 = vld [vmem:[%s5739 + $0x2a4] sm:$0xf]
        %v5910 = vld [vmem:[%s5739 + $0x2a8] sm:$0xf]
        %v5911 = vld [vmem:[%s5739 + $0x2ac] sm:$0xf]
        %v5912 = vld [vmem:[%s5739 + $0x2b0] sm:$0xf]
        %v5913 = vld [vmem:[%s5739 + $0x2b4] sm:$0xf]
        %v5914 = vld [vmem:[%s5739 + $0x2b8] sm:$0xf]
        %v5915 = vld [vmem:[%s5739 + $0x2bc] sm:$0xf]
        %v5927 = vrot.slane %v3987, 1
        %v5928 = vrot.slane %v3988, 1
        %v5929 = vrot.slane %v3989, 1
        %v5930 = vrot.slane %v3990, 1
        %v5931 = vrot.slane %v3991, 1
        %v5932 = vrot.slane %v3992, 1
        %v5933 = vrot.slane %v3993, 1
        %v5934 = vrot.slane %v3994, 1
        %v5935 = vrot.slane %v3995, 1
        %v5936 = vrot.slane %v3996, 1
        %v5937 = vrot.slane %v3997, 1
        %v6125 = vunpack.c.l.b16 %v5740
        %v6126 = vunpack.c.l.b16 %v5741
        %v6127 = vunpack.c.l.b16 %v5742
        %v6128 = vunpack.c.l.b16 %v5743
        %v6129 = vunpack.c.l.b16 %v5744
        %v6130 = vunpack.c.l.b16 %v5745
        %v6131 = vunpack.c.l.b16 %v5746
        %v6132 = vunpack.c.l.b16 %v5747
        %v6133 = vunpack.c.l.b16 %v5748
        %v6134 = vunpack.c.l.b16 %v5749
        %v6135 = vunpack.c.l.b16 %v5750
        %v6136 = vunpack.c.l.b16 %v5751
        %v6137 = vunpack.c.l.b16 %v5752
        %v6138 = vunpack.c.l.b16 %v5753
        %v6139 = vunpack.c.l.b16 %v5754
        %v6140 = vunpack.c.l.b16 %v5755
        %v6141 = vunpack.c.l.b16 %v5756
        %v6142 = vunpack.c.l.b16 %v5757
        %v6143 = vunpack.c.l.b16 %v5758
        %v6144 = vunpack.c.l.b16 %v5759
        %v6145 = vunpack.c.l.b16 %v5760
        %v6146 = vunpack.c.l.b16 %v5761
        %v6147 = vunpack.c.l.b16 %v5762
        %v6148 = vunpack.c.l.b16 %v5763
        %v6149 = vunpack.c.l.b16 %v5764
        %v6150 = vunpack.c.l.b16 %v5765
        %v6151 = vunpack.c.l.b16 %v5766
        %v6152 = vunpack.c.l.b16 %v5767
        %v6153 = vunpack.c.l.b16 %v5768
        %v6154 = vunpack.c.l.b16 %v5769
        %v6155 = vunpack.c.l.b16 %v5770
        %v6156 = vunpack.c.l.b16 %v5771
        %v6157 = vunpack.c.l.b16 %v5772
        %v6158 = vunpack.c.l.b16 %v5773
        %v6159 = vunpack.c.l.b16 %v5774
        %v6160 = vunpack.c.l.b16 %v5775
        %v6161 = vunpack.c.l.b16 %v5776
        %v6162 = vunpack.c.l.b16 %v5777
        %v6163 = vunpack.c.l.b16 %v5778
        %v6164 = vunpack.c.l.b16 %v5779
        %v6165 = vunpack.c.l.b16 %v5780
        %v6166 = vunpack.c.l.b16 %v5781
        %v6167 = vunpack.c.l.b16 %v5782
        %v6168 = vunpack.c.l.b16 %v5783
        %v6169 = vunpack.c.l.b16 %v5784
        %v6170 = vunpack.c.l.b16 %v5785
        %v6171 = vunpack.c.l.b16 %v5786
        %v6172 = vunpack.c.l.b16 %v5787
        %v6173 = vunpack.c.l.b16 %v5788
        %v6174 = vunpack.c.l.b16 %v5789
        %v6175 = vunpack.c.l.b16 %v5790
        %v6176 = vunpack.c.l.b16 %v5791
        %v6177 = vunpack.c.l.b16 %v5792
        %v6178 = vunpack.c.l.b16 %v5793
        %v6179 = vunpack.c.l.b16 %v5794
        %v6180 = vunpack.c.l.b16 %v5795
        %v6181 = vunpack.c.l.b16 %v5796
        %v6182 = vunpack.c.l.b16 %v5797
        %v6183 = vunpack.c.l.b16 %v5798
        %v6184 = vunpack.c.l.b16 %v5799
        %v6185 = vunpack.c.l.b16 %v5800
        %v6186 = vunpack.c.l.b16 %v5801
        %v6187 = vunpack.c.l.b16 %v5802
        %v6188 = vunpack.c.l.b16 %v5803
        %v6189 = vunpack.c.l.b16 %v5804
        %v6190 = vunpack.c.l.b16 %v5805
        %v6191 = vunpack.c.l.b16 %v5806
        %v6192 = vunpack.c.l.b16 %v5807
        %v6193 = vunpack.c.l.b16 %v5808
        %v6194 = vunpack.c.l.b16 %v5809
        %v6195 = vunpack.c.l.b16 %v5810
        %v6196 = vunpack.c.l.b16 %v5811
        %v6197 = vunpack.c.l.b16 %v5812
        %v6198 = vunpack.c.l.b16 %v5813
        %v6199 = vunpack.c.l.b16 %v5814
        %v6200 = vunpack.c.l.b16 %v5815
        %v6201 = vunpack.c.l.b16 %v5816
        %v6202 = vunpack.c.l.b16 %v5817
        %v6203 = vunpack.c.l.b16 %v5818
        %v6204 = vunpack.c.l.b16 %v5819
        %v6205 = vunpack.c.l.b16 %v5820
        %v6206 = vunpack.c.l.b16 %v5821
        %v6207 = vunpack.c.l.b16 %v5822
        %v6208 = vunpack.c.l.b16 %v5823
        %v6209 = vunpack.c.l.b16 %v5824
        %v6210 = vunpack.c.l.b16 %v5825
        %v6211 = vunpack.c.l.b16 %v5826
        %v6212 = vunpack.c.l.b16 %v5827
        %v6213 = vunpack.c.l.b16 %v5828
        %v6214 = vunpack.c.l.b16 %v5829
        %v6215 = vunpack.c.l.b16 %v5830
        %v6216 = vunpack.c.l.b16 %v5831
        %v6217 = vunpack.c.l.b16 %v5832
        %v6218 = vunpack.c.l.b16 %v5833
        %v6219 = vunpack.c.l.b16 %v5834
        %v6220 = vunpack.c.l.b16 %v5835
        %v6221 = vunpack.c.l.b16 %v5836
        %v6222 = vunpack.c.l.b16 %v5837
        %v6223 = vunpack.c.l.b16 %v5838
        %v6224 = vunpack.c.l.b16 %v5839
        %v6225 = vunpack.c.l.b16 %v5840
        %v6226 = vunpack.c.l.b16 %v5841
        %v6227 = vunpack.c.l.b16 %v5842
        %v6228 = vunpack.c.l.b16 %v5843
        %v6229 = vunpack.c.l.b16 %v5844
        %v6230 = vunpack.c.l.b16 %v5845
        %v6231 = vunpack.c.l.b16 %v5846
        %v6232 = vunpack.c.l.b16 %v5847
        %v6233 = vunpack.c.l.b16 %v5848
        %v6234 = vunpack.c.l.b16 %v5849
        %v6235 = vunpack.c.l.b16 %v5850
        %v6236 = vunpack.c.l.b16 %v5851
        %v6237 = vunpack.c.l.b16 %v5852
        %v6238 = vunpack.c.l.b16 %v5853
        %v6239 = vunpack.c.l.b16 %v5854
        %v6240 = vunpack.c.l.b16 %v5855
        %v6241 = vunpack.c.l.b16 %v5856
        %v6242 = vunpack.c.l.b16 %v5857
        %v6243 = vunpack.c.l.b16 %v5858
        %v6244 = vunpack.c.l.b16 %v5859
        %v6245 = vunpack.c.l.b16 %v5860
        %v6246 = vunpack.c.l.b16 %v5861
        %v6247 = vunpack.c.l.b16 %v5862
        %v6248 = vunpack.c.l.b16 %v5863
        %v6249 = vunpack.c.l.b16 %v5864
        %v6250 = vunpack.c.l.b16 %v5865
        %v6251 = vunpack.c.l.b16 %v5866
        %v6252 = vunpack.c.l.b16 %v5867
        %v6253 = vunpack.c.l.b16 %v5868
        %v6254 = vunpack.c.l.b16 %v5869
        %v6255 = vunpack.c.l.b16 %v5870
        %v6256 = vunpack.c.l.b16 %v5871
        %v6257 = vunpack.c.l.b16 %v5872
        %v6258 = vunpack.c.l.b16 %v5873
        %v6259 = vunpack.c.l.b16 %v5874
        %v6260 = vunpack.c.l.b16 %v5875
        %v6261 = vunpack.c.l.b16 %v5876
        %v6262 = vunpack.c.l.b16 %v5877
        %v6263 = vunpack.c.l.b16 %v5878
        %v6264 = vunpack.c.l.b16 %v5879
        %v6265 = vunpack.c.l.b16 %v5880
        %v6266 = vunpack.c.l.b16 %v5881
        %v6267 = vunpack.c.l.b16 %v5882
        %v6268 = vunpack.c.l.b16 %v5883
        %v6269 = vunpack.c.l.b16 %v5884
        %v6270 = vunpack.c.l.b16 %v5885
        %v6271 = vunpack.c.l.b16 %v5886
        %v6272 = vunpack.c.l.b16 %v5887
        %v6273 = vunpack.c.l.b16 %v5888
        %v6274 = vunpack.c.l.b16 %v5889
        %v6275 = vunpack.c.l.b16 %v5890
        %v6276 = vunpack.c.l.b16 %v5891
        %v6277 = vunpack.c.l.b16 %v5892
        %v6278 = vunpack.c.l.b16 %v5893
        %v6279 = vunpack.c.l.b16 %v5894
        %v6280 = vunpack.c.l.b16 %v5895
        %v6281 = vunpack.c.l.b16 %v5896
        %v6282 = vunpack.c.l.b16 %v5897
        %v6283 = vunpack.c.l.b16 %v5898
        %v6284 = vunpack.c.l.b16 %v5899
        %v6285 = vunpack.c.l.b16 %v5900
        %v6286 = vunpack.c.l.b16 %v5901
        %v6287 = vunpack.c.l.b16 %v5902
        %v6288 = vunpack.c.l.b16 %v5903
        %v6289 = vunpack.c.l.b16 %v5904
        %v6290 = vunpack.c.l.b16 %v5905
        %v6291 = vunpack.c.l.b16 %v5906
        %v6292 = vunpack.c.l.b16 %v5907
        %v6293 = vunpack.c.l.b16 %v5908
        %v6294 = vunpack.c.l.b16 %v5909
        %v6295 = vunpack.c.l.b16 %v5910
        %v6296 = vunpack.c.l.b16 %v5911
        %v6297 = vunpack.c.l.b16 %v5912
        %v6298 = vunpack.c.l.b16 %v5913
        %v6299 = vunpack.c.l.b16 %v5914
        %v6300 = vunpack.c.l.b16 %v5915
        %v6301 = vpack.c.b16 %v6126, %v6125
        %v6302 = vpack.c.b16 %v6128, %v6127
        %v6303 = vpack.c.b16 %v6130, %v6129
        %v6304 = vpack.c.b16 %v6132, %v6131
        %v6305 = vpack.c.b16 %v6134, %v6133
        %v6306 = vpack.c.b16 %v6136, %v6135
        %v6307 = vpack.c.b16 %v6138, %v6137
        %v6308 = vpack.c.b16 %v6140, %v6139
        %v6309 = vpack.c.b16 %v6142, %v6141
        %v6310 = vpack.c.b16 %v6144, %v6143
        %v6311 = vpack.c.b16 %v6146, %v6145
        %v6312 = vpack.c.b16 %v6148, %v6147
        %v6313 = vpack.c.b16 %v6150, %v6149
        %v6314 = vpack.c.b16 %v6152, %v6151
        %v6315 = vpack.c.b16 %v6154, %v6153
        %v6316 = vpack.c.b16 %v6156, %v6155
        %v6317 = vpack.c.b16 %v6158, %v6157
        %v6318 = vpack.c.b16 %v6160, %v6159
        %v6319 = vpack.c.b16 %v6162, %v6161
        %v6320 = vpack.c.b16 %v6164, %v6163
        %v6321 = vpack.c.b16 %v6166, %v6165
        %v6322 = vpack.c.b16 %v6168, %v6167
        %v6323 = vpack.c.b16 %v6170, %v6169
        %v6324 = vpack.c.b16 %v6172, %v6171
        %v6325 = vpack.c.b16 %v6174, %v6173
        %v6326 = vpack.c.b16 %v6176, %v6175
        %v6327 = vpack.c.b16 %v6178, %v6177
        %v6328 = vpack.c.b16 %v6180, %v6179
        %v6329 = vpack.c.b16 %v6182, %v6181
        %v6330 = vpack.c.b16 %v6184, %v6183
        %v6331 = vpack.c.b16 %v6186, %v6185
        %v6332 = vpack.c.b16 %v6188, %v6187
        %v6333 = vpack.c.b16 %v6190, %v6189
        %v6334 = vpack.c.b16 %v6192, %v6191
        %v6335 = vpack.c.b16 %v6194, %v6193
        %v6336 = vpack.c.b16 %v6196, %v6195
        %v6337 = vpack.c.b16 %v6198, %v6197
        %v6338 = vpack.c.b16 %v6200, %v6199
        %v6339 = vpack.c.b16 %v6202, %v6201
        %v6340 = vpack.c.b16 %v6204, %v6203
        %v6341 = vpack.c.b16 %v6206, %v6205
        %v6342 = vpack.c.b16 %v6208, %v6207
        %v6343 = vpack.c.b16 %v6210, %v6209
        %v6344 = vpack.c.b16 %v6212, %v6211
        %v6345 = vpack.c.b16 %v6214, %v6213
        %v6346 = vpack.c.b16 %v6216, %v6215
        %v6347 = vpack.c.b16 %v6218, %v6217
        %v6348 = vpack.c.b16 %v6220, %v6219
        %v6349 = vpack.c.b16 %v6222, %v6221
        %v6350 = vpack.c.b16 %v6224, %v6223
        %v6351 = vpack.c.b16 %v6226, %v6225
        %v6352 = vpack.c.b16 %v6228, %v6227
        %v6353 = vpack.c.b16 %v6230, %v6229
        %v6354 = vpack.c.b16 %v6232, %v6231
        %v6355 = vpack.c.b16 %v6234, %v6233
        %v6356 = vpack.c.b16 %v6236, %v6235
        %v6357 = vpack.c.b16 %v6238, %v6237
        %v6358 = vpack.c.b16 %v6240, %v6239
        %v6359 = vpack.c.b16 %v6242, %v6241
        %v6360 = vpack.c.b16 %v6244, %v6243
        %v6361 = vpack.c.b16 %v6246, %v6245
        %v6362 = vpack.c.b16 %v6248, %v6247
        %v6363 = vpack.c.b16 %v6250, %v6249
        %v6364 = vpack.c.b16 %v6252, %v6251
        %v6365 = vpack.c.b16 %v6254, %v6253
        %v6366 = vpack.c.b16 %v6256, %v6255
        %v6367 = vpack.c.b16 %v6258, %v6257
        %v6368 = vpack.c.b16 %v6260, %v6259
        %v6369 = vpack.c.b16 %v6262, %v6261
        %v6370 = vpack.c.b16 %v6264, %v6263
        %v6371 = vpack.c.b16 %v6266, %v6265
        %v6372 = vpack.c.b16 %v6268, %v6267
        %v6373 = vpack.c.b16 %v6270, %v6269
        %v6374 = vpack.c.b16 %v6272, %v6271
        %v6375 = vpack.c.b16 %v6274, %v6273
        %v6376 = vpack.c.b16 %v6276, %v6275
        %v6377 = vpack.c.b16 %v6278, %v6277
        %v6378 = vpack.c.b16 %v6280, %v6279
        %v6379 = vpack.c.b16 %v6282, %v6281
        %v6380 = vpack.c.b16 %v6284, %v6283
        %v6381 = vpack.c.b16 %v6286, %v6285
        %v6382 = vpack.c.b16 %v6288, %v6287
        %v6383 = vpack.c.b16 %v6290, %v6289
        %v6384 = vpack.c.b16 %v6292, %v6291
        %v6385 = vpack.c.b16 %v6294, %v6293
        %v6386 = vpack.c.b16 %v6296, %v6295
        %v6387 = vpack.c.b16 %v6298, %v6297
        %v6388 = vpack.c.b16 %v6300, %v6299
        %6477 = vmatpush.bf16.msra.mxu0 %v6308
        %6478 = vmatpush.bf16.msra.mxu0 %v6307
        %6479 = vmatpush.bf16.msra.mxu0 %v6306
        %6480 = vmatpush.bf16.msra.mxu0 %v6305
        %6481 = vmatpush.bf16.msra.mxu0 %v6304
        %6482 = vmatpush.bf16.msra.mxu0 %v6303
        %6483 = vmatpush.bf16.msra.mxu0 %v6302
        %6484 = vmatpush.bf16.msra.mxu0 %v6301
        %6485 = vmatmul.bf16.gmra.mxu0 %v5927
        %v6486 = vpop.f32.mrf.mxu0
        %v6487 = vadd.f32 0.0, %v6486
        %v6488 = vpop.f32.mrf.mxu0
        %6489 = vdwg.mxu0
        %6490 = vmatpush.bf16.msra.mxu0 %v6316
        %6491 = vmatpush.bf16.msra.mxu0 %v6315
        %6492 = vmatpush.bf16.msra.mxu0 %v6314
        %6493 = vmatpush.bf16.msra.mxu0 %v6313
        %6494 = vmatpush.bf16.msra.mxu0 %v6312
        %6495 = vmatpush.bf16.msra.mxu0 %v6311
        %6496 = vmatpush.bf16.msra.mxu0 %v6310
        %6497 = vmatpush.bf16.msra.mxu0 %v6309
        %6498 = vmatmul.bf16.gmra.mxu0 %v5928
        %v6499 = vpop.f32.mrf.mxu0
        %v6500 = vadd.f32 %v6487, %v6499
        %v6501 = vpop.f32.mrf.mxu0
        %6502 = vdwg.mxu0
        %6503 = vmatpush.bf16.msra.mxu0 %v6324
        %6504 = vmatpush.bf16.msra.mxu0 %v6323
        %6505 = vmatpush.bf16.msra.mxu0 %v6322
        %6506 = vmatpush.bf16.msra.mxu0 %v6321
        %6507 = vmatpush.bf16.msra.mxu0 %v6320
        %6508 = vmatpush.bf16.msra.mxu0 %v6319
        %6509 = vmatpush.bf16.msra.mxu0 %v6318
        %6510 = vmatpush.bf16.msra.mxu0 %v6317
        %6511 = vmatmul.bf16.gmra.mxu0 %v5929
        %v6512 = vpop.f32.mrf.mxu0
        %v6513 = vadd.f32 %v6500, %v6512
        %v6514 = vpop.f32.mrf.mxu0
        %6515 = vdwg.mxu0
        %6516 = vmatpush.bf16.msra.mxu0 %v6332
        %6517 = vmatpush.bf16.msra.mxu0 %v6331
        %6518 = vmatpush.bf16.msra.mxu0 %v6330
        %6519 = vmatpush.bf16.msra.mxu0 %v6329
        %6520 = vmatpush.bf16.msra.mxu0 %v6328
        %6521 = vmatpush.bf16.msra.mxu0 %v6327
        %6522 = vmatpush.bf16.msra.mxu0 %v6326
        %6523 = vmatpush.bf16.msra.mxu0 %v6325
        %6524 = vmatmul.bf16.gmra.mxu0 %v5930
        %v6525 = vpop.f32.mrf.mxu0
        %v6526 = vadd.f32 %v6513, %v6525
        %v6527 = vpop.f32.mrf.mxu0
        %6528 = vdwg.mxu0
        %6529 = vmatpush.bf16.msra.mxu0 %v6340
        %6530 = vmatpush.bf16.msra.mxu0 %v6339
        %6531 = vmatpush.bf16.msra.mxu0 %v6338
        %6532 = vmatpush.bf16.msra.mxu0 %v6337
        %6533 = vmatpush.bf16.msra.mxu0 %v6336
        %6534 = vmatpush.bf16.msra.mxu0 %v6335
        %6535 = vmatpush.bf16.msra.mxu0 %v6334
        %6536 = vmatpush.bf16.msra.mxu0 %v6333
        %6537 = vmatmul.bf16.gmra.mxu0 %v5931
        %v6538 = vpop.f32.mrf.mxu0
        %v6539 = vadd.f32 %v6526, %v6538
        %v6540 = vpop.f32.mrf.mxu0
        %6541 = vdwg.mxu0
        %6542 = vmatpush.bf16.msra.mxu0 %v6348
        %6543 = vmatpush.bf16.msra.mxu0 %v6347
        %6544 = vmatpush.bf16.msra.mxu0 %v6346
        %6545 = vmatpush.bf16.msra.mxu0 %v6345
        %6546 = vmatpush.bf16.msra.mxu0 %v6344
        %6547 = vmatpush.bf16.msra.mxu0 %v6343
        %6548 = vmatpush.bf16.msra.mxu0 %v6342
        %6549 = vmatpush.bf16.msra.mxu0 %v6341
        %6550 = vmatmul.bf16.gmra.mxu0 %v5932
        %v6551 = vpop.f32.mrf.mxu0
        %v6552 = vadd.f32 %v6539, %v6551
        %v6553 = vpop.f32.mrf.mxu0
        %6554 = vdwg.mxu0
        %6555 = vmatpush.bf16.msra.mxu0 %v6356
        %6556 = vmatpush.bf16.msra.mxu0 %v6355
        %6557 = vmatpush.bf16.msra.mxu0 %v6354
        %6558 = vmatpush.bf16.msra.mxu0 %v6353
        %6559 = vmatpush.bf16.msra.mxu0 %v6352
        %6560 = vmatpush.bf16.msra.mxu0 %v6351
        %6561 = vmatpush.bf16.msra.mxu0 %v6350
        %6562 = vmatpush.bf16.msra.mxu0 %v6349
        %6563 = vmatmul.bf16.gmra.mxu0 %v5933
        %v6564 = vpop.f32.mrf.mxu0
        %v6565 = vadd.f32 %v6552, %v6564
        %v6566 = vpop.f32.mrf.mxu0
        %6567 = vdwg.mxu0
        %6568 = vmatpush.bf16.msra.mxu0 %v6364
        %6569 = vmatpush.bf16.msra.mxu0 %v6363
        %6570 = vmatpush.bf16.msra.mxu0 %v6362
        %6571 = vmatpush.bf16.msra.mxu0 %v6361
        %6572 = vmatpush.bf16.msra.mxu0 %v6360
        %6573 = vmatpush.bf16.msra.mxu0 %v6359
        %6574 = vmatpush.bf16.msra.mxu0 %v6358
        %6575 = vmatpush.bf16.msra.mxu0 %v6357
        %6576 = vmatmul.bf16.gmra.mxu0 %v5934
        %v6577 = vpop.f32.mrf.mxu0
        %v6578 = vadd.f32 %v6565, %v6577
        %v6579 = vpop.f32.mrf.mxu0
        %6580 = vdwg.mxu0
        %6581 = vmatpush.bf16.msra.mxu0 %v6372
        %6582 = vmatpush.bf16.msra.mxu0 %v6371
        %6583 = vmatpush.bf16.msra.mxu0 %v6370
        %6584 = vmatpush.bf16.msra.mxu0 %v6369
        %6585 = vmatpush.bf16.msra.mxu0 %v6368
        %6586 = vmatpush.bf16.msra.mxu0 %v6367
        %6587 = vmatpush.bf16.msra.mxu0 %v6366
        %6588 = vmatpush.bf16.msra.mxu0 %v6365
        %6589 = vmatmul.bf16.gmra.mxu0 %v5935
        %v6590 = vpop.f32.mrf.mxu0
        %v6591 = vadd.f32 %v6578, %v6590
        %v6592 = vpop.f32.mrf.mxu0
        %6593 = vdwg.mxu0
        %6594 = vmatpush.bf16.msra.mxu0 %v6380
        %6595 = vmatpush.bf16.msra.mxu0 %v6379
        %6596 = vmatpush.bf16.msra.mxu0 %v6378
        %6597 = vmatpush.bf16.msra.mxu0 %v6377
        %6598 = vmatpush.bf16.msra.mxu0 %v6376
        %6599 = vmatpush.bf16.msra.mxu0 %v6375
        %6600 = vmatpush.bf16.msra.mxu0 %v6374
        %6601 = vmatpush.bf16.msra.mxu0 %v6373
        %6602 = vmatmul.bf16.gmra.mxu0 %v5936
        %v6603 = vpop.f32.mrf.mxu0
        %v6604 = vadd.f32 %v6591, %v6603
        %v6605 = vpop.f32.mrf.mxu0
        %6606 = vdwg.mxu0
        %6607 = vmatpush.bf16.msra.mxu0 %v6388
        %6608 = vmatpush.bf16.msra.mxu0 %v6387
        %6609 = vmatpush.bf16.msra.mxu0 %v6386
        %6610 = vmatpush.bf16.msra.mxu0 %v6385
        %6611 = vmatpush.bf16.msra.mxu0 %v6384
        %6612 = vmatpush.bf16.msra.mxu0 %v6383
        %6613 = vmatpush.bf16.msra.mxu0 %v6382
        %6614 = vmatpush.bf16.msra.mxu0 %v6381
        %6615 = vmatmul.bf16.gmra.mxu0 %v5937
        %v6616 = vpop.f32.mrf.mxu0
        %v6617 = vadd.f32 %v6604, %v6616
        %v6618 = vpop.f32.mrf.mxu0
        %6619 = vdwg.mxu0
        %v6620 = vadd.f32 %v5738, %v6617
        %s6621 = scalar_lea.vmem %s6, 2112
        %v6622 = vld [vmem:[%s6621] sm:$0xf]
        %v6623 = vld [vmem:[%s6621 + $0x4] sm:$0xf]
        %v6624 = vld [vmem:[%s6621 + $0x8] sm:$0xf]
        %v6625 = vld [vmem:[%s6621 + $0xc] sm:$0xf]
        %v6626 = vld [vmem:[%s6621 + $0x10] sm:$0xf]
        %v6627 = vld [vmem:[%s6621 + $0x14] sm:$0xf]
        %v6628 = vld [vmem:[%s6621 + $0x18] sm:$0xf]
        %v6629 = vld [vmem:[%s6621 + $0x1c] sm:$0xf]
        %v6630 = vld [vmem:[%s6621 + $0x20] sm:$0xf]
        %v6631 = vld [vmem:[%s6621 + $0x24] sm:$0xf]
        %v6632 = vld [vmem:[%s6621 + $0x28] sm:$0xf]
        %v6633 = vld [vmem:[%s6621 + $0x2c] sm:$0xf]
        %v6634 = vld [vmem:[%s6621 + $0x30] sm:$0xf]
        %v6635 = vld [vmem:[%s6621 + $0x34] sm:$0xf]
        %v6636 = vld [vmem:[%s6621 + $0x38] sm:$0xf]
        %v6637 = vld [vmem:[%s6621 + $0x3c] sm:$0xf]
        %v6638 = vld [vmem:[%s6621 + $0x40] sm:$0xf]
        %v6639 = vld [vmem:[%s6621 + $0x44] sm:$0xf]
        %v6640 = vld [vmem:[%s6621 + $0x48] sm:$0xf]
        %v6641 = vld [vmem:[%s6621 + $0x4c] sm:$0xf]
        %v6642 = vld [vmem:[%s6621 + $0x50] sm:$0xf]
        %v6643 = vld [vmem:[%s6621 + $0x54] sm:$0xf]
        %v6644 = vld [vmem:[%s6621 + $0x58] sm:$0xf]
        %v6645 = vld [vmem:[%s6621 + $0x5c] sm:$0xf]
        %v6646 = vld [vmem:[%s6621 + $0x60] sm:$0xf]
        %v6647 = vld [vmem:[%s6621 + $0x64] sm:$0xf]
        %v6648 = vld [vmem:[%s6621 + $0x68] sm:$0xf]
        %v6649 = vld [vmem:[%s6621 + $0x6c] sm:$0xf]
        %v6650 = vld [vmem:[%s6621 + $0x70] sm:$0xf]
        %v6651 = vld [vmem:[%s6621 + $0x74] sm:$0xf]
        %v6652 = vld [vmem:[%s6621 + $0x78] sm:$0xf]
        %v6653 = vld [vmem:[%s6621 + $0x7c] sm:$0xf]
        %v6654 = vld [vmem:[%s6621 + $0x80] sm:$0xf]
        %v6655 = vld [vmem:[%s6621 + $0x84] sm:$0xf]
        %v6656 = vld [vmem:[%s6621 + $0x88] sm:$0xf]
        %v6657 = vld [vmem:[%s6621 + $0x8c] sm:$0xf]
        %v6658 = vld [vmem:[%s6621 + $0x90] sm:$0xf]
        %v6659 = vld [vmem:[%s6621 + $0x94] sm:$0xf]
        %v6660 = vld [vmem:[%s6621 + $0x98] sm:$0xf]
        %v6661 = vld [vmem:[%s6621 + $0x9c] sm:$0xf]
        %v6662 = vld [vmem:[%s6621 + $0xa0] sm:$0xf]
        %v6663 = vld [vmem:[%s6621 + $0xa4] sm:$0xf]
        %v6664 = vld [vmem:[%s6621 + $0xa8] sm:$0xf]
        %v6665 = vld [vmem:[%s6621 + $0xac] sm:$0xf]
        %v6666 = vld [vmem:[%s6621 + $0xb0] sm:$0xf]
        %v6667 = vld [vmem:[%s6621 + $0xb4] sm:$0xf]
        %v6668 = vld [vmem:[%s6621 + $0xb8] sm:$0xf]
        %v6669 = vld [vmem:[%s6621 + $0xbc] sm:$0xf]
        %v6670 = vld [vmem:[%s6621 + $0xc0] sm:$0xf]
        %v6671 = vld [vmem:[%s6621 + $0xc4] sm:$0xf]
        %v6672 = vld [vmem:[%s6621 + $0xc8] sm:$0xf]
        %v6673 = vld [vmem:[%s6621 + $0xcc] sm:$0xf]
        %v6674 = vld [vmem:[%s6621 + $0xd0] sm:$0xf]
        %v6675 = vld [vmem:[%s6621 + $0xd4] sm:$0xf]
        %v6676 = vld [vmem:[%s6621 + $0xd8] sm:$0xf]
        %v6677 = vld [vmem:[%s6621 + $0xdc] sm:$0xf]
        %v6678 = vld [vmem:[%s6621 + $0xe0] sm:$0xf]
        %v6679 = vld [vmem:[%s6621 + $0xe4] sm:$0xf]
        %v6680 = vld [vmem:[%s6621 + $0xe8] sm:$0xf]
        %v6681 = vld [vmem:[%s6621 + $0xec] sm:$0xf]
        %v6682 = vld [vmem:[%s6621 + $0xf0] sm:$0xf]
        %v6683 = vld [vmem:[%s6621 + $0xf4] sm:$0xf]
        %v6684 = vld [vmem:[%s6621 + $0xf8] sm:$0xf]
        %v6685 = vld [vmem:[%s6621 + $0xfc] sm:$0xf]
        %v6686 = vld [vmem:[%s6621 + $0x100] sm:$0xf]
        %v6687 = vld [vmem:[%s6621 + $0x104] sm:$0xf]
        %v6688 = vld [vmem:[%s6621 + $0x108] sm:$0xf]
        %v6689 = vld [vmem:[%s6621 + $0x10c] sm:$0xf]
        %v6690 = vld [vmem:[%s6621 + $0x110] sm:$0xf]
        %v6691 = vld [vmem:[%s6621 + $0x114] sm:$0xf]
        %v6692 = vld [vmem:[%s6621 + $0x118] sm:$0xf]
        %v6693 = vld [vmem:[%s6621 + $0x11c] sm:$0xf]
        %v6694 = vld [vmem:[%s6621 + $0x120] sm:$0xf]
        %v6695 = vld [vmem:[%s6621 + $0x124] sm:$0xf]
        %v6696 = vld [vmem:[%s6621 + $0x128] sm:$0xf]
        %v6697 = vld [vmem:[%s6621 + $0x12c] sm:$0xf]
        %v6698 = vld [vmem:[%s6621 + $0x130] sm:$0xf]
        %v6699 = vld [vmem:[%s6621 + $0x134] sm:$0xf]
        %v6700 = vld [vmem:[%s6621 + $0x138] sm:$0xf]
        %v6701 = vld [vmem:[%s6621 + $0x13c] sm:$0xf]
        %v6702 = vld [vmem:[%s6621 + $0x140] sm:$0xf]
        %v6703 = vld [vmem:[%s6621 + $0x144] sm:$0xf]
        %v6704 = vld [vmem:[%s6621 + $0x148] sm:$0xf]
        %v6705 = vld [vmem:[%s6621 + $0x14c] sm:$0xf]
        %v6706 = vld [vmem:[%s6621 + $0x150] sm:$0xf]
        %v6707 = vld [vmem:[%s6621 + $0x154] sm:$0xf]
        %v6708 = vld [vmem:[%s6621 + $0x158] sm:$0xf]
        %v6709 = vld [vmem:[%s6621 + $0x15c] sm:$0xf]
        %v6710 = vld [vmem:[%s6621 + $0x160] sm:$0xf]
        %v6711 = vld [vmem:[%s6621 + $0x164] sm:$0xf]
        %v6712 = vld [vmem:[%s6621 + $0x168] sm:$0xf]
        %v6713 = vld [vmem:[%s6621 + $0x16c] sm:$0xf]
        %v6714 = vld [vmem:[%s6621 + $0x170] sm:$0xf]
        %v6715 = vld [vmem:[%s6621 + $0x174] sm:$0xf]
        %v6716 = vld [vmem:[%s6621 + $0x178] sm:$0xf]
        %v6717 = vld [vmem:[%s6621 + $0x17c] sm:$0xf]
        %v6718 = vld [vmem:[%s6621 + $0x180] sm:$0xf]
        %v6719 = vld [vmem:[%s6621 + $0x184] sm:$0xf]
        %v6720 = vld [vmem:[%s6621 + $0x188] sm:$0xf]
        %v6721 = vld [vmem:[%s6621 + $0x18c] sm:$0xf]
        %v6722 = vld [vmem:[%s6621 + $0x190] sm:$0xf]
        %v6723 = vld [vmem:[%s6621 + $0x194] sm:$0xf]
        %v6724 = vld [vmem:[%s6621 + $0x198] sm:$0xf]
        %v6725 = vld [vmem:[%s6621 + $0x19c] sm:$0xf]
        %v6726 = vld [vmem:[%s6621 + $0x1a0] sm:$0xf]
        %v6727 = vld [vmem:[%s6621 + $0x1a4] sm:$0xf]
        %v6728 = vld [vmem:[%s6621 + $0x1a8] sm:$0xf]
        %v6729 = vld [vmem:[%s6621 + $0x1ac] sm:$0xf]
        %v6730 = vld [vmem:[%s6621 + $0x1b0] sm:$0xf]
        %v6731 = vld [vmem:[%s6621 + $0x1b4] sm:$0xf]
        %v6732 = vld [vmem:[%s6621 + $0x1b8] sm:$0xf]
        %v6733 = vld [vmem:[%s6621 + $0x1bc] sm:$0xf]
        %v6734 = vld [vmem:[%s6621 + $0x1c0] sm:$0xf]
        %v6735 = vld [vmem:[%s6621 + $0x1c4] sm:$0xf]
        %v6736 = vld [vmem:[%s6621 + $0x1c8] sm:$0xf]
        %v6737 = vld [vmem:[%s6621 + $0x1cc] sm:$0xf]
        %v6738 = vld [vmem:[%s6621 + $0x1d0] sm:$0xf]
        %v6739 = vld [vmem:[%s6621 + $0x1d4] sm:$0xf]
        %v6740 = vld [vmem:[%s6621 + $0x1d8] sm:$0xf]
        %v6741 = vld [vmem:[%s6621 + $0x1dc] sm:$0xf]
        %v6742 = vld [vmem:[%s6621 + $0x1e0] sm:$0xf]
        %v6743 = vld [vmem:[%s6621 + $0x1e4] sm:$0xf]
        %v6744 = vld [vmem:[%s6621 + $0x1e8] sm:$0xf]
        %v6745 = vld [vmem:[%s6621 + $0x1ec] sm:$0xf]
        %v6746 = vld [vmem:[%s6621 + $0x1f0] sm:$0xf]
        %v6747 = vld [vmem:[%s6621 + $0x1f4] sm:$0xf]
        %v6748 = vld [vmem:[%s6621 + $0x1f8] sm:$0xf]
        %v6749 = vld [vmem:[%s6621 + $0x1fc] sm:$0xf]
        %v6750 = vld [vmem:[%s6621 + $0x200] sm:$0xf]
        %v6751 = vld [vmem:[%s6621 + $0x204] sm:$0xf]
        %v6752 = vld [vmem:[%s6621 + $0x208] sm:$0xf]
        %v6753 = vld [vmem:[%s6621 + $0x20c] sm:$0xf]
        %v6754 = vld [vmem:[%s6621 + $0x210] sm:$0xf]
        %v6755 = vld [vmem:[%s6621 + $0x214] sm:$0xf]
        %v6756 = vld [vmem:[%s6621 + $0x218] sm:$0xf]
        %v6757 = vld [vmem:[%s6621 + $0x21c] sm:$0xf]
        %v6758 = vld [vmem:[%s6621 + $0x220] sm:$0xf]
        %v6759 = vld [vmem:[%s6621 + $0x224] sm:$0xf]
        %v6760 = vld [vmem:[%s6621 + $0x228] sm:$0xf]
        %v6761 = vld [vmem:[%s6621 + $0x22c] sm:$0xf]
        %v6762 = vld [vmem:[%s6621 + $0x230] sm:$0xf]
        %v6763 = vld [vmem:[%s6621 + $0x234] sm:$0xf]
        %v6764 = vld [vmem:[%s6621 + $0x238] sm:$0xf]
        %v6765 = vld [vmem:[%s6621 + $0x23c] sm:$0xf]
        %v6766 = vld [vmem:[%s6621 + $0x240] sm:$0xf]
        %v6767 = vld [vmem:[%s6621 + $0x244] sm:$0xf]
        %v6768 = vld [vmem:[%s6621 + $0x248] sm:$0xf]
        %v6769 = vld [vmem:[%s6621 + $0x24c] sm:$0xf]
        %v6770 = vld [vmem:[%s6621 + $0x250] sm:$0xf]
        %v6771 = vld [vmem:[%s6621 + $0x254] sm:$0xf]
        %v6772 = vld [vmem:[%s6621 + $0x258] sm:$0xf]
        %v6773 = vld [vmem:[%s6621 + $0x25c] sm:$0xf]
        %v6774 = vld [vmem:[%s6621 + $0x260] sm:$0xf]
        %v6775 = vld [vmem:[%s6621 + $0x264] sm:$0xf]
        %v6776 = vld [vmem:[%s6621 + $0x268] sm:$0xf]
        %v6777 = vld [vmem:[%s6621 + $0x26c] sm:$0xf]
        %v6778 = vld [vmem:[%s6621 + $0x270] sm:$0xf]
        %v6779 = vld [vmem:[%s6621 + $0x274] sm:$0xf]
        %v6780 = vld [vmem:[%s6621 + $0x278] sm:$0xf]
        %v6781 = vld [vmem:[%s6621 + $0x27c] sm:$0xf]
        %v6782 = vld [vmem:[%s6621 + $0x280] sm:$0xf]
        %v6783 = vld [vmem:[%s6621 + $0x284] sm:$0xf]
        %v6784 = vld [vmem:[%s6621 + $0x288] sm:$0xf]
        %v6785 = vld [vmem:[%s6621 + $0x28c] sm:$0xf]
        %v6786 = vld [vmem:[%s6621 + $0x290] sm:$0xf]
        %v6787 = vld [vmem:[%s6621 + $0x294] sm:$0xf]
        %v6788 = vld [vmem:[%s6621 + $0x298] sm:$0xf]
        %v6789 = vld [vmem:[%s6621 + $0x29c] sm:$0xf]
        %v6790 = vld [vmem:[%s6621 + $0x2a0] sm:$0xf]
        %v6791 = vld [vmem:[%s6621 + $0x2a4] sm:$0xf]
        %v6792 = vld [vmem:[%s6621 + $0x2a8] sm:$0xf]
        %v6793 = vld [vmem:[%s6621 + $0x2ac] sm:$0xf]
        %v6794 = vld [vmem:[%s6621 + $0x2b0] sm:$0xf]
        %v6795 = vld [vmem:[%s6621 + $0x2b4] sm:$0xf]
        %v6796 = vld [vmem:[%s6621 + $0x2b8] sm:$0xf]
        %v6797 = vld [vmem:[%s6621 + $0x2bc] sm:$0xf]
        %v6798 = vrot.slane %v5024, 1
        %v6799 = vrot.slane %v5027, 1
        %v6800 = vrot.slane %v5030, 1
        %v6801 = vrot.slane %v5033, 1
        %v6802 = vrot.slane %v5036, 1
        %v6803 = vrot.slane %v5039, 1
        %v6804 = vrot.slane %v5042, 1
        %v6805 = vrot.slane %v5045, 1
        %v6806 = vrot.slane %v5048, 1
        %v6807 = vrot.slane %v5051, 1
        %v6808 = vrot.slane %v5054, 1
        %v6996 = vunpack.c.l.b16 %v6622
        %v6997 = vunpack.c.l.b16 %v6623
        %v6998 = vunpack.c.l.b16 %v6624
        %v6999 = vunpack.c.l.b16 %v6625
        %v7000 = vunpack.c.l.b16 %v6626
        %v7001 = vunpack.c.l.b16 %v6627
        %v7002 = vunpack.c.l.b16 %v6628
        %v7003 = vunpack.c.l.b16 %v6629
        %v7004 = vunpack.c.l.b16 %v6630
        %v7005 = vunpack.c.l.b16 %v6631
        %v7006 = vunpack.c.l.b16 %v6632
        %v7007 = vunpack.c.l.b16 %v6633
        %v7008 = vunpack.c.l.b16 %v6634
        %v7009 = vunpack.c.l.b16 %v6635
        %v7010 = vunpack.c.l.b16 %v6636
        %v7011 = vunpack.c.l.b16 %v6637
        %v7012 = vunpack.c.l.b16 %v6638
        %v7013 = vunpack.c.l.b16 %v6639
        %v7014 = vunpack.c.l.b16 %v6640
        %v7015 = vunpack.c.l.b16 %v6641
        %v7016 = vunpack.c.l.b16 %v6642
        %v7017 = vunpack.c.l.b16 %v6643
        %v7018 = vunpack.c.l.b16 %v6644
        %v7019 = vunpack.c.l.b16 %v6645
        %v7020 = vunpack.c.l.b16 %v6646
        %v7021 = vunpack.c.l.b16 %v6647
        %v7022 = vunpack.c.l.b16 %v6648
        %v7023 = vunpack.c.l.b16 %v6649
        %v7024 = vunpack.c.l.b16 %v6650
        %v7025 = vunpack.c.l.b16 %v6651
        %v7026 = vunpack.c.l.b16 %v6652
        %v7027 = vunpack.c.l.b16 %v6653
        %v7028 = vunpack.c.l.b16 %v6654
        %v7029 = vunpack.c.l.b16 %v6655
        %v7030 = vunpack.c.l.b16 %v6656
        %v7031 = vunpack.c.l.b16 %v6657
        %v7032 = vunpack.c.l.b16 %v6658
        %v7033 = vunpack.c.l.b16 %v6659
        %v7034 = vunpack.c.l.b16 %v6660
        %v7035 = vunpack.c.l.b16 %v6661
        %v7036 = vunpack.c.l.b16 %v6662
        %v7037 = vunpack.c.l.b16 %v6663
        %v7038 = vunpack.c.l.b16 %v6664
        %v7039 = vunpack.c.l.b16 %v6665
        %v7040 = vunpack.c.l.b16 %v6666
        %v7041 = vunpack.c.l.b16 %v6667
        %v7042 = vunpack.c.l.b16 %v6668
        %v7043 = vunpack.c.l.b16 %v6669
        %v7044 = vunpack.c.l.b16 %v6670
        %v7045 = vunpack.c.l.b16 %v6671
        %v7046 = vunpack.c.l.b16 %v6672
        %v7047 = vunpack.c.l.b16 %v6673
        %v7048 = vunpack.c.l.b16 %v6674
        %v7049 = vunpack.c.l.b16 %v6675
        %v7050 = vunpack.c.l.b16 %v6676
        %v7051 = vunpack.c.l.b16 %v6677
        %v7052 = vunpack.c.l.b16 %v6678
        %v7053 = vunpack.c.l.b16 %v6679
        %v7054 = vunpack.c.l.b16 %v6680
        %v7055 = vunpack.c.l.b16 %v6681
        %v7056 = vunpack.c.l.b16 %v6682
        %v7057 = vunpack.c.l.b16 %v6683
        %v7058 = vunpack.c.l.b16 %v6684
        %v7059 = vunpack.c.l.b16 %v6685
        %v7060 = vunpack.c.l.b16 %v6686
        %v7061 = vunpack.c.l.b16 %v6687
        %v7062 = vunpack.c.l.b16 %v6688
        %v7063 = vunpack.c.l.b16 %v6689
        %v7064 = vunpack.c.l.b16 %v6690
        %v7065 = vunpack.c.l.b16 %v6691
        %v7066 = vunpack.c.l.b16 %v6692
        %v7067 = vunpack.c.l.b16 %v6693
        %v7068 = vunpack.c.l.b16 %v6694
        %v7069 = vunpack.c.l.b16 %v6695
        %v7070 = vunpack.c.l.b16 %v6696
        %v7071 = vunpack.c.l.b16 %v6697
        %v7072 = vunpack.c.l.b16 %v6698
        %v7073 = vunpack.c.l.b16 %v6699
        %v7074 = vunpack.c.l.b16 %v6700
        %v7075 = vunpack.c.l.b16 %v6701
        %v7076 = vunpack.c.l.b16 %v6702
        %v7077 = vunpack.c.l.b16 %v6703
        %v7078 = vunpack.c.l.b16 %v6704
        %v7079 = vunpack.c.l.b16 %v6705
        %v7080 = vunpack.c.l.b16 %v6706
        %v7081 = vunpack.c.l.b16 %v6707
        %v7082 = vunpack.c.l.b16 %v6708
        %v7083 = vunpack.c.l.b16 %v6709
        %v7084 = vunpack.c.l.b16 %v6710
        %v7085 = vunpack.c.l.b16 %v6711
        %v7086 = vunpack.c.l.b16 %v6712
        %v7087 = vunpack.c.l.b16 %v6713
        %v7088 = vunpack.c.l.b16 %v6714
        %v7089 = vunpack.c.l.b16 %v6715
        %v7090 = vunpack.c.l.b16 %v6716
        %v7091 = vunpack.c.l.b16 %v6717
        %v7092 = vunpack.c.l.b16 %v6718
        %v7093 = vunpack.c.l.b16 %v6719
        %v7094 = vunpack.c.l.b16 %v6720
        %v7095 = vunpack.c.l.b16 %v6721
        %v7096 = vunpack.c.l.b16 %v6722
        %v7097 = vunpack.c.l.b16 %v6723
        %v7098 = vunpack.c.l.b16 %v6724
        %v7099 = vunpack.c.l.b16 %v6725
        %v7100 = vunpack.c.l.b16 %v6726
        %v7101 = vunpack.c.l.b16 %v6727
        %v7102 = vunpack.c.l.b16 %v6728
        %v7103 = vunpack.c.l.b16 %v6729
        %v7104 = vunpack.c.l.b16 %v6730
        %v7105 = vunpack.c.l.b16 %v6731
        %v7106 = vunpack.c.l.b16 %v6732
        %v7107 = vunpack.c.l.b16 %v6733
        %v7108 = vunpack.c.l.b16 %v6734
        %v7109 = vunpack.c.l.b16 %v6735
        %v7110 = vunpack.c.l.b16 %v6736
        %v7111 = vunpack.c.l.b16 %v6737
        %v7112 = vunpack.c.l.b16 %v6738
        %v7113 = vunpack.c.l.b16 %v6739
        %v7114 = vunpack.c.l.b16 %v6740
        %v7115 = vunpack.c.l.b16 %v6741
        %v7116 = vunpack.c.l.b16 %v6742
        %v7117 = vunpack.c.l.b16 %v6743
        %v7118 = vunpack.c.l.b16 %v6744
        %v7119 = vunpack.c.l.b16 %v6745
        %v7120 = vunpack.c.l.b16 %v6746
        %v7121 = vunpack.c.l.b16 %v6747
        %v7122 = vunpack.c.l.b16 %v6748
        %v7123 = vunpack.c.l.b16 %v6749
        %v7124 = vunpack.c.l.b16 %v6750
        %v7125 = vunpack.c.l.b16 %v6751
        %v7126 = vunpack.c.l.b16 %v6752
        %v7127 = vunpack.c.l.b16 %v6753
        %v7128 = vunpack.c.l.b16 %v6754
        %v7129 = vunpack.c.l.b16 %v6755
        %v7130 = vunpack.c.l.b16 %v6756
        %v7131 = vunpack.c.l.b16 %v6757
        %v7132 = vunpack.c.l.b16 %v6758
        %v7133 = vunpack.c.l.b16 %v6759
        %v7134 = vunpack.c.l.b16 %v6760
        %v7135 = vunpack.c.l.b16 %v6761
        %v7136 = vunpack.c.l.b16 %v6762
        %v7137 = vunpack.c.l.b16 %v6763
        %v7138 = vunpack.c.l.b16 %v6764
        %v7139 = vunpack.c.l.b16 %v6765
        %v7140 = vunpack.c.l.b16 %v6766
        %v7141 = vunpack.c.l.b16 %v6767
        %v7142 = vunpack.c.l.b16 %v6768
        %v7143 = vunpack.c.l.b16 %v6769
        %v7144 = vunpack.c.l.b16 %v6770
        %v7145 = vunpack.c.l.b16 %v6771
        %v7146 = vunpack.c.l.b16 %v6772
        %v7147 = vunpack.c.l.b16 %v6773
        %v7148 = vunpack.c.l.b16 %v6774
        %v7149 = vunpack.c.l.b16 %v6775
        %v7150 = vunpack.c.l.b16 %v6776
        %v7151 = vunpack.c.l.b16 %v6777
        %v7152 = vunpack.c.l.b16 %v6778
        %v7153 = vunpack.c.l.b16 %v6779
        %v7154 = vunpack.c.l.b16 %v6780
        %v7155 = vunpack.c.l.b16 %v6781
        %v7156 = vunpack.c.l.b16 %v6782
        %v7157 = vunpack.c.l.b16 %v6783
        %v7158 = vunpack.c.l.b16 %v6784
        %v7159 = vunpack.c.l.b16 %v6785
        %v7160 = vunpack.c.l.b16 %v6786
        %v7161 = vunpack.c.l.b16 %v6787
        %v7162 = vunpack.c.l.b16 %v6788
        %v7163 = vunpack.c.l.b16 %v6789
        %v7164 = vunpack.c.l.b16 %v6790
        %v7165 = vunpack.c.l.b16 %v6791
        %v7166 = vunpack.c.l.b16 %v6792
        %v7167 = vunpack.c.l.b16 %v6793
        %v7168 = vunpack.c.l.b16 %v6794
        %v7169 = vunpack.c.l.b16 %v6795
        %v7170 = vunpack.c.l.b16 %v6796
        %v7171 = vunpack.c.l.b16 %v6797
        %v7172 = vpack.c.b16 %v6997, %v6996
        %v7173 = vpack.c.b16 %v6999, %v6998
        %v7174 = vpack.c.b16 %v7001, %v7000
        %v7175 = vpack.c.b16 %v7003, %v7002
        %v7176 = vpack.c.b16 %v7005, %v7004
        %v7177 = vpack.c.b16 %v7007, %v7006
        %v7178 = vpack.c.b16 %v7009, %v7008
        %v7179 = vpack.c.b16 %v7011, %v7010
        %v7180 = vpack.c.b16 %v7013, %v7012
        %v7181 = vpack.c.b16 %v7015, %v7014
        %v7182 = vpack.c.b16 %v7017, %v7016
        %v7183 = vpack.c.b16 %v7019, %v7018
        %v7184 = vpack.c.b16 %v7021, %v7020
        %v7185 = vpack.c.b16 %v7023, %v7022
        %v7186 = vpack.c.b16 %v7025, %v7024
        %v7187 = vpack.c.b16 %v7027, %v7026
        %v7188 = vpack.c.b16 %v7029, %v7028
        %v7189 = vpack.c.b16 %v7031, %v7030
        %v7190 = vpack.c.b16 %v7033, %v7032
        %v7191 = vpack.c.b16 %v7035, %v7034
        %v7192 = vpack.c.b16 %v7037, %v7036
        %v7193 = vpack.c.b16 %v7039, %v7038
        %v7194 = vpack.c.b16 %v7041, %v7040
        %v7195 = vpack.c.b16 %v7043, %v7042
        %v7196 = vpack.c.b16 %v7045, %v7044
        %v7197 = vpack.c.b16 %v7047, %v7046
        %v7198 = vpack.c.b16 %v7049, %v7048
        %v7199 = vpack.c.b16 %v7051, %v7050
        %v7200 = vpack.c.b16 %v7053, %v7052
        %v7201 = vpack.c.b16 %v7055, %v7054
        %v7202 = vpack.c.b16 %v7057, %v7056
        %v7203 = vpack.c.b16 %v7059, %v7058
        %v7204 = vpack.c.b16 %v7061, %v7060
        %v7205 = vpack.c.b16 %v7063, %v7062
        %v7206 = vpack.c.b16 %v7065, %v7064
        %v7207 = vpack.c.b16 %v7067, %v7066
        %v7208 = vpack.c.b16 %v7069, %v7068
        %v7209 = vpack.c.b16 %v7071, %v7070
        %v7210 = vpack.c.b16 %v7073, %v7072
        %v7211 = vpack.c.b16 %v7075, %v7074
        %v7212 = vpack.c.b16 %v7077, %v7076
        %v7213 = vpack.c.b16 %v7079, %v7078
        %v7214 = vpack.c.b16 %v7081, %v7080
        %v7215 = vpack.c.b16 %v7083, %v7082
        %v7216 = vpack.c.b16 %v7085, %v7084
        %v7217 = vpack.c.b16 %v7087, %v7086
        %v7218 = vpack.c.b16 %v7089, %v7088
        %v7219 = vpack.c.b16 %v7091, %v7090
        %v7220 = vpack.c.b16 %v7093, %v7092
        %v7221 = vpack.c.b16 %v7095, %v7094
        %v7222 = vpack.c.b16 %v7097, %v7096
        %v7223 = vpack.c.b16 %v7099, %v7098
        %v7224 = vpack.c.b16 %v7101, %v7100
        %v7225 = vpack.c.b16 %v7103, %v7102
        %v7226 = vpack.c.b16 %v7105, %v7104
        %v7227 = vpack.c.b16 %v7107, %v7106
        %v7228 = vpack.c.b16 %v7109, %v7108
        %v7229 = vpack.c.b16 %v7111, %v7110
        %v7230 = vpack.c.b16 %v7113, %v7112
        %v7231 = vpack.c.b16 %v7115, %v7114
        %v7232 = vpack.c.b16 %v7117, %v7116
        %v7233 = vpack.c.b16 %v7119, %v7118
        %v7234 = vpack.c.b16 %v7121, %v7120
        %v7235 = vpack.c.b16 %v7123, %v7122
        %v7236 = vpack.c.b16 %v7125, %v7124
        %v7237 = vpack.c.b16 %v7127, %v7126
        %v7238 = vpack.c.b16 %v7129, %v7128
        %v7239 = vpack.c.b16 %v7131, %v7130
        %v7240 = vpack.c.b16 %v7133, %v7132
        %v7241 = vpack.c.b16 %v7135, %v7134
        %v7242 = vpack.c.b16 %v7137, %v7136
        %v7243 = vpack.c.b16 %v7139, %v7138
        %v7244 = vpack.c.b16 %v7141, %v7140
        %v7245 = vpack.c.b16 %v7143, %v7142
        %v7246 = vpack.c.b16 %v7145, %v7144
        %v7247 = vpack.c.b16 %v7147, %v7146
        %v7248 = vpack.c.b16 %v7149, %v7148
        %v7249 = vpack.c.b16 %v7151, %v7150
        %v7250 = vpack.c.b16 %v7153, %v7152
        %v7251 = vpack.c.b16 %v7155, %v7154
        %v7252 = vpack.c.b16 %v7157, %v7156
        %v7253 = vpack.c.b16 %v7159, %v7158
        %v7254 = vpack.c.b16 %v7161, %v7160
        %v7255 = vpack.c.b16 %v7163, %v7162
        %v7256 = vpack.c.b16 %v7165, %v7164
        %v7257 = vpack.c.b16 %v7167, %v7166
        %v7258 = vpack.c.b16 %v7169, %v7168
        %v7259 = vpack.c.b16 %v7171, %v7170
        %7348 = vmatpush.bf16.msra.mxu0 %v7179
        %7349 = vmatpush.bf16.msra.mxu0 %v7178
        %7350 = vmatpush.bf16.msra.mxu0 %v7177
        %7351 = vmatpush.bf16.msra.mxu0 %v7176
        %7352 = vmatpush.bf16.msra.mxu0 %v7175
        %7353 = vmatpush.bf16.msra.mxu0 %v7174
        %7354 = vmatpush.bf16.msra.mxu0 %v7173
        %7355 = vmatpush.bf16.msra.mxu0 %v7172
        %7356 = vmatmul.bf16.gmra.mxu0 %v6798
        %v7357 = vpop.f32.mrf.mxu0
        %v7358 = vadd.f32 0.0, %v7357
        %v7359 = vpop.f32.mrf.mxu0
        %7360 = vdwg.mxu0
        %7361 = vmatpush.bf16.msra.mxu0 %v7187
        %7362 = vmatpush.bf16.msra.mxu0 %v7186
        %7363 = vmatpush.bf16.msra.mxu0 %v7185
        %7364 = vmatpush.bf16.msra.mxu0 %v7184
        %7365 = vmatpush.bf16.msra.mxu0 %v7183
        %7366 = vmatpush.bf16.msra.mxu0 %v7182
        %7367 = vmatpush.bf16.msra.mxu0 %v7181
        %7368 = vmatpush.bf16.msra.mxu0 %v7180
        %7369 = vmatmul.bf16.gmra.mxu0 %v6799
        %v7370 = vpop.f32.mrf.mxu0
        %v7371 = vadd.f32 %v7358, %v7370
        %v7372 = vpop.f32.mrf.mxu0
        %7373 = vdwg.mxu0
        %7374 = vmatpush.bf16.msra.mxu0 %v7195
        %7375 = vmatpush.bf16.msra.mxu0 %v7194
        %7376 = vmatpush.bf16.msra.mxu0 %v7193
        %7377 = vmatpush.bf16.msra.mxu0 %v7192
        %7378 = vmatpush.bf16.msra.mxu0 %v7191
        %7379 = vmatpush.bf16.msra.mxu0 %v7190
        %7380 = vmatpush.bf16.msra.mxu0 %v7189
        %7381 = vmatpush.bf16.msra.mxu0 %v7188
        %7382 = vmatmul.bf16.gmra.mxu0 %v6800
        %v7383 = vpop.f32.mrf.mxu0
        %v7384 = vadd.f32 %v7371, %v7383
        %v7385 = vpop.f32.mrf.mxu0
        %7386 = vdwg.mxu0
        %7387 = vmatpush.bf16.msra.mxu0 %v7203
        %7388 = vmatpush.bf16.msra.mxu0 %v7202
        %7389 = vmatpush.bf16.msra.mxu0 %v7201
        %7390 = vmatpush.bf16.msra.mxu0 %v7200
        %7391 = vmatpush.bf16.msra.mxu0 %v7199
        %7392 = vmatpush.bf16.msra.mxu0 %v7198
        %7393 = vmatpush.bf16.msra.mxu0 %v7197
        %7394 = vmatpush.bf16.msra.mxu0 %v7196
        %7395 = vmatmul.bf16.gmra.mxu0 %v6801
        %v7396 = vpop.f32.mrf.mxu0
        %v7397 = vadd.f32 %v7384, %v7396
        %v7398 = vpop.f32.mrf.mxu0
        %7399 = vdwg.mxu0
        %7400 = vmatpush.bf16.msra.mxu0 %v7211
        %7401 = vmatpush.bf16.msra.mxu0 %v7210
        %7402 = vmatpush.bf16.msra.mxu0 %v7209
        %7403 = vmatpush.bf16.msra.mxu0 %v7208
        %7404 = vmatpush.bf16.msra.mxu0 %v7207
        %7405 = vmatpush.bf16.msra.mxu0 %v7206
        %7406 = vmatpush.bf16.msra.mxu0 %v7205
        %7407 = vmatpush.bf16.msra.mxu0 %v7204
        %7408 = vmatmul.bf16.gmra.mxu0 %v6802
        %v7409 = vpop.f32.mrf.mxu0
        %v7410 = vadd.f32 %v7397, %v7409
        %v7411 = vpop.f32.mrf.mxu0
        %7412 = vdwg.mxu0
        %7413 = vmatpush.bf16.msra.mxu0 %v7219
        %7414 = vmatpush.bf16.msra.mxu0 %v7218
        %7415 = vmatpush.bf16.msra.mxu0 %v7217
        %7416 = vmatpush.bf16.msra.mxu0 %v7216
        %7417 = vmatpush.bf16.msra.mxu0 %v7215
        %7418 = vmatpush.bf16.msra.mxu0 %v7214
        %7419 = vmatpush.bf16.msra.mxu0 %v7213
        %7420 = vmatpush.bf16.msra.mxu0 %v7212
        %7421 = vmatmul.bf16.gmra.mxu0 %v6803
        %v7422 = vpop.f32.mrf.mxu0
        %v7423 = vadd.f32 %v7410, %v7422
        %v7424 = vpop.f32.mrf.mxu0
        %7425 = vdwg.mxu0
        %7426 = vmatpush.bf16.msra.mxu0 %v7227
        %7427 = vmatpush.bf16.msra.mxu0 %v7226
        %7428 = vmatpush.bf16.msra.mxu0 %v7225
        %7429 = vmatpush.bf16.msra.mxu0 %v7224
        %7430 = vmatpush.bf16.msra.mxu0 %v7223
        %7431 = vmatpush.bf16.msra.mxu0 %v7222
        %7432 = vmatpush.bf16.msra.mxu0 %v7221
        %7433 = vmatpush.bf16.msra.mxu0 %v7220
        %7434 = vmatmul.bf16.gmra.mxu0 %v6804
        %v7435 = vpop.f32.mrf.mxu0
        %v7436 = vadd.f32 %v7423, %v7435
        %v7437 = vpop.f32.mrf.mxu0
        %7438 = vdwg.mxu0
        %7439 = vmatpush.bf16.msra.mxu0 %v7235
        %7440 = vmatpush.bf16.msra.mxu0 %v7234
        %7441 = vmatpush.bf16.msra.mxu0 %v7233
        %7442 = vmatpush.bf16.msra.mxu0 %v7232
        %7443 = vmatpush.bf16.msra.mxu0 %v7231
        %7444 = vmatpush.bf16.msra.mxu0 %v7230
        %7445 = vmatpush.bf16.msra.mxu0 %v7229
        %7446 = vmatpush.bf16.msra.mxu0 %v7228
        %7447 = vmatmul.bf16.gmra.mxu0 %v6805
        %v7448 = vpop.f32.mrf.mxu0
        %v7449 = vadd.f32 %v7436, %v7448
        %v7450 = vpop.f32.mrf.mxu0
        %7451 = vdwg.mxu0
        %7452 = vmatpush.bf16.msra.mxu0 %v7243
        %7453 = vmatpush.bf16.msra.mxu0 %v7242
        %7454 = vmatpush.bf16.msra.mxu0 %v7241
        %7455 = vmatpush.bf16.msra.mxu0 %v7240
        %7456 = vmatpush.bf16.msra.mxu0 %v7239
        %7457 = vmatpush.bf16.msra.mxu0 %v7238
        %7458 = vmatpush.bf16.msra.mxu0 %v7237
        %7459 = vmatpush.bf16.msra.mxu0 %v7236
        %7460 = vmatmul.bf16.gmra.mxu0 %v6806
        %v7461 = vpop.f32.mrf.mxu0
        %v7462 = vadd.f32 %v7449, %v7461
        %v7463 = vpop.f32.mrf.mxu0
        %7464 = vdwg.mxu0
        %7465 = vmatpush.bf16.msra.mxu0 %v7251
        %7466 = vmatpush.bf16.msra.mxu0 %v7250
        %7467 = vmatpush.bf16.msra.mxu0 %v7249
        %7468 = vmatpush.bf16.msra.mxu0 %v7248
        %7469 = vmatpush.bf16.msra.mxu0 %v7247
        %7470 = vmatpush.bf16.msra.mxu0 %v7246
        %7471 = vmatpush.bf16.msra.mxu0 %v7245
        %7472 = vmatpush.bf16.msra.mxu0 %v7244
        %7473 = vmatmul.bf16.gmra.mxu0 %v6807
        %v7474 = vpop.f32.mrf.mxu0
        %v7475 = vadd.f32 %v7462, %v7474
        %v7476 = vpop.f32.mrf.mxu0
        %7477 = vdwg.mxu0
        %7478 = vmatpush.bf16.msra.mxu0 %v7259
        %7479 = vmatpush.bf16.msra.mxu0 %v7258
        %7480 = vmatpush.bf16.msra.mxu0 %v7257
        %7481 = vmatpush.bf16.msra.mxu0 %v7256
        %7482 = vmatpush.bf16.msra.mxu0 %v7255
        %7483 = vmatpush.bf16.msra.mxu0 %v7254
        %7484 = vmatpush.bf16.msra.mxu0 %v7253
        %7485 = vmatpush.bf16.msra.mxu0 %v7252
        %7486 = vmatmul.bf16.gmra.mxu0 %v6808
        %v7487 = vpop.f32.mrf.mxu0
        %v7488 = vadd.f32 %v7475, %v7487
        %v7489 = vpop.f32.mrf.mxu0
        %7490 = vdwg.mxu0
        %v7491 = vadd.f32 %v6620, %v7488
        %s7492 = scalar_lea.vmem %s6, 2816
        %v7493 = vld [vmem:[%s7492] sm:$0xf]
        %v7494 = vld [vmem:[%s7492 + $0x4] sm:$0xf]
        %v7495 = vld [vmem:[%s7492 + $0x8] sm:$0xf]
        %v7496 = vld [vmem:[%s7492 + $0xc] sm:$0xf]
        %v7497 = vld [vmem:[%s7492 + $0x10] sm:$0xf]
        %v7498 = vld [vmem:[%s7492 + $0x14] sm:$0xf]
        %v7499 = vld [vmem:[%s7492 + $0x18] sm:$0xf]
        %v7500 = vld [vmem:[%s7492 + $0x1c] sm:$0xf]
        %v7501 = vld [vmem:[%s7492 + $0x20] sm:$0xf]
        %v7502 = vld [vmem:[%s7492 + $0x24] sm:$0xf]
        %v7503 = vld [vmem:[%s7492 + $0x28] sm:$0xf]
        %v7504 = vld [vmem:[%s7492 + $0x2c] sm:$0xf]
        %v7505 = vld [vmem:[%s7492 + $0x30] sm:$0xf]
        %v7506 = vld [vmem:[%s7492 + $0x34] sm:$0xf]
        %v7507 = vld [vmem:[%s7492 + $0x38] sm:$0xf]
        %v7508 = vld [vmem:[%s7492 + $0x3c] sm:$0xf]
        %v7509 = vld [vmem:[%s7492 + $0x40] sm:$0xf]
        %v7510 = vld [vmem:[%s7492 + $0x44] sm:$0xf]
        %v7511 = vld [vmem:[%s7492 + $0x48] sm:$0xf]
        %v7512 = vld [vmem:[%s7492 + $0x4c] sm:$0xf]
        %v7513 = vld [vmem:[%s7492 + $0x50] sm:$0xf]
        %v7514 = vld [vmem:[%s7492 + $0x54] sm:$0xf]
        %v7515 = vld [vmem:[%s7492 + $0x58] sm:$0xf]
        %v7516 = vld [vmem:[%s7492 + $0x5c] sm:$0xf]
        %v7517 = vld [vmem:[%s7492 + $0x60] sm:$0xf]
        %v7518 = vld [vmem:[%s7492 + $0x64] sm:$0xf]
        %v7519 = vld [vmem:[%s7492 + $0x68] sm:$0xf]
        %v7520 = vld [vmem:[%s7492 + $0x6c] sm:$0xf]
        %v7521 = vld [vmem:[%s7492 + $0x70] sm:$0xf]
        %v7522 = vld [vmem:[%s7492 + $0x74] sm:$0xf]
        %v7523 = vld [vmem:[%s7492 + $0x78] sm:$0xf]
        %v7524 = vld [vmem:[%s7492 + $0x7c] sm:$0xf]
        %v7525 = vld [vmem:[%s7492 + $0x80] sm:$0xf]
        %v7526 = vld [vmem:[%s7492 + $0x84] sm:$0xf]
        %v7527 = vld [vmem:[%s7492 + $0x88] sm:$0xf]
        %v7528 = vld [vmem:[%s7492 + $0x8c] sm:$0xf]
        %v7529 = vld [vmem:[%s7492 + $0x90] sm:$0xf]
        %v7530 = vld [vmem:[%s7492 + $0x94] sm:$0xf]
        %v7531 = vld [vmem:[%s7492 + $0x98] sm:$0xf]
        %v7532 = vld [vmem:[%s7492 + $0x9c] sm:$0xf]
        %v7533 = vld [vmem:[%s7492 + $0xa0] sm:$0xf]
        %v7534 = vld [vmem:[%s7492 + $0xa4] sm:$0xf]
        %v7535 = vld [vmem:[%s7492 + $0xa8] sm:$0xf]
        %v7536 = vld [vmem:[%s7492 + $0xac] sm:$0xf]
        %v7537 = vld [vmem:[%s7492 + $0xb0] sm:$0xf]
        %v7538 = vld [vmem:[%s7492 + $0xb4] sm:$0xf]
        %v7539 = vld [vmem:[%s7492 + $0xb8] sm:$0xf]
        %v7540 = vld [vmem:[%s7492 + $0xbc] sm:$0xf]
        %v7541 = vld [vmem:[%s7492 + $0xc0] sm:$0xf]
        %v7542 = vld [vmem:[%s7492 + $0xc4] sm:$0xf]
        %v7543 = vld [vmem:[%s7492 + $0xc8] sm:$0xf]
        %v7544 = vld [vmem:[%s7492 + $0xcc] sm:$0xf]
        %v7545 = vld [vmem:[%s7492 + $0xd0] sm:$0xf]
        %v7546 = vld [vmem:[%s7492 + $0xd4] sm:$0xf]
        %v7547 = vld [vmem:[%s7492 + $0xd8] sm:$0xf]
        %v7548 = vld [vmem:[%s7492 + $0xdc] sm:$0xf]
        %v7549 = vld [vmem:[%s7492 + $0xe0] sm:$0xf]
        %v7550 = vld [vmem:[%s7492 + $0xe4] sm:$0xf]
        %v7551 = vld [vmem:[%s7492 + $0xe8] sm:$0xf]
        %v7552 = vld [vmem:[%s7492 + $0xec] sm:$0xf]
        %v7553 = vld [vmem:[%s7492 + $0xf0] sm:$0xf]
        %v7554 = vld [vmem:[%s7492 + $0xf4] sm:$0xf]
        %v7555 = vld [vmem:[%s7492 + $0xf8] sm:$0xf]
        %v7556 = vld [vmem:[%s7492 + $0xfc] sm:$0xf]
        %v7557 = vld [vmem:[%s7492 + $0x100] sm:$0xf]
        %v7558 = vld [vmem:[%s7492 + $0x104] sm:$0xf]
        %v7559 = vld [vmem:[%s7492 + $0x108] sm:$0xf]
        %v7560 = vld [vmem:[%s7492 + $0x10c] sm:$0xf]
        %v7561 = vld [vmem:[%s7492 + $0x110] sm:$0xf]
        %v7562 = vld [vmem:[%s7492 + $0x114] sm:$0xf]
        %v7563 = vld [vmem:[%s7492 + $0x118] sm:$0xf]
        %v7564 = vld [vmem:[%s7492 + $0x11c] sm:$0xf]
        %v7565 = vld [vmem:[%s7492 + $0x120] sm:$0xf]
        %v7566 = vld [vmem:[%s7492 + $0x124] sm:$0xf]
        %v7567 = vld [vmem:[%s7492 + $0x128] sm:$0xf]
        %v7568 = vld [vmem:[%s7492 + $0x12c] sm:$0xf]
        %v7569 = vld [vmem:[%s7492 + $0x130] sm:$0xf]
        %v7570 = vld [vmem:[%s7492 + $0x134] sm:$0xf]
        %v7571 = vld [vmem:[%s7492 + $0x138] sm:$0xf]
        %v7572 = vld [vmem:[%s7492 + $0x13c] sm:$0xf]
        %v7573 = vld [vmem:[%s7492 + $0x140] sm:$0xf]
        %v7574 = vld [vmem:[%s7492 + $0x144] sm:$0xf]
        %v7575 = vld [vmem:[%s7492 + $0x148] sm:$0xf]
        %v7576 = vld [vmem:[%s7492 + $0x14c] sm:$0xf]
        %v7577 = vld [vmem:[%s7492 + $0x150] sm:$0xf]
        %v7578 = vld [vmem:[%s7492 + $0x154] sm:$0xf]
        %v7579 = vld [vmem:[%s7492 + $0x158] sm:$0xf]
        %v7580 = vld [vmem:[%s7492 + $0x15c] sm:$0xf]
        %v7581 = vld [vmem:[%s7492 + $0x160] sm:$0xf]
        %v7582 = vld [vmem:[%s7492 + $0x164] sm:$0xf]
        %v7583 = vld [vmem:[%s7492 + $0x168] sm:$0xf]
        %v7584 = vld [vmem:[%s7492 + $0x16c] sm:$0xf]
        %v7585 = vld [vmem:[%s7492 + $0x170] sm:$0xf]
        %v7586 = vld [vmem:[%s7492 + $0x174] sm:$0xf]
        %v7587 = vld [vmem:[%s7492 + $0x178] sm:$0xf]
        %v7588 = vld [vmem:[%s7492 + $0x17c] sm:$0xf]
        %v7589 = vld [vmem:[%s7492 + $0x180] sm:$0xf]
        %v7590 = vld [vmem:[%s7492 + $0x184] sm:$0xf]
        %v7591 = vld [vmem:[%s7492 + $0x188] sm:$0xf]
        %v7592 = vld [vmem:[%s7492 + $0x18c] sm:$0xf]
        %v7593 = vld [vmem:[%s7492 + $0x190] sm:$0xf]
        %v7594 = vld [vmem:[%s7492 + $0x194] sm:$0xf]
        %v7595 = vld [vmem:[%s7492 + $0x198] sm:$0xf]
        %v7596 = vld [vmem:[%s7492 + $0x19c] sm:$0xf]
        %v7597 = vld [vmem:[%s7492 + $0x1a0] sm:$0xf]
        %v7598 = vld [vmem:[%s7492 + $0x1a4] sm:$0xf]
        %v7599 = vld [vmem:[%s7492 + $0x1a8] sm:$0xf]
        %v7600 = vld [vmem:[%s7492 + $0x1ac] sm:$0xf]
        %v7601 = vld [vmem:[%s7492 + $0x1b0] sm:$0xf]
        %v7602 = vld [vmem:[%s7492 + $0x1b4] sm:$0xf]
        %v7603 = vld [vmem:[%s7492 + $0x1b8] sm:$0xf]
        %v7604 = vld [vmem:[%s7492 + $0x1bc] sm:$0xf]
        %v7605 = vld [vmem:[%s7492 + $0x1c0] sm:$0xf]
        %v7606 = vld [vmem:[%s7492 + $0x1c4] sm:$0xf]
        %v7607 = vld [vmem:[%s7492 + $0x1c8] sm:$0xf]
        %v7608 = vld [vmem:[%s7492 + $0x1cc] sm:$0xf]
        %v7609 = vld [vmem:[%s7492 + $0x1d0] sm:$0xf]
        %v7610 = vld [vmem:[%s7492 + $0x1d4] sm:$0xf]
        %v7611 = vld [vmem:[%s7492 + $0x1d8] sm:$0xf]
        %v7612 = vld [vmem:[%s7492 + $0x1dc] sm:$0xf]
        %v7613 = vld [vmem:[%s7492 + $0x1e0] sm:$0xf]
        %v7614 = vld [vmem:[%s7492 + $0x1e4] sm:$0xf]
        %v7615 = vld [vmem:[%s7492 + $0x1e8] sm:$0xf]
        %v7616 = vld [vmem:[%s7492 + $0x1ec] sm:$0xf]
        %v7617 = vld [vmem:[%s7492 + $0x1f0] sm:$0xf]
        %v7618 = vld [vmem:[%s7492 + $0x1f4] sm:$0xf]
        %v7619 = vld [vmem:[%s7492 + $0x1f8] sm:$0xf]
        %v7620 = vld [vmem:[%s7492 + $0x1fc] sm:$0xf]
        %v7621 = vld [vmem:[%s7492 + $0x200] sm:$0xf]
        %v7622 = vld [vmem:[%s7492 + $0x204] sm:$0xf]
        %v7623 = vld [vmem:[%s7492 + $0x208] sm:$0xf]
        %v7624 = vld [vmem:[%s7492 + $0x20c] sm:$0xf]
        %v7625 = vld [vmem:[%s7492 + $0x210] sm:$0xf]
        %v7626 = vld [vmem:[%s7492 + $0x214] sm:$0xf]
        %v7627 = vld [vmem:[%s7492 + $0x218] sm:$0xf]
        %v7628 = vld [vmem:[%s7492 + $0x21c] sm:$0xf]
        %v7629 = vld [vmem:[%s7492 + $0x220] sm:$0xf]
        %v7630 = vld [vmem:[%s7492 + $0x224] sm:$0xf]
        %v7631 = vld [vmem:[%s7492 + $0x228] sm:$0xf]
        %v7632 = vld [vmem:[%s7492 + $0x22c] sm:$0xf]
        %v7633 = vld [vmem:[%s7492 + $0x230] sm:$0xf]
        %v7634 = vld [vmem:[%s7492 + $0x234] sm:$0xf]
        %v7635 = vld [vmem:[%s7492 + $0x238] sm:$0xf]
        %v7636 = vld [vmem:[%s7492 + $0x23c] sm:$0xf]
        %v7637 = vld [vmem:[%s7492 + $0x240] sm:$0xf]
        %v7638 = vld [vmem:[%s7492 + $0x244] sm:$0xf]
        %v7639 = vld [vmem:[%s7492 + $0x248] sm:$0xf]
        %v7640 = vld [vmem:[%s7492 + $0x24c] sm:$0xf]
        %v7641 = vld [vmem:[%s7492 + $0x250] sm:$0xf]
        %v7642 = vld [vmem:[%s7492 + $0x254] sm:$0xf]
        %v7643 = vld [vmem:[%s7492 + $0x258] sm:$0xf]
        %v7644 = vld [vmem:[%s7492 + $0x25c] sm:$0xf]
        %v7645 = vld [vmem:[%s7492 + $0x260] sm:$0xf]
        %v7646 = vld [vmem:[%s7492 + $0x264] sm:$0xf]
        %v7647 = vld [vmem:[%s7492 + $0x268] sm:$0xf]
        %v7648 = vld [vmem:[%s7492 + $0x26c] sm:$0xf]
        %v7649 = vld [vmem:[%s7492 + $0x270] sm:$0xf]
        %v7650 = vld [vmem:[%s7492 + $0x274] sm:$0xf]
        %v7651 = vld [vmem:[%s7492 + $0x278] sm:$0xf]
        %v7652 = vld [vmem:[%s7492 + $0x27c] sm:$0xf]
        %v7653 = vld [vmem:[%s7492 + $0x280] sm:$0xf]
        %v7654 = vld [vmem:[%s7492 + $0x284] sm:$0xf]
        %v7655 = vld [vmem:[%s7492 + $0x288] sm:$0xf]
        %v7656 = vld [vmem:[%s7492 + $0x28c] sm:$0xf]
        %v7657 = vld [vmem:[%s7492 + $0x290] sm:$0xf]
        %v7658 = vld [vmem:[%s7492 + $0x294] sm:$0xf]
        %v7659 = vld [vmem:[%s7492 + $0x298] sm:$0xf]
        %v7660 = vld [vmem:[%s7492 + $0x29c] sm:$0xf]
        %v7661 = vld [vmem:[%s7492 + $0x2a0] sm:$0xf]
        %v7662 = vld [vmem:[%s7492 + $0x2a4] sm:$0xf]
        %v7663 = vld [vmem:[%s7492 + $0x2a8] sm:$0xf]
        %v7664 = vld [vmem:[%s7492 + $0x2ac] sm:$0xf]
        %v7665 = vld [vmem:[%s7492 + $0x2b0] sm:$0xf]
        %v7666 = vld [vmem:[%s7492 + $0x2b4] sm:$0xf]
        %v7667 = vld [vmem:[%s7492 + $0x2b8] sm:$0xf]
        %v7668 = vld [vmem:[%s7492 + $0x2bc] sm:$0xf]
        %v7669 = vrot.slane %v3987, 2
        %v7670 = vrot.slane %v3988, 2
        %v7671 = vrot.slane %v3989, 2
        %v7672 = vrot.slane %v3990, 2
        %v7673 = vrot.slane %v3991, 2
        %v7674 = vrot.slane %v3992, 2
        %v7675 = vrot.slane %v3993, 2
        %v7676 = vrot.slane %v3994, 2
        %v7677 = vrot.slane %v3995, 2
        %v7678 = vrot.slane %v3996, 2
        %v7679 = vrot.slane %v3997, 2
        %v7867 = vunpack.c.l.b16 %v7493
        %v7868 = vunpack.c.l.b16 %v7494
        %v7869 = vunpack.c.l.b16 %v7495
        %v7870 = vunpack.c.l.b16 %v7496
        %v7871 = vunpack.c.l.b16 %v7497
        %v7872 = vunpack.c.l.b16 %v7498
        %v7873 = vunpack.c.l.b16 %v7499
        %v7874 = vunpack.c.l.b16 %v7500
        %v7875 = vunpack.c.l.b16 %v7501
        %v7876 = vunpack.c.l.b16 %v7502
        %v7877 = vunpack.c.l.b16 %v7503
        %v7878 = vunpack.c.l.b16 %v7504
        %v7879 = vunpack.c.l.b16 %v7505
        %v7880 = vunpack.c.l.b16 %v7506
        %v7881 = vunpack.c.l.b16 %v7507
        %v7882 = vunpack.c.l.b16 %v7508
        %v7883 = vunpack.c.l.b16 %v7509
        %v7884 = vunpack.c.l.b16 %v7510
        %v7885 = vunpack.c.l.b16 %v7511
        %v7886 = vunpack.c.l.b16 %v7512
        %v7887 = vunpack.c.l.b16 %v7513
        %v7888 = vunpack.c.l.b16 %v7514
        %v7889 = vunpack.c.l.b16 %v7515
        %v7890 = vunpack.c.l.b16 %v7516
        %v7891 = vunpack.c.l.b16 %v7517
        %v7892 = vunpack.c.l.b16 %v7518
        %v7893 = vunpack.c.l.b16 %v7519
        %v7894 = vunpack.c.l.b16 %v7520
        %v7895 = vunpack.c.l.b16 %v7521
        %v7896 = vunpack.c.l.b16 %v7522
        %v7897 = vunpack.c.l.b16 %v7523
        %v7898 = vunpack.c.l.b16 %v7524
        %v7899 = vunpack.c.l.b16 %v7525
        %v7900 = vunpack.c.l.b16 %v7526
        %v7901 = vunpack.c.l.b16 %v7527
        %v7902 = vunpack.c.l.b16 %v7528
        %v7903 = vunpack.c.l.b16 %v7529
        %v7904 = vunpack.c.l.b16 %v7530
        %v7905 = vunpack.c.l.b16 %v7531
        %v7906 = vunpack.c.l.b16 %v7532
        %v7907 = vunpack.c.l.b16 %v7533
        %v7908 = vunpack.c.l.b16 %v7534
        %v7909 = vunpack.c.l.b16 %v7535
        %v7910 = vunpack.c.l.b16 %v7536
        %v7911 = vunpack.c.l.b16 %v7537
        %v7912 = vunpack.c.l.b16 %v7538
        %v7913 = vunpack.c.l.b16 %v7539
        %v7914 = vunpack.c.l.b16 %v7540
        %v7915 = vunpack.c.l.b16 %v7541
        %v7916 = vunpack.c.l.b16 %v7542
        %v7917 = vunpack.c.l.b16 %v7543
        %v7918 = vunpack.c.l.b16 %v7544
        %v7919 = vunpack.c.l.b16 %v7545
        %v7920 = vunpack.c.l.b16 %v7546
        %v7921 = vunpack.c.l.b16 %v7547
        %v7922 = vunpack.c.l.b16 %v7548
        %v7923 = vunpack.c.l.b16 %v7549
        %v7924 = vunpack.c.l.b16 %v7550
        %v7925 = vunpack.c.l.b16 %v7551
        %v7926 = vunpack.c.l.b16 %v7552
        %v7927 = vunpack.c.l.b16 %v7553
        %v7928 = vunpack.c.l.b16 %v7554
        %v7929 = vunpack.c.l.b16 %v7555
        %v7930 = vunpack.c.l.b16 %v7556
        %v7931 = vunpack.c.l.b16 %v7557
        %v7932 = vunpack.c.l.b16 %v7558
        %v7933 = vunpack.c.l.b16 %v7559
        %v7934 = vunpack.c.l.b16 %v7560
        %v7935 = vunpack.c.l.b16 %v7561
        %v7936 = vunpack.c.l.b16 %v7562
        %v7937 = vunpack.c.l.b16 %v7563
        %v7938 = vunpack.c.l.b16 %v7564
        %v7939 = vunpack.c.l.b16 %v7565
        %v7940 = vunpack.c.l.b16 %v7566
        %v7941 = vunpack.c.l.b16 %v7567
        %v7942 = vunpack.c.l.b16 %v7568
        %v7943 = vunpack.c.l.b16 %v7569
        %v7944 = vunpack.c.l.b16 %v7570
        %v7945 = vunpack.c.l.b16 %v7571
        %v7946 = vunpack.c.l.b16 %v7572
        %v7947 = vunpack.c.l.b16 %v7573
        %v7948 = vunpack.c.l.b16 %v7574
        %v7949 = vunpack.c.l.b16 %v7575
        %v7950 = vunpack.c.l.b16 %v7576
        %v7951 = vunpack.c.l.b16 %v7577
        %v7952 = vunpack.c.l.b16 %v7578
        %v7953 = vunpack.c.l.b16 %v7579
        %v7954 = vunpack.c.l.b16 %v7580
        %v7955 = vunpack.c.l.b16 %v7581
        %v7956 = vunpack.c.l.b16 %v7582
        %v7957 = vunpack.c.l.b16 %v7583
        %v7958 = vunpack.c.l.b16 %v7584
        %v7959 = vunpack.c.l.b16 %v7585
        %v7960 = vunpack.c.l.b16 %v7586
        %v7961 = vunpack.c.l.b16 %v7587
        %v7962 = vunpack.c.l.b16 %v7588
        %v7963 = vunpack.c.l.b16 %v7589
        %v7964 = vunpack.c.l.b16 %v7590
        %v7965 = vunpack.c.l.b16 %v7591
        %v7966 = vunpack.c.l.b16 %v7592
        %v7967 = vunpack.c.l.b16 %v7593
        %v7968 = vunpack.c.l.b16 %v7594
        %v7969 = vunpack.c.l.b16 %v7595
        %v7970 = vunpack.c.l.b16 %v7596
        %v7971 = vunpack.c.l.b16 %v7597
        %v7972 = vunpack.c.l.b16 %v7598
        %v7973 = vunpack.c.l.b16 %v7599
        %v7974 = vunpack.c.l.b16 %v7600
        %v7975 = vunpack.c.l.b16 %v7601
        %v7976 = vunpack.c.l.b16 %v7602
        %v7977 = vunpack.c.l.b16 %v7603
        %v7978 = vunpack.c.l.b16 %v7604
        %v7979 = vunpack.c.l.b16 %v7605
        %v7980 = vunpack.c.l.b16 %v7606
        %v7981 = vunpack.c.l.b16 %v7607
        %v7982 = vunpack.c.l.b16 %v7608
        %v7983 = vunpack.c.l.b16 %v7609
        %v7984 = vunpack.c.l.b16 %v7610
        %v7985 = vunpack.c.l.b16 %v7611
        %v7986 = vunpack.c.l.b16 %v7612
        %v7987 = vunpack.c.l.b16 %v7613
        %v7988 = vunpack.c.l.b16 %v7614
        %v7989 = vunpack.c.l.b16 %v7615
        %v7990 = vunpack.c.l.b16 %v7616
        %v7991 = vunpack.c.l.b16 %v7617
        %v7992 = vunpack.c.l.b16 %v7618
        %v7993 = vunpack.c.l.b16 %v7619
        %v7994 = vunpack.c.l.b16 %v7620
        %v7995 = vunpack.c.l.b16 %v7621
        %v7996 = vunpack.c.l.b16 %v7622
        %v7997 = vunpack.c.l.b16 %v7623
        %v7998 = vunpack.c.l.b16 %v7624
        %v7999 = vunpack.c.l.b16 %v7625
        %v8000 = vunpack.c.l.b16 %v7626
        %v8001 = vunpack.c.l.b16 %v7627
        %v8002 = vunpack.c.l.b16 %v7628
        %v8003 = vunpack.c.l.b16 %v7629
        %v8004 = vunpack.c.l.b16 %v7630
        %v8005 = vunpack.c.l.b16 %v7631
        %v8006 = vunpack.c.l.b16 %v7632
        %v8007 = vunpack.c.l.b16 %v7633
        %v8008 = vunpack.c.l.b16 %v7634
        %v8009 = vunpack.c.l.b16 %v7635
        %v8010 = vunpack.c.l.b16 %v7636
        %v8011 = vunpack.c.l.b16 %v7637
        %v8012 = vunpack.c.l.b16 %v7638
        %v8013 = vunpack.c.l.b16 %v7639
        %v8014 = vunpack.c.l.b16 %v7640
        %v8015 = vunpack.c.l.b16 %v7641
        %v8016 = vunpack.c.l.b16 %v7642
        %v8017 = vunpack.c.l.b16 %v7643
        %v8018 = vunpack.c.l.b16 %v7644
        %v8019 = vunpack.c.l.b16 %v7645
        %v8020 = vunpack.c.l.b16 %v7646
        %v8021 = vunpack.c.l.b16 %v7647
        %v8022 = vunpack.c.l.b16 %v7648
        %v8023 = vunpack.c.l.b16 %v7649
        %v8024 = vunpack.c.l.b16 %v7650
        %v8025 = vunpack.c.l.b16 %v7651
        %v8026 = vunpack.c.l.b16 %v7652
        %v8027 = vunpack.c.l.b16 %v7653
        %v8028 = vunpack.c.l.b16 %v7654
        %v8029 = vunpack.c.l.b16 %v7655
        %v8030 = vunpack.c.l.b16 %v7656
        %v8031 = vunpack.c.l.b16 %v7657
        %v8032 = vunpack.c.l.b16 %v7658
        %v8033 = vunpack.c.l.b16 %v7659
        %v8034 = vunpack.c.l.b16 %v7660
        %v8035 = vunpack.c.l.b16 %v7661
        %v8036 = vunpack.c.l.b16 %v7662
        %v8037 = vunpack.c.l.b16 %v7663
        %v8038 = vunpack.c.l.b16 %v7664
        %v8039 = vunpack.c.l.b16 %v7665
        %v8040 = vunpack.c.l.b16 %v7666
        %v8041 = vunpack.c.l.b16 %v7667
        %v8042 = vunpack.c.l.b16 %v7668
        %v8043 = vpack.c.b16 %v7868, %v7867
        %v8044 = vpack.c.b16 %v7870, %v7869
        %v8045 = vpack.c.b16 %v7872, %v7871
        %v8046 = vpack.c.b16 %v7874, %v7873
        %v8047 = vpack.c.b16 %v7876, %v7875
        %v8048 = vpack.c.b16 %v7878, %v7877
        %v8049 = vpack.c.b16 %v7880, %v7879
        %v8050 = vpack.c.b16 %v7882, %v7881
        %v8051 = vpack.c.b16 %v7884, %v7883
        %v8052 = vpack.c.b16 %v7886, %v7885
        %v8053 = vpack.c.b16 %v7888, %v7887
        %v8054 = vpack.c.b16 %v7890, %v7889
        %v8055 = vpack.c.b16 %v7892, %v7891
        %v8056 = vpack.c.b16 %v7894, %v7893
        %v8057 = vpack.c.b16 %v7896, %v7895
        %v8058 = vpack.c.b16 %v7898, %v7897
        %v8059 = vpack.c.b16 %v7900, %v7899
        %v8060 = vpack.c.b16 %v7902, %v7901
        %v8061 = vpack.c.b16 %v7904, %v7903
        %v8062 = vpack.c.b16 %v7906, %v7905
        %v8063 = vpack.c.b16 %v7908, %v7907
        %v8064 = vpack.c.b16 %v7910, %v7909
        %v8065 = vpack.c.b16 %v7912, %v7911
        %v8066 = vpack.c.b16 %v7914, %v7913
        %v8067 = vpack.c.b16 %v7916, %v7915
        %v8068 = vpack.c.b16 %v7918, %v7917
        %v8069 = vpack.c.b16 %v7920, %v7919
        %v8070 = vpack.c.b16 %v7922, %v7921
        %v8071 = vpack.c.b16 %v7924, %v7923
        %v8072 = vpack.c.b16 %v7926, %v7925
        %v8073 = vpack.c.b16 %v7928, %v7927
        %v8074 = vpack.c.b16 %v7930, %v7929
        %v8075 = vpack.c.b16 %v7932, %v7931
        %v8076 = vpack.c.b16 %v7934, %v7933
        %v8077 = vpack.c.b16 %v7936, %v7935
        %v8078 = vpack.c.b16 %v7938, %v7937
        %v8079 = vpack.c.b16 %v7940, %v7939
        %v8080 = vpack.c.b16 %v7942, %v7941
        %v8081 = vpack.c.b16 %v7944, %v7943
        %v8082 = vpack.c.b16 %v7946, %v7945
        %v8083 = vpack.c.b16 %v7948, %v7947
        %v8084 = vpack.c.b16 %v7950, %v7949
        %v8085 = vpack.c.b16 %v7952, %v7951
        %v8086 = vpack.c.b16 %v7954, %v7953
        %v8087 = vpack.c.b16 %v7956, %v7955
        %v8088 = vpack.c.b16 %v7958, %v7957
        %v8089 = vpack.c.b16 %v7960, %v7959
        %v8090 = vpack.c.b16 %v7962, %v7961
        %v8091 = vpack.c.b16 %v7964, %v7963
        %v8092 = vpack.c.b16 %v7966, %v7965
        %v8093 = vpack.c.b16 %v7968, %v7967
        %v8094 = vpack.c.b16 %v7970, %v7969
        %v8095 = vpack.c.b16 %v7972, %v7971
        %v8096 = vpack.c.b16 %v7974, %v7973
        %v8097 = vpack.c.b16 %v7976, %v7975
        %v8098 = vpack.c.b16 %v7978, %v7977
        %v8099 = vpack.c.b16 %v7980, %v7979
        %v8100 = vpack.c.b16 %v7982, %v7981
        %v8101 = vpack.c.b16 %v7984, %v7983
        %v8102 = vpack.c.b16 %v7986, %v7985
        %v8103 = vpack.c.b16 %v7988, %v7987
        %v8104 = vpack.c.b16 %v7990, %v7989
        %v8105 = vpack.c.b16 %v7992, %v7991
        %v8106 = vpack.c.b16 %v7994, %v7993
        %v8107 = vpack.c.b16 %v7996, %v7995
        %v8108 = vpack.c.b16 %v7998, %v7997
        %v8109 = vpack.c.b16 %v8000, %v7999
        %v8110 = vpack.c.b16 %v8002, %v8001
        %v8111 = vpack.c.b16 %v8004, %v8003
        %v8112 = vpack.c.b16 %v8006, %v8005
        %v8113 = vpack.c.b16 %v8008, %v8007
        %v8114 = vpack.c.b16 %v8010, %v8009
        %v8115 = vpack.c.b16 %v8012, %v8011
        %v8116 = vpack.c.b16 %v8014, %v8013
        %v8117 = vpack.c.b16 %v8016, %v8015
        %v8118 = vpack.c.b16 %v8018, %v8017
        %v8119 = vpack.c.b16 %v8020, %v8019
        %v8120 = vpack.c.b16 %v8022, %v8021
        %v8121 = vpack.c.b16 %v8024, %v8023
        %v8122 = vpack.c.b16 %v8026, %v8025
        %v8123 = vpack.c.b16 %v8028, %v8027
        %v8124 = vpack.c.b16 %v8030, %v8029
        %v8125 = vpack.c.b16 %v8032, %v8031
        %v8126 = vpack.c.b16 %v8034, %v8033
        %v8127 = vpack.c.b16 %v8036, %v8035
        %v8128 = vpack.c.b16 %v8038, %v8037
        %v8129 = vpack.c.b16 %v8040, %v8039
        %v8130 = vpack.c.b16 %v8042, %v8041
        %8219 = vmatpush.bf16.msra.mxu0 %v8050
        %8220 = vmatpush.bf16.msra.mxu0 %v8049
        %8221 = vmatpush.bf16.msra.mxu0 %v8048
        %8222 = vmatpush.bf16.msra.mxu0 %v8047
        %8223 = vmatpush.bf16.msra.mxu0 %v8046
        %8224 = vmatpush.bf16.msra.mxu0 %v8045
        %8225 = vmatpush.bf16.msra.mxu0 %v8044
        %8226 = vmatpush.bf16.msra.mxu0 %v8043
        %8227 = vmatmul.bf16.gmra.mxu0 %v7669
        %v8228 = vpop.f32.mrf.mxu0
        %v8229 = vadd.f32 0.0, %v8228
        %v8230 = vpop.f32.mrf.mxu0
        %8231 = vdwg.mxu0
        %8232 = vmatpush.bf16.msra.mxu0 %v8058
        %8233 = vmatpush.bf16.msra.mxu0 %v8057
        %8234 = vmatpush.bf16.msra.mxu0 %v8056
        %8235 = vmatpush.bf16.msra.mxu0 %v8055
        %8236 = vmatpush.bf16.msra.mxu0 %v8054
        %8237 = vmatpush.bf16.msra.mxu0 %v8053
        %8238 = vmatpush.bf16.msra.mxu0 %v8052
        %8239 = vmatpush.bf16.msra.mxu0 %v8051
        %8240 = vmatmul.bf16.gmra.mxu0 %v7670
        %v8241 = vpop.f32.mrf.mxu0
        %v8242 = vadd.f32 %v8229, %v8241
        %v8243 = vpop.f32.mrf.mxu0
        %8244 = vdwg.mxu0
        %8245 = vmatpush.bf16.msra.mxu0 %v8066
        %8246 = vmatpush.bf16.msra.mxu0 %v8065
        %8247 = vmatpush.bf16.msra.mxu0 %v8064
        %8248 = vmatpush.bf16.msra.mxu0 %v8063
        %8249 = vmatpush.bf16.msra.mxu0 %v8062
        %8250 = vmatpush.bf16.msra.mxu0 %v8061
        %8251 = vmatpush.bf16.msra.mxu0 %v8060
        %8252 = vmatpush.bf16.msra.mxu0 %v8059
        %8253 = vmatmul.bf16.gmra.mxu0 %v7671
        %v8254 = vpop.f32.mrf.mxu0
        %v8255 = vadd.f32 %v8242, %v8254
        %v8256 = vpop.f32.mrf.mxu0
        %8257 = vdwg.mxu0
        %8258 = vmatpush.bf16.msra.mxu0 %v8074
        %8259 = vmatpush.bf16.msra.mxu0 %v8073
        %8260 = vmatpush.bf16.msra.mxu0 %v8072
        %8261 = vmatpush.bf16.msra.mxu0 %v8071
        %8262 = vmatpush.bf16.msra.mxu0 %v8070
        %8263 = vmatpush.bf16.msra.mxu0 %v8069
        %8264 = vmatpush.bf16.msra.mxu0 %v8068
        %8265 = vmatpush.bf16.msra.mxu0 %v8067
        %8266 = vmatmul.bf16.gmra.mxu0 %v7672
        %v8267 = vpop.f32.mrf.mxu0
        %v8268 = vadd.f32 %v8255, %v8267
        %v8269 = vpop.f32.mrf.mxu0
        %8270 = vdwg.mxu0
        %8271 = vmatpush.bf16.msra.mxu0 %v8082
        %8272 = vmatpush.bf16.msra.mxu0 %v8081
        %8273 = vmatpush.bf16.msra.mxu0 %v8080
        %8274 = vmatpush.bf16.msra.mxu0 %v8079
        %8275 = vmatpush.bf16.msra.mxu0 %v8078
        %8276 = vmatpush.bf16.msra.mxu0 %v8077
        %8277 = vmatpush.bf16.msra.mxu0 %v8076
        %8278 = vmatpush.bf16.msra.mxu0 %v8075
        %8279 = vmatmul.bf16.gmra.mxu0 %v7673
        %v8280 = vpop.f32.mrf.mxu0
        %v8281 = vadd.f32 %v8268, %v8280
        %v8282 = vpop.f32.mrf.mxu0
        %8283 = vdwg.mxu0
        %8284 = vmatpush.bf16.msra.mxu0 %v8090
        %8285 = vmatpush.bf16.msra.mxu0 %v8089
        %8286 = vmatpush.bf16.msra.mxu0 %v8088
        %8287 = vmatpush.bf16.msra.mxu0 %v8087
        %8288 = vmatpush.bf16.msra.mxu0 %v8086
        %8289 = vmatpush.bf16.msra.mxu0 %v8085
        %8290 = vmatpush.bf16.msra.mxu0 %v8084
        %8291 = vmatpush.bf16.msra.mxu0 %v8083
        %8292 = vmatmul.bf16.gmra.mxu0 %v7674
        %v8293 = vpop.f32.mrf.mxu0
        %v8294 = vadd.f32 %v8281, %v8293
        %v8295 = vpop.f32.mrf.mxu0
        %8296 = vdwg.mxu0
        %8297 = vmatpush.bf16.msra.mxu0 %v8098
        %8298 = vmatpush.bf16.msra.mxu0 %v8097
        %8299 = vmatpush.bf16.msra.mxu0 %v8096
        %8300 = vmatpush.bf16.msra.mxu0 %v8095
        %8301 = vmatpush.bf16.msra.mxu0 %v8094
        %8302 = vmatpush.bf16.msra.mxu0 %v8093
        %8303 = vmatpush.bf16.msra.mxu0 %v8092
        %8304 = vmatpush.bf16.msra.mxu0 %v8091
        %8305 = vmatmul.bf16.gmra.mxu0 %v7675
        %v8306 = vpop.f32.mrf.mxu0
        %v8307 = vadd.f32 %v8294, %v8306
        %v8308 = vpop.f32.mrf.mxu0
        %8309 = vdwg.mxu0
        %8310 = vmatpush.bf16.msra.mxu0 %v8106
        %8311 = vmatpush.bf16.msra.mxu0 %v8105
        %8312 = vmatpush.bf16.msra.mxu0 %v8104
        %8313 = vmatpush.bf16.msra.mxu0 %v8103
        %8314 = vmatpush.bf16.msra.mxu0 %v8102
        %8315 = vmatpush.bf16.msra.mxu0 %v8101
        %8316 = vmatpush.bf16.msra.mxu0 %v8100
        %8317 = vmatpush.bf16.msra.mxu0 %v8099
        %8318 = vmatmul.bf16.gmra.mxu0 %v7676
        %v8319 = vpop.f32.mrf.mxu0
        %v8320 = vadd.f32 %v8307, %v8319
        %v8321 = vpop.f32.mrf.mxu0
        %8322 = vdwg.mxu0
        %8323 = vmatpush.bf16.msra.mxu0 %v8114
        %8324 = vmatpush.bf16.msra.mxu0 %v8113
        %8325 = vmatpush.bf16.msra.mxu0 %v8112
        %8326 = vmatpush.bf16.msra.mxu0 %v8111
        %8327 = vmatpush.bf16.msra.mxu0 %v8110
        %8328 = vmatpush.bf16.msra.mxu0 %v8109
        %8329 = vmatpush.bf16.msra.mxu0 %v8108
        %8330 = vmatpush.bf16.msra.mxu0 %v8107
        %8331 = vmatmul.bf16.gmra.mxu0 %v7677
        %v8332 = vpop.f32.mrf.mxu0
        %v8333 = vadd.f32 %v8320, %v8332
        %v8334 = vpop.f32.mrf.mxu0
        %8335 = vdwg.mxu0
        %8336 = vmatpush.bf16.msra.mxu0 %v8122
        %8337 = vmatpush.bf16.msra.mxu0 %v8121
        %8338 = vmatpush.bf16.msra.mxu0 %v8120
        %8339 = vmatpush.bf16.msra.mxu0 %v8119
        %8340 = vmatpush.bf16.msra.mxu0 %v8118
        %8341 = vmatpush.bf16.msra.mxu0 %v8117
        %8342 = vmatpush.bf16.msra.mxu0 %v8116
        %8343 = vmatpush.bf16.msra.mxu0 %v8115
        %8344 = vmatmul.bf16.gmra.mxu0 %v7678
        %v8345 = vpop.f32.mrf.mxu0
        %v8346 = vadd.f32 %v8333, %v8345
        %v8347 = vpop.f32.mrf.mxu0
        %8348 = vdwg.mxu0
        %8349 = vmatpush.bf16.msra.mxu0 %v8130
        %8350 = vmatpush.bf16.msra.mxu0 %v8129
        %8351 = vmatpush.bf16.msra.mxu0 %v8128
        %8352 = vmatpush.bf16.msra.mxu0 %v8127
        %8353 = vmatpush.bf16.msra.mxu0 %v8126
        %8354 = vmatpush.bf16.msra.mxu0 %v8125
        %8355 = vmatpush.bf16.msra.mxu0 %v8124
        %8356 = vmatpush.bf16.msra.mxu0 %v8123
        %8357 = vmatmul.bf16.gmra.mxu0 %v7679
        %v8358 = vpop.f32.mrf.mxu0
        %v8359 = vadd.f32 %v8346, %v8358
        %v8360 = vpop.f32.mrf.mxu0
        %8361 = vdwg.mxu0
        %v8362 = vadd.f32 %v7491, %v8359
        %s8363 = scalar_lea.vmem %s6, 3520
        %v8364 = vld [vmem:[%s8363] sm:$0xf]
        %v8365 = vld [vmem:[%s8363 + $0x4] sm:$0xf]
        %v8366 = vld [vmem:[%s8363 + $0x8] sm:$0xf]
        %v8367 = vld [vmem:[%s8363 + $0xc] sm:$0xf]
        %v8368 = vld [vmem:[%s8363 + $0x10] sm:$0xf]
        %v8369 = vld [vmem:[%s8363 + $0x14] sm:$0xf]
        %v8370 = vld [vmem:[%s8363 + $0x18] sm:$0xf]
        %v8371 = vld [vmem:[%s8363 + $0x1c] sm:$0xf]
        %v8372 = vld [vmem:[%s8363 + $0x20] sm:$0xf]
        %v8373 = vld [vmem:[%s8363 + $0x24] sm:$0xf]
        %v8374 = vld [vmem:[%s8363 + $0x28] sm:$0xf]
        %v8375 = vld [vmem:[%s8363 + $0x2c] sm:$0xf]
        %v8376 = vld [vmem:[%s8363 + $0x30] sm:$0xf]
        %v8377 = vld [vmem:[%s8363 + $0x34] sm:$0xf]
        %v8378 = vld [vmem:[%s8363 + $0x38] sm:$0xf]
        %v8379 = vld [vmem:[%s8363 + $0x3c] sm:$0xf]
        %v8380 = vld [vmem:[%s8363 + $0x40] sm:$0xf]
        %v8381 = vld [vmem:[%s8363 + $0x44] sm:$0xf]
        %v8382 = vld [vmem:[%s8363 + $0x48] sm:$0xf]
        %v8383 = vld [vmem:[%s8363 + $0x4c] sm:$0xf]
        %v8384 = vld [vmem:[%s8363 + $0x50] sm:$0xf]
        %v8385 = vld [vmem:[%s8363 + $0x54] sm:$0xf]
        %v8386 = vld [vmem:[%s8363 + $0x58] sm:$0xf]
        %v8387 = vld [vmem:[%s8363 + $0x5c] sm:$0xf]
        %v8388 = vld [vmem:[%s8363 + $0x60] sm:$0xf]
        %v8389 = vld [vmem:[%s8363 + $0x64] sm:$0xf]
        %v8390 = vld [vmem:[%s8363 + $0x68] sm:$0xf]
        %v8391 = vld [vmem:[%s8363 + $0x6c] sm:$0xf]
        %v8392 = vld [vmem:[%s8363 + $0x70] sm:$0xf]
        %v8393 = vld [vmem:[%s8363 + $0x74] sm:$0xf]
        %v8394 = vld [vmem:[%s8363 + $0x78] sm:$0xf]
        %v8395 = vld [vmem:[%s8363 + $0x7c] sm:$0xf]
        %v8396 = vld [vmem:[%s8363 + $0x80] sm:$0xf]
        %v8397 = vld [vmem:[%s8363 + $0x84] sm:$0xf]
        %v8398 = vld [vmem:[%s8363 + $0x88] sm:$0xf]
        %v8399 = vld [vmem:[%s8363 + $0x8c] sm:$0xf]
        %v8400 = vld [vmem:[%s8363 + $0x90] sm:$0xf]
        %v8401 = vld [vmem:[%s8363 + $0x94] sm:$0xf]
        %v8402 = vld [vmem:[%s8363 + $0x98] sm:$0xf]
        %v8403 = vld [vmem:[%s8363 + $0x9c] sm:$0xf]
        %v8404 = vld [vmem:[%s8363 + $0xa0] sm:$0xf]
        %v8405 = vld [vmem:[%s8363 + $0xa4] sm:$0xf]
        %v8406 = vld [vmem:[%s8363 + $0xa8] sm:$0xf]
        %v8407 = vld [vmem:[%s8363 + $0xac] sm:$0xf]
        %v8408 = vld [vmem:[%s8363 + $0xb0] sm:$0xf]
        %v8409 = vld [vmem:[%s8363 + $0xb4] sm:$0xf]
        %v8410 = vld [vmem:[%s8363 + $0xb8] sm:$0xf]
        %v8411 = vld [vmem:[%s8363 + $0xbc] sm:$0xf]
        %v8412 = vld [vmem:[%s8363 + $0xc0] sm:$0xf]
        %v8413 = vld [vmem:[%s8363 + $0xc4] sm:$0xf]
        %v8414 = vld [vmem:[%s8363 + $0xc8] sm:$0xf]
        %v8415 = vld [vmem:[%s8363 + $0xcc] sm:$0xf]
        %v8416 = vld [vmem:[%s8363 + $0xd0] sm:$0xf]
        %v8417 = vld [vmem:[%s8363 + $0xd4] sm:$0xf]
        %v8418 = vld [vmem:[%s8363 + $0xd8] sm:$0xf]
        %v8419 = vld [vmem:[%s8363 + $0xdc] sm:$0xf]
        %v8420 = vld [vmem:[%s8363 + $0xe0] sm:$0xf]
        %v8421 = vld [vmem:[%s8363 + $0xe4] sm:$0xf]
        %v8422 = vld [vmem:[%s8363 + $0xe8] sm:$0xf]
        %v8423 = vld [vmem:[%s8363 + $0xec] sm:$0xf]
        %v8424 = vld [vmem:[%s8363 + $0xf0] sm:$0xf]
        %v8425 = vld [vmem:[%s8363 + $0xf4] sm:$0xf]
        %v8426 = vld [vmem:[%s8363 + $0xf8] sm:$0xf]
        %v8427 = vld [vmem:[%s8363 + $0xfc] sm:$0xf]
        %v8428 = vld [vmem:[%s8363 + $0x100] sm:$0xf]
        %v8429 = vld [vmem:[%s8363 + $0x104] sm:$0xf]
        %v8430 = vld [vmem:[%s8363 + $0x108] sm:$0xf]
        %v8431 = vld [vmem:[%s8363 + $0x10c] sm:$0xf]
        %v8432 = vld [vmem:[%s8363 + $0x110] sm:$0xf]
        %v8433 = vld [vmem:[%s8363 + $0x114] sm:$0xf]
        %v8434 = vld [vmem:[%s8363 + $0x118] sm:$0xf]
        %v8435 = vld [vmem:[%s8363 + $0x11c] sm:$0xf]
        %v8436 = vld [vmem:[%s8363 + $0x120] sm:$0xf]
        %v8437 = vld [vmem:[%s8363 + $0x124] sm:$0xf]
        %v8438 = vld [vmem:[%s8363 + $0x128] sm:$0xf]
        %v8439 = vld [vmem:[%s8363 + $0x12c] sm:$0xf]
        %v8440 = vld [vmem:[%s8363 + $0x130] sm:$0xf]
        %v8441 = vld [vmem:[%s8363 + $0x134] sm:$0xf]
        %v8442 = vld [vmem:[%s8363 + $0x138] sm:$0xf]
        %v8443 = vld [vmem:[%s8363 + $0x13c] sm:$0xf]
        %v8444 = vld [vmem:[%s8363 + $0x140] sm:$0xf]
        %v8445 = vld [vmem:[%s8363 + $0x144] sm:$0xf]
        %v8446 = vld [vmem:[%s8363 + $0x148] sm:$0xf]
        %v8447 = vld [vmem:[%s8363 + $0x14c] sm:$0xf]
        %v8448 = vld [vmem:[%s8363 + $0x150] sm:$0xf]
        %v8449 = vld [vmem:[%s8363 + $0x154] sm:$0xf]
        %v8450 = vld [vmem:[%s8363 + $0x158] sm:$0xf]
        %v8451 = vld [vmem:[%s8363 + $0x15c] sm:$0xf]
        %v8452 = vld [vmem:[%s8363 + $0x160] sm:$0xf]
        %v8453 = vld [vmem:[%s8363 + $0x164] sm:$0xf]
        %v8454 = vld [vmem:[%s8363 + $0x168] sm:$0xf]
        %v8455 = vld [vmem:[%s8363 + $0x16c] sm:$0xf]
        %v8456 = vld [vmem:[%s8363 + $0x170] sm:$0xf]
        %v8457 = vld [vmem:[%s8363 + $0x174] sm:$0xf]
        %v8458 = vld [vmem:[%s8363 + $0x178] sm:$0xf]
        %v8459 = vld [vmem:[%s8363 + $0x17c] sm:$0xf]
        %v8460 = vld [vmem:[%s8363 + $0x180] sm:$0xf]
        %v8461 = vld [vmem:[%s8363 + $0x184] sm:$0xf]
        %v8462 = vld [vmem:[%s8363 + $0x188] sm:$0xf]
        %v8463 = vld [vmem:[%s8363 + $0x18c] sm:$0xf]
        %v8464 = vld [vmem:[%s8363 + $0x190] sm:$0xf]
        %v8465 = vld [vmem:[%s8363 + $0x194] sm:$0xf]
        %v8466 = vld [vmem:[%s8363 + $0x198] sm:$0xf]
        %v8467 = vld [vmem:[%s8363 + $0x19c] sm:$0xf]
        %v8468 = vld [vmem:[%s8363 + $0x1a0] sm:$0xf]
        %v8469 = vld [vmem:[%s8363 + $0x1a4] sm:$0xf]
        %v8470 = vld [vmem:[%s8363 + $0x1a8] sm:$0xf]
        %v8471 = vld [vmem:[%s8363 + $0x1ac] sm:$0xf]
        %v8472 = vld [vmem:[%s8363 + $0x1b0] sm:$0xf]
        %v8473 = vld [vmem:[%s8363 + $0x1b4] sm:$0xf]
        %v8474 = vld [vmem:[%s8363 + $0x1b8] sm:$0xf]
        %v8475 = vld [vmem:[%s8363 + $0x1bc] sm:$0xf]
        %v8476 = vld [vmem:[%s8363 + $0x1c0] sm:$0xf]
        %v8477 = vld [vmem:[%s8363 + $0x1c4] sm:$0xf]
        %v8478 = vld [vmem:[%s8363 + $0x1c8] sm:$0xf]
        %v8479 = vld [vmem:[%s8363 + $0x1cc] sm:$0xf]
        %v8480 = vld [vmem:[%s8363 + $0x1d0] sm:$0xf]
        %v8481 = vld [vmem:[%s8363 + $0x1d4] sm:$0xf]
        %v8482 = vld [vmem:[%s8363 + $0x1d8] sm:$0xf]
        %v8483 = vld [vmem:[%s8363 + $0x1dc] sm:$0xf]
        %v8484 = vld [vmem:[%s8363 + $0x1e0] sm:$0xf]
        %v8485 = vld [vmem:[%s8363 + $0x1e4] sm:$0xf]
        %v8486 = vld [vmem:[%s8363 + $0x1e8] sm:$0xf]
        %v8487 = vld [vmem:[%s8363 + $0x1ec] sm:$0xf]
        %v8488 = vld [vmem:[%s8363 + $0x1f0] sm:$0xf]
        %v8489 = vld [vmem:[%s8363 + $0x1f4] sm:$0xf]
        %v8490 = vld [vmem:[%s8363 + $0x1f8] sm:$0xf]
        %v8491 = vld [vmem:[%s8363 + $0x1fc] sm:$0xf]
        %v8492 = vld [vmem:[%s8363 + $0x200] sm:$0xf]
        %v8493 = vld [vmem:[%s8363 + $0x204] sm:$0xf]
        %v8494 = vld [vmem:[%s8363 + $0x208] sm:$0xf]
        %v8495 = vld [vmem:[%s8363 + $0x20c] sm:$0xf]
        %v8496 = vld [vmem:[%s8363 + $0x210] sm:$0xf]
        %v8497 = vld [vmem:[%s8363 + $0x214] sm:$0xf]
        %v8498 = vld [vmem:[%s8363 + $0x218] sm:$0xf]
        %v8499 = vld [vmem:[%s8363 + $0x21c] sm:$0xf]
        %v8500 = vld [vmem:[%s8363 + $0x220] sm:$0xf]
        %v8501 = vld [vmem:[%s8363 + $0x224] sm:$0xf]
        %v8502 = vld [vmem:[%s8363 + $0x228] sm:$0xf]
        %v8503 = vld [vmem:[%s8363 + $0x22c] sm:$0xf]
        %v8504 = vld [vmem:[%s8363 + $0x230] sm:$0xf]
        %v8505 = vld [vmem:[%s8363 + $0x234] sm:$0xf]
        %v8506 = vld [vmem:[%s8363 + $0x238] sm:$0xf]
        %v8507 = vld [vmem:[%s8363 + $0x23c] sm:$0xf]
        %v8508 = vld [vmem:[%s8363 + $0x240] sm:$0xf]
        %v8509 = vld [vmem:[%s8363 + $0x244] sm:$0xf]
        %v8510 = vld [vmem:[%s8363 + $0x248] sm:$0xf]
        %v8511 = vld [vmem:[%s8363 + $0x24c] sm:$0xf]
        %v8512 = vld [vmem:[%s8363 + $0x250] sm:$0xf]
        %v8513 = vld [vmem:[%s8363 + $0x254] sm:$0xf]
        %v8514 = vld [vmem:[%s8363 + $0x258] sm:$0xf]
        %v8515 = vld [vmem:[%s8363 + $0x25c] sm:$0xf]
        %v8516 = vld [vmem:[%s8363 + $0x260] sm:$0xf]
        %v8517 = vld [vmem:[%s8363 + $0x264] sm:$0xf]
        %v8518 = vld [vmem:[%s8363 + $0x268] sm:$0xf]
        %v8519 = vld [vmem:[%s8363 + $0x26c] sm:$0xf]
        %v8520 = vld [vmem:[%s8363 + $0x270] sm:$0xf]
        %v8521 = vld [vmem:[%s8363 + $0x274] sm:$0xf]
        %v8522 = vld [vmem:[%s8363 + $0x278] sm:$0xf]
        %v8523 = vld [vmem:[%s8363 + $0x27c] sm:$0xf]
        %v8524 = vld [vmem:[%s8363 + $0x280] sm:$0xf]
        %v8525 = vld [vmem:[%s8363 + $0x284] sm:$0xf]
        %v8526 = vld [vmem:[%s8363 + $0x288] sm:$0xf]
        %v8527 = vld [vmem:[%s8363 + $0x28c] sm:$0xf]
        %v8528 = vld [vmem:[%s8363 + $0x290] sm:$0xf]
        %v8529 = vld [vmem:[%s8363 + $0x294] sm:$0xf]
        %v8530 = vld [vmem:[%s8363 + $0x298] sm:$0xf]
        %v8531 = vld [vmem:[%s8363 + $0x29c] sm:$0xf]
        %v8532 = vld [vmem:[%s8363 + $0x2a0] sm:$0xf]
        %v8533 = vld [vmem:[%s8363 + $0x2a4] sm:$0xf]
        %v8534 = vld [vmem:[%s8363 + $0x2a8] sm:$0xf]
        %v8535 = vld [vmem:[%s8363 + $0x2ac] sm:$0xf]
        %v8536 = vld [vmem:[%s8363 + $0x2b0] sm:$0xf]
        %v8537 = vld [vmem:[%s8363 + $0x2b4] sm:$0xf]
        %v8538 = vld [vmem:[%s8363 + $0x2b8] sm:$0xf]
        %v8539 = vld [vmem:[%s8363 + $0x2bc] sm:$0xf]
        %v8540 = vrot.slane %v5024, 2
        %v8541 = vrot.slane %v5027, 2
        %v8542 = vrot.slane %v5030, 2
        %v8543 = vrot.slane %v5033, 2
        %v8544 = vrot.slane %v5036, 2
        %v8545 = vrot.slane %v5039, 2
        %v8546 = vrot.slane %v5042, 2
        %v8547 = vrot.slane %v5045, 2
        %v8548 = vrot.slane %v5048, 2
        %v8549 = vrot.slane %v5051, 2
        %v8550 = vrot.slane %v5054, 2
        %v8738 = vunpack.c.l.b16 %v8364
        %v8739 = vunpack.c.l.b16 %v8365
        %v8740 = vunpack.c.l.b16 %v8366
        %v8741 = vunpack.c.l.b16 %v8367
        %v8742 = vunpack.c.l.b16 %v8368
        %v8743 = vunpack.c.l.b16 %v8369
        %v8744 = vunpack.c.l.b16 %v8370
        %v8745 = vunpack.c.l.b16 %v8371
        %v8746 = vunpack.c.l.b16 %v8372
        %v8747 = vunpack.c.l.b16 %v8373
        %v8748 = vunpack.c.l.b16 %v8374
        %v8749 = vunpack.c.l.b16 %v8375
        %v8750 = vunpack.c.l.b16 %v8376
        %v8751 = vunpack.c.l.b16 %v8377
        %v8752 = vunpack.c.l.b16 %v8378
        %v8753 = vunpack.c.l.b16 %v8379
        %v8754 = vunpack.c.l.b16 %v8380
        %v8755 = vunpack.c.l.b16 %v8381
        %v8756 = vunpack.c.l.b16 %v8382
        %v8757 = vunpack.c.l.b16 %v8383
        %v8758 = vunpack.c.l.b16 %v8384
        %v8759 = vunpack.c.l.b16 %v8385
        %v8760 = vunpack.c.l.b16 %v8386
        %v8761 = vunpack.c.l.b16 %v8387
        %v8762 = vunpack.c.l.b16 %v8388
        %v8763 = vunpack.c.l.b16 %v8389
        %v8764 = vunpack.c.l.b16 %v8390
        %v8765 = vunpack.c.l.b16 %v8391
        %v8766 = vunpack.c.l.b16 %v8392
        %v8767 = vunpack.c.l.b16 %v8393
        %v8768 = vunpack.c.l.b16 %v8394
        %v8769 = vunpack.c.l.b16 %v8395
        %v8770 = vunpack.c.l.b16 %v8396
        %v8771 = vunpack.c.l.b16 %v8397
        %v8772 = vunpack.c.l.b16 %v8398
        %v8773 = vunpack.c.l.b16 %v8399
        %v8774 = vunpack.c.l.b16 %v8400
        %v8775 = vunpack.c.l.b16 %v8401
        %v8776 = vunpack.c.l.b16 %v8402
        %v8777 = vunpack.c.l.b16 %v8403
        %v8778 = vunpack.c.l.b16 %v8404
        %v8779 = vunpack.c.l.b16 %v8405
        %v8780 = vunpack.c.l.b16 %v8406
        %v8781 = vunpack.c.l.b16 %v8407
        %v8782 = vunpack.c.l.b16 %v8408
        %v8783 = vunpack.c.l.b16 %v8409
        %v8784 = vunpack.c.l.b16 %v8410
        %v8785 = vunpack.c.l.b16 %v8411
        %v8786 = vunpack.c.l.b16 %v8412
        %v8787 = vunpack.c.l.b16 %v8413
        %v8788 = vunpack.c.l.b16 %v8414
        %v8789 = vunpack.c.l.b16 %v8415
        %v8790 = vunpack.c.l.b16 %v8416
        %v8791 = vunpack.c.l.b16 %v8417
        %v8792 = vunpack.c.l.b16 %v8418
        %v8793 = vunpack.c.l.b16 %v8419
        %v8794 = vunpack.c.l.b16 %v8420
        %v8795 = vunpack.c.l.b16 %v8421
        %v8796 = vunpack.c.l.b16 %v8422
        %v8797 = vunpack.c.l.b16 %v8423
        %v8798 = vunpack.c.l.b16 %v8424
        %v8799 = vunpack.c.l.b16 %v8425
        %v8800 = vunpack.c.l.b16 %v8426
        %v8801 = vunpack.c.l.b16 %v8427
        %v8802 = vunpack.c.l.b16 %v8428
        %v8803 = vunpack.c.l.b16 %v8429
        %v8804 = vunpack.c.l.b16 %v8430
        %v8805 = vunpack.c.l.b16 %v8431
        %v8806 = vunpack.c.l.b16 %v8432
        %v8807 = vunpack.c.l.b16 %v8433
        %v8808 = vunpack.c.l.b16 %v8434
        %v8809 = vunpack.c.l.b16 %v8435
        %v8810 = vunpack.c.l.b16 %v8436
        %v8811 = vunpack.c.l.b16 %v8437
        %v8812 = vunpack.c.l.b16 %v8438
        %v8813 = vunpack.c.l.b16 %v8439
        %v8814 = vunpack.c.l.b16 %v8440
        %v8815 = vunpack.c.l.b16 %v8441
        %v8816 = vunpack.c.l.b16 %v8442
        %v8817 = vunpack.c.l.b16 %v8443
        %v8818 = vunpack.c.l.b16 %v8444
        %v8819 = vunpack.c.l.b16 %v8445
        %v8820 = vunpack.c.l.b16 %v8446
        %v8821 = vunpack.c.l.b16 %v8447
        %v8822 = vunpack.c.l.b16 %v8448
        %v8823 = vunpack.c.l.b16 %v8449
        %v8824 = vunpack.c.l.b16 %v8450
        %v8825 = vunpack.c.l.b16 %v8451
        %v8826 = vunpack.c.l.b16 %v8452
        %v8827 = vunpack.c.l.b16 %v8453
        %v8828 = vunpack.c.l.b16 %v8454
        %v8829 = vunpack.c.l.b16 %v8455
        %v8830 = vunpack.c.l.b16 %v8456
        %v8831 = vunpack.c.l.b16 %v8457
        %v8832 = vunpack.c.l.b16 %v8458
        %v8833 = vunpack.c.l.b16 %v8459
        %v8834 = vunpack.c.l.b16 %v8460
        %v8835 = vunpack.c.l.b16 %v8461
        %v8836 = vunpack.c.l.b16 %v8462
        %v8837 = vunpack.c.l.b16 %v8463
        %v8838 = vunpack.c.l.b16 %v8464
        %v8839 = vunpack.c.l.b16 %v8465
        %v8840 = vunpack.c.l.b16 %v8466
        %v8841 = vunpack.c.l.b16 %v8467
        %v8842 = vunpack.c.l.b16 %v8468
        %v8843 = vunpack.c.l.b16 %v8469
        %v8844 = vunpack.c.l.b16 %v8470
        %v8845 = vunpack.c.l.b16 %v8471
        %v8846 = vunpack.c.l.b16 %v8472
        %v8847 = vunpack.c.l.b16 %v8473
        %v8848 = vunpack.c.l.b16 %v8474
        %v8849 = vunpack.c.l.b16 %v8475
        %v8850 = vunpack.c.l.b16 %v8476
        %v8851 = vunpack.c.l.b16 %v8477
        %v8852 = vunpack.c.l.b16 %v8478
        %v8853 = vunpack.c.l.b16 %v8479
        %v8854 = vunpack.c.l.b16 %v8480
        %v8855 = vunpack.c.l.b16 %v8481
        %v8856 = vunpack.c.l.b16 %v8482
        %v8857 = vunpack.c.l.b16 %v8483
        %v8858 = vunpack.c.l.b16 %v8484
        %v8859 = vunpack.c.l.b16 %v8485
        %v8860 = vunpack.c.l.b16 %v8486
        %v8861 = vunpack.c.l.b16 %v8487
        %v8862 = vunpack.c.l.b16 %v8488
        %v8863 = vunpack.c.l.b16 %v8489
        %v8864 = vunpack.c.l.b16 %v8490
        %v8865 = vunpack.c.l.b16 %v8491
        %v8866 = vunpack.c.l.b16 %v8492
        %v8867 = vunpack.c.l.b16 %v8493
        %v8868 = vunpack.c.l.b16 %v8494
        %v8869 = vunpack.c.l.b16 %v8495
        %v8870 = vunpack.c.l.b16 %v8496
        %v8871 = vunpack.c.l.b16 %v8497
        %v8872 = vunpack.c.l.b16 %v8498
        %v8873 = vunpack.c.l.b16 %v8499
        %v8874 = vunpack.c.l.b16 %v8500
        %v8875 = vunpack.c.l.b16 %v8501
        %v8876 = vunpack.c.l.b16 %v8502
        %v8877 = vunpack.c.l.b16 %v8503
        %v8878 = vunpack.c.l.b16 %v8504
        %v8879 = vunpack.c.l.b16 %v8505
        %v8880 = vunpack.c.l.b16 %v8506
        %v8881 = vunpack.c.l.b16 %v8507
        %v8882 = vunpack.c.l.b16 %v8508
        %v8883 = vunpack.c.l.b16 %v8509
        %v8884 = vunpack.c.l.b16 %v8510
        %v8885 = vunpack.c.l.b16 %v8511
        %v8886 = vunpack.c.l.b16 %v8512
        %v8887 = vunpack.c.l.b16 %v8513
        %v8888 = vunpack.c.l.b16 %v8514
        %v8889 = vunpack.c.l.b16 %v8515
        %v8890 = vunpack.c.l.b16 %v8516
        %v8891 = vunpack.c.l.b16 %v8517
        %v8892 = vunpack.c.l.b16 %v8518
        %v8893 = vunpack.c.l.b16 %v8519
        %v8894 = vunpack.c.l.b16 %v8520
        %v8895 = vunpack.c.l.b16 %v8521
        %v8896 = vunpack.c.l.b16 %v8522
        %v8897 = vunpack.c.l.b16 %v8523
        %v8898 = vunpack.c.l.b16 %v8524
        %v8899 = vunpack.c.l.b16 %v8525
        %v8900 = vunpack.c.l.b16 %v8526
        %v8901 = vunpack.c.l.b16 %v8527
        %v8902 = vunpack.c.l.b16 %v8528
        %v8903 = vunpack.c.l.b16 %v8529
        %v8904 = vunpack.c.l.b16 %v8530
        %v8905 = vunpack.c.l.b16 %v8531
        %v8906 = vunpack.c.l.b16 %v8532
        %v8907 = vunpack.c.l.b16 %v8533
        %v8908 = vunpack.c.l.b16 %v8534
        %v8909 = vunpack.c.l.b16 %v8535
        %v8910 = vunpack.c.l.b16 %v8536
        %v8911 = vunpack.c.l.b16 %v8537
        %v8912 = vunpack.c.l.b16 %v8538
        %v8913 = vunpack.c.l.b16 %v8539
        %v8914 = vpack.c.b16 %v8739, %v8738
        %v8915 = vpack.c.b16 %v8741, %v8740
        %v8916 = vpack.c.b16 %v8743, %v8742
        %v8917 = vpack.c.b16 %v8745, %v8744
        %v8918 = vpack.c.b16 %v8747, %v8746
        %v8919 = vpack.c.b16 %v8749, %v8748
        %v8920 = vpack.c.b16 %v8751, %v8750
        %v8921 = vpack.c.b16 %v8753, %v8752
        %v8922 = vpack.c.b16 %v8755, %v8754
        %v8923 = vpack.c.b16 %v8757, %v8756
        %v8924 = vpack.c.b16 %v8759, %v8758
        %v8925 = vpack.c.b16 %v8761, %v8760
        %v8926 = vpack.c.b16 %v8763, %v8762
        %v8927 = vpack.c.b16 %v8765, %v8764
        %v8928 = vpack.c.b16 %v8767, %v8766
        %v8929 = vpack.c.b16 %v8769, %v8768
        %v8930 = vpack.c.b16 %v8771, %v8770
        %v8931 = vpack.c.b16 %v8773, %v8772
        %v8932 = vpack.c.b16 %v8775, %v8774
        %v8933 = vpack.c.b16 %v8777, %v8776
        %v8934 = vpack.c.b16 %v8779, %v8778
        %v8935 = vpack.c.b16 %v8781, %v8780
        %v8936 = vpack.c.b16 %v8783, %v8782
        %v8937 = vpack.c.b16 %v8785, %v8784
        %v8938 = vpack.c.b16 %v8787, %v8786
        %v8939 = vpack.c.b16 %v8789, %v8788
        %v8940 = vpack.c.b16 %v8791, %v8790
        %v8941 = vpack.c.b16 %v8793, %v8792
        %v8942 = vpack.c.b16 %v8795, %v8794
        %v8943 = vpack.c.b16 %v8797, %v8796
        %v8944 = vpack.c.b16 %v8799, %v8798
        %v8945 = vpack.c.b16 %v8801, %v8800
        %v8946 = vpack.c.b16 %v8803, %v8802
        %v8947 = vpack.c.b16 %v8805, %v8804
        %v8948 = vpack.c.b16 %v8807, %v8806
        %v8949 = vpack.c.b16 %v8809, %v8808
        %v8950 = vpack.c.b16 %v8811, %v8810
        %v8951 = vpack.c.b16 %v8813, %v8812
        %v8952 = vpack.c.b16 %v8815, %v8814
        %v8953 = vpack.c.b16 %v8817, %v8816
        %v8954 = vpack.c.b16 %v8819, %v8818
        %v8955 = vpack.c.b16 %v8821, %v8820
        %v8956 = vpack.c.b16 %v8823, %v8822
        %v8957 = vpack.c.b16 %v8825, %v8824
        %v8958 = vpack.c.b16 %v8827, %v8826
        %v8959 = vpack.c.b16 %v8829, %v8828
        %v8960 = vpack.c.b16 %v8831, %v8830
        %v8961 = vpack.c.b16 %v8833, %v8832
        %v8962 = vpack.c.b16 %v8835, %v8834
        %v8963 = vpack.c.b16 %v8837, %v8836
        %v8964 = vpack.c.b16 %v8839, %v8838
        %v8965 = vpack.c.b16 %v8841, %v8840
        %v8966 = vpack.c.b16 %v8843, %v8842
        %v8967 = vpack.c.b16 %v8845, %v8844
        %v8968 = vpack.c.b16 %v8847, %v8846
        %v8969 = vpack.c.b16 %v8849, %v8848
        %v8970 = vpack.c.b16 %v8851, %v8850
        %v8971 = vpack.c.b16 %v8853, %v8852
        %v8972 = vpack.c.b16 %v8855, %v8854
        %v8973 = vpack.c.b16 %v8857, %v8856
        %v8974 = vpack.c.b16 %v8859, %v8858
        %v8975 = vpack.c.b16 %v8861, %v8860
        %v8976 = vpack.c.b16 %v8863, %v8862
        %v8977 = vpack.c.b16 %v8865, %v8864
        %v8978 = vpack.c.b16 %v8867, %v8866
        %v8979 = vpack.c.b16 %v8869, %v8868
        %v8980 = vpack.c.b16 %v8871, %v8870
        %v8981 = vpack.c.b16 %v8873, %v8872
        %v8982 = vpack.c.b16 %v8875, %v8874
        %v8983 = vpack.c.b16 %v8877, %v8876
        %v8984 = vpack.c.b16 %v8879, %v8878
        %v8985 = vpack.c.b16 %v8881, %v8880
        %v8986 = vpack.c.b16 %v8883, %v8882
        %v8987 = vpack.c.b16 %v8885, %v8884
        %v8988 = vpack.c.b16 %v8887, %v8886
        %v8989 = vpack.c.b16 %v8889, %v8888
        %v8990 = vpack.c.b16 %v8891, %v8890
        %v8991 = vpack.c.b16 %v8893, %v8892
        %v8992 = vpack.c.b16 %v8895, %v8894
        %v8993 = vpack.c.b16 %v8897, %v8896
        %v8994 = vpack.c.b16 %v8899, %v8898
        %v8995 = vpack.c.b16 %v8901, %v8900
        %v8996 = vpack.c.b16 %v8903, %v8902
        %v8997 = vpack.c.b16 %v8905, %v8904
        %v8998 = vpack.c.b16 %v8907, %v8906
        %v8999 = vpack.c.b16 %v8909, %v8908
        %v9000 = vpack.c.b16 %v8911, %v8910
        %v9001 = vpack.c.b16 %v8913, %v8912
        %9090 = vmatpush.bf16.msra.mxu0 %v8921
        %9091 = vmatpush.bf16.msra.mxu0 %v8920
        %9092 = vmatpush.bf16.msra.mxu0 %v8919
        %9093 = vmatpush.bf16.msra.mxu0 %v8918
        %9094 = vmatpush.bf16.msra.mxu0 %v8917
        %9095 = vmatpush.bf16.msra.mxu0 %v8916
        %9096 = vmatpush.bf16.msra.mxu0 %v8915
        %9097 = vmatpush.bf16.msra.mxu0 %v8914
        %9098 = vmatmul.bf16.gmra.mxu0 %v8540
        %v9099 = vpop.f32.mrf.mxu0
        %v9100 = vadd.f32 0.0, %v9099
        %v9101 = vpop.f32.mrf.mxu0
        %9102 = vdwg.mxu0
        %9103 = vmatpush.bf16.msra.mxu0 %v8929
        %9104 = vmatpush.bf16.msra.mxu0 %v8928
        %9105 = vmatpush.bf16.msra.mxu0 %v8927
        %9106 = vmatpush.bf16.msra.mxu0 %v8926
        %9107 = vmatpush.bf16.msra.mxu0 %v8925
        %9108 = vmatpush.bf16.msra.mxu0 %v8924
        %9109 = vmatpush.bf16.msra.mxu0 %v8923
        %9110 = vmatpush.bf16.msra.mxu0 %v8922
        %9111 = vmatmul.bf16.gmra.mxu0 %v8541
        %v9112 = vpop.f32.mrf.mxu0
        %v9113 = vadd.f32 %v9100, %v9112
        %v9114 = vpop.f32.mrf.mxu0
        %9115 = vdwg.mxu0
        %9116 = vmatpush.bf16.msra.mxu0 %v8937
        %9117 = vmatpush.bf16.msra.mxu0 %v8936
        %9118 = vmatpush.bf16.msra.mxu0 %v8935
        %9119 = vmatpush.bf16.msra.mxu0 %v8934
        %9120 = vmatpush.bf16.msra.mxu0 %v8933
        %9121 = vmatpush.bf16.msra.mxu0 %v8932
        %9122 = vmatpush.bf16.msra.mxu0 %v8931
        %9123 = vmatpush.bf16.msra.mxu0 %v8930
        %9124 = vmatmul.bf16.gmra.mxu0 %v8542
        %v9125 = vpop.f32.mrf.mxu0
        %v9126 = vadd.f32 %v9113, %v9125
        %v9127 = vpop.f32.mrf.mxu0
        %9128 = vdwg.mxu0
        %9129 = vmatpush.bf16.msra.mxu0 %v8945
        %9130 = vmatpush.bf16.msra.mxu0 %v8944
        %9131 = vmatpush.bf16.msra.mxu0 %v8943
        %9132 = vmatpush.bf16.msra.mxu0 %v8942
        %9133 = vmatpush.bf16.msra.mxu0 %v8941
        %9134 = vmatpush.bf16.msra.mxu0 %v8940
        %9135 = vmatpush.bf16.msra.mxu0 %v8939
        %9136 = vmatpush.bf16.msra.mxu0 %v8938
        %9137 = vmatmul.bf16.gmra.mxu0 %v8543
        %v9138 = vpop.f32.mrf.mxu0
        %v9139 = vadd.f32 %v9126, %v9138
        %v9140 = vpop.f32.mrf.mxu0
        %9141 = vdwg.mxu0
        %9142 = vmatpush.bf16.msra.mxu0 %v8953
        %9143 = vmatpush.bf16.msra.mxu0 %v8952
        %9144 = vmatpush.bf16.msra.mxu0 %v8951
        %9145 = vmatpush.bf16.msra.mxu0 %v8950
        %9146 = vmatpush.bf16.msra.mxu0 %v8949
        %9147 = vmatpush.bf16.msra.mxu0 %v8948
        %9148 = vmatpush.bf16.msra.mxu0 %v8947
        %9149 = vmatpush.bf16.msra.mxu0 %v8946
        %9150 = vmatmul.bf16.gmra.mxu0 %v8544
        %v9151 = vpop.f32.mrf.mxu0
        %v9152 = vadd.f32 %v9139, %v9151
        %v9153 = vpop.f32.mrf.mxu0
        %9154 = vdwg.mxu0
        %9155 = vmatpush.bf16.msra.mxu0 %v8961
        %9156 = vmatpush.bf16.msra.mxu0 %v8960
        %9157 = vmatpush.bf16.msra.mxu0 %v8959
        %9158 = vmatpush.bf16.msra.mxu0 %v8958
        %9159 = vmatpush.bf16.msra.mxu0 %v8957
        %9160 = vmatpush.bf16.msra.mxu0 %v8956
        %9161 = vmatpush.bf16.msra.mxu0 %v8955
        %9162 = vmatpush.bf16.msra.mxu0 %v8954
        %9163 = vmatmul.bf16.gmra.mxu0 %v8545
        %v9164 = vpop.f32.mrf.mxu0
        %v9165 = vadd.f32 %v9152, %v9164
        %v9166 = vpop.f32.mrf.mxu0
        %9167 = vdwg.mxu0
        %9168 = vmatpush.bf16.msra.mxu0 %v8969
        %9169 = vmatpush.bf16.msra.mxu0 %v8968
        %9170 = vmatpush.bf16.msra.mxu0 %v8967
        %9171 = vmatpush.bf16.msra.mxu0 %v8966
        %9172 = vmatpush.bf16.msra.mxu0 %v8965
        %9173 = vmatpush.bf16.msra.mxu0 %v8964
        %9174 = vmatpush.bf16.msra.mxu0 %v8963
        %9175 = vmatpush.bf16.msra.mxu0 %v8962
        %9176 = vmatmul.bf16.gmra.mxu0 %v8546
        %v9177 = vpop.f32.mrf.mxu0
        %v9178 = vadd.f32 %v9165, %v9177
        %v9179 = vpop.f32.mrf.mxu0
        %9180 = vdwg.mxu0
        %9181 = vmatpush.bf16.msra.mxu0 %v8977
        %9182 = vmatpush.bf16.msra.mxu0 %v8976
        %9183 = vmatpush.bf16.msra.mxu0 %v8975
        %9184 = vmatpush.bf16.msra.mxu0 %v8974
        %9185 = vmatpush.bf16.msra.mxu0 %v8973
        %9186 = vmatpush.bf16.msra.mxu0 %v8972
        %9187 = vmatpush.bf16.msra.mxu0 %v8971
        %9188 = vmatpush.bf16.msra.mxu0 %v8970
        %9189 = vmatmul.bf16.gmra.mxu0 %v8547
        %v9190 = vpop.f32.mrf.mxu0
        %v9191 = vadd.f32 %v9178, %v9190
        %v9192 = vpop.f32.mrf.mxu0
        %9193 = vdwg.mxu0
        %9194 = vmatpush.bf16.msra.mxu0 %v8985
        %9195 = vmatpush.bf16.msra.mxu0 %v8984
        %9196 = vmatpush.bf16.msra.mxu0 %v8983
        %9197 = vmatpush.bf16.msra.mxu0 %v8982
        %9198 = vmatpush.bf16.msra.mxu0 %v8981
        %9199 = vmatpush.bf16.msra.mxu0 %v8980
        %9200 = vmatpush.bf16.msra.mxu0 %v8979
        %9201 = vmatpush.bf16.msra.mxu0 %v8978
        %9202 = vmatmul.bf16.gmra.mxu0 %v8548
        %v9203 = vpop.f32.mrf.mxu0
        %v9204 = vadd.f32 %v9191, %v9203
        %v9205 = vpop.f32.mrf.mxu0
        %9206 = vdwg.mxu0
        %9207 = vmatpush.bf16.msra.mxu0 %v8993
        %9208 = vmatpush.bf16.msra.mxu0 %v8992
        %9209 = vmatpush.bf16.msra.mxu0 %v8991
        %9210 = vmatpush.bf16.msra.mxu0 %v8990
        %9211 = vmatpush.bf16.msra.mxu0 %v8989
        %9212 = vmatpush.bf16.msra.mxu0 %v8988
        %9213 = vmatpush.bf16.msra.mxu0 %v8987
        %9214 = vmatpush.bf16.msra.mxu0 %v8986
        %9215 = vmatmul.bf16.gmra.mxu0 %v8549
        %v9216 = vpop.f32.mrf.mxu0
        %v9217 = vadd.f32 %v9204, %v9216
        %v9218 = vpop.f32.mrf.mxu0
        %9219 = vdwg.mxu0
        %9220 = vmatpush.bf16.msra.mxu0 %v9001
        %9221 = vmatpush.bf16.msra.mxu0 %v9000
        %9222 = vmatpush.bf16.msra.mxu0 %v8999
        %9223 = vmatpush.bf16.msra.mxu0 %v8998
        %9224 = vmatpush.bf16.msra.mxu0 %v8997
        %9225 = vmatpush.bf16.msra.mxu0 %v8996
        %9226 = vmatpush.bf16.msra.mxu0 %v8995
        %9227 = vmatpush.bf16.msra.mxu0 %v8994
        %9228 = vmatmul.bf16.gmra.mxu0 %v8550
        %v9229 = vpop.f32.mrf.mxu0
        %v9230 = vadd.f32 %v9217, %v9229
        %v9231 = vpop.f32.mrf.mxu0
        %9232 = vdwg.mxu0
        %v9233 = vadd.f32 %v8362, %v9230
        %s9234 = scalar_lea.vmem %s6, 4224
        %v9235 = vld [vmem:[%s9234] sm:$0xf]
        %v9236 = vld [vmem:[%s9234 + $0x4] sm:$0xf]
        %v9237 = vld [vmem:[%s9234 + $0x8] sm:$0xf]
        %v9238 = vld [vmem:[%s9234 + $0xc] sm:$0xf]
        %v9239 = vld [vmem:[%s9234 + $0x10] sm:$0xf]
        %v9240 = vld [vmem:[%s9234 + $0x14] sm:$0xf]
        %v9241 = vld [vmem:[%s9234 + $0x18] sm:$0xf]
        %v9242 = vld [vmem:[%s9234 + $0x1c] sm:$0xf]
        %v9243 = vld [vmem:[%s9234 + $0x20] sm:$0xf]
        %v9244 = vld [vmem:[%s9234 + $0x24] sm:$0xf]
        %v9245 = vld [vmem:[%s9234 + $0x28] sm:$0xf]
        %v9246 = vld [vmem:[%s9234 + $0x2c] sm:$0xf]
        %v9247 = vld [vmem:[%s9234 + $0x30] sm:$0xf]
        %v9248 = vld [vmem:[%s9234 + $0x34] sm:$0xf]
        %v9249 = vld [vmem:[%s9234 + $0x38] sm:$0xf]
        %v9250 = vld [vmem:[%s9234 + $0x3c] sm:$0xf]
        %v9251 = vld [vmem:[%s9234 + $0x40] sm:$0xf]
        %v9252 = vld [vmem:[%s9234 + $0x44] sm:$0xf]
        %v9253 = vld [vmem:[%s9234 + $0x48] sm:$0xf]
        %v9254 = vld [vmem:[%s9234 + $0x4c] sm:$0xf]
        %v9255 = vld [vmem:[%s9234 + $0x50] sm:$0xf]
        %v9256 = vld [vmem:[%s9234 + $0x54] sm:$0xf]
        %v9257 = vld [vmem:[%s9234 + $0x58] sm:$0xf]
        %v9258 = vld [vmem:[%s9234 + $0x5c] sm:$0xf]
        %v9259 = vld [vmem:[%s9234 + $0x60] sm:$0xf]
        %v9260 = vld [vmem:[%s9234 + $0x64] sm:$0xf]
        %v9261 = vld [vmem:[%s9234 + $0x68] sm:$0xf]
        %v9262 = vld [vmem:[%s9234 + $0x6c] sm:$0xf]
        %v9263 = vld [vmem:[%s9234 + $0x70] sm:$0xf]
        %v9264 = vld [vmem:[%s9234 + $0x74] sm:$0xf]
        %v9265 = vld [vmem:[%s9234 + $0x78] sm:$0xf]
        %v9266 = vld [vmem:[%s9234 + $0x7c] sm:$0xf]
        %v9267 = vld [vmem:[%s9234 + $0x80] sm:$0xf]
        %v9268 = vld [vmem:[%s9234 + $0x84] sm:$0xf]
        %v9269 = vld [vmem:[%s9234 + $0x88] sm:$0xf]
        %v9270 = vld [vmem:[%s9234 + $0x8c] sm:$0xf]
        %v9271 = vld [vmem:[%s9234 + $0x90] sm:$0xf]
        %v9272 = vld [vmem:[%s9234 + $0x94] sm:$0xf]
        %v9273 = vld [vmem:[%s9234 + $0x98] sm:$0xf]
        %v9274 = vld [vmem:[%s9234 + $0x9c] sm:$0xf]
        %v9275 = vld [vmem:[%s9234 + $0xa0] sm:$0xf]
        %v9276 = vld [vmem:[%s9234 + $0xa4] sm:$0xf]
        %v9277 = vld [vmem:[%s9234 + $0xa8] sm:$0xf]
        %v9278 = vld [vmem:[%s9234 + $0xac] sm:$0xf]
        %v9279 = vld [vmem:[%s9234 + $0xb0] sm:$0xf]
        %v9280 = vld [vmem:[%s9234 + $0xb4] sm:$0xf]
        %v9281 = vld [vmem:[%s9234 + $0xb8] sm:$0xf]
        %v9282 = vld [vmem:[%s9234 + $0xbc] sm:$0xf]
        %v9283 = vld [vmem:[%s9234 + $0xc0] sm:$0xf]
        %v9284 = vld [vmem:[%s9234 + $0xc4] sm:$0xf]
        %v9285 = vld [vmem:[%s9234 + $0xc8] sm:$0xf]
        %v9286 = vld [vmem:[%s9234 + $0xcc] sm:$0xf]
        %v9287 = vld [vmem:[%s9234 + $0xd0] sm:$0xf]
        %v9288 = vld [vmem:[%s9234 + $0xd4] sm:$0xf]
        %v9289 = vld [vmem:[%s9234 + $0xd8] sm:$0xf]
        %v9290 = vld [vmem:[%s9234 + $0xdc] sm:$0xf]
        %v9291 = vld [vmem:[%s9234 + $0xe0] sm:$0xf]
        %v9292 = vld [vmem:[%s9234 + $0xe4] sm:$0xf]
        %v9293 = vld [vmem:[%s9234 + $0xe8] sm:$0xf]
        %v9294 = vld [vmem:[%s9234 + $0xec] sm:$0xf]
        %v9295 = vld [vmem:[%s9234 + $0xf0] sm:$0xf]
        %v9296 = vld [vmem:[%s9234 + $0xf4] sm:$0xf]
        %v9297 = vld [vmem:[%s9234 + $0xf8] sm:$0xf]
        %v9298 = vld [vmem:[%s9234 + $0xfc] sm:$0xf]
        %v9299 = vld [vmem:[%s9234 + $0x100] sm:$0xf]
        %v9300 = vld [vmem:[%s9234 + $0x104] sm:$0xf]
        %v9301 = vld [vmem:[%s9234 + $0x108] sm:$0xf]
        %v9302 = vld [vmem:[%s9234 + $0x10c] sm:$0xf]
        %v9303 = vld [vmem:[%s9234 + $0x110] sm:$0xf]
        %v9304 = vld [vmem:[%s9234 + $0x114] sm:$0xf]
        %v9305 = vld [vmem:[%s9234 + $0x118] sm:$0xf]
        %v9306 = vld [vmem:[%s9234 + $0x11c] sm:$0xf]
        %v9307 = vld [vmem:[%s9234 + $0x120] sm:$0xf]
        %v9308 = vld [vmem:[%s9234 + $0x124] sm:$0xf]
        %v9309 = vld [vmem:[%s9234 + $0x128] sm:$0xf]
        %v9310 = vld [vmem:[%s9234 + $0x12c] sm:$0xf]
        %v9311 = vld [vmem:[%s9234 + $0x130] sm:$0xf]
        %v9312 = vld [vmem:[%s9234 + $0x134] sm:$0xf]
        %v9313 = vld [vmem:[%s9234 + $0x138] sm:$0xf]
        %v9314 = vld [vmem:[%s9234 + $0x13c] sm:$0xf]
        %v9315 = vld [vmem:[%s9234 + $0x140] sm:$0xf]
        %v9316 = vld [vmem:[%s9234 + $0x144] sm:$0xf]
        %v9317 = vld [vmem:[%s9234 + $0x148] sm:$0xf]
        %v9318 = vld [vmem:[%s9234 + $0x14c] sm:$0xf]
        %v9319 = vld [vmem:[%s9234 + $0x150] sm:$0xf]
        %v9320 = vld [vmem:[%s9234 + $0x154] sm:$0xf]
        %v9321 = vld [vmem:[%s9234 + $0x158] sm:$0xf]
        %v9322 = vld [vmem:[%s9234 + $0x15c] sm:$0xf]
        %v9323 = vld [vmem:[%s9234 + $0x160] sm:$0xf]
        %v9324 = vld [vmem:[%s9234 + $0x164] sm:$0xf]
        %v9325 = vld [vmem:[%s9234 + $0x168] sm:$0xf]
        %v9326 = vld [vmem:[%s9234 + $0x16c] sm:$0xf]
        %v9327 = vld [vmem:[%s9234 + $0x170] sm:$0xf]
        %v9328 = vld [vmem:[%s9234 + $0x174] sm:$0xf]
        %v9329 = vld [vmem:[%s9234 + $0x178] sm:$0xf]
        %v9330 = vld [vmem:[%s9234 + $0x17c] sm:$0xf]
        %v9331 = vld [vmem:[%s9234 + $0x180] sm:$0xf]
        %v9332 = vld [vmem:[%s9234 + $0x184] sm:$0xf]
        %v9333 = vld [vmem:[%s9234 + $0x188] sm:$0xf]
        %v9334 = vld [vmem:[%s9234 + $0x18c] sm:$0xf]
        %v9335 = vld [vmem:[%s9234 + $0x190] sm:$0xf]
        %v9336 = vld [vmem:[%s9234 + $0x194] sm:$0xf]
        %v9337 = vld [vmem:[%s9234 + $0x198] sm:$0xf]
        %v9338 = vld [vmem:[%s9234 + $0x19c] sm:$0xf]
        %v9339 = vld [vmem:[%s9234 + $0x1a0] sm:$0xf]
        %v9340 = vld [vmem:[%s9234 + $0x1a4] sm:$0xf]
        %v9341 = vld [vmem:[%s9234 + $0x1a8] sm:$0xf]
        %v9342 = vld [vmem:[%s9234 + $0x1ac] sm:$0xf]
        %v9343 = vld [vmem:[%s9234 + $0x1b0] sm:$0xf]
        %v9344 = vld [vmem:[%s9234 + $0x1b4] sm:$0xf]
        %v9345 = vld [vmem:[%s9234 + $0x1b8] sm:$0xf]
        %v9346 = vld [vmem:[%s9234 + $0x1bc] sm:$0xf]
        %v9347 = vld [vmem:[%s9234 + $0x1c0] sm:$0xf]
        %v9348 = vld [vmem:[%s9234 + $0x1c4] sm:$0xf]
        %v9349 = vld [vmem:[%s9234 + $0x1c8] sm:$0xf]
        %v9350 = vld [vmem:[%s9234 + $0x1cc] sm:$0xf]
        %v9351 = vld [vmem:[%s9234 + $0x1d0] sm:$0xf]
        %v9352 = vld [vmem:[%s9234 + $0x1d4] sm:$0xf]
        %v9353 = vld [vmem:[%s9234 + $0x1d8] sm:$0xf]
        %v9354 = vld [vmem:[%s9234 + $0x1dc] sm:$0xf]
        %v9355 = vld [vmem:[%s9234 + $0x1e0] sm:$0xf]
        %v9356 = vld [vmem:[%s9234 + $0x1e4] sm:$0xf]
        %v9357 = vld [vmem:[%s9234 + $0x1e8] sm:$0xf]
        %v9358 = vld [vmem:[%s9234 + $0x1ec] sm:$0xf]
        %v9359 = vld [vmem:[%s9234 + $0x1f0] sm:$0xf]
        %v9360 = vld [vmem:[%s9234 + $0x1f4] sm:$0xf]
        %v9361 = vld [vmem:[%s9234 + $0x1f8] sm:$0xf]
        %v9362 = vld [vmem:[%s9234 + $0x1fc] sm:$0xf]
        %v9363 = vld [vmem:[%s9234 + $0x200] sm:$0xf]
        %v9364 = vld [vmem:[%s9234 + $0x204] sm:$0xf]
        %v9365 = vld [vmem:[%s9234 + $0x208] sm:$0xf]
        %v9366 = vld [vmem:[%s9234 + $0x20c] sm:$0xf]
        %v9367 = vld [vmem:[%s9234 + $0x210] sm:$0xf]
        %v9368 = vld [vmem:[%s9234 + $0x214] sm:$0xf]
        %v9369 = vld [vmem:[%s9234 + $0x218] sm:$0xf]
        %v9370 = vld [vmem:[%s9234 + $0x21c] sm:$0xf]
        %v9371 = vld [vmem:[%s9234 + $0x220] sm:$0xf]
        %v9372 = vld [vmem:[%s9234 + $0x224] sm:$0xf]
        %v9373 = vld [vmem:[%s9234 + $0x228] sm:$0xf]
        %v9374 = vld [vmem:[%s9234 + $0x22c] sm:$0xf]
        %v9375 = vld [vmem:[%s9234 + $0x230] sm:$0xf]
        %v9376 = vld [vmem:[%s9234 + $0x234] sm:$0xf]
        %v9377 = vld [vmem:[%s9234 + $0x238] sm:$0xf]
        %v9378 = vld [vmem:[%s9234 + $0x23c] sm:$0xf]
        %v9379 = vld [vmem:[%s9234 + $0x240] sm:$0xf]
        %v9380 = vld [vmem:[%s9234 + $0x244] sm:$0xf]
        %v9381 = vld [vmem:[%s9234 + $0x248] sm:$0xf]
        %v9382 = vld [vmem:[%s9234 + $0x24c] sm:$0xf]
        %v9383 = vld [vmem:[%s9234 + $0x250] sm:$0xf]
        %v9384 = vld [vmem:[%s9234 + $0x254] sm:$0xf]
        %v9385 = vld [vmem:[%s9234 + $0x258] sm:$0xf]
        %v9386 = vld [vmem:[%s9234 + $0x25c] sm:$0xf]
        %v9387 = vld [vmem:[%s9234 + $0x260] sm:$0xf]
        %v9388 = vld [vmem:[%s9234 + $0x264] sm:$0xf]
        %v9389 = vld [vmem:[%s9234 + $0x268] sm:$0xf]
        %v9390 = vld [vmem:[%s9234 + $0x26c] sm:$0xf]
        %v9391 = vld [vmem:[%s9234 + $0x270] sm:$0xf]
        %v9392 = vld [vmem:[%s9234 + $0x274] sm:$0xf]
        %v9393 = vld [vmem:[%s9234 + $0x278] sm:$0xf]
        %v9394 = vld [vmem:[%s9234 + $0x27c] sm:$0xf]
        %v9395 = vld [vmem:[%s9234 + $0x280] sm:$0xf]
        %v9396 = vld [vmem:[%s9234 + $0x284] sm:$0xf]
        %v9397 = vld [vmem:[%s9234 + $0x288] sm:$0xf]
        %v9398 = vld [vmem:[%s9234 + $0x28c] sm:$0xf]
        %v9399 = vld [vmem:[%s9234 + $0x290] sm:$0xf]
        %v9400 = vld [vmem:[%s9234 + $0x294] sm:$0xf]
        %v9401 = vld [vmem:[%s9234 + $0x298] sm:$0xf]
        %v9402 = vld [vmem:[%s9234 + $0x29c] sm:$0xf]
        %v9403 = vld [vmem:[%s9234 + $0x2a0] sm:$0xf]
        %v9404 = vld [vmem:[%s9234 + $0x2a4] sm:$0xf]
        %v9405 = vld [vmem:[%s9234 + $0x2a8] sm:$0xf]
        %v9406 = vld [vmem:[%s9234 + $0x2ac] sm:$0xf]
        %v9407 = vld [vmem:[%s9234 + $0x2b0] sm:$0xf]
        %v9408 = vld [vmem:[%s9234 + $0x2b4] sm:$0xf]
        %v9409 = vld [vmem:[%s9234 + $0x2b8] sm:$0xf]
        %v9410 = vld [vmem:[%s9234 + $0x2bc] sm:$0xf]
        %v9411 = vrot.slane %v3987, 3
        %v9412 = vrot.slane %v3988, 3
        %v9413 = vrot.slane %v3989, 3
        %v9414 = vrot.slane %v3990, 3
        %v9415 = vrot.slane %v3991, 3
        %v9416 = vrot.slane %v3992, 3
        %v9417 = vrot.slane %v3993, 3
        %v9418 = vrot.slane %v3994, 3
        %v9419 = vrot.slane %v3995, 3
        %v9420 = vrot.slane %v3996, 3
        %v9421 = vrot.slane %v3997, 3
        %v9609 = vunpack.c.l.b16 %v9235
        %v9610 = vunpack.c.l.b16 %v9236
        %v9611 = vunpack.c.l.b16 %v9237
        %v9612 = vunpack.c.l.b16 %v9238
        %v9613 = vunpack.c.l.b16 %v9239
        %v9614 = vunpack.c.l.b16 %v9240
        %v9615 = vunpack.c.l.b16 %v9241
        %v9616 = vunpack.c.l.b16 %v9242
        %v9617 = vunpack.c.l.b16 %v9243
        %v9618 = vunpack.c.l.b16 %v9244
        %v9619 = vunpack.c.l.b16 %v9245
        %v9620 = vunpack.c.l.b16 %v9246
        %v9621 = vunpack.c.l.b16 %v9247
        %v9622 = vunpack.c.l.b16 %v9248
        %v9623 = vunpack.c.l.b16 %v9249
        %v9624 = vunpack.c.l.b16 %v9250
        %v9625 = vunpack.c.l.b16 %v9251
        %v9626 = vunpack.c.l.b16 %v9252
        %v9627 = vunpack.c.l.b16 %v9253
        %v9628 = vunpack.c.l.b16 %v9254
        %v9629 = vunpack.c.l.b16 %v9255
        %v9630 = vunpack.c.l.b16 %v9256
        %v9631 = vunpack.c.l.b16 %v9257
        %v9632 = vunpack.c.l.b16 %v9258
        %v9633 = vunpack.c.l.b16 %v9259
        %v9634 = vunpack.c.l.b16 %v9260
        %v9635 = vunpack.c.l.b16 %v9261
        %v9636 = vunpack.c.l.b16 %v9262
        %v9637 = vunpack.c.l.b16 %v9263
        %v9638 = vunpack.c.l.b16 %v9264
        %v9639 = vunpack.c.l.b16 %v9265
        %v9640 = vunpack.c.l.b16 %v9266
        %v9641 = vunpack.c.l.b16 %v9267
        %v9642 = vunpack.c.l.b16 %v9268
        %v9643 = vunpack.c.l.b16 %v9269
        %v9644 = vunpack.c.l.b16 %v9270
        %v9645 = vunpack.c.l.b16 %v9271
        %v9646 = vunpack.c.l.b16 %v9272
        %v9647 = vunpack.c.l.b16 %v9273
        %v9648 = vunpack.c.l.b16 %v9274
        %v9649 = vunpack.c.l.b16 %v9275
        %v9650 = vunpack.c.l.b16 %v9276
        %v9651 = vunpack.c.l.b16 %v9277
        %v9652 = vunpack.c.l.b16 %v9278
        %v9653 = vunpack.c.l.b16 %v9279
        %v9654 = vunpack.c.l.b16 %v9280
        %v9655 = vunpack.c.l.b16 %v9281
        %v9656 = vunpack.c.l.b16 %v9282
        %v9657 = vunpack.c.l.b16 %v9283
        %v9658 = vunpack.c.l.b16 %v9284
        %v9659 = vunpack.c.l.b16 %v9285
        %v9660 = vunpack.c.l.b16 %v9286
        %v9661 = vunpack.c.l.b16 %v9287
        %v9662 = vunpack.c.l.b16 %v9288
        %v9663 = vunpack.c.l.b16 %v9289
        %v9664 = vunpack.c.l.b16 %v9290
        %v9665 = vunpack.c.l.b16 %v9291
        %v9666 = vunpack.c.l.b16 %v9292
        %v9667 = vunpack.c.l.b16 %v9293
        %v9668 = vunpack.c.l.b16 %v9294
        %v9669 = vunpack.c.l.b16 %v9295
        %v9670 = vunpack.c.l.b16 %v9296
        %v9671 = vunpack.c.l.b16 %v9297
        %v9672 = vunpack.c.l.b16 %v9298
        %v9673 = vunpack.c.l.b16 %v9299
        %v9674 = vunpack.c.l.b16 %v9300
        %v9675 = vunpack.c.l.b16 %v9301
        %v9676 = vunpack.c.l.b16 %v9302
        %v9677 = vunpack.c.l.b16 %v9303
        %v9678 = vunpack.c.l.b16 %v9304
        %v9679 = vunpack.c.l.b16 %v9305
        %v9680 = vunpack.c.l.b16 %v9306
        %v9681 = vunpack.c.l.b16 %v9307
        %v9682 = vunpack.c.l.b16 %v9308
        %v9683 = vunpack.c.l.b16 %v9309
        %v9684 = vunpack.c.l.b16 %v9310
        %v9685 = vunpack.c.l.b16 %v9311
        %v9686 = vunpack.c.l.b16 %v9312
        %v9687 = vunpack.c.l.b16 %v9313
        %v9688 = vunpack.c.l.b16 %v9314
        %v9689 = vunpack.c.l.b16 %v9315
        %v9690 = vunpack.c.l.b16 %v9316
        %v9691 = vunpack.c.l.b16 %v9317
        %v9692 = vunpack.c.l.b16 %v9318
        %v9693 = vunpack.c.l.b16 %v9319
        %v9694 = vunpack.c.l.b16 %v9320
        %v9695 = vunpack.c.l.b16 %v9321
        %v9696 = vunpack.c.l.b16 %v9322
        %v9697 = vunpack.c.l.b16 %v9323
        %v9698 = vunpack.c.l.b16 %v9324
        %v9699 = vunpack.c.l.b16 %v9325
        %v9700 = vunpack.c.l.b16 %v9326
        %v9701 = vunpack.c.l.b16 %v9327
        %v9702 = vunpack.c.l.b16 %v9328
        %v9703 = vunpack.c.l.b16 %v9329
        %v9704 = vunpack.c.l.b16 %v9330
        %v9705 = vunpack.c.l.b16 %v9331
        %v9706 = vunpack.c.l.b16 %v9332
        %v9707 = vunpack.c.l.b16 %v9333
        %v9708 = vunpack.c.l.b16 %v9334
        %v9709 = vunpack.c.l.b16 %v9335
        %v9710 = vunpack.c.l.b16 %v9336
        %v9711 = vunpack.c.l.b16 %v9337
        %v9712 = vunpack.c.l.b16 %v9338
        %v9713 = vunpack.c.l.b16 %v9339
        %v9714 = vunpack.c.l.b16 %v9340
        %v9715 = vunpack.c.l.b16 %v9341
        %v9716 = vunpack.c.l.b16 %v9342
        %v9717 = vunpack.c.l.b16 %v9343
        %v9718 = vunpack.c.l.b16 %v9344
        %v9719 = vunpack.c.l.b16 %v9345
        %v9720 = vunpack.c.l.b16 %v9346
        %v9721 = vunpack.c.l.b16 %v9347
        %v9722 = vunpack.c.l.b16 %v9348
        %v9723 = vunpack.c.l.b16 %v9349
        %v9724 = vunpack.c.l.b16 %v9350
        %v9725 = vunpack.c.l.b16 %v9351
        %v9726 = vunpack.c.l.b16 %v9352
        %v9727 = vunpack.c.l.b16 %v9353
        %v9728 = vunpack.c.l.b16 %v9354
        %v9729 = vunpack.c.l.b16 %v9355
        %v9730 = vunpack.c.l.b16 %v9356
        %v9731 = vunpack.c.l.b16 %v9357
        %v9732 = vunpack.c.l.b16 %v9358
        %v9733 = vunpack.c.l.b16 %v9359
        %v9734 = vunpack.c.l.b16 %v9360
        %v9735 = vunpack.c.l.b16 %v9361
        %v9736 = vunpack.c.l.b16 %v9362
        %v9737 = vunpack.c.l.b16 %v9363
        %v9738 = vunpack.c.l.b16 %v9364
        %v9739 = vunpack.c.l.b16 %v9365
        %v9740 = vunpack.c.l.b16 %v9366
        %v9741 = vunpack.c.l.b16 %v9367
        %v9742 = vunpack.c.l.b16 %v9368
        %v9743 = vunpack.c.l.b16 %v9369
        %v9744 = vunpack.c.l.b16 %v9370
        %v9745 = vunpack.c.l.b16 %v9371
        %v9746 = vunpack.c.l.b16 %v9372
        %v9747 = vunpack.c.l.b16 %v9373
        %v9748 = vunpack.c.l.b16 %v9374
        %v9749 = vunpack.c.l.b16 %v9375
        %v9750 = vunpack.c.l.b16 %v9376
        %v9751 = vunpack.c.l.b16 %v9377
        %v9752 = vunpack.c.l.b16 %v9378
        %v9753 = vunpack.c.l.b16 %v9379
        %v9754 = vunpack.c.l.b16 %v9380
        %v9755 = vunpack.c.l.b16 %v9381
        %v9756 = vunpack.c.l.b16 %v9382
        %v9757 = vunpack.c.l.b16 %v9383
        %v9758 = vunpack.c.l.b16 %v9384
        %v9759 = vunpack.c.l.b16 %v9385
        %v9760 = vunpack.c.l.b16 %v9386
        %v9761 = vunpack.c.l.b16 %v9387
        %v9762 = vunpack.c.l.b16 %v9388
        %v9763 = vunpack.c.l.b16 %v9389
        %v9764 = vunpack.c.l.b16 %v9390
        %v9765 = vunpack.c.l.b16 %v9391
        %v9766 = vunpack.c.l.b16 %v9392
        %v9767 = vunpack.c.l.b16 %v9393
        %v9768 = vunpack.c.l.b16 %v9394
        %v9769 = vunpack.c.l.b16 %v9395
        %v9770 = vunpack.c.l.b16 %v9396
        %v9771 = vunpack.c.l.b16 %v9397
        %v9772 = vunpack.c.l.b16 %v9398
        %v9773 = vunpack.c.l.b16 %v9399
        %v9774 = vunpack.c.l.b16 %v9400
        %v9775 = vunpack.c.l.b16 %v9401
        %v9776 = vunpack.c.l.b16 %v9402
        %v9777 = vunpack.c.l.b16 %v9403
        %v9778 = vunpack.c.l.b16 %v9404
        %v9779 = vunpack.c.l.b16 %v9405
        %v9780 = vunpack.c.l.b16 %v9406
        %v9781 = vunpack.c.l.b16 %v9407
        %v9782 = vunpack.c.l.b16 %v9408
        %v9783 = vunpack.c.l.b16 %v9409
        %v9784 = vunpack.c.l.b16 %v9410
        %v9785 = vpack.c.b16 %v9610, %v9609
        %v9786 = vpack.c.b16 %v9612, %v9611
        %v9787 = vpack.c.b16 %v9614, %v9613
        %v9788 = vpack.c.b16 %v9616, %v9615
        %v9789 = vpack.c.b16 %v9618, %v9617
        %v9790 = vpack.c.b16 %v9620, %v9619
        %v9791 = vpack.c.b16 %v9622, %v9621
        %v9792 = vpack.c.b16 %v9624, %v9623
        %v9793 = vpack.c.b16 %v9626, %v9625
        %v9794 = vpack.c.b16 %v9628, %v9627
        %v9795 = vpack.c.b16 %v9630, %v9629
        %v9796 = vpack.c.b16 %v9632, %v9631
        %v9797 = vpack.c.b16 %v9634, %v9633
        %v9798 = vpack.c.b16 %v9636, %v9635
        %v9799 = vpack.c.b16 %v9638, %v9637
        %v9800 = vpack.c.b16 %v9640, %v9639
        %v9801 = vpack.c.b16 %v9642, %v9641
        %v9802 = vpack.c.b16 %v9644, %v9643
        %v9803 = vpack.c.b16 %v9646, %v9645
        %v9804 = vpack.c.b16 %v9648, %v9647
        %v9805 = vpack.c.b16 %v9650, %v9649
        %v9806 = vpack.c.b16 %v9652, %v9651
        %v9807 = vpack.c.b16 %v9654, %v9653
        %v9808 = vpack.c.b16 %v9656, %v9655
        %v9809 = vpack.c.b16 %v9658, %v9657
        %v9810 = vpack.c.b16 %v9660, %v9659
        %v9811 = vpack.c.b16 %v9662, %v9661
        %v9812 = vpack.c.b16 %v9664, %v9663
        %v9813 = vpack.c.b16 %v9666, %v9665
        %v9814 = vpack.c.b16 %v9668, %v9667
        %v9815 = vpack.c.b16 %v9670, %v9669
        %v9816 = vpack.c.b16 %v9672, %v9671
        %v9817 = vpack.c.b16 %v9674, %v9673
        %v9818 = vpack.c.b16 %v9676, %v9675
        %v9819 = vpack.c.b16 %v9678, %v9677
        %v9820 = vpack.c.b16 %v9680, %v9679
        %v9821 = vpack.c.b16 %v9682, %v9681
        %v9822 = vpack.c.b16 %v9684, %v9683
        %v9823 = vpack.c.b16 %v9686, %v9685
        %v9824 = vpack.c.b16 %v9688, %v9687
        %v9825 = vpack.c.b16 %v9690, %v9689
        %v9826 = vpack.c.b16 %v9692, %v9691
        %v9827 = vpack.c.b16 %v9694, %v9693
        %v9828 = vpack.c.b16 %v9696, %v9695
        %v9829 = vpack.c.b16 %v9698, %v9697
        %v9830 = vpack.c.b16 %v9700, %v9699
        %v9831 = vpack.c.b16 %v9702, %v9701
        %v9832 = vpack.c.b16 %v9704, %v9703
        %v9833 = vpack.c.b16 %v9706, %v9705
        %v9834 = vpack.c.b16 %v9708, %v9707
        %v9835 = vpack.c.b16 %v9710, %v9709
        %v9836 = vpack.c.b16 %v9712, %v9711
        %v9837 = vpack.c.b16 %v9714, %v9713
        %v9838 = vpack.c.b16 %v9716, %v9715
        %v9839 = vpack.c.b16 %v9718, %v9717
        %v9840 = vpack.c.b16 %v9720, %v9719
        %v9841 = vpack.c.b16 %v9722, %v9721
        %v9842 = vpack.c.b16 %v9724, %v9723
        %v9843 = vpack.c.b16 %v9726, %v9725
        %v9844 = vpack.c.b16 %v9728, %v9727
        %v9845 = vpack.c.b16 %v9730, %v9729
        %v9846 = vpack.c.b16 %v9732, %v9731
        %v9847 = vpack.c.b16 %v9734, %v9733
        %v9848 = vpack.c.b16 %v9736, %v9735
        %v9849 = vpack.c.b16 %v9738, %v9737
        %v9850 = vpack.c.b16 %v9740, %v9739
        %v9851 = vpack.c.b16 %v9742, %v9741
        %v9852 = vpack.c.b16 %v9744, %v9743
        %v9853 = vpack.c.b16 %v9746, %v9745
        %v9854 = vpack.c.b16 %v9748, %v9747
        %v9855 = vpack.c.b16 %v9750, %v9749
        %v9856 = vpack.c.b16 %v9752, %v9751
        %v9857 = vpack.c.b16 %v9754, %v9753
        %v9858 = vpack.c.b16 %v9756, %v9755
        %v9859 = vpack.c.b16 %v9758, %v9757
        %v9860 = vpack.c.b16 %v9760, %v9759
        %v9861 = vpack.c.b16 %v9762, %v9761
        %v9862 = vpack.c.b16 %v9764, %v9763
        %v9863 = vpack.c.b16 %v9766, %v9765
        %v9864 = vpack.c.b16 %v9768, %v9767
        %v9865 = vpack.c.b16 %v9770, %v9769
        %v9866 = vpack.c.b16 %v9772, %v9771
        %v9867 = vpack.c.b16 %v9774, %v9773
        %v9868 = vpack.c.b16 %v9776, %v9775
        %v9869 = vpack.c.b16 %v9778, %v9777
        %v9870 = vpack.c.b16 %v9780, %v9779
        %v9871 = vpack.c.b16 %v9782, %v9781
        %v9872 = vpack.c.b16 %v9784, %v9783
        %9961 = vmatpush.bf16.msra.mxu0 %v9792
        %9962 = vmatpush.bf16.msra.mxu0 %v9791
        %9963 = vmatpush.bf16.msra.mxu0 %v9790
        %9964 = vmatpush.bf16.msra.mxu0 %v9789
        %9965 = vmatpush.bf16.msra.mxu0 %v9788
        %9966 = vmatpush.bf16.msra.mxu0 %v9787
        %9967 = vmatpush.bf16.msra.mxu0 %v9786
        %9968 = vmatpush.bf16.msra.mxu0 %v9785
        %9969 = vmatmul.bf16.gmra.mxu0 %v9411
        %v9970 = vpop.f32.mrf.mxu0
        %v9971 = vadd.f32 0.0, %v9970
        %v9972 = vpop.f32.mrf.mxu0
        %9973 = vdwg.mxu0
        %9974 = vmatpush.bf16.msra.mxu0 %v9800
        %9975 = vmatpush.bf16.msra.mxu0 %v9799
        %9976 = vmatpush.bf16.msra.mxu0 %v9798
        %9977 = vmatpush.bf16.msra.mxu0 %v9797
        %9978 = vmatpush.bf16.msra.mxu0 %v9796
        %9979 = vmatpush.bf16.msra.mxu0 %v9795
        %9980 = vmatpush.bf16.msra.mxu0 %v9794
        %9981 = vmatpush.bf16.msra.mxu0 %v9793
        %9982 = vmatmul.bf16.gmra.mxu0 %v9412
        %v9983 = vpop.f32.mrf.mxu0
        %v9984 = vadd.f32 %v9971, %v9983
        %v9985 = vpop.f32.mrf.mxu0
        %9986 = vdwg.mxu0
        %9987 = vmatpush.bf16.msra.mxu0 %v9808
        %9988 = vmatpush.bf16.msra.mxu0 %v9807
        %9989 = vmatpush.bf16.msra.mxu0 %v9806
        %9990 = vmatpush.bf16.msra.mxu0 %v9805
        %9991 = vmatpush.bf16.msra.mxu0 %v9804
        %9992 = vmatpush.bf16.msra.mxu0 %v9803
        %9993 = vmatpush.bf16.msra.mxu0 %v9802
        %9994 = vmatpush.bf16.msra.mxu0 %v9801
        %9995 = vmatmul.bf16.gmra.mxu0 %v9413
        %v9996 = vpop.f32.mrf.mxu0
        %v9997 = vadd.f32 %v9984, %v9996
        %v9998 = vpop.f32.mrf.mxu0
        %9999 = vdwg.mxu0
        %10000 = vmatpush.bf16.msra.mxu0 %v9816
        %10001 = vmatpush.bf16.msra.mxu0 %v9815
        %10002 = vmatpush.bf16.msra.mxu0 %v9814
        %10003 = vmatpush.bf16.msra.mxu0 %v9813
        %10004 = vmatpush.bf16.msra.mxu0 %v9812
        %10005 = vmatpush.bf16.msra.mxu0 %v9811
        %10006 = vmatpush.bf16.msra.mxu0 %v9810
        %10007 = vmatpush.bf16.msra.mxu0 %v9809
        %10008 = vmatmul.bf16.gmra.mxu0 %v9414
        %v10009 = vpop.f32.mrf.mxu0
        %v10010 = vadd.f32 %v9997, %v10009
        %v10011 = vpop.f32.mrf.mxu0
        %10012 = vdwg.mxu0
        %10013 = vmatpush.bf16.msra.mxu0 %v9824
        %10014 = vmatpush.bf16.msra.mxu0 %v9823
        %10015 = vmatpush.bf16.msra.mxu0 %v9822
        %10016 = vmatpush.bf16.msra.mxu0 %v9821
        %10017 = vmatpush.bf16.msra.mxu0 %v9820
        %10018 = vmatpush.bf16.msra.mxu0 %v9819
        %10019 = vmatpush.bf16.msra.mxu0 %v9818
        %10020 = vmatpush.bf16.msra.mxu0 %v9817
        %10021 = vmatmul.bf16.gmra.mxu0 %v9415
        %v10022 = vpop.f32.mrf.mxu0
        %v10023 = vadd.f32 %v10010, %v10022
        %v10024 = vpop.f32.mrf.mxu0
        %10025 = vdwg.mxu0
        %10026 = vmatpush.bf16.msra.mxu0 %v9832
        %10027 = vmatpush.bf16.msra.mxu0 %v9831
        %10028 = vmatpush.bf16.msra.mxu0 %v9830
        %10029 = vmatpush.bf16.msra.mxu0 %v9829
        %10030 = vmatpush.bf16.msra.mxu0 %v9828
        %10031 = vmatpush.bf16.msra.mxu0 %v9827
        %10032 = vmatpush.bf16.msra.mxu0 %v9826
        %10033 = vmatpush.bf16.msra.mxu0 %v9825
        %10034 = vmatmul.bf16.gmra.mxu0 %v9416
        %v10035 = vpop.f32.mrf.mxu0
        %v10036 = vadd.f32 %v10023, %v10035
        %v10037 = vpop.f32.mrf.mxu0
        %10038 = vdwg.mxu0
        %10039 = vmatpush.bf16.msra.mxu0 %v9840
        %10040 = vmatpush.bf16.msra.mxu0 %v9839
        %10041 = vmatpush.bf16.msra.mxu0 %v9838
        %10042 = vmatpush.bf16.msra.mxu0 %v9837
        %10043 = vmatpush.bf16.msra.mxu0 %v9836
        %10044 = vmatpush.bf16.msra.mxu0 %v9835
        %10045 = vmatpush.bf16.msra.mxu0 %v9834
        %10046 = vmatpush.bf16.msra.mxu0 %v9833
        %10047 = vmatmul.bf16.gmra.mxu0 %v9417
        %v10048 = vpop.f32.mrf.mxu0
        %v10049 = vadd.f32 %v10036, %v10048
        %v10050 = vpop.f32.mrf.mxu0
        %10051 = vdwg.mxu0
        %10052 = vmatpush.bf16.msra.mxu0 %v9848
        %10053 = vmatpush.bf16.msra.mxu0 %v9847
        %10054 = vmatpush.bf16.msra.mxu0 %v9846
        %10055 = vmatpush.bf16.msra.mxu0 %v9845
        %10056 = vmatpush.bf16.msra.mxu0 %v9844
        %10057 = vmatpush.bf16.msra.mxu0 %v9843
        %10058 = vmatpush.bf16.msra.mxu0 %v9842
        %10059 = vmatpush.bf16.msra.mxu0 %v9841
        %10060 = vmatmul.bf16.gmra.mxu0 %v9418
        %v10061 = vpop.f32.mrf.mxu0
        %v10062 = vadd.f32 %v10049, %v10061
        %v10063 = vpop.f32.mrf.mxu0
        %10064 = vdwg.mxu0
        %10065 = vmatpush.bf16.msra.mxu0 %v9856
        %10066 = vmatpush.bf16.msra.mxu0 %v9855
        %10067 = vmatpush.bf16.msra.mxu0 %v9854
        %10068 = vmatpush.bf16.msra.mxu0 %v9853
        %10069 = vmatpush.bf16.msra.mxu0 %v9852
        %10070 = vmatpush.bf16.msra.mxu0 %v9851
        %10071 = vmatpush.bf16.msra.mxu0 %v9850
        %10072 = vmatpush.bf16.msra.mxu0 %v9849
        %10073 = vmatmul.bf16.gmra.mxu0 %v9419
        %v10074 = vpop.f32.mrf.mxu0
        %v10075 = vadd.f32 %v10062, %v10074
        %v10076 = vpop.f32.mrf.mxu0
        %10077 = vdwg.mxu0
        %10078 = vmatpush.bf16.msra.mxu0 %v9864
        %10079 = vmatpush.bf16.msra.mxu0 %v9863
        %10080 = vmatpush.bf16.msra.mxu0 %v9862
        %10081 = vmatpush.bf16.msra.mxu0 %v9861
        %10082 = vmatpush.bf16.msra.mxu0 %v9860
        %10083 = vmatpush.bf16.msra.mxu0 %v9859
        %10084 = vmatpush.bf16.msra.mxu0 %v9858
        %10085 = vmatpush.bf16.msra.mxu0 %v9857
        %10086 = vmatmul.bf16.gmra.mxu0 %v9420
        %v10087 = vpop.f32.mrf.mxu0
        %v10088 = vadd.f32 %v10075, %v10087
        %v10089 = vpop.f32.mrf.mxu0
        %10090 = vdwg.mxu0
        %10091 = vmatpush.bf16.msra.mxu0 %v9872
        %10092 = vmatpush.bf16.msra.mxu0 %v9871
        %10093 = vmatpush.bf16.msra.mxu0 %v9870
        %10094 = vmatpush.bf16.msra.mxu0 %v9869
        %10095 = vmatpush.bf16.msra.mxu0 %v9868
        %10096 = vmatpush.bf16.msra.mxu0 %v9867
        %10097 = vmatpush.bf16.msra.mxu0 %v9866
        %10098 = vmatpush.bf16.msra.mxu0 %v9865
        %10099 = vmatmul.bf16.gmra.mxu0 %v9421
        %v10100 = vpop.f32.mrf.mxu0
        %v10101 = vadd.f32 %v10088, %v10100
        %v10102 = vpop.f32.mrf.mxu0
        %10103 = vdwg.mxu0
        %v10104 = vadd.f32 %v9233, %v10101
        %s10105 = scalar_lea.vmem %s6, 4928
        %v10106 = vld [vmem:[%s10105] sm:$0xf]
        %v10107 = vld [vmem:[%s10105 + $0x4] sm:$0xf]
        %v10108 = vld [vmem:[%s10105 + $0x8] sm:$0xf]
        %v10109 = vld [vmem:[%s10105 + $0xc] sm:$0xf]
        %v10110 = vld [vmem:[%s10105 + $0x10] sm:$0xf]
        %v10111 = vld [vmem:[%s10105 + $0x14] sm:$0xf]
        %v10112 = vld [vmem:[%s10105 + $0x18] sm:$0xf]
        %v10113 = vld [vmem:[%s10105 + $0x1c] sm:$0xf]
        %v10114 = vld [vmem:[%s10105 + $0x20] sm:$0xf]
        %v10115 = vld [vmem:[%s10105 + $0x24] sm:$0xf]
        %v10116 = vld [vmem:[%s10105 + $0x28] sm:$0xf]
        %v10117 = vld [vmem:[%s10105 + $0x2c] sm:$0xf]
        %v10118 = vld [vmem:[%s10105 + $0x30] sm:$0xf]
        %v10119 = vld [vmem:[%s10105 + $0x34] sm:$0xf]
        %v10120 = vld [vmem:[%s10105 + $0x38] sm:$0xf]
        %v10121 = vld [vmem:[%s10105 + $0x3c] sm:$0xf]
        %v10122 = vld [vmem:[%s10105 + $0x40] sm:$0xf]
        %v10123 = vld [vmem:[%s10105 + $0x44] sm:$0xf]
        %v10124 = vld [vmem:[%s10105 + $0x48] sm:$0xf]
        %v10125 = vld [vmem:[%s10105 + $0x4c] sm:$0xf]
        %v10126 = vld [vmem:[%s10105 + $0x50] sm:$0xf]
        %v10127 = vld [vmem:[%s10105 + $0x54] sm:$0xf]
        %v10128 = vld [vmem:[%s10105 + $0x58] sm:$0xf]
        %v10129 = vld [vmem:[%s10105 + $0x5c] sm:$0xf]
        %v10130 = vld [vmem:[%s10105 + $0x60] sm:$0xf]
        %v10131 = vld [vmem:[%s10105 + $0x64] sm:$0xf]
        %v10132 = vld [vmem:[%s10105 + $0x68] sm:$0xf]
        %v10133 = vld [vmem:[%s10105 + $0x6c] sm:$0xf]
        %v10134 = vld [vmem:[%s10105 + $0x70] sm:$0xf]
        %v10135 = vld [vmem:[%s10105 + $0x74] sm:$0xf]
        %v10136 = vld [vmem:[%s10105 + $0x78] sm:$0xf]
        %v10137 = vld [vmem:[%s10105 + $0x7c] sm:$0xf]
        %v10138 = vld [vmem:[%s10105 + $0x80] sm:$0xf]
        %v10139 = vld [vmem:[%s10105 + $0x84] sm:$0xf]
        %v10140 = vld [vmem:[%s10105 + $0x88] sm:$0xf]
        %v10141 = vld [vmem:[%s10105 + $0x8c] sm:$0xf]
        %v10142 = vld [vmem:[%s10105 + $0x90] sm:$0xf]
        %v10143 = vld [vmem:[%s10105 + $0x94] sm:$0xf]
        %v10144 = vld [vmem:[%s10105 + $0x98] sm:$0xf]
        %v10145 = vld [vmem:[%s10105 + $0x9c] sm:$0xf]
        %v10146 = vld [vmem:[%s10105 + $0xa0] sm:$0xf]
        %v10147 = vld [vmem:[%s10105 + $0xa4] sm:$0xf]
        %v10148 = vld [vmem:[%s10105 + $0xa8] sm:$0xf]
        %v10149 = vld [vmem:[%s10105 + $0xac] sm:$0xf]
        %v10150 = vld [vmem:[%s10105 + $0xb0] sm:$0xf]
        %v10151 = vld [vmem:[%s10105 + $0xb4] sm:$0xf]
        %v10152 = vld [vmem:[%s10105 + $0xb8] sm:$0xf]
        %v10153 = vld [vmem:[%s10105 + $0xbc] sm:$0xf]
        %v10154 = vld [vmem:[%s10105 + $0xc0] sm:$0xf]
        %v10155 = vld [vmem:[%s10105 + $0xc4] sm:$0xf]
        %v10156 = vld [vmem:[%s10105 + $0xc8] sm:$0xf]
        %v10157 = vld [vmem:[%s10105 + $0xcc] sm:$0xf]
        %v10158 = vld [vmem:[%s10105 + $0xd0] sm:$0xf]
        %v10159 = vld [vmem:[%s10105 + $0xd4] sm:$0xf]
        %v10160 = vld [vmem:[%s10105 + $0xd8] sm:$0xf]
        %v10161 = vld [vmem:[%s10105 + $0xdc] sm:$0xf]
        %v10162 = vld [vmem:[%s10105 + $0xe0] sm:$0xf]
        %v10163 = vld [vmem:[%s10105 + $0xe4] sm:$0xf]
        %v10164 = vld [vmem:[%s10105 + $0xe8] sm:$0xf]
        %v10165 = vld [vmem:[%s10105 + $0xec] sm:$0xf]
        %v10166 = vld [vmem:[%s10105 + $0xf0] sm:$0xf]
        %v10167 = vld [vmem:[%s10105 + $0xf4] sm:$0xf]
        %v10168 = vld [vmem:[%s10105 + $0xf8] sm:$0xf]
        %v10169 = vld [vmem:[%s10105 + $0xfc] sm:$0xf]
        %v10170 = vld [vmem:[%s10105 + $0x100] sm:$0xf]
        %v10171 = vld [vmem:[%s10105 + $0x104] sm:$0xf]
        %v10172 = vld [vmem:[%s10105 + $0x108] sm:$0xf]
        %v10173 = vld [vmem:[%s10105 + $0x10c] sm:$0xf]
        %v10174 = vld [vmem:[%s10105 + $0x110] sm:$0xf]
        %v10175 = vld [vmem:[%s10105 + $0x114] sm:$0xf]
        %v10176 = vld [vmem:[%s10105 + $0x118] sm:$0xf]
        %v10177 = vld [vmem:[%s10105 + $0x11c] sm:$0xf]
        %v10178 = vld [vmem:[%s10105 + $0x120] sm:$0xf]
        %v10179 = vld [vmem:[%s10105 + $0x124] sm:$0xf]
        %v10180 = vld [vmem:[%s10105 + $0x128] sm:$0xf]
        %v10181 = vld [vmem:[%s10105 + $0x12c] sm:$0xf]
        %v10182 = vld [vmem:[%s10105 + $0x130] sm:$0xf]
        %v10183 = vld [vmem:[%s10105 + $0x134] sm:$0xf]
        %v10184 = vld [vmem:[%s10105 + $0x138] sm:$0xf]
        %v10185 = vld [vmem:[%s10105 + $0x13c] sm:$0xf]
        %v10186 = vld [vmem:[%s10105 + $0x140] sm:$0xf]
        %v10187 = vld [vmem:[%s10105 + $0x144] sm:$0xf]
        %v10188 = vld [vmem:[%s10105 + $0x148] sm:$0xf]
        %v10189 = vld [vmem:[%s10105 + $0x14c] sm:$0xf]
        %v10190 = vld [vmem:[%s10105 + $0x150] sm:$0xf]
        %v10191 = vld [vmem:[%s10105 + $0x154] sm:$0xf]
        %v10192 = vld [vmem:[%s10105 + $0x158] sm:$0xf]
        %v10193 = vld [vmem:[%s10105 + $0x15c] sm:$0xf]
        %v10194 = vld [vmem:[%s10105 + $0x160] sm:$0xf]
        %v10195 = vld [vmem:[%s10105 + $0x164] sm:$0xf]
        %v10196 = vld [vmem:[%s10105 + $0x168] sm:$0xf]
        %v10197 = vld [vmem:[%s10105 + $0x16c] sm:$0xf]
        %v10198 = vld [vmem:[%s10105 + $0x170] sm:$0xf]
        %v10199 = vld [vmem:[%s10105 + $0x174] sm:$0xf]
        %v10200 = vld [vmem:[%s10105 + $0x178] sm:$0xf]
        %v10201 = vld [vmem:[%s10105 + $0x17c] sm:$0xf]
        %v10202 = vld [vmem:[%s10105 + $0x180] sm:$0xf]
        %v10203 = vld [vmem:[%s10105 + $0x184] sm:$0xf]
        %v10204 = vld [vmem:[%s10105 + $0x188] sm:$0xf]
        %v10205 = vld [vmem:[%s10105 + $0x18c] sm:$0xf]
        %v10206 = vld [vmem:[%s10105 + $0x190] sm:$0xf]
        %v10207 = vld [vmem:[%s10105 + $0x194] sm:$0xf]
        %v10208 = vld [vmem:[%s10105 + $0x198] sm:$0xf]
        %v10209 = vld [vmem:[%s10105 + $0x19c] sm:$0xf]
        %v10210 = vld [vmem:[%s10105 + $0x1a0] sm:$0xf]
        %v10211 = vld [vmem:[%s10105 + $0x1a4] sm:$0xf]
        %v10212 = vld [vmem:[%s10105 + $0x1a8] sm:$0xf]
        %v10213 = vld [vmem:[%s10105 + $0x1ac] sm:$0xf]
        %v10214 = vld [vmem:[%s10105 + $0x1b0] sm:$0xf]
        %v10215 = vld [vmem:[%s10105 + $0x1b4] sm:$0xf]
        %v10216 = vld [vmem:[%s10105 + $0x1b8] sm:$0xf]
        %v10217 = vld [vmem:[%s10105 + $0x1bc] sm:$0xf]
        %v10218 = vld [vmem:[%s10105 + $0x1c0] sm:$0xf]
        %v10219 = vld [vmem:[%s10105 + $0x1c4] sm:$0xf]
        %v10220 = vld [vmem:[%s10105 + $0x1c8] sm:$0xf]
        %v10221 = vld [vmem:[%s10105 + $0x1cc] sm:$0xf]
        %v10222 = vld [vmem:[%s10105 + $0x1d0] sm:$0xf]
        %v10223 = vld [vmem:[%s10105 + $0x1d4] sm:$0xf]
        %v10224 = vld [vmem:[%s10105 + $0x1d8] sm:$0xf]
        %v10225 = vld [vmem:[%s10105 + $0x1dc] sm:$0xf]
        %v10226 = vld [vmem:[%s10105 + $0x1e0] sm:$0xf]
        %v10227 = vld [vmem:[%s10105 + $0x1e4] sm:$0xf]
        %v10228 = vld [vmem:[%s10105 + $0x1e8] sm:$0xf]
        %v10229 = vld [vmem:[%s10105 + $0x1ec] sm:$0xf]
        %v10230 = vld [vmem:[%s10105 + $0x1f0] sm:$0xf]
        %v10231 = vld [vmem:[%s10105 + $0x1f4] sm:$0xf]
        %v10232 = vld [vmem:[%s10105 + $0x1f8] sm:$0xf]
        %v10233 = vld [vmem:[%s10105 + $0x1fc] sm:$0xf]
        %v10234 = vld [vmem:[%s10105 + $0x200] sm:$0xf]
        %v10235 = vld [vmem:[%s10105 + $0x204] sm:$0xf]
        %v10236 = vld [vmem:[%s10105 + $0x208] sm:$0xf]
        %v10237 = vld [vmem:[%s10105 + $0x20c] sm:$0xf]
        %v10238 = vld [vmem:[%s10105 + $0x210] sm:$0xf]
        %v10239 = vld [vmem:[%s10105 + $0x214] sm:$0xf]
        %v10240 = vld [vmem:[%s10105 + $0x218] sm:$0xf]
        %v10241 = vld [vmem:[%s10105 + $0x21c] sm:$0xf]
        %v10242 = vld [vmem:[%s10105 + $0x220] sm:$0xf]
        %v10243 = vld [vmem:[%s10105 + $0x224] sm:$0xf]
        %v10244 = vld [vmem:[%s10105 + $0x228] sm:$0xf]
        %v10245 = vld [vmem:[%s10105 + $0x22c] sm:$0xf]
        %v10246 = vld [vmem:[%s10105 + $0x230] sm:$0xf]
        %v10247 = vld [vmem:[%s10105 + $0x234] sm:$0xf]
        %v10248 = vld [vmem:[%s10105 + $0x238] sm:$0xf]
        %v10249 = vld [vmem:[%s10105 + $0x23c] sm:$0xf]
        %v10250 = vld [vmem:[%s10105 + $0x240] sm:$0xf]
        %v10251 = vld [vmem:[%s10105 + $0x244] sm:$0xf]
        %v10252 = vld [vmem:[%s10105 + $0x248] sm:$0xf]
        %v10253 = vld [vmem:[%s10105 + $0x24c] sm:$0xf]
        %v10254 = vld [vmem:[%s10105 + $0x250] sm:$0xf]
        %v10255 = vld [vmem:[%s10105 + $0x254] sm:$0xf]
        %v10256 = vld [vmem:[%s10105 + $0x258] sm:$0xf]
        %v10257 = vld [vmem:[%s10105 + $0x25c] sm:$0xf]
        %v10258 = vld [vmem:[%s10105 + $0x260] sm:$0xf]
        %v10259 = vld [vmem:[%s10105 + $0x264] sm:$0xf]
        %v10260 = vld [vmem:[%s10105 + $0x268] sm:$0xf]
        %v10261 = vld [vmem:[%s10105 + $0x26c] sm:$0xf]
        %v10262 = vld [vmem:[%s10105 + $0x270] sm:$0xf]
        %v10263 = vld [vmem:[%s10105 + $0x274] sm:$0xf]
        %v10264 = vld [vmem:[%s10105 + $0x278] sm:$0xf]
        %v10265 = vld [vmem:[%s10105 + $0x27c] sm:$0xf]
        %v10266 = vld [vmem:[%s10105 + $0x280] sm:$0xf]
        %v10267 = vld [vmem:[%s10105 + $0x284] sm:$0xf]
        %v10268 = vld [vmem:[%s10105 + $0x288] sm:$0xf]
        %v10269 = vld [vmem:[%s10105 + $0x28c] sm:$0xf]
        %v10270 = vld [vmem:[%s10105 + $0x290] sm:$0xf]
        %v10271 = vld [vmem:[%s10105 + $0x294] sm:$0xf]
        %v10272 = vld [vmem:[%s10105 + $0x298] sm:$0xf]
        %v10273 = vld [vmem:[%s10105 + $0x29c] sm:$0xf]
        %v10274 = vld [vmem:[%s10105 + $0x2a0] sm:$0xf]
        %v10275 = vld [vmem:[%s10105 + $0x2a4] sm:$0xf]
        %v10276 = vld [vmem:[%s10105 + $0x2a8] sm:$0xf]
        %v10277 = vld [vmem:[%s10105 + $0x2ac] sm:$0xf]
        %v10278 = vld [vmem:[%s10105 + $0x2b0] sm:$0xf]
        %v10279 = vld [vmem:[%s10105 + $0x2b4] sm:$0xf]
        %v10280 = vld [vmem:[%s10105 + $0x2b8] sm:$0xf]
        %v10281 = vld [vmem:[%s10105 + $0x2bc] sm:$0xf]
        %v10282 = vrot.slane %v5024, 3
        %v10283 = vrot.slane %v5027, 3
        %v10284 = vrot.slane %v5030, 3
        %v10285 = vrot.slane %v5033, 3
        %v10286 = vrot.slane %v5036, 3
        %v10287 = vrot.slane %v5039, 3
        %v10288 = vrot.slane %v5042, 3
        %v10289 = vrot.slane %v5045, 3
        %v10290 = vrot.slane %v5048, 3
        %v10291 = vrot.slane %v5051, 3
        %v10292 = vrot.slane %v5054, 3
        %v10480 = vunpack.c.l.b16 %v10106
        %v10481 = vunpack.c.l.b16 %v10107
        %v10482 = vunpack.c.l.b16 %v10108
        %v10483 = vunpack.c.l.b16 %v10109
        %v10484 = vunpack.c.l.b16 %v10110
        %v10485 = vunpack.c.l.b16 %v10111
        %v10486 = vunpack.c.l.b16 %v10112
        %v10487 = vunpack.c.l.b16 %v10113
        %v10488 = vunpack.c.l.b16 %v10114
        %v10489 = vunpack.c.l.b16 %v10115
        %v10490 = vunpack.c.l.b16 %v10116
        %v10491 = vunpack.c.l.b16 %v10117
        %v10492 = vunpack.c.l.b16 %v10118
        %v10493 = vunpack.c.l.b16 %v10119
        %v10494 = vunpack.c.l.b16 %v10120
        %v10495 = vunpack.c.l.b16 %v10121
        %v10496 = vunpack.c.l.b16 %v10122
        %v10497 = vunpack.c.l.b16 %v10123
        %v10498 = vunpack.c.l.b16 %v10124
        %v10499 = vunpack.c.l.b16 %v10125
        %v10500 = vunpack.c.l.b16 %v10126
        %v10501 = vunpack.c.l.b16 %v10127
        %v10502 = vunpack.c.l.b16 %v10128
        %v10503 = vunpack.c.l.b16 %v10129
        %v10504 = vunpack.c.l.b16 %v10130
        %v10505 = vunpack.c.l.b16 %v10131
        %v10506 = vunpack.c.l.b16 %v10132
        %v10507 = vunpack.c.l.b16 %v10133
        %v10508 = vunpack.c.l.b16 %v10134
        %v10509 = vunpack.c.l.b16 %v10135
        %v10510 = vunpack.c.l.b16 %v10136
        %v10511 = vunpack.c.l.b16 %v10137
        %v10512 = vunpack.c.l.b16 %v10138
        %v10513 = vunpack.c.l.b16 %v10139
        %v10514 = vunpack.c.l.b16 %v10140
        %v10515 = vunpack.c.l.b16 %v10141
        %v10516 = vunpack.c.l.b16 %v10142
        %v10517 = vunpack.c.l.b16 %v10143
        %v10518 = vunpack.c.l.b16 %v10144
        %v10519 = vunpack.c.l.b16 %v10145
        %v10520 = vunpack.c.l.b16 %v10146
        %v10521 = vunpack.c.l.b16 %v10147
        %v10522 = vunpack.c.l.b16 %v10148
        %v10523 = vunpack.c.l.b16 %v10149
        %v10524 = vunpack.c.l.b16 %v10150
        %v10525 = vunpack.c.l.b16 %v10151
        %v10526 = vunpack.c.l.b16 %v10152
        %v10527 = vunpack.c.l.b16 %v10153
        %v10528 = vunpack.c.l.b16 %v10154
        %v10529 = vunpack.c.l.b16 %v10155
        %v10530 = vunpack.c.l.b16 %v10156
        %v10531 = vunpack.c.l.b16 %v10157
        %v10532 = vunpack.c.l.b16 %v10158
        %v10533 = vunpack.c.l.b16 %v10159
        %v10534 = vunpack.c.l.b16 %v10160
        %v10535 = vunpack.c.l.b16 %v10161
        %v10536 = vunpack.c.l.b16 %v10162
        %v10537 = vunpack.c.l.b16 %v10163
        %v10538 = vunpack.c.l.b16 %v10164
        %v10539 = vunpack.c.l.b16 %v10165
        %v10540 = vunpack.c.l.b16 %v10166
        %v10541 = vunpack.c.l.b16 %v10167
        %v10542 = vunpack.c.l.b16 %v10168
        %v10543 = vunpack.c.l.b16 %v10169
        %v10544 = vunpack.c.l.b16 %v10170
        %v10545 = vunpack.c.l.b16 %v10171
        %v10546 = vunpack.c.l.b16 %v10172
        %v10547 = vunpack.c.l.b16 %v10173
        %v10548 = vunpack.c.l.b16 %v10174
        %v10549 = vunpack.c.l.b16 %v10175
        %v10550 = vunpack.c.l.b16 %v10176
        %v10551 = vunpack.c.l.b16 %v10177
        %v10552 = vunpack.c.l.b16 %v10178
        %v10553 = vunpack.c.l.b16 %v10179
        %v10554 = vunpack.c.l.b16 %v10180
        %v10555 = vunpack.c.l.b16 %v10181
        %v10556 = vunpack.c.l.b16 %v10182
        %v10557 = vunpack.c.l.b16 %v10183
        %v10558 = vunpack.c.l.b16 %v10184
        %v10559 = vunpack.c.l.b16 %v10185
        %v10560 = vunpack.c.l.b16 %v10186
        %v10561 = vunpack.c.l.b16 %v10187
        %v10562 = vunpack.c.l.b16 %v10188
        %v10563 = vunpack.c.l.b16 %v10189
        %v10564 = vunpack.c.l.b16 %v10190
        %v10565 = vunpack.c.l.b16 %v10191
        %v10566 = vunpack.c.l.b16 %v10192
        %v10567 = vunpack.c.l.b16 %v10193
        %v10568 = vunpack.c.l.b16 %v10194
        %v10569 = vunpack.c.l.b16 %v10195
        %v10570 = vunpack.c.l.b16 %v10196
        %v10571 = vunpack.c.l.b16 %v10197
        %v10572 = vunpack.c.l.b16 %v10198
        %v10573 = vunpack.c.l.b16 %v10199
        %v10574 = vunpack.c.l.b16 %v10200
        %v10575 = vunpack.c.l.b16 %v10201
        %v10576 = vunpack.c.l.b16 %v10202
        %v10577 = vunpack.c.l.b16 %v10203
        %v10578 = vunpack.c.l.b16 %v10204
        %v10579 = vunpack.c.l.b16 %v10205
        %v10580 = vunpack.c.l.b16 %v10206
        %v10581 = vunpack.c.l.b16 %v10207
        %v10582 = vunpack.c.l.b16 %v10208
        %v10583 = vunpack.c.l.b16 %v10209
        %v10584 = vunpack.c.l.b16 %v10210
        %v10585 = vunpack.c.l.b16 %v10211
        %v10586 = vunpack.c.l.b16 %v10212
        %v10587 = vunpack.c.l.b16 %v10213
        %v10588 = vunpack.c.l.b16 %v10214
        %v10589 = vunpack.c.l.b16 %v10215
        %v10590 = vunpack.c.l.b16 %v10216
        %v10591 = vunpack.c.l.b16 %v10217
        %v10592 = vunpack.c.l.b16 %v10218
        %v10593 = vunpack.c.l.b16 %v10219
        %v10594 = vunpack.c.l.b16 %v10220
        %v10595 = vunpack.c.l.b16 %v10221
        %v10596 = vunpack.c.l.b16 %v10222
        %v10597 = vunpack.c.l.b16 %v10223
        %v10598 = vunpack.c.l.b16 %v10224
        %v10599 = vunpack.c.l.b16 %v10225
        %v10600 = vunpack.c.l.b16 %v10226
        %v10601 = vunpack.c.l.b16 %v10227
        %v10602 = vunpack.c.l.b16 %v10228
        %v10603 = vunpack.c.l.b16 %v10229
        %v10604 = vunpack.c.l.b16 %v10230
        %v10605 = vunpack.c.l.b16 %v10231
        %v10606 = vunpack.c.l.b16 %v10232
        %v10607 = vunpack.c.l.b16 %v10233
        %v10608 = vunpack.c.l.b16 %v10234
        %v10609 = vunpack.c.l.b16 %v10235
        %v10610 = vunpack.c.l.b16 %v10236
        %v10611 = vunpack.c.l.b16 %v10237
        %v10612 = vunpack.c.l.b16 %v10238
        %v10613 = vunpack.c.l.b16 %v10239
        %v10614 = vunpack.c.l.b16 %v10240
        %v10615 = vunpack.c.l.b16 %v10241
        %v10616 = vunpack.c.l.b16 %v10242
        %v10617 = vunpack.c.l.b16 %v10243
        %v10618 = vunpack.c.l.b16 %v10244
        %v10619 = vunpack.c.l.b16 %v10245
        %v10620 = vunpack.c.l.b16 %v10246
        %v10621 = vunpack.c.l.b16 %v10247
        %v10622 = vunpack.c.l.b16 %v10248
        %v10623 = vunpack.c.l.b16 %v10249
        %v10624 = vunpack.c.l.b16 %v10250
        %v10625 = vunpack.c.l.b16 %v10251
        %v10626 = vunpack.c.l.b16 %v10252
        %v10627 = vunpack.c.l.b16 %v10253
        %v10628 = vunpack.c.l.b16 %v10254
        %v10629 = vunpack.c.l.b16 %v10255
        %v10630 = vunpack.c.l.b16 %v10256
        %v10631 = vunpack.c.l.b16 %v10257
        %v10632 = vunpack.c.l.b16 %v10258
        %v10633 = vunpack.c.l.b16 %v10259
        %v10634 = vunpack.c.l.b16 %v10260
        %v10635 = vunpack.c.l.b16 %v10261
        %v10636 = vunpack.c.l.b16 %v10262
        %v10637 = vunpack.c.l.b16 %v10263
        %v10638 = vunpack.c.l.b16 %v10264
        %v10639 = vunpack.c.l.b16 %v10265
        %v10640 = vunpack.c.l.b16 %v10266
        %v10641 = vunpack.c.l.b16 %v10267
        %v10642 = vunpack.c.l.b16 %v10268
        %v10643 = vunpack.c.l.b16 %v10269
        %v10644 = vunpack.c.l.b16 %v10270
        %v10645 = vunpack.c.l.b16 %v10271
        %v10646 = vunpack.c.l.b16 %v10272
        %v10647 = vunpack.c.l.b16 %v10273
        %v10648 = vunpack.c.l.b16 %v10274
        %v10649 = vunpack.c.l.b16 %v10275
        %v10650 = vunpack.c.l.b16 %v10276
        %v10651 = vunpack.c.l.b16 %v10277
        %v10652 = vunpack.c.l.b16 %v10278
        %v10653 = vunpack.c.l.b16 %v10279
        %v10654 = vunpack.c.l.b16 %v10280
        %v10655 = vunpack.c.l.b16 %v10281
        %v10656 = vpack.c.b16 %v10481, %v10480
        %v10657 = vpack.c.b16 %v10483, %v10482
        %v10658 = vpack.c.b16 %v10485, %v10484
        %v10659 = vpack.c.b16 %v10487, %v10486
        %v10660 = vpack.c.b16 %v10489, %v10488
        %v10661 = vpack.c.b16 %v10491, %v10490
        %v10662 = vpack.c.b16 %v10493, %v10492
        %v10663 = vpack.c.b16 %v10495, %v10494
        %v10664 = vpack.c.b16 %v10497, %v10496
        %v10665 = vpack.c.b16 %v10499, %v10498
        %v10666 = vpack.c.b16 %v10501, %v10500
        %v10667 = vpack.c.b16 %v10503, %v10502
        %v10668 = vpack.c.b16 %v10505, %v10504
        %v10669 = vpack.c.b16 %v10507, %v10506
        %v10670 = vpack.c.b16 %v10509, %v10508
        %v10671 = vpack.c.b16 %v10511, %v10510
        %v10672 = vpack.c.b16 %v10513, %v10512
        %v10673 = vpack.c.b16 %v10515, %v10514
        %v10674 = vpack.c.b16 %v10517, %v10516
        %v10675 = vpack.c.b16 %v10519, %v10518
        %v10676 = vpack.c.b16 %v10521, %v10520
        %v10677 = vpack.c.b16 %v10523, %v10522
        %v10678 = vpack.c.b16 %v10525, %v10524
        %v10679 = vpack.c.b16 %v10527, %v10526
        %v10680 = vpack.c.b16 %v10529, %v10528
        %v10681 = vpack.c.b16 %v10531, %v10530
        %v10682 = vpack.c.b16 %v10533, %v10532
        %v10683 = vpack.c.b16 %v10535, %v10534
        %v10684 = vpack.c.b16 %v10537, %v10536
        %v10685 = vpack.c.b16 %v10539, %v10538
        %v10686 = vpack.c.b16 %v10541, %v10540
        %v10687 = vpack.c.b16 %v10543, %v10542
        %v10688 = vpack.c.b16 %v10545, %v10544
        %v10689 = vpack.c.b16 %v10547, %v10546
        %v10690 = vpack.c.b16 %v10549, %v10548
        %v10691 = vpack.c.b16 %v10551, %v10550
        %v10692 = vpack.c.b16 %v10553, %v10552
        %v10693 = vpack.c.b16 %v10555, %v10554
        %v10694 = vpack.c.b16 %v10557, %v10556
        %v10695 = vpack.c.b16 %v10559, %v10558
        %v10696 = vpack.c.b16 %v10561, %v10560
        %v10697 = vpack.c.b16 %v10563, %v10562
        %v10698 = vpack.c.b16 %v10565, %v10564
        %v10699 = vpack.c.b16 %v10567, %v10566
        %v10700 = vpack.c.b16 %v10569, %v10568
        %v10701 = vpack.c.b16 %v10571, %v10570
        %v10702 = vpack.c.b16 %v10573, %v10572
        %v10703 = vpack.c.b16 %v10575, %v10574
        %v10704 = vpack.c.b16 %v10577, %v10576
        %v10705 = vpack.c.b16 %v10579, %v10578
        %v10706 = vpack.c.b16 %v10581, %v10580
        %v10707 = vpack.c.b16 %v10583, %v10582
        %v10708 = vpack.c.b16 %v10585, %v10584
        %v10709 = vpack.c.b16 %v10587, %v10586
        %v10710 = vpack.c.b16 %v10589, %v10588
        %v10711 = vpack.c.b16 %v10591, %v10590
        %v10712 = vpack.c.b16 %v10593, %v10592
        %v10713 = vpack.c.b16 %v10595, %v10594
        %v10714 = vpack.c.b16 %v10597, %v10596
        %v10715 = vpack.c.b16 %v10599, %v10598
        %v10716 = vpack.c.b16 %v10601, %v10600
        %v10717 = vpack.c.b16 %v10603, %v10602
        %v10718 = vpack.c.b16 %v10605, %v10604
        %v10719 = vpack.c.b16 %v10607, %v10606
        %v10720 = vpack.c.b16 %v10609, %v10608
        %v10721 = vpack.c.b16 %v10611, %v10610
        %v10722 = vpack.c.b16 %v10613, %v10612
        %v10723 = vpack.c.b16 %v10615, %v10614
        %v10724 = vpack.c.b16 %v10617, %v10616
        %v10725 = vpack.c.b16 %v10619, %v10618
        %v10726 = vpack.c.b16 %v10621, %v10620
        %v10727 = vpack.c.b16 %v10623, %v10622
        %v10728 = vpack.c.b16 %v10625, %v10624
        %v10729 = vpack.c.b16 %v10627, %v10626
        %v10730 = vpack.c.b16 %v10629, %v10628
        %v10731 = vpack.c.b16 %v10631, %v10630
        %v10732 = vpack.c.b16 %v10633, %v10632
        %v10733 = vpack.c.b16 %v10635, %v10634
        %v10734 = vpack.c.b16 %v10637, %v10636
        %v10735 = vpack.c.b16 %v10639, %v10638
        %v10736 = vpack.c.b16 %v10641, %v10640
        %v10737 = vpack.c.b16 %v10643, %v10642
        %v10738 = vpack.c.b16 %v10645, %v10644
        %v10739 = vpack.c.b16 %v10647, %v10646
        %v10740 = vpack.c.b16 %v10649, %v10648
        %v10741 = vpack.c.b16 %v10651, %v10650
        %v10742 = vpack.c.b16 %v10653, %v10652
        %v10743 = vpack.c.b16 %v10655, %v10654
        %10832 = vmatpush.bf16.msra.mxu0 %v10663
        %10833 = vmatpush.bf16.msra.mxu0 %v10662
        %10834 = vmatpush.bf16.msra.mxu0 %v10661
        %10835 = vmatpush.bf16.msra.mxu0 %v10660
        %10836 = vmatpush.bf16.msra.mxu0 %v10659
        %10837 = vmatpush.bf16.msra.mxu0 %v10658
        %10838 = vmatpush.bf16.msra.mxu0 %v10657
        %10839 = vmatpush.bf16.msra.mxu0 %v10656
        %10840 = vmatmul.bf16.gmra.mxu0 %v10282
        %v10841 = vpop.f32.mrf.mxu0
        %v10842 = vadd.f32 0.0, %v10841
        %v10843 = vpop.f32.mrf.mxu0
        %10844 = vdwg.mxu0
        %10845 = vmatpush.bf16.msra.mxu0 %v10671
        %10846 = vmatpush.bf16.msra.mxu0 %v10670
        %10847 = vmatpush.bf16.msra.mxu0 %v10669
        %10848 = vmatpush.bf16.msra.mxu0 %v10668
        %10849 = vmatpush.bf16.msra.mxu0 %v10667
        %10850 = vmatpush.bf16.msra.mxu0 %v10666
        %10851 = vmatpush.bf16.msra.mxu0 %v10665
        %10852 = vmatpush.bf16.msra.mxu0 %v10664
        %10853 = vmatmul.bf16.gmra.mxu0 %v10283
        %v10854 = vpop.f32.mrf.mxu0
        %v10855 = vadd.f32 %v10842, %v10854
        %v10856 = vpop.f32.mrf.mxu0
        %10857 = vdwg.mxu0
        %10858 = vmatpush.bf16.msra.mxu0 %v10679
        %10859 = vmatpush.bf16.msra.mxu0 %v10678
        %10860 = vmatpush.bf16.msra.mxu0 %v10677
        %10861 = vmatpush.bf16.msra.mxu0 %v10676
        %10862 = vmatpush.bf16.msra.mxu0 %v10675
        %10863 = vmatpush.bf16.msra.mxu0 %v10674
        %10864 = vmatpush.bf16.msra.mxu0 %v10673
        %10865 = vmatpush.bf16.msra.mxu0 %v10672
        %10866 = vmatmul.bf16.gmra.mxu0 %v10284
        %v10867 = vpop.f32.mrf.mxu0
        %v10868 = vadd.f32 %v10855, %v10867
        %v10869 = vpop.f32.mrf.mxu0
        %10870 = vdwg.mxu0
        %10871 = vmatpush.bf16.msra.mxu0 %v10687
        %10872 = vmatpush.bf16.msra.mxu0 %v10686
        %10873 = vmatpush.bf16.msra.mxu0 %v10685
        %10874 = vmatpush.bf16.msra.mxu0 %v10684
        %10875 = vmatpush.bf16.msra.mxu0 %v10683
        %10876 = vmatpush.bf16.msra.mxu0 %v10682
        %10877 = vmatpush.bf16.msra.mxu0 %v10681
        %10878 = vmatpush.bf16.msra.mxu0 %v10680
        %10879 = vmatmul.bf16.gmra.mxu0 %v10285
        %v10880 = vpop.f32.mrf.mxu0
        %v10881 = vadd.f32 %v10868, %v10880
        %v10882 = vpop.f32.mrf.mxu0
        %10883 = vdwg.mxu0
        %10884 = vmatpush.bf16.msra.mxu0 %v10695
        %10885 = vmatpush.bf16.msra.mxu0 %v10694
        %10886 = vmatpush.bf16.msra.mxu0 %v10693
        %10887 = vmatpush.bf16.msra.mxu0 %v10692
        %10888 = vmatpush.bf16.msra.mxu0 %v10691
        %10889 = vmatpush.bf16.msra.mxu0 %v10690
        %10890 = vmatpush.bf16.msra.mxu0 %v10689
        %10891 = vmatpush.bf16.msra.mxu0 %v10688
        %10892 = vmatmul.bf16.gmra.mxu0 %v10286
        %v10893 = vpop.f32.mrf.mxu0
        %v10894 = vadd.f32 %v10881, %v10893
        %v10895 = vpop.f32.mrf.mxu0
        %10896 = vdwg.mxu0
        %10897 = vmatpush.bf16.msra.mxu0 %v10703
        %10898 = vmatpush.bf16.msra.mxu0 %v10702
        %10899 = vmatpush.bf16.msra.mxu0 %v10701
        %10900 = vmatpush.bf16.msra.mxu0 %v10700
        %10901 = vmatpush.bf16.msra.mxu0 %v10699
        %10902 = vmatpush.bf16.msra.mxu0 %v10698
        %10903 = vmatpush.bf16.msra.mxu0 %v10697
        %10904 = vmatpush.bf16.msra.mxu0 %v10696
        %10905 = vmatmul.bf16.gmra.mxu0 %v10287
        %v10906 = vpop.f32.mrf.mxu0
        %v10907 = vadd.f32 %v10894, %v10906
        %v10908 = vpop.f32.mrf.mxu0
        %10909 = vdwg.mxu0
        %10910 = vmatpush.bf16.msra.mxu0 %v10711
        %10911 = vmatpush.bf16.msra.mxu0 %v10710
        %10912 = vmatpush.bf16.msra.mxu0 %v10709
        %10913 = vmatpush.bf16.msra.mxu0 %v10708
        %10914 = vmatpush.bf16.msra.mxu0 %v10707
        %10915 = vmatpush.bf16.msra.mxu0 %v10706
        %10916 = vmatpush.bf16.msra.mxu0 %v10705
        %10917 = vmatpush.bf16.msra.mxu0 %v10704
        %10918 = vmatmul.bf16.gmra.mxu0 %v10288
        %v10919 = vpop.f32.mrf.mxu0
        %v10920 = vadd.f32 %v10907, %v10919
        %v10921 = vpop.f32.mrf.mxu0
        %10922 = vdwg.mxu0
        %10923 = vmatpush.bf16.msra.mxu0 %v10719
        %10924 = vmatpush.bf16.msra.mxu0 %v10718
        %10925 = vmatpush.bf16.msra.mxu0 %v10717
        %10926 = vmatpush.bf16.msra.mxu0 %v10716
        %10927 = vmatpush.bf16.msra.mxu0 %v10715
        %10928 = vmatpush.bf16.msra.mxu0 %v10714
        %10929 = vmatpush.bf16.msra.mxu0 %v10713
        %10930 = vmatpush.bf16.msra.mxu0 %v10712
        %10931 = vmatmul.bf16.gmra.mxu0 %v10289
        %v10932 = vpop.f32.mrf.mxu0
        %v10933 = vadd.f32 %v10920, %v10932
        %v10934 = vpop.f32.mrf.mxu0
        %10935 = vdwg.mxu0
        %10936 = vmatpush.bf16.msra.mxu0 %v10727
        %10937 = vmatpush.bf16.msra.mxu0 %v10726
        %10938 = vmatpush.bf16.msra.mxu0 %v10725
        %10939 = vmatpush.bf16.msra.mxu0 %v10724
        %10940 = vmatpush.bf16.msra.mxu0 %v10723
        %10941 = vmatpush.bf16.msra.mxu0 %v10722
        %10942 = vmatpush.bf16.msra.mxu0 %v10721
        %10943 = vmatpush.bf16.msra.mxu0 %v10720
        %10944 = vmatmul.bf16.gmra.mxu0 %v10290
        %v10945 = vpop.f32.mrf.mxu0
        %v10946 = vadd.f32 %v10933, %v10945
        %v10947 = vpop.f32.mrf.mxu0
        %10948 = vdwg.mxu0
        %10949 = vmatpush.bf16.msra.mxu0 %v10735
        %10950 = vmatpush.bf16.msra.mxu0 %v10734
        %10951 = vmatpush.bf16.msra.mxu0 %v10733
        %10952 = vmatpush.bf16.msra.mxu0 %v10732
        %10953 = vmatpush.bf16.msra.mxu0 %v10731
        %10954 = vmatpush.bf16.msra.mxu0 %v10730
        %10955 = vmatpush.bf16.msra.mxu0 %v10729
        %10956 = vmatpush.bf16.msra.mxu0 %v10728
        %10957 = vmatmul.bf16.gmra.mxu0 %v10291
        %v10958 = vpop.f32.mrf.mxu0
        %v10959 = vadd.f32 %v10946, %v10958
        %v10960 = vpop.f32.mrf.mxu0
        %10961 = vdwg.mxu0
        %10962 = vmatpush.bf16.msra.mxu0 %v10743
        %10963 = vmatpush.bf16.msra.mxu0 %v10742
        %10964 = vmatpush.bf16.msra.mxu0 %v10741
        %10965 = vmatpush.bf16.msra.mxu0 %v10740
        %10966 = vmatpush.bf16.msra.mxu0 %v10739
        %10967 = vmatpush.bf16.msra.mxu0 %v10738
        %10968 = vmatpush.bf16.msra.mxu0 %v10737
        %10969 = vmatpush.bf16.msra.mxu0 %v10736
        %10970 = vmatmul.bf16.gmra.mxu0 %v10292
        %v10971 = vpop.f32.mrf.mxu0
        %v10972 = vadd.f32 %v10959, %v10971
        %v10973 = vpop.f32.mrf.mxu0
        %10974 = vdwg.mxu0
        %v10975 = vadd.f32 %v10104, %v10972
        %vm10976 = vcmask 73728
        %10977 = vst.msk [vmem:[%s297] sm:$0x1] %vm10976, %v10975
        %s10978 = sand.u32 %s203, 1
        %s10979 = scalar_lea.sflag [#allocation4], %s10978
        %s10980 = sand.u32 %s203, 1
        %s10981 = scalar_lea.vmem [#allocation3], %s10980
        // Predicated region
        $region53: #{classic_cnn_forward.1} parent=51 // pred_check
          %p10982 = pneg %p213
        $region54: #{classic_cnn_forward.1} parent=51 // pred_check_branch
          %10984 = sbr.rel (%p10982) target = $region56
        $region55: #{classic_cnn_forward.1} parent=51 // pred_region
          %10986 = vsyncadd %s10979, 0
          %s10987 = scalar_lea.hbm %s8, %s22
          %s10989 = sshll.u32 %s10981, 4
          %s10990 = int_to_ptr.vmem [resolvable:$true] %s10989
          %s10991 = sshll.u32 %s10987, 4
          %s10992 = int_to_ptr.hbm [resolvable:$true] %s10991
          %10994 = dma.vmem_to_hbm [thread:$0]  %s10990, 16, %s10992, %s10979
        $region56: #{classic_cnn_forward.1} parent=51 // pred_fallthru
          _
      $region52: #{classic_cnn_forward.1} parent=5 // pred_fallthru
        _
      %p10995 = scmp.le.s32.totalorder 2, %s17
      // Predicated region
      $region57: #{classic_cnn_forward.1} parent=5 // pred_check
        %p10996 = pneg %p10995
      $region58: #{classic_cnn_forward.1} parent=5 // pred_check_branch
        %10998 = sbr.rel (%p10996) target = $region60
      $region59: #{classic_cnn_forward.1} parent=5 // pred_region
        %s10999 = ssub.s32 %s17, 2
        // Predicated region
        $region61: #{classic_cnn_forward.1} parent=59 // pred_check
          %p11000 = pneg %p219
        $region62: #{classic_cnn_forward.1} parent=59 // pred_check_branch
          %11002 = sbr.rel (%p11000) target = $region64
        $region63: #{classic_cnn_forward.1} parent=59 // pred_region
          %s11003 = sand.u32 %s204, 1
          %s11004 = scalar_lea.sflag [#allocation4], %s11003
          %s11005 = sand.u32 %s204, 1
          %s11006 = scalar_lea.vmem [#allocation3], %s11005
          %11008 = dma.done %s11004, 16
        $region64: #{classic_cnn_forward.1} parent=59 // pred_fallthru
          _
      $region60: #{classic_cnn_forward.1} parent=5 // pred_fallthru
        _
    $region6: #{classic_cnn_forward.1} parent=1 // loop_footer
      %s21 = sadd.s32 1, %s17
    $region7: #{classic_cnn_forward.1} parent=1 // loop_footer_branch
      %16 = sbr.rel target = $region3
    $region8: #{classic_cnn_forward.1} parent=1 // loop_exit
      _
    %11009 = vsyncpa [#allocation4], 1
    %s11010 = scalar_lea.sflag [#allocation4], 1
    %11011 = vsyncpa %s11010, 1

</llo_original>
